<compile_context>
chip_gen: v5e
topology: v5e:2x2
jax: 0.10.0
libtpu: 0.0.40
codegen_flags: <defaults>
</compile_context>

<pallas_src>
import math

import numpy as np
import jax
import jax.numpy as jnp
from jax.experimental import pallas as pl
from jax.experimental.pallas import tpu as pltpu

# ---------------- small but forward-consistent config ----------------
B = 2               # batch
C_IN = 3            # RGB
T = 8               # num_frames
IMG = 64            # img_size / input_size
PATCH = 16          # patch_size
TUBELET = 2         # tubelet_size
D = 64              # embed_dim       (shrunk from 768)
DEPTH = 2           # depth           (shrunk from 12)
HEADS = 2           # num_heads       (shrunk from 12)
HEAD_DIM = D // HEADS
MLP_H = 4 * D       # mlp_ratio = 4
NUM_CLASSES = 400   # nb_classes
NUM_CLASSES_PAD = ((NUM_CLASSES + 127) // 128) * 128   # 512: lane-dense head output
EPS = 1e-6          # LayerNorm eps (partial(nn.LayerNorm, eps=1e-6))

T_P = T // TUBELET
HW_P = IMG // PATCH
N_TOK = T_P * HW_P * HW_P                     # 4 * 4 * 4 = 64 tokens
ROWS = B * N_TOK                              # 128 rows for all dense matmuls
K_PATCH = C_IN * TUBELET * PATCH * PATCH      # 1536
SCALE = HEAD_DIM ** -0.5
_SQRT2 = np.float32(math.sqrt(2.0))


# ---------------- shared math ----------------
def _ln(v, g, b):
    mu = jnp.mean(v, axis=-1, keepdims=True)
    var = jnp.mean(jnp.square(v - mu), axis=-1, keepdims=True)
    return (v - mu) * jax.lax.rsqrt(var + EPS) * g + b


def _gelu(v):
    # exact GELU (PyTorch nn.GELU default, approximate='none')
    return 0.5 * v * (1.0 + jax.lax.erf(v / _SQRT2))


# ---------------- fused Pallas kernel ----------------
# grid = (DEPTH,) sequential.  Layer 0 also does the patch embed; the last layer
# also does mean-pool + fc_norm + head.  Activation (ROWS, D) lives in VMEM scratch
# for the whole grid; per-layer weights are (1, ...) blocks of (DEPTH, ...) stacks.
def fused_vit_kernel(
    patches_ref, w_pe_ref, pe_add_ref,
    ln1g_ref, ln1b_ref, wqkv_ref, bqkv_ref, wo_ref, bo_ref,
    ln2g_ref, ln2b_ref, w1_ref, b1_ref, w2_ref, b2_ref,
    fng_ref, fnb_ref, wh_ref, bh_ref,
    out_ref, act_ref,
):
    layer = pl.program_id(0)

    # ---- patch embed (+ sinusoid pos embed), only on the first grid step ----
    @pl.when(layer == 0)
    def _():
        act_ref[...] = (
            jnp.dot(patches_ref[...], w_pe_ref[...],
                    preferred_element_type=jnp.float32)
            + pe_add_ref[...])

    x = act_ref[...]                                            # (ROWS, D)

    # ---- attention branch ----
    ln1g = ln1g_ref[0]
    ln1b = ln1b_ref[0]
    wqkv = wqkv_ref[0]
    bqkv = bqkv_ref[0]
    wo = wo_ref[0]
    bo = bo_ref[0]

    xn = _ln(x, ln1g, ln1b)
    qkv = jnp.dot(xn, wqkv, preferred_element_type=jnp.float32) + bqkv  # (ROWS, 3D)
    qkv3 = qkv.reshape(B, N_TOK, 3 * D)                         # batch back out

    attn = jnp.zeros((ROWS, D), jnp.float32)
    for h in range(HEADS):                                      # static unroll (2)
        q = qkv3[:, :, h * HEAD_DIM:(h + 1) * HEAD_DIM]                 # (B, N, dh)
        k = qkv3[:, :, D + h * HEAD_DIM:D + (h + 1) * HEAD_DIM]
        v = qkv3[:, :, 2 * D + h * HEAD_DIM:2 * D + (h + 1) * HEAD_DIM]
        # batched over B so tokens never attend across batch elements
        s = jnp.einsum("bnd,bmd->bnm", q, k,
                       preferred_element_type=jnp.float32) * SCALE
        s = s - jnp.max(s, axis=-1, keepdims=True)
        p = jnp.exp(s)
        p = p * pl.reciprocal(jnp.sum(p, axis=-1, keepdims=True), approx=True)
        ho = jnp.einsum("bnm,bmd->bnd", p, v,
                        preferred_element_type=jnp.float32)             # (B, N, dh)
        # project this head's slice of w_proj directly; no lane concat needed
        attn = attn + jnp.dot(ho.reshape(ROWS, HEAD_DIM),
                              wo[h * HEAD_DIM:(h + 1) * HEAD_DIM, :],
                              preferred_element_type=jnp.float32)
    x = x + attn + bo

    # ---- MLP branch ----
    xn2 = _ln(x, ln2g_ref[0], ln2b_ref[0])
    hid = jnp.dot(xn2, w1_ref[0], preferred_element_type=jnp.float32) + b1_ref[0]
    hid = _gelu(hid)
    x = x + jnp.dot(hid, w2_ref[0], preferred_element_type=jnp.float32) + b2_ref[0]
    act_ref[...] = x

    # ---- mean-pool + fc_norm + head, only on the last grid step ----
    @pl.when(layer == pl.num_programs(0) - 1)
    def _():
        m = jnp.mean(x.reshape(B, N_TOK, D), axis=1)            # (B, D)
        mn = _ln(m, fng_ref[...], fnb_ref[...])                 # fc_norm
        out_ref[...] = (jnp.dot(mn, wh_ref[...],
                                preferred_element_type=jnp.float32)
                        + bh_ref[...])


# ---------------- pallas_call wrapper ----------------
def _const_spec(shape):
    nd = len(shape)
    return pl.BlockSpec(shape, lambda l, _n=nd: (0,) * _n)


def _layer_spec(shape):
    nd = len(shape)
    return pl.BlockSpec((1,) + tuple(shape), lambda l, _n=nd: (l,) + (0,) * _n)


_BLOCK_PARAM_ORDER = [
    "ln1_g", "ln1_b", "w_qkv", "b_qkv", "w_proj", "b_proj",
    "ln2_g", "ln2_b", "w_fc1", "b_fc1", "w_fc2", "b_fc2",
]


def videomae_forward(x, params):
    patches = extract_patches(x).reshape(ROWS, K_PATCH)
    # conv bias + fixed sinusoid pos embed, tiled to the batch-folded row layout
    pe_add = jnp.tile(params["pos"] + params["b_pe"], (B, 1))           # (ROWS, D)
    # lane-dense head: pad 400 -> 512 columns with zeros, slice back outside
    w_head_pad = jnp.zeros((D, NUM_CLASSES_PAD), jnp.float32
                           ).at[:, :NUM_CLASSES].set(params["w_head"])
    b_head_pad = jnp.zeros((1, NUM_CLASSES_PAD), jnp.float32
                           ).at[:, :NUM_CLASSES].set(params["b_head"])
    # stack per-layer weights so the depth grid axis pipelines their DMA
    stacked = {n: jnp.stack([blk[n] for blk in params["blocks"]])
               for n in _BLOCK_PARAM_ORDER}

    in_specs = [
        _const_spec((ROWS, K_PATCH)),
        _const_spec((K_PATCH, D)),
        _const_spec((ROWS, D)),
    ]
    args = [patches, params["w_pe"], pe_add]
    for n in _BLOCK_PARAM_ORDER:
        arr = stacked[n]
        in_specs.append(_layer_spec(arr.shape[1:]))
        args.append(arr)
    in_specs += [
        _const_spec((1, D)),
        _const_spec((1, D)),
        _const_spec((D, NUM_CLASSES_PAD)),
        _const_spec((1, NUM_CLASSES_PAD)),
    ]
    args += [params["fc_norm_g"], params["fc_norm_b"], w_head_pad, b_head_pad]

    out_pad = pl.pallas_call(
        fused_vit_kernel,
        out_shape=jax.ShapeDtypeStruct((B, NUM_CLASSES_PAD), jnp.float32),
        grid=(DEPTH,),
        in_specs=in_specs,
        out_specs=pl.BlockSpec((B, NUM_CLASSES_PAD), lambda l: (0, 0)),
        scratch_shapes=[pltpu.VMEM((ROWS, D), jnp.float32)],
        compiler_params=pltpu.CompilerParams(
            dimension_semantics=("arbitrary",)),
    )(*args)
    return out_pad[:, :NUM_CLASSES]


# ---------------- glue: patch extraction (tubelet conv3d as matmul) ----------------
def extract_patches(x):
    # x: (B, C, T, H, W) -> (B, N_TOK, C*TUBELET*PATCH*PATCH), token order (t', h', w')
    xr = x.reshape(B, C_IN, T_P, TUBELET, HW_P, PATCH, HW_P, PATCH)
    xr = xr.transpose(0, 2, 4, 6, 1, 3, 5, 7)   # (B, t', h', w', C, kt, kh, kw)
    return xr.reshape(B, N_TOK, K_PATCH)


def sinusoid_table(n_pos, d):
    # VideoMAE's fixed get_sinusoid_encoding_table
    pos = np.arange(n_pos, dtype=np.float64)[:, None]
    idx = np.arange(d, dtype=np.float64)[None, :]
    angle = pos / np.power(10000.0, 2.0 * (idx // 2) / d)
    tbl = np.zeros((n_pos, d), dtype=np.float64)
    tbl[:, 0::2] = np.sin(angle[:, 0::2])
    tbl[:, 1::2] = np.cos(angle[:, 1::2])
    return jnp.asarray(tbl, dtype=jnp.float32)


# ---------------- deterministic synthetic parameters ----------------
def init_params(key):
    def normal(k, shape, std=0.02):
        return (std * jax.random.normal(k, shape)).astype(jnp.float32)

    keys = jax.random.split(key, DEPTH + 2)
    params = {
        "w_pe": normal(keys[0], (K_PATCH, D)),
        "b_pe": jnp.zeros((1, D), jnp.float32),
        "pos": sinusoid_table(N_TOK, D),
        "fc_norm_g": jnp.ones((1, D), jnp.float32),
        "fc_norm_b": jnp.zeros((1, D), jnp.float32),
        # init_scale = 0.001 scaling of head weights
        "w_head": normal(keys[1], (D, NUM_CLASSES)) * np.float32(0.001),
        "b_head": jnp.zeros((1, NUM_CLASSES), jnp.float32),
    }
    blocks = []
    for l in range(DEPTH):
        bk = jax.random.split(keys[2 + l], 8)
        q_bias = normal(bk[4], (D,))
        v_bias = normal(bk[5], (D,))
        # qkv_bias=True in VideoMAE: q & v biases learnable, k bias fixed to zero
        b_qkv = jnp.concatenate(
            [q_bias, jnp.zeros((D,), jnp.float32), v_bias]).reshape(1, 3 * D)
        blocks.append({
            "ln1_g": jnp.ones((1, D), jnp.float32),
            "ln1_b": jnp.zeros((1, D), jnp.float32),
            "w_qkv": normal(bk[0], (D, 3 * D)),
            "b_qkv": b_qkv,
            "w_proj": normal(bk[1], (D, D)),
            "b_proj": jnp.zeros((1, D), jnp.float32),
            "ln2_g": jnp.ones((1, D), jnp.float32),
            "ln2_b": jnp.zeros((1, D), jnp.float32),
            "w_fc1": normal(bk[2], (D, MLP_H)),
            "b_fc1": jnp.zeros((1, MLP_H), jnp.float32),
            "w_fc2": normal(bk[3], (MLP_H, D)),
            "b_fc2": jnp.zeros((1, D), jnp.float32),
        })
    params["blocks"] = blocks
    return params


# ---------------- pure-JAX reference ----------------
def reference_forward(x, params):
    patches = extract_patches(x)
    tok = patches @ params["w_pe"] + params["b_pe"] + params["pos"][None]
    for p in params["blocks"]:
        xn = _ln(tok, p["ln1_g"], p["ln1_b"])
        qkv = xn @ p["w_qkv"] + p["b_qkv"]
        q, k, v = jnp.split(qkv, 3, axis=-1)
        q = q.reshape(B, N_TOK, HEADS, HEAD_DIM)
        k = k.reshape(B, N_TOK, HEADS, HEAD_DIM)
        v = v.reshape(B, N_TOK, HEADS, HEAD_DIM)
        att = jnp.einsum("bnhd,bmhd->bhnm", q, k) * SCALE
        att = jax.nn.softmax(att, axis=-1)
        o = jnp.einsum("bhnm,bmhd->bnhd", att, v).reshape(B, N_TOK, D)
        tok = tok + o @ p["w_proj"] + p["b_proj"]
        xn2 = _ln(tok, p["ln2_g"], p["ln2_b"])
        hid = _gelu(xn2 @ p["w_fc1"] + p["b_fc1"])
        tok = tok + hid @ p["w_fc2"] + p["b_fc2"]
    m = tok.mean(axis=1)
    mn = _ln(m, params["fc_norm_g"], params["fc_norm_b"])
    return mn @ params["w_head"] + params["b_head"]


if __name__ == "__main__":
    key = jax.random.PRNGKey(0)
    pkey, xkey = jax.random.split(key)
    params = init_params(pkey)
    x = jax.random.normal(xkey, (B, C_IN, T, IMG, IMG), dtype=jnp.float32)

    out = videomae_forward(x, params)
    out = jax.block_until_ready(out)
    assert out.shape == (B, NUM_CLASSES), out.shape

    ref = reference_forward(x, params)
    np.testing.assert_allclose(np.asarray(out), np.asarray(ref), rtol=5e-3, atol=1e-5)

    print("KERNEL_OK")
</pallas_src>

<mosaic_0001>
module attributes {stable_mosaic.version = 11 : i64} {
  func.func @fused_vit_kernel(%arg0: i32, %arg1: memref<128x1536xf32, #tpu.memory_space<vmem>>, %arg2: memref<1536x64xf32, #tpu.memory_space<vmem>>, %arg3: memref<128x64xf32, #tpu.memory_space<vmem>>, %arg4: memref<1x1x64xf32, #tpu.memory_space<vmem>>, %arg5: memref<1x1x64xf32, #tpu.memory_space<vmem>>, %arg6: memref<1x64x192xf32, #tpu.memory_space<vmem>>, %arg7: memref<1x1x192xf32, #tpu.memory_space<vmem>>, %arg8: memref<1x64x64xf32, #tpu.memory_space<vmem>>, %arg9: memref<1x1x64xf32, #tpu.memory_space<vmem>>, %arg10: memref<1x1x64xf32, #tpu.memory_space<vmem>>, %arg11: memref<1x1x64xf32, #tpu.memory_space<vmem>>, %arg12: memref<1x64x256xf32, #tpu.memory_space<vmem>>, %arg13: memref<1x1x256xf32, #tpu.memory_space<vmem>>, %arg14: memref<1x256x64xf32, #tpu.memory_space<vmem>>, %arg15: memref<1x1x64xf32, #tpu.memory_space<vmem>>, %arg16: memref<1x64xf32, #tpu.memory_space<vmem>>, %arg17: memref<1x64xf32, #tpu.memory_space<vmem>>, %arg18: memref<64x512xf32, #tpu.memory_space<vmem>>, %arg19: memref<1x512xf32, #tpu.memory_space<vmem>>, %arg20: memref<2x512xf32, #tpu.memory_space<vmem>>, %arg21: memref<128x64xf32, #tpu.memory_space<vmem>>) attributes {dimension_semantics = [#tpu.dimension_semantics<arbitrary>], iteration_bounds = array<i64: 2>, scalar_prefetch = 0 : i64, scratch_operands = 1 : i64, tpu.core_type = #tpu.core_type<tc>, window_params = [{pipeline_mode = #tpu.pipeline_mode<synchronous>, transform_indices = @transform_0, window_bounds = array<i64: 128, 1536>}, {pipeline_mode = #tpu.pipeline_mode<synchronous>, transform_indices = @transform_1, window_bounds = array<i64: 1536, 64>}, {pipeline_mode = #tpu.pipeline_mode<synchronous>, transform_indices = @transform_2, window_bounds = array<i64: 128, 64>}, {transform_indices = @transform_3, window_bounds = array<i64: 1, 1, 64>}, {transform_indices = @transform_4, window_bounds = array<i64: 1, 1, 64>}, {transform_indices = @transform_5, window_bounds = array<i64: 1, 64, 192>}, {transform_indices = @transform_6, window_bounds = array<i64: 1, 1, 192>}, {transform_indices = @transform_7, window_bounds = array<i64: 1, 64, 64>}, {transform_indices = @transform_8, window_bounds = array<i64: 1, 1, 64>}, {transform_indices = @transform_9, window_bounds = array<i64: 1, 1, 64>}, {transform_indices = @transform_10, window_bounds = array<i64: 1, 1, 64>}, {transform_indices = @transform_11, window_bounds = array<i64: 1, 64, 256>}, {transform_indices = @transform_12, window_bounds = array<i64: 1, 1, 256>}, {transform_indices = @transform_13, window_bounds = array<i64: 1, 256, 64>}, {transform_indices = @transform_14, window_bounds = array<i64: 1, 1, 64>}, {pipeline_mode = #tpu.pipeline_mode<synchronous>, transform_indices = @transform_15, window_bounds = array<i64: 1, 64>}, {pipeline_mode = #tpu.pipeline_mode<synchronous>, transform_indices = @transform_16, window_bounds = array<i64: 1, 64>}, {pipeline_mode = #tpu.pipeline_mode<synchronous>, transform_indices = @transform_17, window_bounds = array<i64: 64, 512>}, {pipeline_mode = #tpu.pipeline_mode<synchronous>, transform_indices = @transform_18, window_bounds = array<i64: 1, 512>}, {pipeline_mode = #tpu.pipeline_mode<synchronous>, transform_indices = @transform_19, window_bounds = array<i64: 2, 512>}]} {
    %c0_i32 = arith.constant 0 : i32
    %0 = arith.cmpi eq, %arg0, %c0_i32 : i32
    %1 = arith.extui %0 : i1 to i32
    %c0_i32_0 = arith.constant 0 : i32
    %2 = arith.cmpi ne, %1, %c0_i32_0 : i32
    scf.if %2 {
      %c0_69 = arith.constant 0 : index
      %c0_70 = arith.constant 0 : index
      %141 = vector.load %arg1[%c0_69, %c0_70] : memref<128x1536xf32, #tpu.memory_space<vmem>>, vector<128x1536xf32>
      %c0_71 = arith.constant 0 : index
      %c0_72 = arith.constant 0 : index
      %142 = vector.load %arg2[%c0_71, %c0_72] : memref<1536x64xf32, #tpu.memory_space<vmem>>, vector<1536x64xf32>
      %cst_73 = arith.constant dense<0.000000e+00> : vector<128x64xf32>
      %143 = tpu.matmul %141, %142, %cst_73 {dimension_numbers = #tpu.dot_dimension_numbers<[1], [0], [0], [1], [0, 0, 1, 1], [], []>} : vector<128x1536xf32>, vector<1536x64xf32>, vector<128x64xf32> -> vector<128x64xf32>
      %c0_74 = arith.constant 0 : index
      %c0_75 = arith.constant 0 : index
      %144 = vector.load %arg3[%c0_74, %c0_75] : memref<128x64xf32, #tpu.memory_space<vmem>>, vector<128x64xf32>
      %145 = arith.addf %143, %144 : vector<128x64xf32>
      %c0_76 = arith.constant 0 : index
      %c0_77 = arith.constant 0 : index
      %146 = vector.load %arg21[%c0_76, %c0_77] : memref<128x64xf32, #tpu.memory_space<vmem>>, vector<128x64xf32>
      tpu.vector_store %arg21[%c0_76, %c0_77], %145 {strides = array<i32>} : memref<128x64xf32, #tpu.memory_space<vmem>>, vector<128x64xf32>,
    } else {
    }
    %c0 = arith.constant 0 : index
    %c0_1 = arith.constant 0 : index
    %3 = vector.load %arg21[%c0, %c0_1] : memref<128x64xf32, #tpu.memory_space<vmem>>, vector<128x64xf32>
    %c0_2 = arith.constant 0 : index
    %c0_3 = arith.constant 0 : index
    %c0_4 = arith.constant 0 : index
    %4 = vector.load %arg4[%c0_2, %c0_3, %c0_4] : memref<1x1x64xf32, #tpu.memory_space<vmem>>, vector<1x1x64xf32>
    %5 = vector.shape_cast %4 : vector<1x1x64xf32> to vector<1x64xf32>
    %c0_5 = arith.constant 0 : index
    %c0_6 = arith.constant 0 : index
    %c0_7 = arith.constant 0 : index
    %6 = vector.load %arg5[%c0_5, %c0_6, %c0_7] : memref<1x1x64xf32, #tpu.memory_space<vmem>>, vector<1x1x64xf32>
    %7 = vector.shape_cast %6 : vector<1x1x64xf32> to vector<1x64xf32>
    %c0_8 = arith.constant 0 : index
    %c0_9 = arith.constant 0 : index
    %c0_10 = arith.constant 0 : index
    %8 = vector.load %arg6[%c0_8, %c0_9, %c0_10] : memref<1x64x192xf32, #tpu.memory_space<vmem>>, vector<1x64x192xf32>
    %9 = vector.shape_cast %8 : vector<1x64x192xf32> to vector<64x192xf32>
    %c0_11 = arith.constant 0 : index
    %c0_12 = arith.constant 0 : index
    %c0_13 = arith.constant 0 : index
    %10 = vector.load %arg7[%c0_11, %c0_12, %c0_13] : memref<1x1x192xf32, #tpu.memory_space<vmem>>, vector<1x1x192xf32>
    %11 = vector.shape_cast %10 : vector<1x1x192xf32> to vector<1x192xf32>
    %c0_14 = arith.constant 0 : index
    %c0_15 = arith.constant 0 : index
    %c0_16 = arith.constant 0 : index
    %12 = vector.load %arg8[%c0_14, %c0_15, %c0_16] : memref<1x64x64xf32, #tpu.memory_space<vmem>>, vector<1x64x64xf32>
    %13 = vector.shape_cast %12 : vector<1x64x64xf32> to vector<64x64xf32>
    %c0_17 = arith.constant 0 : index
    %c0_18 = arith.constant 0 : index
    %c0_19 = arith.constant 0 : index
    %14 = vector.load %arg9[%c0_17, %c0_18, %c0_19] : memref<1x1x64xf32, #tpu.memory_space<vmem>>, vector<1x1x64xf32>
    %15 = vector.shape_cast %14 : vector<1x1x64xf32> to vector<1x64xf32>
    %cst = arith.constant dense<0.000000e+00> : vector<128xf32>
    %16 = vector.multi_reduction <add>, %3, %cst [1] : vector<128x64xf32> to vector<128xf32>
    %17 = vector.shape_cast %16 : vector<128xf32> to vector<128x1xf32>
    %cst_20 = arith.constant 6.400000e+01 : f32
    %18 = vector.broadcast %cst_20 : f32 to vector<128x1xf32>
    %19 = arith.divf %17, %18 : vector<128x1xf32>
    %20 = vector.broadcast %19 : vector<128x1xf32> to vector<128x64xf32>
    %21 = arith.subf %3, %20 : vector<128x64xf32>
    %22 = arith.mulf %21, %21 : vector<128x64xf32>
    %cst_21 = arith.constant dense<0.000000e+00> : vector<128xf32>
    %23 = vector.multi_reduction <add>, %22, %cst_21 [1] : vector<128x64xf32> to vector<128xf32>
    %24 = vector.shape_cast %23 : vector<128xf32> to vector<128x1xf32>
    %cst_22 = arith.constant 6.400000e+01 : f32
    %25 = vector.broadcast %cst_22 : f32 to vector<128x1xf32>
    %26 = arith.divf %24, %25 : vector<128x1xf32>
    %27 = vector.broadcast %19 : vector<128x1xf32> to vector<128x64xf32>
    %28 = arith.subf %3, %27 : vector<128x64xf32>
    %cst_23 = arith.constant 9.99999997E-7 : f32
    %29 = vector.broadcast %cst_23 : f32 to vector<128x1xf32>
    %30 = arith.addf %26, %29 : vector<128x1xf32>
    %31 = math.rsqrt %30 : vector<128x1xf32>
    %32 = vector.broadcast %31 : vector<128x1xf32> to vector<128x64xf32>
    %33 = arith.mulf %28, %32 : vector<128x64xf32>
    %34 = vector.broadcast %5 : vector<1x64xf32> to vector<128x64xf32>
    %35 = arith.mulf %33, %34 : vector<128x64xf32>
    %36 = vector.broadcast %7 : vector<1x64xf32> to vector<128x64xf32>
    %37 = arith.addf %35, %36 : vector<128x64xf32>
    %cst_24 = arith.constant dense<0.000000e+00> : vector<128x192xf32>
    %38 = tpu.matmul %37, %9, %cst_24 {dimension_numbers = #tpu.dot_dimension_numbers<[1], [0], [0], [1], [0, 0, 1, 1], [], []>} : vector<128x64xf32>, vector<64x192xf32>, vector<128x192xf32> -> vector<128x192xf32>
    %39 = vector.broadcast %11 : vector<1x192xf32> to vector<128x192xf32>
    %40 = arith.addf %38, %39 : vector<128x192xf32>
    %41 = vector.shape_cast %40 : vector<128x192xf32> to vector<2x64x192xf32>
    %cst_25 = arith.constant 0.000000e+00 : f32
    %42 = vector.broadcast %cst_25 : f32 to vector<128x64xf32>
    %43 = vector.extract_strided_slice %41 {offsets = [0, 0, 0], sizes = [2, 64, 32], strides = [1, 1, 1]} : vector<2x64x192xf32> to vector<2x64x32xf32>
    %44 = vector.extract_strided_slice %41 {offsets = [0, 0, 64], sizes = [2, 64, 32], strides = [1, 1, 1]} : vector<2x64x192xf32> to vector<2x64x32xf32>
    %45 = vector.extract_strided_slice %41 {offsets = [0, 0, 128], sizes = [2, 64, 32], strides = [1, 1, 1]} : vector<2x64x192xf32> to vector<2x64x32xf32>
    "tpu.trace_start"() <{level = 10 : i32, message = "bnd,bmd->bnm"}> : () -> ()
    %cst_26 = arith.constant dense<0.000000e+00> : vector<2x64x64xf32>
    %46 = tpu.matmul %43, %44, %cst_26 {dimension_numbers = #tpu.dot_dimension_numbers<[2], [2], [1], [1], [0, 0, 0, 1, 1, 1], [0], [0]>} : vector<2x64x32xf32>, vector<2x64x32xf32>, vector<2x64x64xf32> -> vector<2x64x64xf32>
    "tpu.trace_stop"() : () -> ()
    %cst_27 = arith.constant 0.176776692 : f32
    %47 = vector.broadcast %cst_27 : f32 to vector<2x64x64xf32>
    %48 = arith.mulf %46, %47 : vector<2x64x64xf32>
    %cst_28 = arith.constant dense<0xFF800000> : vector<2x64xf32>
    %49 = vector.multi_reduction <maximumf>, %48, %cst_28 [2] : vector<2x64x64xf32> to vector<2x64xf32>
    %50 = vector.shape_cast %49 : vector<2x64xf32> to vector<2x64x1xf32>
    %51 = vector.broadcast %50 : vector<2x64x1xf32> to vector<2x64x64xf32>
    %52 = arith.subf %48, %51 : vector<2x64x64xf32>
    %53 = math.exp %52 : vector<2x64x64xf32>
    %cst_29 = arith.constant dense<0.000000e+00> : vector<2x64xf32>
    %54 = vector.multi_reduction <add>, %53, %cst_29 [2] : vector<2x64x64xf32> to vector<2x64xf32>
    %55 = vector.shape_cast %54 : vector<2x64xf32> to vector<2x64x1xf32>
    %56 = tpu.reciprocal %55 {approx = true} : vector<2x64x1xf32> -> vector<2x64x1xf32>
    %57 = vector.broadcast %56 : vector<2x64x1xf32> to vector<2x64x64xf32>
    %58 = arith.mulf %53, %57 : vector<2x64x64xf32>
    "tpu.trace_start"() <{level = 10 : i32, message = "bnm,bmd->bnd"}> : () -> ()
    %cst_30 = arith.constant dense<0.000000e+00> : vector<2x64x32xf32>
    %59 = tpu.matmul %58, %45, %cst_30 {dimension_numbers = #tpu.dot_dimension_numbers<[2], [1], [1], [2], [0, 0, 0, 1, 1, 2], [0], [0]>} : vector<2x64x64xf32>, vector<2x64x32xf32>, vector<2x64x32xf32> -> vector<2x64x32xf32>
    "tpu.trace_stop"() : () -> ()
    %60 = vector.shape_cast %59 : vector<2x64x32xf32> to vector<128x32xf32>
    %61 = vector.extract_strided_slice %13 {offsets = [0, 0], sizes = [32, 64], strides = [1, 1]} : vector<64x64xf32> to vector<32x64xf32>
    %cst_31 = arith.constant dense<0.000000e+00> : vector<128x64xf32>
    %62 = tpu.matmul %60, %61, %cst_31 {dimension_numbers = #tpu.dot_dimension_numbers<[1], [0], [0], [1], [0, 0, 1, 1], [], []>} : vector<128x32xf32>, vector<32x64xf32>, vector<128x64xf32> -> vector<128x64xf32>
    %63 = arith.addf %42, %62 : vector<128x64xf32>
    %64 = vector.extract_strided_slice %41 {offsets = [0, 0, 32], sizes = [2, 64, 32], strides = [1, 1, 1]} : vector<2x64x192xf32> to vector<2x64x32xf32>
    %65 = vector.extract_strided_slice %41 {offsets = [0, 0, 96], sizes = [2, 64, 32], strides = [1, 1, 1]} : vector<2x64x192xf32> to vector<2x64x32xf32>
    %66 = vector.extract_strided_slice %41 {offsets = [0, 0, 160], sizes = [2, 64, 32], strides = [1, 1, 1]} : vector<2x64x192xf32> to vector<2x64x32xf32>
    "tpu.trace_start"() <{level = 10 : i32, message = "bnd,bmd->bnm"}> : () -> ()
    %cst_32 = arith.constant dense<0.000000e+00> : vector<2x64x64xf32>
    %67 = tpu.matmul %64, %65, %cst_32 {dimension_numbers = #tpu.dot_dimension_numbers<[2], [2], [1], [1], [0, 0, 0, 1, 1, 1], [0], [0]>} : vector<2x64x32xf32>, vector<2x64x32xf32>, vector<2x64x64xf32> -> vector<2x64x64xf32>
    "tpu.trace_stop"() : () -> ()
    %cst_33 = arith.constant 0.176776692 : f32
    %68 = vector.broadcast %cst_33 : f32 to vector<2x64x64xf32>
    %69 = arith.mulf %67, %68 : vector<2x64x64xf32>
    %cst_34 = arith.constant dense<0xFF800000> : vector<2x64xf32>
    %70 = vector.multi_reduction <maximumf>, %69, %cst_34 [2] : vector<2x64x64xf32> to vector<2x64xf32>
    %71 = vector.shape_cast %70 : vector<2x64xf32> to vector<2x64x1xf32>
    %72 = vector.broadcast %71 : vector<2x64x1xf32> to vector<2x64x64xf32>
    %73 = arith.subf %69, %72 : vector<2x64x64xf32>
    %74 = math.exp %73 : vector<2x64x64xf32>
    %cst_35 = arith.constant dense<0.000000e+00> : vector<2x64xf32>
    %75 = vector.multi_reduction <add>, %74, %cst_35 [2] : vector<2x64x64xf32> to vector<2x64xf32>
    %76 = vector.shape_cast %75 : vector<2x64xf32> to vector<2x64x1xf32>
    %77 = tpu.reciprocal %76 {approx = true} : vector<2x64x1xf32> -> vector<2x64x1xf32>
    %78 = vector.broadcast %77 : vector<2x64x1xf32> to vector<2x64x64xf32>
    %79 = arith.mulf %74, %78 : vector<2x64x64xf32>
    "tpu.trace_start"() <{level = 10 : i32, message = "bnm,bmd->bnd"}> : () -> ()
    %cst_36 = arith.constant dense<0.000000e+00> : vector<2x64x32xf32>
    %80 = tpu.matmul %79, %66, %cst_36 {dimension_numbers = #tpu.dot_dimension_numbers<[2], [1], [1], [2], [0, 0, 0, 1, 1, 2], [0], [0]>} : vector<2x64x64xf32>, vector<2x64x32xf32>, vector<2x64x32xf32> -> vector<2x64x32xf32>
    "tpu.trace_stop"() : () -> ()
    %81 = vector.shape_cast %80 : vector<2x64x32xf32> to vector<128x32xf32>
    %82 = vector.extract_strided_slice %13 {offsets = [32, 0], sizes = [32, 64], strides = [1, 1]} : vector<64x64xf32> to vector<32x64xf32>
    %cst_37 = arith.constant dense<0.000000e+00> : vector<128x64xf32>
    %83 = tpu.matmul %81, %82, %cst_37 {dimension_numbers = #tpu.dot_dimension_numbers<[1], [0], [0], [1], [0, 0, 1, 1], [], []>} : vector<128x32xf32>, vector<32x64xf32>, vector<128x64xf32> -> vector<128x64xf32>
    %84 = arith.addf %63, %83 : vector<128x64xf32>
    %85 = arith.addf %3, %84 : vector<128x64xf32>
    %86 = vector.broadcast %15 : vector<1x64xf32> to vector<128x64xf32>
    %87 = arith.addf %85, %86 : vector<128x64xf32>
    %c0_38 = arith.constant 0 : index
    %c0_39 = arith.constant 0 : index
    %c0_40 = arith.constant 0 : index
    %88 = vector.load %arg10[%c0_38, %c0_39, %c0_40] : memref<1x1x64xf32, #tpu.memory_space<vmem>>, vector<1x1x64xf32>
    %89 = vector.shape_cast %88 : vector<1x1x64xf32> to vector<1x64xf32>
    %c0_41 = arith.constant 0 : index
    %c0_42 = arith.constant 0 : index
    %c0_43 = arith.constant 0 : index
    %90 = vector.load %arg11[%c0_41, %c0_42, %c0_43] : memref<1x1x64xf32, #tpu.memory_space<vmem>>, vector<1x1x64xf32>
    %91 = vector.shape_cast %90 : vector<1x1x64xf32> to vector<1x64xf32>
    %cst_44 = arith.constant dense<0.000000e+00> : vector<128xf32>
    %92 = vector.multi_reduction <add>, %87, %cst_44 [1] : vector<128x64xf32> to vector<128xf32>
    %93 = vector.shape_cast %92 : vector<128xf32> to vector<128x1xf32>
    %cst_45 = arith.constant 6.400000e+01 : f32
    %94 = vector.broadcast %cst_45 : f32 to vector<128x1xf32>
    %95 = arith.divf %93, %94 : vector<128x1xf32>
    %96 = vector.broadcast %95 : vector<128x1xf32> to vector<128x64xf32>
    %97 = arith.subf %87, %96 : vector<128x64xf32>
    %98 = arith.mulf %97, %97 : vector<128x64xf32>
    %cst_46 = arith.constant dense<0.000000e+00> : vector<128xf32>
    %99 = vector.multi_reduction <add>, %98, %cst_46 [1] : vector<128x64xf32> to vector<128xf32>
    %100 = vector.shape_cast %99 : vector<128xf32> to vector<128x1xf32>
    %cst_47 = arith.constant 6.400000e+01 : f32
    %101 = vector.broadcast %cst_47 : f32 to vector<128x1xf32>
    %102 = arith.divf %100, %101 : vector<128x1xf32>
    %103 = vector.broadcast %95 : vector<128x1xf32> to vector<128x64xf32>
    %104 = arith.subf %87, %103 : vector<128x64xf32>
    %cst_48 = arith.constant 9.99999997E-7 : f32
    %105 = vector.broadcast %cst_48 : f32 to vector<128x1xf32>
    %106 = arith.addf %102, %105 : vector<128x1xf32>
    %107 = math.rsqrt %106 : vector<128x1xf32>
    %108 = vector.broadcast %107 : vector<128x1xf32> to vector<128x64xf32>
    %109 = arith.mulf %104, %108 : vector<128x64xf32>
    %110 = vector.broadcast %89 : vector<1x64xf32> to vector<128x64xf32>
    %111 = arith.mulf %109, %110 : vector<128x64xf32>
    %112 = vector.broadcast %91 : vector<1x64xf32> to vector<128x64xf32>
    %113 = arith.addf %111, %112 : vector<128x64xf32>
    %c0_49 = arith.constant 0 : index
    %c0_50 = arith.constant 0 : index
    %c0_51 = arith.constant 0 : index
    %114 = vector.load %arg12[%c0_49, %c0_50, %c0_51] : memref<1x64x256xf32, #tpu.memory_space<vmem>>, vector<1x64x256xf32>
    %115 = vector.shape_cast %114 : vector<1x64x256xf32> to vector<64x256xf32>
    %cst_52 = arith.constant dense<0.000000e+00> : vector<128x256xf32>
    %116 = tpu.matmul %113, %115, %cst_52 {dimension_numbers = #tpu.dot_dimension_numbers<[1], [0], [0], [1], [0, 0, 1, 1], [], []>} : vector<128x64xf32>, vector<64x256xf32>, vector<128x256xf32> -> vector<128x256xf32>
    %c0_53 = arith.constant 0 : index
    %c0_54 = arith.constant 0 : index
    %c0_55 = arith.constant 0 : index
    %117 = vector.load %arg13[%c0_53, %c0_54, %c0_55] : memref<1x1x256xf32, #tpu.memory_space<vmem>>, vector<1x1x256xf32>
    %118 = vector.shape_cast %117 : vector<1x1x256xf32> to vector<1x256xf32>
    %119 = vector.broadcast %118 : vector<1x256xf32> to vector<128x256xf32>
    %120 = arith.addf %116, %119 : vector<128x256xf32>
    %cst_56 = arith.constant 5.000000e-01 : f32
    %121 = vector.broadcast %cst_56 : f32 to vector<128x256xf32>
    %122 = arith.mulf %121, %120 : vector<128x256xf32>
    %cst_57 = arith.constant 1.41421354 : f32
    %123 = vector.broadcast %cst_57 : f32 to vector<128x256xf32>
    %124 = arith.divf %120, %123 : vector<128x256xf32>
    %125 = math.erf %124 : vector<128x256xf32>
    %cst_58 = arith.constant 1.000000e+00 : f32
    %126 = vector.broadcast %cst_58 : f32 to vector<128x256xf32>
    %127 = arith.addf %126, %125 : vector<128x256xf32>
    %128 = arith.mulf %122, %127 : vector<128x256xf32>
    %c0_59 = arith.constant 0 : index
    %c0_60 = arith.constant 0 : index
    %c0_61 = arith.constant 0 : index
    %129 = vector.load %arg14[%c0_59, %c0_60, %c0_61] : memref<1x256x64xf32, #tpu.memory_space<vmem>>, vector<1x256x64xf32>
    %130 = vector.shape_cast %129 : vector<1x256x64xf32> to vector<256x64xf32>
    %cst_62 = arith.constant dense<0.000000e+00> : vector<128x64xf32>
    %131 = tpu.matmul %128, %130, %cst_62 {dimension_numbers = #tpu.dot_dimension_numbers<[1], [0], [0], [1], [0, 0, 1, 1], [], []>} : vector<128x256xf32>, vector<256x64xf32>, vector<128x64xf32> -> vector<128x64xf32>
    %132 = arith.addf %87, %131 : vector<128x64xf32>
    %c0_63 = arith.constant 0 : index
    %c0_64 = arith.constant 0 : index
    %c0_65 = arith.constant 0 : index
    %133 = vector.load %arg15[%c0_63, %c0_64, %c0_65] : memref<1x1x64xf32, #tpu.memory_space<vmem>>, vector<1x1x64xf32>
    %134 = vector.shape_cast %133 : vector<1x1x64xf32> to vector<1x64xf32>
    %135 = vector.broadcast %134 : vector<1x64xf32> to vector<128x64xf32>
    %136 = arith.addf %132, %135 : vector<128x64xf32>
    %c0_66 = arith.constant 0 : index
    %c0_67 = arith.constant 0 : index
    %137 = vector.load %arg21[%c0_66, %c0_67] : memref<128x64xf32, #tpu.memory_space<vmem>>, vector<128x64xf32>
    tpu.vector_store %arg21[%c0_66, %c0_67], %136 {strides = array<i32>} : memref<128x64xf32, #tpu.memory_space<vmem>>, vector<128x64xf32>,
    %c1_i32 = arith.constant 1 : i32
    %138 = arith.cmpi eq, %arg0, %c1_i32 : i32
    %139 = arith.extui %138 : i1 to i32
    %c0_i32_68 = arith.constant 0 : i32
    %140 = arith.cmpi ne, %139, %c0_i32_68 : i32
    scf.if %140 {
      %141 = vector.shape_cast %136 : vector<128x64xf32> to vector<2x64x64xf32>
      %cst_69 = arith.constant dense<0.000000e+00> : vector<2x64xf32>
      %142 = vector.multi_reduction <add>, %141, %cst_69 [1] : vector<2x64x64xf32> to vector<2x64xf32>
      %cst_70 = arith.constant 6.400000e+01 : f32
      %143 = vector.broadcast %cst_70 : f32 to vector<2x64xf32>
      %144 = arith.divf %142, %143 : vector<2x64xf32>
      %c0_71 = arith.constant 0 : index
      %c0_72 = arith.constant 0 : index
      %145 = vector.load %arg16[%c0_71, %c0_72] : memref<1x64xf32, #tpu.memory_space<vmem>>, vector<1x64xf32>
      %c0_73 = arith.constant 0 : index
      %c0_74 = arith.constant 0 : index
      %146 = vector.load %arg17[%c0_73, %c0_74] : memref<1x64xf32, #tpu.memory_space<vmem>>, vector<1x64xf32>
      %cst_75 = arith.constant dense<0.000000e+00> : vector<2xf32>
      %147 = vector.multi_reduction <add>, %144, %cst_75 [1] : vector<2x64xf32> to vector<2xf32>
      %148 = vector.shape_cast %147 : vector<2xf32> to vector<2x1xf32>
      %cst_76 = arith.constant 6.400000e+01 : f32
      %149 = vector.broadcast %cst_76 : f32 to vector<2x1xf32>
      %150 = arith.divf %148, %149 : vector<2x1xf32>
      %151 = vector.broadcast %150 : vector<2x1xf32> to vector<2x64xf32>
      %152 = arith.subf %144, %151 : vector<2x64xf32>
      %153 = arith.mulf %152, %152 : vector<2x64xf32>
      %cst_77 = arith.constant dense<0.000000e+00> : vector<2xf32>
      %154 = vector.multi_reduction <add>, %153, %cst_77 [1] : vector<2x64xf32> to vector<2xf32>
      %155 = vector.shape_cast %154 : vector<2xf32> to vector<2x1xf32>
      %cst_78 = arith.constant 6.400000e+01 : f32
      %156 = vector.broadcast %cst_78 : f32 to vector<2x1xf32>
      %157 = arith.divf %155, %156 : vector<2x1xf32>
      %158 = vector.broadcast %150 : vector<2x1xf32> to vector<2x64xf32>
      %159 = arith.subf %144, %158 : vector<2x64xf32>
      %cst_79 = arith.constant 9.99999997E-7 : f32
      %160 = vector.broadcast %cst_79 : f32 to vector<2x1xf32>
      %161 = arith.addf %157, %160 : vector<2x1xf32>
      %162 = math.rsqrt %161 : vector<2x1xf32>
      %163 = vector.broadcast %162 : vector<2x1xf32> to vector<2x64xf32>
      %164 = arith.mulf %159, %163 : vector<2x64xf32>
      %165 = vector.broadcast %145 : vector<1x64xf32> to vector<2x64xf32>
      %166 = arith.mulf %164, %165 : vector<2x64xf32>
      %167 = vector.broadcast %146 : vector<1x64xf32> to vector<2x64xf32>
      %168 = arith.addf %166, %167 : vector<2x64xf32>
      %c0_80 = arith.constant 0 : index
      %c0_81 = arith.constant 0 : index
      %169 = vector.load %arg18[%c0_80, %c0_81] : memref<64x512xf32, #tpu.memory_space<vmem>>, vector<64x512xf32>
      %cst_82 = arith.constant dense<0.000000e+00> : vector<2x512xf32>
      %170 = tpu.matmul %168, %169, %cst_82 {dimension_numbers = #tpu.dot_dimension_numbers<[1], [0], [0], [1], [0, 0, 1, 1], [], []>} : vector<2x64xf32>, vector<64x512xf32>, vector<2x512xf32> -> vector<2x512xf32>
      %c0_83 = arith.constant 0 : index
      %c0_84 = arith.constant 0 : index
      %171 = vector.load %arg19[%c0_83, %c0_84] : memref<1x512xf32, #tpu.memory_space<vmem>>, vector<1x512xf32>
      %172 = vector.broadcast %171 : vector<1x512xf32> to vector<2x512xf32>
      %173 = arith.addf %170, %172 : vector<2x512xf32>
      %c0_85 = arith.constant 0 : index
      %c0_86 = arith.constant 0 : index
      %174 = vector.load %arg20[%c0_85, %c0_86] : memref<2x512xf32, #tpu.memory_space<vmem>>, vector<2x512xf32>
      tpu.vector_store %arg20[%c0_85, %c0_86], %173 {strides = array<i32>} : memref<2x512xf32, #tpu.memory_space<vmem>>, vector<2x512xf32>,
    } else {
    }
    return
  }
  func.func @transform_0(%arg0: i32) -> (i32, i32) {
    %c0_i32 = arith.constant 0 : i32
    %c0_i32_0 = arith.constant 0 : i32
    %c0_i32_1 = arith.constant 0 : i32
    return %c0_i32, %c0_i32_0 : i32, i32
  }
  func.func @transform_1(%arg0: i32) -> (i32, i32) {
    %c0_i32 = arith.constant 0 : i32
    %c0_i32_0 = arith.constant 0 : i32
    %c0_i32_1 = arith.constant 0 : i32
    return %c0_i32, %c0_i32_0 : i32, i32
  }
  func.func @transform_2(%arg0: i32) -> (i32, i32) {
    %c0_i32 = arith.constant 0 : i32
    %c0_i32_0 = arith.constant 0 : i32
    %c0_i32_1 = arith.constant 0 : i32
    return %c0_i32, %c0_i32_0 : i32, i32
  }
  func.func @transform_3(%arg0: i32) -> (i32, i32, i32) {
    %c0_i32 = arith.constant 0 : i32
    %c0_i32_0 = arith.constant 0 : i32
    %c0_i32_1 = arith.constant 0 : i32
    return %arg0, %c0_i32, %c0_i32_0 : i32, i32, i32
  }
  func.func @transform_4(%arg0: i32) -> (i32, i32, i32) {
    %c0_i32 = arith.constant 0 : i32
    %c0_i32_0 = arith.constant 0 : i32
    %c0_i32_1 = arith.constant 0 : i32
    return %arg0, %c0_i32, %c0_i32_0 : i32, i32, i32
  }
  func.func @transform_5(%arg0: i32) -> (i32, i32, i32) {
    %c0_i32 = arith.constant 0 : i32
    %c0_i32_0 = arith.constant 0 : i32
    %c0_i32_1 = arith.constant 0 : i32
    return %arg0, %c0_i32, %c0_i32_0 : i32, i32, i32
  }
  func.func @transform_6(%arg0: i32) -> (i32, i32, i32) {
    %c0_i32 = arith.constant 0 : i32
    %c0_i32_0 = arith.constant 0 : i32
    %c0_i32_1 = arith.constant 0 : i32
    return %arg0, %c0_i32, %c0_i32_0 : i32, i32, i32
  }
  func.func @transform_7(%arg0: i32) -> (i32, i32, i32) {
    %c0_i32 = arith.constant 0 : i32
    %c0_i32_0 = arith.constant 0 : i32
    %c0_i32_1 = arith.constant 0 : i32
    return %arg0, %c0_i32, %c0_i32_0 : i32, i32, i32
  }
  func.func @transform_8(%arg0: i32) -> (i32, i32, i32) {
    %c0_i32 = arith.constant 0 : i32
    %c0_i32_0 = arith.constant 0 : i32
    %c0_i32_1 = arith.constant 0 : i32
    return %arg0, %c0_i32, %c0_i32_0 : i32, i32, i32
  }
  func.func @transform_9(%arg0: i32) -> (i32, i32, i32) {
    %c0_i32 = arith.constant 0 : i32
    %c0_i32_0 = arith.constant 0 : i32
    %c0_i32_1 = arith.constant 0 : i32
    return %arg0, %c0_i32, %c0_i32_0 : i32, i32, i32
  }
  func.func @transform_10(%arg0: i32) -> (i32, i32, i32) {
    %c0_i32 = arith.constant 0 : i32
    %c0_i32_0 = arith.constant 0 : i32
    %c0_i32_1 = arith.constant 0 : i32
    return %arg0, %c0_i32, %c0_i32_0 : i32, i32, i32
  }
  func.func @transform_11(%arg0: i32) -> (i32, i32, i32) {
    %c0_i32 = arith.constant 0 : i32
    %c0_i32_0 = arith.constant 0 : i32
    %c0_i32_1 = arith.constant 0 : i32
    return %arg0, %c0_i32, %c0_i32_0 : i32, i32, i32
  }
  func.func @transform_12(%arg0: i32) -> (i32, i32, i32) {
    %c0_i32 = arith.constant 0 : i32
    %c0_i32_0 = arith.constant 0 : i32
    %c0_i32_1 = arith.constant 0 : i32
    return %arg0, %c0_i32, %c0_i32_0 : i32, i32, i32
  }
  func.func @transform_13(%arg0: i32) -> (i32, i32, i32) {
    %c0_i32 = arith.constant 0 : i32
    %c0_i32_0 = arith.constant 0 : i32
    %c0_i32_1 = arith.constant 0 : i32
    return %arg0, %c0_i32, %c0_i32_0 : i32, i32, i32
  }
  func.func @transform_14(%arg0: i32) -> (i32, i32, i32) {
    %c0_i32 = arith.constant 0 : i32
    %c0_i32_0 = arith.constant 0 : i32
    %c0_i32_1 = arith.constant 0 : i32
    return %arg0, %c0_i32, %c0_i32_0 : i32, i32, i32
  }
  func.func @transform_15(%arg0: i32) -> (i32, i32) {
    %c0_i32 = arith.constant 0 : i32
    %c0_i32_0 = arith.constant 0 : i32
    %c0_i32_1 = arith.constant 0 : i32
    return %c0_i32, %c0_i32_0 : i32, i32
  }
  func.func @transform_16(%arg0: i32) -> (i32, i32) {
    %c0_i32 = arith.constant 0 : i32
    %c0_i32_0 = arith.constant 0 : i32
    %c0_i32_1 = arith.constant 0 : i32
    return %c0_i32, %c0_i32_0 : i32, i32
  }
  func.func @transform_17(%arg0: i32) -> (i32, i32) {
    %c0_i32 = arith.constant 0 : i32
    %c0_i32_0 = arith.constant 0 : i32
    %c0_i32_1 = arith.constant 0 : i32
    return %c0_i32, %c0_i32_0 : i32, i32
  }
  func.func @transform_18(%arg0: i32) -> (i32, i32) {
    %c0_i32 = arith.constant 0 : i32
    %c0_i32_0 = arith.constant 0 : i32
    %c0_i32_1 = arith.constant 0 : i32
    return %c0_i32, %c0_i32_0 : i32, i32
  }
  func.func @transform_19(%arg0: i32) -> (i32, i32) {
    %c0_i32 = arith.constant 0 : i32
    %c0_i32_0 = arith.constant 0 : i32
    %c0_i32_1 = arith.constant 0 : i32
    return %c0_i32, %c0_i32_0 : i32, i32
  }
}

</mosaic_0001>

<llo_original>
// kernel: tpu_custom_call.1
$region0: #{tpu_custom_call.1}
  #allocation0 [shape = 'u32[]', space=smem, size = 0x4, offset = 0x4, fixed_abs, tag = 'smem constant byte address 0x4 - core index']
  #allocation1 [shape = 'u32[72,128]{1,0:T(1,128)}', space=vmem, size = 0x9000, scoped, tag = 'internal scratch']
  #allocation2 [shape = 'f32[128,64]{1,0:T(8,128)}', space=vmem, size = 0x10000, scoped, tag = 'scratch operand']
  %s0 = inlined_call_operand.vmem [shape: f32[128,1536], index: 0, kind: input, shape index: {}]
  %s1 = inlined_call_operand.vmem [shape: f32[1536,64], index: 1, kind: input, shape index: {}]
  %s2 = inlined_call_operand.vmem [shape: f32[128,64], index: 2, kind: input, shape index: {}]
  %s3 = inlined_call_operand.vmem [shape: f32[2,1,64], index: 3, kind: input, shape index: {}]
  %s4 = inlined_call_operand.vmem [shape: f32[2,1,64], index: 4, kind: input, shape index: {}]
  %s5 = inlined_call_operand.vmem [shape: f32[2,64,192], index: 5, kind: input, shape index: {}]
  %s6 = inlined_call_operand.vmem [shape: f32[2,1,192], index: 6, kind: input, shape index: {}]
  %s7 = inlined_call_operand.vmem [shape: f32[2,64,64], index: 7, kind: input, shape index: {}]
  %s8 = inlined_call_operand.vmem [shape: f32[2,1,64], index: 8, kind: input, shape index: {}]
  %s9 = inlined_call_operand.vmem [shape: f32[2,1,64], index: 9, kind: input, shape index: {}]
  %s10 = inlined_call_operand.vmem [shape: f32[2,1,64], index: 10, kind: input, shape index: {}]
  %s11 = inlined_call_operand.vmem [shape: f32[2,64,256], index: 11, kind: input, shape index: {}]
  %s12 = inlined_call_operand.vmem [shape: f32[2,1,256], index: 12, kind: input, shape index: {}]
  %s13 = inlined_call_operand.vmem [shape: f32[2,256,64], index: 13, kind: input, shape index: {}]
  %s14 = inlined_call_operand.vmem [shape: f32[2,1,64], index: 14, kind: input, shape index: {}]
  %s15 = inlined_call_operand.vmem [shape: f32[1,64], index: 15, kind: input, shape index: {}]
  %s16 = inlined_call_operand.vmem [shape: f32[1,64], index: 16, kind: input, shape index: {}]
  %s17 = inlined_call_operand.vmem [shape: f32[64,512], index: 17, kind: input, shape index: {}]
  %s18 = inlined_call_operand.vmem [shape: f32[1,512], index: 18, kind: input, shape index: {}]
  %s19 = inlined_call_operand.hbm [shape: f32[2,512], index: 19, kind: output, shape index: {}]
  %s20 = sld [smem:[#allocation0]]
  $region117: #{tpu_custom_call.1} parent=0
    _
  %s22 = ssub.s32 1, %s20
  %s23 = scalar_select 0, %s22, %s20
  $region1: #{tpu_custom_call.1} parent=0
    #allocation3 [shape = 'u8[4096]{0}', space=vmem, size = 0x1000, scoped, tag = 'output window, operand 0, single buffered']
    #allocation4 [shape = 's32[2]{0}', space=sflag, size = 0x8, scoped, tag = 'scoped memory for tpu_custom_call.1']
    %24 = vsyncpa [#allocation4], 0
    loop: start=0, step=1, limit=4
    $region2: #{tpu_custom_call.1} parent=1 // loop_pre_header
      _
    $region3: #{tpu_custom_call.1} parent=1 // loop_header
      %s26 = sphi 0, %s30
      %p27 = scmp.ge.s32.totalorder %s26, 4
      %s34 = sphi 0, %s34
      %s36 = sphi 0, %s34
      %s37 = sphi 0, %s36
      %s51 = sphi 0, %s37
      %s55 = sphi 0, %s55
      %s57 = sphi 0, %s55
      %s58 = sphi 0, %s57
      %s72 = sphi 0, %s58
      %s76 = sphi 0, %s76
      %s78 = sphi 0, %s76
      %s79 = sphi 0, %s78
      %s93 = sphi 0, %s79
      %s99 = sphi 0, %s101
      %s102 = sphi 0, %s99
      %s103 = sphi 0, %s102
      %s119 = sphi 0, %s103
      %s125 = sphi 0, %s127
      %s128 = sphi 0, %s125
      %s129 = sphi 0, %s128
      %s145 = sphi 0, %s129
      %s151 = sphi 0, %s153
      %s154 = sphi 0, %s151
      %s155 = sphi 0, %s154
      %s171 = sphi 0, %s155
      %s177 = sphi 0, %s179
      %s180 = sphi 0, %s177
      %s181 = sphi 0, %s180
      %s197 = sphi 0, %s181
      %s203 = sphi 0, %s205
      %s206 = sphi 0, %s203
      %s207 = sphi 0, %s206
      %s223 = sphi 0, %s207
      %s229 = sphi 0, %s231
      %s232 = sphi 0, %s229
      %s233 = sphi 0, %s232
      %s249 = sphi 0, %s233
      %s255 = sphi 0, %s257
      %s258 = sphi 0, %s255
      %s259 = sphi 0, %s258
      %s275 = sphi 0, %s259
      %s281 = sphi 0, %s283
      %s284 = sphi 0, %s281
      %s285 = sphi 0, %s284
      %s301 = sphi 0, %s285
      %s307 = sphi 0, %s309
      %s310 = sphi 0, %s307
      %s311 = sphi 0, %s310
      %s327 = sphi 0, %s311
      %s333 = sphi 0, %s335
      %s336 = sphi 0, %s333
      %s337 = sphi 0, %s336
      %s353 = sphi 0, %s337
      %s359 = sphi 0, %s361
      %s362 = sphi 0, %s359
      %s363 = sphi 0, %s362
      %s379 = sphi 0, %s363
      %s385 = sphi 0, %s387
      %s388 = sphi 0, %s385
      %s389 = sphi 0, %s388
      %s405 = sphi 0, %s389
      %s409 = sphi 0, %s409
      %s411 = sphi 0, %s409
      %s412 = sphi 0, %s411
      %s426 = sphi 0, %s412
      %s430 = sphi 0, %s430
      %s432 = sphi 0, %s430
      %s433 = sphi 0, %s432
      %s447 = sphi 0, %s433
      %s451 = sphi 0, %s451
      %s453 = sphi 0, %s451
      %s454 = sphi 0, %s453
      %s468 = sphi 0, %s454
      %s472 = sphi 0, %s472
      %s474 = sphi 0, %s472
      %s475 = sphi 0, %s474
      %s489 = sphi 0, %s475
      %s493 = sphi 0, %s493
      %s495 = sphi 0, %s493
      %s496 = sphi 0, %s495
      %s510 = sphi 0, %s496
    $region4: #{tpu_custom_call.1} parent=1 // loop_header_branch
      %29 = sbr.rel (%p27) target = $region8
    $region5: #{tpu_custom_call.1} parent=1 // loop_body
      %s31 = ssub.s32 %s26, 1
      %s32 = ssub.s32 %s26, 2
      %s33 = sadd.s32 %s26, 1
      %s35 = sadd.s32 %s34, 1
      %p38 = scmp.eq.s32.totalorder %s26, 1
      %p39 = scmp.ne.s32.totalorder %s34, %s36
      %p40 = scmp.eq.s32.totalorder %s26, 0
      %p41 = por %p39, %p40
      %p42 = scmp.ne.s32.totalorder %s34, %s36
      %p43 = scmp.eq.s32.totalorder %s31, 1
      %p44 = por %p42, %p43
      %p45 = scmp.ne.s32.totalorder %s36, %s37
      %p46 = scmp.eq.s32.totalorder %s31, 0
      %p47 = por %p45, %p46
      %p48 = scmp.ne.s32.totalorder %s36, %s37
      %p49 = scmp.eq.s32.totalorder %s32, 1
      %p50 = por %p48, %p49
      %p52 = scmp.ne.s32.totalorder %s37, %s51
      %p53 = scmp.eq.s32.totalorder %s32, 0
      %p54 = por %p52, %p53
      %s56 = sadd.s32 %s55, 1
      %p59 = scmp.eq.s32.totalorder %s26, 1
      %p60 = scmp.ne.s32.totalorder %s55, %s57
      %p61 = scmp.eq.s32.totalorder %s26, 0
      %p62 = por %p60, %p61
      %p63 = scmp.ne.s32.totalorder %s55, %s57
      %p64 = scmp.eq.s32.totalorder %s31, 1
      %p65 = por %p63, %p64
      %p66 = scmp.ne.s32.totalorder %s57, %s58
      %p67 = scmp.eq.s32.totalorder %s31, 0
      %p68 = por %p66, %p67
      %p69 = scmp.ne.s32.totalorder %s57, %s58
      %p70 = scmp.eq.s32.totalorder %s32, 1
      %p71 = por %p69, %p70
      %p73 = scmp.ne.s32.totalorder %s58, %s72
      %p74 = scmp.eq.s32.totalorder %s32, 0
      %p75 = por %p73, %p74
      %s77 = sadd.s32 %s76, 1
      %p80 = scmp.eq.s32.totalorder %s26, 1
      %p81 = scmp.ne.s32.totalorder %s76, %s78
      %p82 = scmp.eq.s32.totalorder %s26, 0
      %p83 = por %p81, %p82
      %p84 = scmp.ne.s32.totalorder %s76, %s78
      %p85 = scmp.eq.s32.totalorder %s31, 1
      %p86 = por %p84, %p85
      %p87 = scmp.ne.s32.totalorder %s78, %s79
      %p88 = scmp.eq.s32.totalorder %s31, 0
      %p89 = por %p87, %p88
      %p90 = scmp.ne.s32.totalorder %s78, %s79
      %p91 = scmp.eq.s32.totalorder %s32, 1
      %p92 = por %p90, %p91
      %p94 = scmp.ne.s32.totalorder %s79, %s93
      %p95 = scmp.eq.s32.totalorder %s32, 0
      %p96 = por %p94, %p95
      %s97 = ssub.s32 %s26, %s33
      %p98 = scmp.eq.s32.totalorder %s97, 0
      %s100 = sadd.s32 %s99, 1
      %s101 = scalar_select %p98, %s99, %s100
      %p104 = pneg %p98
      %p105 = scmp.eq.s32.totalorder %s26, 1
      %p106 = por %p104, %p105
      %p107 = scmp.ne.s32.totalorder %s99, %s102
      %p108 = scmp.eq.s32.totalorder %s26, 0
      %p109 = por %p107, %p108
      %p110 = scmp.ne.s32.totalorder %s99, %s102
      %p111 = scmp.eq.s32.totalorder %s31, 1
      %p112 = por %p110, %p111
      %p113 = scmp.ne.s32.totalorder %s102, %s103
      %p114 = scmp.eq.s32.totalorder %s31, 0
      %p115 = por %p113, %p114
      %p116 = scmp.ne.s32.totalorder %s102, %s103
      %p117 = scmp.eq.s32.totalorder %s32, 1
      %p118 = por %p116, %p117
      %p120 = scmp.ne.s32.totalorder %s103, %s119
      %p121 = scmp.eq.s32.totalorder %s32, 0
      %p122 = por %p120, %p121
      %s123 = ssub.s32 %s26, %s33
      %p124 = scmp.eq.s32.totalorder %s123, 0
      %s126 = sadd.s32 %s125, 1
      %s127 = scalar_select %p124, %s125, %s126
      %p130 = pneg %p124
      %p131 = scmp.eq.s32.totalorder %s26, 1
      %p132 = por %p130, %p131
      %p133 = scmp.ne.s32.totalorder %s125, %s128
      %p134 = scmp.eq.s32.totalorder %s26, 0
      %p135 = por %p133, %p134
      %p136 = scmp.ne.s32.totalorder %s125, %s128
      %p137 = scmp.eq.s32.totalorder %s31, 1
      %p138 = por %p136, %p137
      %p139 = scmp.ne.s32.totalorder %s128, %s129
      %p140 = scmp.eq.s32.totalorder %s31, 0
      %p141 = por %p139, %p140
      %p142 = scmp.ne.s32.totalorder %s128, %s129
      %p143 = scmp.eq.s32.totalorder %s32, 1
      %p144 = por %p142, %p143
      %p146 = scmp.ne.s32.totalorder %s129, %s145
      %p147 = scmp.eq.s32.totalorder %s32, 0
      %p148 = por %p146, %p147
      %s149 = ssub.s32 %s26, %s33
      %p150 = scmp.eq.s32.totalorder %s149, 0
      %s152 = sadd.s32 %s151, 1
      %s153 = scalar_select %p150, %s151, %s152
      %p156 = pneg %p150
      %p157 = scmp.eq.s32.totalorder %s26, 1
      %p158 = por %p156, %p157
      %p159 = scmp.ne.s32.totalorder %s151, %s154
      %p160 = scmp.eq.s32.totalorder %s26, 0
      %p161 = por %p159, %p160
      %p162 = scmp.ne.s32.totalorder %s151, %s154
      %p163 = scmp.eq.s32.totalorder %s31, 1
      %p164 = por %p162, %p163
      %p165 = scmp.ne.s32.totalorder %s154, %s155
      %p166 = scmp.eq.s32.totalorder %s31, 0
      %p167 = por %p165, %p166
      %p168 = scmp.ne.s32.totalorder %s154, %s155
      %p169 = scmp.eq.s32.totalorder %s32, 1
      %p170 = por %p168, %p169
      %p172 = scmp.ne.s32.totalorder %s155, %s171
      %p173 = scmp.eq.s32.totalorder %s32, 0
      %p174 = por %p172, %p173
      %s175 = ssub.s32 %s26, %s33
      %p176 = scmp.eq.s32.totalorder %s175, 0
      %s178 = sadd.s32 %s177, 1
      %s179 = scalar_select %p176, %s177, %s178
      %p182 = pneg %p176
      %p183 = scmp.eq.s32.totalorder %s26, 1
      %p184 = por %p182, %p183
      %p185 = scmp.ne.s32.totalorder %s177, %s180
      %p186 = scmp.eq.s32.totalorder %s26, 0
      %p187 = por %p185, %p186
      %p188 = scmp.ne.s32.totalorder %s177, %s180
      %p189 = scmp.eq.s32.totalorder %s31, 1
      %p190 = por %p188, %p189
      %p191 = scmp.ne.s32.totalorder %s180, %s181
      %p192 = scmp.eq.s32.totalorder %s31, 0
      %p193 = por %p191, %p192
      %p194 = scmp.ne.s32.totalorder %s180, %s181
      %p195 = scmp.eq.s32.totalorder %s32, 1
      %p196 = por %p194, %p195
      %p198 = scmp.ne.s32.totalorder %s181, %s197
      %p199 = scmp.eq.s32.totalorder %s32, 0
      %p200 = por %p198, %p199
      %s201 = ssub.s32 %s26, %s33
      %p202 = scmp.eq.s32.totalorder %s201, 0
      %s204 = sadd.s32 %s203, 1
      %s205 = scalar_select %p202, %s203, %s204
      %p208 = pneg %p202
      %p209 = scmp.eq.s32.totalorder %s26, 1
      %p210 = por %p208, %p209
      %p211 = scmp.ne.s32.totalorder %s203, %s206
      %p212 = scmp.eq.s32.totalorder %s26, 0
      %p213 = por %p211, %p212
      %p214 = scmp.ne.s32.totalorder %s203, %s206
      %p215 = scmp.eq.s32.totalorder %s31, 1
      %p216 = por %p214, %p215
      %p217 = scmp.ne.s32.totalorder %s206, %s207
      %p218 = scmp.eq.s32.totalorder %s31, 0
      %p219 = por %p217, %p218
      %p220 = scmp.ne.s32.totalorder %s206, %s207
      %p221 = scmp.eq.s32.totalorder %s32, 1
      %p222 = por %p220, %p221
      %p224 = scmp.ne.s32.totalorder %s207, %s223
      %p225 = scmp.eq.s32.totalorder %s32, 0
      %p226 = por %p224, %p225
      %s227 = ssub.s32 %s26, %s33
      %p228 = scmp.eq.s32.totalorder %s227, 0
      %s230 = sadd.s32 %s229, 1
      %s231 = scalar_select %p228, %s229, %s230
      %p234 = pneg %p228
      %p235 = scmp.eq.s32.totalorder %s26, 1
      %p236 = por %p234, %p235
      %p237 = scmp.ne.s32.totalorder %s229, %s232
      %p238 = scmp.eq.s32.totalorder %s26, 0
      %p239 = por %p237, %p238
      %p240 = scmp.ne.s32.totalorder %s229, %s232
      %p241 = scmp.eq.s32.totalorder %s31, 1
      %p242 = por %p240, %p241
      %p243 = scmp.ne.s32.totalorder %s232, %s233
      %p244 = scmp.eq.s32.totalorder %s31, 0
      %p245 = por %p243, %p244
      %p246 = scmp.ne.s32.totalorder %s232, %s233
      %p247 = scmp.eq.s32.totalorder %s32, 1
      %p248 = por %p246, %p247
      %p250 = scmp.ne.s32.totalorder %s233, %s249
      %p251 = scmp.eq.s32.totalorder %s32, 0
      %p252 = por %p250, %p251
      %s253 = ssub.s32 %s26, %s33
      %p254 = scmp.eq.s32.totalorder %s253, 0
      %s256 = sadd.s32 %s255, 1
      %s257 = scalar_select %p254, %s255, %s256
      %p260 = pneg %p254
      %p261 = scmp.eq.s32.totalorder %s26, 1
      %p262 = por %p260, %p261
      %p263 = scmp.ne.s32.totalorder %s255, %s258
      %p264 = scmp.eq.s32.totalorder %s26, 0
      %p265 = por %p263, %p264
      %p266 = scmp.ne.s32.totalorder %s255, %s258
      %p267 = scmp.eq.s32.totalorder %s31, 1
      %p268 = por %p266, %p267
      %p269 = scmp.ne.s32.totalorder %s258, %s259
      %p270 = scmp.eq.s32.totalorder %s31, 0
      %p271 = por %p269, %p270
      %p272 = scmp.ne.s32.totalorder %s258, %s259
      %p273 = scmp.eq.s32.totalorder %s32, 1
      %p274 = por %p272, %p273
      %p276 = scmp.ne.s32.totalorder %s259, %s275
      %p277 = scmp.eq.s32.totalorder %s32, 0
      %p278 = por %p276, %p277
      %s279 = ssub.s32 %s26, %s33
      %p280 = scmp.eq.s32.totalorder %s279, 0
      %s282 = sadd.s32 %s281, 1
      %s283 = scalar_select %p280, %s281, %s282
      %p286 = pneg %p280
      %p287 = scmp.eq.s32.totalorder %s26, 1
      %p288 = por %p286, %p287
      %p289 = scmp.ne.s32.totalorder %s281, %s284
      %p290 = scmp.eq.s32.totalorder %s26, 0
      %p291 = por %p289, %p290
      %p292 = scmp.ne.s32.totalorder %s281, %s284
      %p293 = scmp.eq.s32.totalorder %s31, 1
      %p294 = por %p292, %p293
      %p295 = scmp.ne.s32.totalorder %s284, %s285
      %p296 = scmp.eq.s32.totalorder %s31, 0
      %p297 = por %p295, %p296
      %p298 = scmp.ne.s32.totalorder %s284, %s285
      %p299 = scmp.eq.s32.totalorder %s32, 1
      %p300 = por %p298, %p299
      %p302 = scmp.ne.s32.totalorder %s285, %s301
      %p303 = scmp.eq.s32.totalorder %s32, 0
      %p304 = por %p302, %p303
      %s305 = ssub.s32 %s26, %s33
      %p306 = scmp.eq.s32.totalorder %s305, 0
      %s308 = sadd.s32 %s307, 1
      %s309 = scalar_select %p306, %s307, %s308
      %p312 = pneg %p306
      %p313 = scmp.eq.s32.totalorder %s26, 1
      %p314 = por %p312, %p313
      %p315 = scmp.ne.s32.totalorder %s307, %s310
      %p316 = scmp.eq.s32.totalorder %s26, 0
      %p317 = por %p315, %p316
      %p318 = scmp.ne.s32.totalorder %s307, %s310
      %p319 = scmp.eq.s32.totalorder %s31, 1
      %p320 = por %p318, %p319
      %p321 = scmp.ne.s32.totalorder %s310, %s311
      %p322 = scmp.eq.s32.totalorder %s31, 0
      %p323 = por %p321, %p322
      %p324 = scmp.ne.s32.totalorder %s310, %s311
      %p325 = scmp.eq.s32.totalorder %s32, 1
      %p326 = por %p324, %p325
      %p328 = scmp.ne.s32.totalorder %s311, %s327
      %p329 = scmp.eq.s32.totalorder %s32, 0
      %p330 = por %p328, %p329
      %s331 = ssub.s32 %s26, %s33
      %p332 = scmp.eq.s32.totalorder %s331, 0
      %s334 = sadd.s32 %s333, 1
      %s335 = scalar_select %p332, %s333, %s334
      %p338 = pneg %p332
      %p339 = scmp.eq.s32.totalorder %s26, 1
      %p340 = por %p338, %p339
      %p341 = scmp.ne.s32.totalorder %s333, %s336
      %p342 = scmp.eq.s32.totalorder %s26, 0
      %p343 = por %p341, %p342
      %p344 = scmp.ne.s32.totalorder %s333, %s336
      %p345 = scmp.eq.s32.totalorder %s31, 1
      %p346 = por %p344, %p345
      %p347 = scmp.ne.s32.totalorder %s336, %s337
      %p348 = scmp.eq.s32.totalorder %s31, 0
      %p349 = por %p347, %p348
      %p350 = scmp.ne.s32.totalorder %s336, %s337
      %p351 = scmp.eq.s32.totalorder %s32, 1
      %p352 = por %p350, %p351
      %p354 = scmp.ne.s32.totalorder %s337, %s353
      %p355 = scmp.eq.s32.totalorder %s32, 0
      %p356 = por %p354, %p355
      %s357 = ssub.s32 %s26, %s33
      %p358 = scmp.eq.s32.totalorder %s357, 0
      %s360 = sadd.s32 %s359, 1
      %s361 = scalar_select %p358, %s359, %s360
      %p364 = pneg %p358
      %p365 = scmp.eq.s32.totalorder %s26, 1
      %p366 = por %p364, %p365
      %p367 = scmp.ne.s32.totalorder %s359, %s362
      %p368 = scmp.eq.s32.totalorder %s26, 0
      %p369 = por %p367, %p368
      %p370 = scmp.ne.s32.totalorder %s359, %s362
      %p371 = scmp.eq.s32.totalorder %s31, 1
      %p372 = por %p370, %p371
      %p373 = scmp.ne.s32.totalorder %s362, %s363
      %p374 = scmp.eq.s32.totalorder %s31, 0
      %p375 = por %p373, %p374
      %p376 = scmp.ne.s32.totalorder %s362, %s363
      %p377 = scmp.eq.s32.totalorder %s32, 1
      %p378 = por %p376, %p377
      %p380 = scmp.ne.s32.totalorder %s363, %s379
      %p381 = scmp.eq.s32.totalorder %s32, 0
      %p382 = por %p380, %p381
      %s383 = ssub.s32 %s26, %s33
      %p384 = scmp.eq.s32.totalorder %s383, 0
      %s386 = sadd.s32 %s385, 1
      %s387 = scalar_select %p384, %s385, %s386
      %p390 = pneg %p384
      %p391 = scmp.eq.s32.totalorder %s26, 1
      %p392 = por %p390, %p391
      %p393 = scmp.ne.s32.totalorder %s385, %s388
      %p394 = scmp.eq.s32.totalorder %s26, 0
      %p395 = por %p393, %p394
      %p396 = scmp.ne.s32.totalorder %s385, %s388
      %p397 = scmp.eq.s32.totalorder %s31, 1
      %p398 = por %p396, %p397
      %p399 = scmp.ne.s32.totalorder %s388, %s389
      %p400 = scmp.eq.s32.totalorder %s31, 0
      %p401 = por %p399, %p400
      %p402 = scmp.ne.s32.totalorder %s388, %s389
      %p403 = scmp.eq.s32.totalorder %s32, 1
      %p404 = por %p402, %p403
      %p406 = scmp.ne.s32.totalorder %s389, %s405
      %p407 = scmp.eq.s32.totalorder %s32, 0
      %p408 = por %p406, %p407
      %s410 = sadd.s32 %s409, 1
      %p413 = scmp.eq.s32.totalorder %s26, 1
      %p414 = scmp.ne.s32.totalorder %s409, %s411
      %p415 = scmp.eq.s32.totalorder %s26, 0
      %p416 = por %p414, %p415
      %p417 = scmp.ne.s32.totalorder %s409, %s411
      %p418 = scmp.eq.s32.totalorder %s31, 1
      %p419 = por %p417, %p418
      %p420 = scmp.ne.s32.totalorder %s411, %s412
      %p421 = scmp.eq.s32.totalorder %s31, 0
      %p422 = por %p420, %p421
      %p423 = scmp.ne.s32.totalorder %s411, %s412
      %p424 = scmp.eq.s32.totalorder %s32, 1
      %p425 = por %p423, %p424
      %p427 = scmp.ne.s32.totalorder %s412, %s426
      %p428 = scmp.eq.s32.totalorder %s32, 0
      %p429 = por %p427, %p428
      %s431 = sadd.s32 %s430, 1
      %p434 = scmp.eq.s32.totalorder %s26, 1
      %p435 = scmp.ne.s32.totalorder %s430, %s432
      %p436 = scmp.eq.s32.totalorder %s26, 0
      %p437 = por %p435, %p436
      %p438 = scmp.ne.s32.totalorder %s430, %s432
      %p439 = scmp.eq.s32.totalorder %s31, 1
      %p440 = por %p438, %p439
      %p441 = scmp.ne.s32.totalorder %s432, %s433
      %p442 = scmp.eq.s32.totalorder %s31, 0
      %p443 = por %p441, %p442
      %p444 = scmp.ne.s32.totalorder %s432, %s433
      %p445 = scmp.eq.s32.totalorder %s32, 1
      %p446 = por %p444, %p445
      %p448 = scmp.ne.s32.totalorder %s433, %s447
      %p449 = scmp.eq.s32.totalorder %s32, 0
      %p450 = por %p448, %p449
      %s452 = sadd.s32 %s451, 1
      %p455 = scmp.eq.s32.totalorder %s26, 1
      %p456 = scmp.ne.s32.totalorder %s451, %s453
      %p457 = scmp.eq.s32.totalorder %s26, 0
      %p458 = por %p456, %p457
      %p459 = scmp.ne.s32.totalorder %s451, %s453
      %p460 = scmp.eq.s32.totalorder %s31, 1
      %p461 = por %p459, %p460
      %p462 = scmp.ne.s32.totalorder %s453, %s454
      %p463 = scmp.eq.s32.totalorder %s31, 0
      %p464 = por %p462, %p463
      %p465 = scmp.ne.s32.totalorder %s453, %s454
      %p466 = scmp.eq.s32.totalorder %s32, 1
      %p467 = por %p465, %p466
      %p469 = scmp.ne.s32.totalorder %s454, %s468
      %p470 = scmp.eq.s32.totalorder %s32, 0
      %p471 = por %p469, %p470
      %s473 = sadd.s32 %s472, 1
      %p476 = scmp.eq.s32.totalorder %s26, 1
      %p477 = scmp.ne.s32.totalorder %s472, %s474
      %p478 = scmp.eq.s32.totalorder %s26, 0
      %p479 = por %p477, %p478
      %p480 = scmp.ne.s32.totalorder %s472, %s474
      %p481 = scmp.eq.s32.totalorder %s31, 1
      %p482 = por %p480, %p481
      %p483 = scmp.ne.s32.totalorder %s474, %s475
      %p484 = scmp.eq.s32.totalorder %s31, 0
      %p485 = por %p483, %p484
      %p486 = scmp.ne.s32.totalorder %s474, %s475
      %p487 = scmp.eq.s32.totalorder %s32, 1
      %p488 = por %p486, %p487
      %p490 = scmp.ne.s32.totalorder %s475, %s489
      %p491 = scmp.eq.s32.totalorder %s32, 0
      %p492 = por %p490, %p491
      %s494 = sadd.s32 %s493, 1
      %p497 = scmp.eq.s32.totalorder %s26, 1
      %p498 = scmp.ne.s32.totalorder %s493, %s495
      %p499 = scmp.eq.s32.totalorder %s26, 0
      %p500 = por %p498, %p499
      %p501 = scmp.ne.s32.totalorder %s493, %s495
      %p502 = scmp.eq.s32.totalorder %s31, 1
      %p503 = por %p501, %p502
      %p504 = scmp.ne.s32.totalorder %s495, %s496
      %p505 = scmp.eq.s32.totalorder %s31, 0
      %p506 = por %p504, %p505
      %p507 = scmp.ne.s32.totalorder %s495, %s496
      %p508 = scmp.eq.s32.totalorder %s32, 1
      %p509 = por %p507, %p508
      %p511 = scmp.ne.s32.totalorder %s496, %s510
      %p512 = scmp.eq.s32.totalorder %s32, 0
      %p513 = por %p511, %p512
      %p514 = scmp.le.s32.totalorder 1, %s26
      %p515 = scmp.lt.s32.totalorder %s26, 3
      %p516 = pnand %p514, %p515
      %p517 = pneg %p516
      // Predicated region
      $region9: #{tpu_custom_call.1} parent=5 // pred_check
        _
      $region10: #{tpu_custom_call.1} parent=5 // pred_check_branch
        %519 = sbr.rel (%p516) target = $region12
      $region11: #{tpu_custom_call.1} parent=5 // pred_region
        %s520 = ssub.s32 %s26, 1
        // Predicated region
        $region13: #{tpu_custom_call.1} parent=11 // pred_check
          %p521 = pneg %p47
        $region14: #{tpu_custom_call.1} parent=11 // pred_check_branch
          %523 = sbr.rel (%p521) target = $region16
        $region15: #{tpu_custom_call.1} parent=11 // pred_region
          _
        $region16: #{tpu_custom_call.1} parent=11 // pred_fallthru
          _
        // Predicated region
        $region17: #{tpu_custom_call.1} parent=11 // pred_check
          %p524 = pneg %p68
        $region18: #{tpu_custom_call.1} parent=11 // pred_check_branch
          %526 = sbr.rel (%p524) target = $region20
        $region19: #{tpu_custom_call.1} parent=11 // pred_region
          _
        $region20: #{tpu_custom_call.1} parent=11 // pred_fallthru
          _
        // Predicated region
        $region21: #{tpu_custom_call.1} parent=11 // pred_check
          %p527 = pneg %p89
        $region22: #{tpu_custom_call.1} parent=11 // pred_check_branch
          %529 = sbr.rel (%p527) target = $region24
        $region23: #{tpu_custom_call.1} parent=11 // pred_region
          _
        $region24: #{tpu_custom_call.1} parent=11 // pred_fallthru
          _
        // Predicated region
        $region25: #{tpu_custom_call.1} parent=11 // pred_check
          %p530 = pneg %p422
        $region26: #{tpu_custom_call.1} parent=11 // pred_check_branch
          %532 = sbr.rel (%p530) target = $region28
        $region27: #{tpu_custom_call.1} parent=11 // pred_region
          _
        $region28: #{tpu_custom_call.1} parent=11 // pred_fallthru
          _
        // Predicated region
        $region29: #{tpu_custom_call.1} parent=11 // pred_check
          %p533 = pneg %p443
        $region30: #{tpu_custom_call.1} parent=11 // pred_check_branch
          %535 = sbr.rel (%p533) target = $region32
        $region31: #{tpu_custom_call.1} parent=11 // pred_region
          _
        $region32: #{tpu_custom_call.1} parent=11 // pred_fallthru
          _
        // Predicated region
        $region33: #{tpu_custom_call.1} parent=11 // pred_check
          %p536 = pneg %p464
        $region34: #{tpu_custom_call.1} parent=11 // pred_check_branch
          %538 = sbr.rel (%p536) target = $region36
        $region35: #{tpu_custom_call.1} parent=11 // pred_region
          _
        $region36: #{tpu_custom_call.1} parent=11 // pred_fallthru
          _
        // Predicated region
        $region37: #{tpu_custom_call.1} parent=11 // pred_check
          %p539 = pneg %p485
        $region38: #{tpu_custom_call.1} parent=11 // pred_check_branch
          %541 = sbr.rel (%p539) target = $region40
        $region39: #{tpu_custom_call.1} parent=11 // pred_region
          _
        $region40: #{tpu_custom_call.1} parent=11 // pred_fallthru
          _
      $region12: #{tpu_custom_call.1} parent=5 // pred_fallthru
        _
      %p542 = scmp.lt.s32.totalorder %s26, 2
      // Predicated region
      $region41: #{tpu_custom_call.1} parent=5 // pred_check
        %p543 = pneg %p542
      $region42: #{tpu_custom_call.1} parent=5 // pred_check_branch
        %545 = sbr.rel (%p543) target = $region44
      $region43: #{tpu_custom_call.1} parent=5 // pred_region
        // Predicated region
        $region45: #{tpu_custom_call.1} parent=43 // pred_check
          %p546 = pneg %p109
        $region46: #{tpu_custom_call.1} parent=43 // pred_check_branch
          %548 = sbr.rel (%p546) target = $region48
        $region47: #{tpu_custom_call.1} parent=43 // pred_region
          %p549 = scmp.lt.s32.totalorder %s26, 1
          %s550 = scalar_select %p549, %s26, 1
          %s551 = scalar_lea.vmem %s3, %s550
        $region48: #{tpu_custom_call.1} parent=43 // pred_fallthru
          _
        // Predicated region
        $region49: #{tpu_custom_call.1} parent=43 // pred_check
          %p552 = pneg %p135
        $region50: #{tpu_custom_call.1} parent=43 // pred_check_branch
          %554 = sbr.rel (%p552) target = $region52
        $region51: #{tpu_custom_call.1} parent=43 // pred_region
          %p555 = scmp.lt.s32.totalorder %s26, 1
          %s556 = scalar_select %p555, %s26, 1
          %s557 = scalar_lea.vmem %s4, %s556
        $region52: #{tpu_custom_call.1} parent=43 // pred_fallthru
          _
        // Predicated region
        $region53: #{tpu_custom_call.1} parent=43 // pred_check
          %p558 = pneg %p161
        $region54: #{tpu_custom_call.1} parent=43 // pred_check_branch
          %560 = sbr.rel (%p558) target = $region56
        $region55: #{tpu_custom_call.1} parent=43 // pred_region
          %p561 = scmp.lt.s32.totalorder %s26, 1
          %s562 = scalar_select %p561, %s26, 1
          %s563 = smul.addr %s562, 16
          %s564 = smul.addr %s563, 8
          %s565 = scalar_lea.vmem %s5, %s564
        $region56: #{tpu_custom_call.1} parent=43 // pred_fallthru
          _
        // Predicated region
        $region57: #{tpu_custom_call.1} parent=43 // pred_check
          %p566 = pneg %p187
        $region58: #{tpu_custom_call.1} parent=43 // pred_check_branch
          %568 = sbr.rel (%p566) target = $region60
        $region59: #{tpu_custom_call.1} parent=43 // pred_region
          %p569 = scmp.lt.s32.totalorder %s26, 1
          %s570 = scalar_select %p569, %s26, 1
          %s571 = smul.addr %s570, 2
          %s572 = scalar_lea.vmem %s6, %s571
        $region60: #{tpu_custom_call.1} parent=43 // pred_fallthru
          _
        // Predicated region
        $region61: #{tpu_custom_call.1} parent=43 // pred_check
          %p573 = pneg %p213
        $region62: #{tpu_custom_call.1} parent=43 // pred_check_branch
          %575 = sbr.rel (%p573) target = $region64
        $region63: #{tpu_custom_call.1} parent=43 // pred_region
          %p576 = scmp.lt.s32.totalorder %s26, 1
          %s577 = scalar_select %p576, %s26, 1
          %s578 = smul.addr %s577, 8
          %s579 = smul.addr %s578, 8
          %s580 = scalar_lea.vmem %s7, %s579
        $region64: #{tpu_custom_call.1} parent=43 // pred_fallthru
          _
        // Predicated region
        $region65: #{tpu_custom_call.1} parent=43 // pred_check
          %p581 = pneg %p239
        $region66: #{tpu_custom_call.1} parent=43 // pred_check_branch
          %583 = sbr.rel (%p581) target = $region68
        $region67: #{tpu_custom_call.1} parent=43 // pred_region
          %p584 = scmp.lt.s32.totalorder %s26, 1
          %s585 = scalar_select %p584, %s26, 1
          %s586 = scalar_lea.vmem %s8, %s585
        $region68: #{tpu_custom_call.1} parent=43 // pred_fallthru
          _
        // Predicated region
        $region69: #{tpu_custom_call.1} parent=43 // pred_check
          %p587 = pneg %p265
        $region70: #{tpu_custom_call.1} parent=43 // pred_check_branch
          %589 = sbr.rel (%p587) target = $region72
        $region71: #{tpu_custom_call.1} parent=43 // pred_region
          %p590 = scmp.lt.s32.totalorder %s26, 1
          %s591 = scalar_select %p590, %s26, 1
          %s592 = scalar_lea.vmem %s9, %s591
        $region72: #{tpu_custom_call.1} parent=43 // pred_fallthru
          _
        // Predicated region
        $region73: #{tpu_custom_call.1} parent=43 // pred_check
          %p593 = pneg %p291
        $region74: #{tpu_custom_call.1} parent=43 // pred_check_branch
          %595 = sbr.rel (%p593) target = $region76
        $region75: #{tpu_custom_call.1} parent=43 // pred_region
          %p596 = scmp.lt.s32.totalorder %s26, 1
          %s597 = scalar_select %p596, %s26, 1
          %s598 = scalar_lea.vmem %s10, %s597
        $region76: #{tpu_custom_call.1} parent=43 // pred_fallthru
          _
        // Predicated region
        $region77: #{tpu_custom_call.1} parent=43 // pred_check
          %p599 = pneg %p317
        $region78: #{tpu_custom_call.1} parent=43 // pred_check_branch
          %601 = sbr.rel (%p599) target = $region80
        $region79: #{tpu_custom_call.1} parent=43 // pred_region
          %p602 = scmp.lt.s32.totalorder %s26, 1
          %s603 = scalar_select %p602, %s26, 1
          %s604 = smul.addr %s603, 16
          %s605 = smul.addr %s604, 8
          %s606 = scalar_lea.vmem %s11, %s605
        $region80: #{tpu_custom_call.1} parent=43 // pred_fallthru
          _
        // Predicated region
        $region81: #{tpu_custom_call.1} parent=43 // pred_check
          %p607 = pneg %p343
        $region82: #{tpu_custom_call.1} parent=43 // pred_check_branch
          %609 = sbr.rel (%p607) target = $region84
        $region83: #{tpu_custom_call.1} parent=43 // pred_region
          %p610 = scmp.lt.s32.totalorder %s26, 1
          %s611 = scalar_select %p610, %s26, 1
          %s612 = smul.addr %s611, 2
          %s613 = scalar_lea.vmem %s12, %s612
        $region84: #{tpu_custom_call.1} parent=43 // pred_fallthru
          _
        // Predicated region
        $region85: #{tpu_custom_call.1} parent=43 // pred_check
          %p614 = pneg %p369
        $region86: #{tpu_custom_call.1} parent=43 // pred_check_branch
          %616 = sbr.rel (%p614) target = $region88
        $region87: #{tpu_custom_call.1} parent=43 // pred_region
          %p617 = scmp.lt.s32.totalorder %s26, 1
          %s618 = scalar_select %p617, %s26, 1
          %s619 = smul.addr %s618, 32
          %s620 = smul.addr %s619, 8
          %s621 = scalar_lea.vmem %s13, %s620
        $region88: #{tpu_custom_call.1} parent=43 // pred_fallthru
          _
        // Predicated region
        $region89: #{tpu_custom_call.1} parent=43 // pred_check
          %p622 = pneg %p395
        $region90: #{tpu_custom_call.1} parent=43 // pred_check_branch
          %624 = sbr.rel (%p622) target = $region92
        $region91: #{tpu_custom_call.1} parent=43 // pred_region
          %p625 = scmp.lt.s32.totalorder %s26, 1
          %s626 = scalar_select %p625, %s26, 1
          %s627 = scalar_lea.vmem %s14, %s626
        $region92: #{tpu_custom_call.1} parent=43 // pred_fallthru
          _
      $region44: #{tpu_custom_call.1} parent=5 // pred_fallthru
        _
      %p628 = scmp.le.s32.totalorder 1, %s26
      %p629 = scmp.lt.s32.totalorder %s26, 3
      %p630 = pnand %p628, %p629
      %p631 = pneg %p630
      // Predicated region
      $region93: #{tpu_custom_call.1} parent=5 // pred_check
        _
      $region94: #{tpu_custom_call.1} parent=5 // pred_check_branch
        %633 = sbr.rel (%p630) target = $region96
      $region95: #{tpu_custom_call.1} parent=5 // pred_region
        %s634 = ssub.s32 %s26, 1
        %p635 = pneg %p47
        %p636 = pneg %p44
        %p637 = pneg %p68
        %p638 = pneg %p65
        %p639 = pneg %p89
        %p640 = pneg %p86
        %p641 = scmp.lt.s32.totalorder %s31, 1
        %s642 = scalar_select %p641, %s31, 1
        %s643 = scalar_lea.vmem %s3, %s642
        %p644 = pneg %p115
        %p645 = pneg %p112
        %p646 = scmp.lt.s32.totalorder %s31, 1
        %s647 = scalar_select %p646, %s31, 1
        %s648 = scalar_lea.vmem %s4, %s647
        %p649 = pneg %p141
        %p650 = pneg %p138
        %p651 = scmp.lt.s32.totalorder %s31, 1
        %s652 = scalar_select %p651, %s31, 1
        %s653 = smul.addr %s652, 16
        %s654 = smul.addr %s653, 8
        %s655 = scalar_lea.vmem %s5, %s654
        %p656 = pneg %p167
        %p657 = pneg %p164
        %p658 = scmp.lt.s32.totalorder %s31, 1
        %s659 = scalar_select %p658, %s31, 1
        %s660 = smul.addr %s659, 2
        %s661 = scalar_lea.vmem %s6, %s660
        %p662 = pneg %p193
        %p663 = pneg %p190
        %p664 = scmp.lt.s32.totalorder %s31, 1
        %s665 = scalar_select %p664, %s31, 1
        %s666 = smul.addr %s665, 8
        %s667 = smul.addr %s666, 8
        %s668 = scalar_lea.vmem %s7, %s667
        %p669 = pneg %p219
        %p670 = pneg %p216
        %p671 = scmp.lt.s32.totalorder %s31, 1
        %s672 = scalar_select %p671, %s31, 1
        %s673 = scalar_lea.vmem %s8, %s672
        %p674 = pneg %p245
        %p675 = pneg %p242
        %p676 = scmp.lt.s32.totalorder %s31, 1
        %s677 = scalar_select %p676, %s31, 1
        %s678 = scalar_lea.vmem %s9, %s677
        %p679 = pneg %p271
        %p680 = pneg %p268
        %p681 = scmp.lt.s32.totalorder %s31, 1
        %s682 = scalar_select %p681, %s31, 1
        %s683 = scalar_lea.vmem %s10, %s682
        %p684 = pneg %p297
        %p685 = pneg %p294
        %p686 = scmp.lt.s32.totalorder %s31, 1
        %s687 = scalar_select %p686, %s31, 1
        %s688 = smul.addr %s687, 16
        %s689 = smul.addr %s688, 8
        %s690 = scalar_lea.vmem %s11, %s689
        %p691 = pneg %p323
        %p692 = pneg %p320
        %p693 = scmp.lt.s32.totalorder %s31, 1
        %s694 = scalar_select %p693, %s31, 1
        %s695 = smul.addr %s694, 2
        %s696 = scalar_lea.vmem %s12, %s695
        %p697 = pneg %p349
        %p698 = pneg %p346
        %p699 = scmp.lt.s32.totalorder %s31, 1
        %s700 = scalar_select %p699, %s31, 1
        %s701 = smul.addr %s700, 32
        %s702 = smul.addr %s701, 8
        %s703 = scalar_lea.vmem %s13, %s702
        %p704 = pneg %p375
        %p705 = pneg %p372
        %p706 = scmp.lt.s32.totalorder %s31, 1
        %s707 = scalar_select %p706, %s31, 1
        %s708 = scalar_lea.vmem %s14, %s707
        %p709 = pneg %p401
        %p710 = pneg %p398
        %p711 = pneg %p422
        %p712 = pneg %p419
        %p713 = pneg %p443
        %p714 = pneg %p440
        %p715 = pneg %p464
        %p716 = pneg %p461
        %p717 = pneg %p485
        %p718 = pneg %p482
        %p719 = pneg %p506
        %p720 = pneg %p503
        %p721 = scmp.lt.s32.totalorder %s31, 1
        %s722 = scalar_select %p721, %s31, 1
        %s723 = scalar_lea.vmem %s3, %s722
        %p724 = scmp.lt.s32.totalorder %s31, 1
        %s725 = scalar_select %p724, %s31, 1
        %s726 = scalar_lea.vmem %s4, %s725
        %p727 = scmp.lt.s32.totalorder %s31, 1
        %s728 = scalar_select %p727, %s31, 1
        %s729 = smul.addr %s728, 16
        %s730 = smul.addr %s729, 8
        %s731 = scalar_lea.vmem %s5, %s730
        %p732 = scmp.lt.s32.totalorder %s31, 1
        %s733 = scalar_select %p732, %s31, 1
        %s734 = smul.addr %s733, 2
        %s735 = scalar_lea.vmem %s6, %s734
        %p736 = scmp.lt.s32.totalorder %s31, 1
        %s737 = scalar_select %p736, %s31, 1
        %s738 = smul.addr %s737, 8
        %s739 = smul.addr %s738, 8
        %s740 = scalar_lea.vmem %s7, %s739
        %p741 = scmp.lt.s32.totalorder %s31, 1
        %s742 = scalar_select %p741, %s31, 1
        %s743 = scalar_lea.vmem %s8, %s742
        %p744 = scmp.lt.s32.totalorder %s31, 1
        %s745 = scalar_select %p744, %s31, 1
        %s746 = scalar_lea.vmem %s9, %s745
        %p747 = scmp.lt.s32.totalorder %s31, 1
        %s748 = scalar_select %p747, %s31, 1
        %s749 = scalar_lea.vmem %s10, %s748
        %p750 = scmp.lt.s32.totalorder %s31, 1
        %s751 = scalar_select %p750, %s31, 1
        %s752 = smul.addr %s751, 16
        %s753 = smul.addr %s752, 8
        %s754 = scalar_lea.vmem %s11, %s753
        %p755 = scmp.lt.s32.totalorder %s31, 1
        %s756 = scalar_select %p755, %s31, 1
        %s757 = smul.addr %s756, 2
        %s758 = scalar_lea.vmem %s12, %s757
        %p759 = scmp.lt.s32.totalorder %s31, 1
        %s760 = scalar_select %p759, %s31, 1
        %s761 = smul.addr %s760, 32
        %s762 = smul.addr %s761, 8
        %s763 = scalar_lea.vmem %s13, %s762
        %p764 = scmp.lt.s32.totalorder %s31, 1
        %s765 = scalar_select %p764, %s31, 1
        %s766 = scalar_lea.vmem %s14, %s765
        %p767 = scmp.eq.s32.totalorder %s31, 0
        // Predicated region
        $region97: #{tpu_custom_call.1} parent=95 // pred_check
          %p768 = pneg %p767
        $region98: #{tpu_custom_call.1} parent=95 // pred_check_branch
          %770 = sbr.rel (%p768) target = $region100
        $region99: #{tpu_custom_call.1} parent=95 // pred_region
          %v771 = vld [vmem:[%s0] sm:$0xff]
          %v772 = vld [vmem:[%s0 + $0x8] sm:$0xff]
          %v773 = vld [vmem:[%s0 + $0x10] sm:$0xff]
          %v774 = vld [vmem:[%s0 + $0x18] sm:$0xff]
          %v775 = vld [vmem:[%s0 + $0x20] sm:$0xff]
          %v776 = vld [vmem:[%s0 + $0x28] sm:$0xff]
          %v777 = vld [vmem:[%s0 + $0x30] sm:$0xff]
          %v778 = vld [vmem:[%s0 + $0x38] sm:$0xff]
          %v779 = vld [vmem:[%s0 + $0x40] sm:$0xff]
          %v780 = vld [vmem:[%s0 + $0x48] sm:$0xff]
          %v781 = vld [vmem:[%s0 + $0x50] sm:$0xff]
          %v782 = vld [vmem:[%s0 + $0x58] sm:$0xff]
          %v783 = vld [vmem:[%s0 + $0x60] sm:$0xff]
          %v784 = vld [vmem:[%s0 + $0x68] sm:$0xff]
          %v785 = vld [vmem:[%s0 + $0x70] sm:$0xff]
          %v786 = vld [vmem:[%s0 + $0x78] sm:$0xff]
          %v787 = vld [vmem:[%s0 + $0x80] sm:$0xff]
          %v788 = vld [vmem:[%s0 + $0x88] sm:$0xff]
          %v789 = vld [vmem:[%s0 + $0x90] sm:$0xff]
          %v790 = vld [vmem:[%s0 + $0x98] sm:$0xff]
          %v791 = vld [vmem:[%s0 + $0xa0] sm:$0xff]
          %v792 = vld [vmem:[%s0 + $0xa8] sm:$0xff]
          %v793 = vld [vmem:[%s0 + $0xb0] sm:$0xff]
          %v794 = vld [vmem:[%s0 + $0xb8] sm:$0xff]
          %v795 = vld [vmem:[%s0 + $0xc0] sm:$0xff]
          %v796 = vld [vmem:[%s0 + $0xc8] sm:$0xff]
          %v797 = vld [vmem:[%s0 + $0xd0] sm:$0xff]
          %v798 = vld [vmem:[%s0 + $0xd8] sm:$0xff]
          %v799 = vld [vmem:[%s0 + $0xe0] sm:$0xff]
          %v800 = vld [vmem:[%s0 + $0xe8] sm:$0xff]
          %v801 = vld [vmem:[%s0 + $0xf0] sm:$0xff]
          %v802 = vld [vmem:[%s0 + $0xf8] sm:$0xff]
          %v803 = vld [vmem:[%s0 + $0x100] sm:$0xff]
          %v804 = vld [vmem:[%s0 + $0x108] sm:$0xff]
          %v805 = vld [vmem:[%s0 + $0x110] sm:$0xff]
          %v806 = vld [vmem:[%s0 + $0x118] sm:$0xff]
          %v807 = vld [vmem:[%s0 + $0x120] sm:$0xff]
          %v808 = vld [vmem:[%s0 + $0x128] sm:$0xff]
          %v809 = vld [vmem:[%s0 + $0x130] sm:$0xff]
          %v810 = vld [vmem:[%s0 + $0x138] sm:$0xff]
          %v811 = vld [vmem:[%s0 + $0x140] sm:$0xff]
          %v812 = vld [vmem:[%s0 + $0x148] sm:$0xff]
          %v813 = vld [vmem:[%s0 + $0x150] sm:$0xff]
          %v814 = vld [vmem:[%s0 + $0x158] sm:$0xff]
          %v815 = vld [vmem:[%s0 + $0x160] sm:$0xff]
          %v816 = vld [vmem:[%s0 + $0x168] sm:$0xff]
          %v817 = vld [vmem:[%s0 + $0x170] sm:$0xff]
          %v818 = vld [vmem:[%s0 + $0x178] sm:$0xff]
          %v819 = vld [vmem:[%s0 + $0x180] sm:$0xff]
          %v820 = vld [vmem:[%s0 + $0x188] sm:$0xff]
          %v821 = vld [vmem:[%s0 + $0x190] sm:$0xff]
          %v822 = vld [vmem:[%s0 + $0x198] sm:$0xff]
          %v823 = vld [vmem:[%s0 + $0x1a0] sm:$0xff]
          %v824 = vld [vmem:[%s0 + $0x1a8] sm:$0xff]
          %v825 = vld [vmem:[%s0 + $0x1b0] sm:$0xff]
          %v826 = vld [vmem:[%s0 + $0x1b8] sm:$0xff]
          %v827 = vld [vmem:[%s0 + $0x1c0] sm:$0xff]
          %v828 = vld [vmem:[%s0 + $0x1c8] sm:$0xff]
          %v829 = vld [vmem:[%s0 + $0x1d0] sm:$0xff]
          %v830 = vld [vmem:[%s0 + $0x1d8] sm:$0xff]
          %v831 = vld [vmem:[%s0 + $0x1e0] sm:$0xff]
          %v832 = vld [vmem:[%s0 + $0x1e8] sm:$0xff]
          %v833 = vld [vmem:[%s0 + $0x1f0] sm:$0xff]
          %v834 = vld [vmem:[%s0 + $0x1f8] sm:$0xff]
          %v835 = vld [vmem:[%s0 + $0x200] sm:$0xff]
          %v836 = vld [vmem:[%s0 + $0x208] sm:$0xff]
          %v837 = vld [vmem:[%s0 + $0x210] sm:$0xff]
          %v838 = vld [vmem:[%s0 + $0x218] sm:$0xff]
          %v839 = vld [vmem:[%s0 + $0x220] sm:$0xff]
          %v840 = vld [vmem:[%s0 + $0x228] sm:$0xff]
          %v841 = vld [vmem:[%s0 + $0x230] sm:$0xff]
          %v842 = vld [vmem:[%s0 + $0x238] sm:$0xff]
          %v843 = vld [vmem:[%s0 + $0x240] sm:$0xff]
          %v844 = vld [vmem:[%s0 + $0x248] sm:$0xff]
          %v845 = vld [vmem:[%s0 + $0x250] sm:$0xff]
          %v846 = vld [vmem:[%s0 + $0x258] sm:$0xff]
          %v847 = vld [vmem:[%s0 + $0x260] sm:$0xff]
          %v848 = vld [vmem:[%s0 + $0x268] sm:$0xff]
          %v849 = vld [vmem:[%s0 + $0x270] sm:$0xff]
          %v850 = vld [vmem:[%s0 + $0x278] sm:$0xff]
          %v851 = vld [vmem:[%s0 + $0x280] sm:$0xff]
          %v852 = vld [vmem:[%s0 + $0x288] sm:$0xff]
          %v853 = vld [vmem:[%s0 + $0x290] sm:$0xff]
          %v854 = vld [vmem:[%s0 + $0x298] sm:$0xff]
          %v855 = vld [vmem:[%s0 + $0x2a0] sm:$0xff]
          %v856 = vld [vmem:[%s0 + $0x2a8] sm:$0xff]
          %v857 = vld [vmem:[%s0 + $0x2b0] sm:$0xff]
          %v858 = vld [vmem:[%s0 + $0x2b8] sm:$0xff]
          %v859 = vld [vmem:[%s0 + $0x2c0] sm:$0xff]
          %v860 = vld [vmem:[%s0 + $0x2c8] sm:$0xff]
          %v861 = vld [vmem:[%s0 + $0x2d0] sm:$0xff]
          %v862 = vld [vmem:[%s0 + $0x2d8] sm:$0xff]
          %v863 = vld [vmem:[%s0 + $0x2e0] sm:$0xff]
          %v864 = vld [vmem:[%s0 + $0x2e8] sm:$0xff]
          %v865 = vld [vmem:[%s0 + $0x2f0] sm:$0xff]
          %v866 = vld [vmem:[%s0 + $0x2f8] sm:$0xff]
          %v867 = vld [vmem:[%s0 + $0x300] sm:$0xff]
          %v868 = vld [vmem:[%s0 + $0x308] sm:$0xff]
          %v869 = vld [vmem:[%s0 + $0x310] sm:$0xff]
          %v870 = vld [vmem:[%s0 + $0x318] sm:$0xff]
          %v871 = vld [vmem:[%s0 + $0x320] sm:$0xff]
          %v872 = vld [vmem:[%s0 + $0x328] sm:$0xff]
          %v873 = vld [vmem:[%s0 + $0x330] sm:$0xff]
          %v874 = vld [vmem:[%s0 + $0x338] sm:$0xff]
          %v875 = vld [vmem:[%s0 + $0x340] sm:$0xff]
          %v876 = vld [vmem:[%s0 + $0x348] sm:$0xff]
          %v877 = vld [vmem:[%s0 + $0x350] sm:$0xff]
          %v878 = vld [vmem:[%s0 + $0x358] sm:$0xff]
          %v879 = vld [vmem:[%s0 + $0x360] sm:$0xff]
          %v880 = vld [vmem:[%s0 + $0x368] sm:$0xff]
          %v881 = vld [vmem:[%s0 + $0x370] sm:$0xff]
          %v882 = vld [vmem:[%s0 + $0x378] sm:$0xff]
          %v883 = vld [vmem:[%s0 + $0x380] sm:$0xff]
          %v884 = vld [vmem:[%s0 + $0x388] sm:$0xff]
          %v885 = vld [vmem:[%s0 + $0x390] sm:$0xff]
          %v886 = vld [vmem:[%s0 + $0x398] sm:$0xff]
          %v887 = vld [vmem:[%s0 + $0x3a0] sm:$0xff]
          %v888 = vld [vmem:[%s0 + $0x3a8] sm:$0xff]
          %v889 = vld [vmem:[%s0 + $0x3b0] sm:$0xff]
          %v890 = vld [vmem:[%s0 + $0x3b8] sm:$0xff]
          %v891 = vld [vmem:[%s0 + $0x3c0] sm:$0xff]
          %v892 = vld [vmem:[%s0 + $0x3c8] sm:$0xff]
          %v893 = vld [vmem:[%s0 + $0x3d0] sm:$0xff]
          %v894 = vld [vmem:[%s0 + $0x3d8] sm:$0xff]
          %v895 = vld [vmem:[%s0 + $0x3e0] sm:$0xff]
          %v896 = vld [vmem:[%s0 + $0x3e8] sm:$0xff]
          %v897 = vld [vmem:[%s0 + $0x3f0] sm:$0xff]
          %v898 = vld [vmem:[%s0 + $0x3f8] sm:$0xff]
          %v899 = vld [vmem:[%s0 + $0x400] sm:$0xff]
          %v900 = vld [vmem:[%s0 + $0x408] sm:$0xff]
          %v901 = vld [vmem:[%s0 + $0x410] sm:$0xff]
          %v902 = vld [vmem:[%s0 + $0x418] sm:$0xff]
          %v903 = vld [vmem:[%s0 + $0x420] sm:$0xff]
          %v904 = vld [vmem:[%s0 + $0x428] sm:$0xff]
          %v905 = vld [vmem:[%s0 + $0x430] sm:$0xff]
          %v906 = vld [vmem:[%s0 + $0x438] sm:$0xff]
          %v907 = vld [vmem:[%s0 + $0x440] sm:$0xff]
          %v908 = vld [vmem:[%s0 + $0x448] sm:$0xff]
          %v909 = vld [vmem:[%s0 + $0x450] sm:$0xff]
          %v910 = vld [vmem:[%s0 + $0x458] sm:$0xff]
          %v911 = vld [vmem:[%s0 + $0x460] sm:$0xff]
          %v912 = vld [vmem:[%s0 + $0x468] sm:$0xff]
          %v913 = vld [vmem:[%s0 + $0x470] sm:$0xff]
          %v914 = vld [vmem:[%s0 + $0x478] sm:$0xff]
          %v915 = vld [vmem:[%s0 + $0x480] sm:$0xff]
          %v916 = vld [vmem:[%s0 + $0x488] sm:$0xff]
          %v917 = vld [vmem:[%s0 + $0x490] sm:$0xff]
          %v918 = vld [vmem:[%s0 + $0x498] sm:$0xff]
          %v919 = vld [vmem:[%s0 + $0x4a0] sm:$0xff]
          %v920 = vld [vmem:[%s0 + $0x4a8] sm:$0xff]
          %v921 = vld [vmem:[%s0 + $0x4b0] sm:$0xff]
          %v922 = vld [vmem:[%s0 + $0x4b8] sm:$0xff]
          %v923 = vld [vmem:[%s0 + $0x4c0] sm:$0xff]
          %v924 = vld [vmem:[%s0 + $0x4c8] sm:$0xff]
          %v925 = vld [vmem:[%s0 + $0x4d0] sm:$0xff]
          %v926 = vld [vmem:[%s0 + $0x4d8] sm:$0xff]
          %v927 = vld [vmem:[%s0 + $0x4e0] sm:$0xff]
          %v928 = vld [vmem:[%s0 + $0x4e8] sm:$0xff]
          %v929 = vld [vmem:[%s0 + $0x4f0] sm:$0xff]
          %v930 = vld [vmem:[%s0 + $0x4f8] sm:$0xff]
          %v931 = vld [vmem:[%s0 + $0x500] sm:$0xff]
          %v932 = vld [vmem:[%s0 + $0x508] sm:$0xff]
          %v933 = vld [vmem:[%s0 + $0x510] sm:$0xff]
          %v934 = vld [vmem:[%s0 + $0x518] sm:$0xff]
          %v935 = vld [vmem:[%s0 + $0x520] sm:$0xff]
          %v936 = vld [vmem:[%s0 + $0x528] sm:$0xff]
          %v937 = vld [vmem:[%s0 + $0x530] sm:$0xff]
          %v938 = vld [vmem:[%s0 + $0x538] sm:$0xff]
          %v939 = vld [vmem:[%s0 + $0x540] sm:$0xff]
          %v940 = vld [vmem:[%s0 + $0x548] sm:$0xff]
          %v941 = vld [vmem:[%s0 + $0x550] sm:$0xff]
          %v942 = vld [vmem:[%s0 + $0x558] sm:$0xff]
          %v943 = vld [vmem:[%s0 + $0x560] sm:$0xff]
          %v944 = vld [vmem:[%s0 + $0x568] sm:$0xff]
          %v945 = vld [vmem:[%s0 + $0x570] sm:$0xff]
          %v946 = vld [vmem:[%s0 + $0x578] sm:$0xff]
          %v947 = vld [vmem:[%s0 + $0x580] sm:$0xff]
          %v948 = vld [vmem:[%s0 + $0x588] sm:$0xff]
          %v949 = vld [vmem:[%s0 + $0x590] sm:$0xff]
          %v950 = vld [vmem:[%s0 + $0x598] sm:$0xff]
          %v951 = vld [vmem:[%s0 + $0x5a0] sm:$0xff]
          %v952 = vld [vmem:[%s0 + $0x5a8] sm:$0xff]
          %v953 = vld [vmem:[%s0 + $0x5b0] sm:$0xff]
          %v954 = vld [vmem:[%s0 + $0x5b8] sm:$0xff]
          %v955 = vld [vmem:[%s0 + $0x5c0] sm:$0xff]
          %v956 = vld [vmem:[%s0 + $0x5c8] sm:$0xff]
          %v957 = vld [vmem:[%s0 + $0x5d0] sm:$0xff]
          %v958 = vld [vmem:[%s0 + $0x5d8] sm:$0xff]
          %v959 = vld [vmem:[%s0 + $0x5e0] sm:$0xff]
          %v960 = vld [vmem:[%s0 + $0x5e8] sm:$0xff]
          %v961 = vld [vmem:[%s0 + $0x5f0] sm:$0xff]
          %v962 = vld [vmem:[%s0 + $0x5f8] sm:$0xff]
          %v963 = vld [vmem:[%s1] sm:$0xff]
          %v964 = vld [vmem:[%s1 + $0x8] sm:$0xff]
          %v965 = vld [vmem:[%s1 + $0x10] sm:$0xff]
          %v966 = vld [vmem:[%s1 + $0x18] sm:$0xff]
          %v967 = vld [vmem:[%s1 + $0x20] sm:$0xff]
          %v968 = vld [vmem:[%s1 + $0x28] sm:$0xff]
          %v969 = vld [vmem:[%s1 + $0x30] sm:$0xff]
          %v970 = vld [vmem:[%s1 + $0x38] sm:$0xff]
          %v971 = vld [vmem:[%s1 + $0x40] sm:$0xff]
          %v972 = vld [vmem:[%s1 + $0x48] sm:$0xff]
          %v973 = vld [vmem:[%s1 + $0x50] sm:$0xff]
          %v974 = vld [vmem:[%s1 + $0x58] sm:$0xff]
          %v975 = vld [vmem:[%s1 + $0x60] sm:$0xff]
          %v976 = vld [vmem:[%s1 + $0x68] sm:$0xff]
          %v977 = vld [vmem:[%s1 + $0x70] sm:$0xff]
          %v978 = vld [vmem:[%s1 + $0x78] sm:$0xff]
          %v979 = vld [vmem:[%s1 + $0x80] sm:$0xff]
          %v980 = vld [vmem:[%s1 + $0x88] sm:$0xff]
          %v981 = vld [vmem:[%s1 + $0x90] sm:$0xff]
          %v982 = vld [vmem:[%s1 + $0x98] sm:$0xff]
          %v983 = vld [vmem:[%s1 + $0xa0] sm:$0xff]
          %v984 = vld [vmem:[%s1 + $0xa8] sm:$0xff]
          %v985 = vld [vmem:[%s1 + $0xb0] sm:$0xff]
          %v986 = vld [vmem:[%s1 + $0xb8] sm:$0xff]
          %v987 = vld [vmem:[%s1 + $0xc0] sm:$0xff]
          %v988 = vld [vmem:[%s1 + $0xc8] sm:$0xff]
          %v989 = vld [vmem:[%s1 + $0xd0] sm:$0xff]
          %v990 = vld [vmem:[%s1 + $0xd8] sm:$0xff]
          %v991 = vld [vmem:[%s1 + $0xe0] sm:$0xff]
          %v992 = vld [vmem:[%s1 + $0xe8] sm:$0xff]
          %v993 = vld [vmem:[%s1 + $0xf0] sm:$0xff]
          %v994 = vld [vmem:[%s1 + $0xf8] sm:$0xff]
          %v995 = vld [vmem:[%s1 + $0x100] sm:$0xff]
          %v996 = vld [vmem:[%s1 + $0x108] sm:$0xff]
          %v997 = vld [vmem:[%s1 + $0x110] sm:$0xff]
          %v998 = vld [vmem:[%s1 + $0x118] sm:$0xff]
          %v999 = vld [vmem:[%s1 + $0x120] sm:$0xff]
          %v1000 = vld [vmem:[%s1 + $0x128] sm:$0xff]
          %v1001 = vld [vmem:[%s1 + $0x130] sm:$0xff]
          %v1002 = vld [vmem:[%s1 + $0x138] sm:$0xff]
          %v1003 = vld [vmem:[%s1 + $0x140] sm:$0xff]
          %v1004 = vld [vmem:[%s1 + $0x148] sm:$0xff]
          %v1005 = vld [vmem:[%s1 + $0x150] sm:$0xff]
          %v1006 = vld [vmem:[%s1 + $0x158] sm:$0xff]
          %v1007 = vld [vmem:[%s1 + $0x160] sm:$0xff]
          %v1008 = vld [vmem:[%s1 + $0x168] sm:$0xff]
          %v1009 = vld [vmem:[%s1 + $0x170] sm:$0xff]
          %v1010 = vld [vmem:[%s1 + $0x178] sm:$0xff]
          %v1011 = vld [vmem:[%s1 + $0x180] sm:$0xff]
          %v1012 = vld [vmem:[%s1 + $0x188] sm:$0xff]
          %v1013 = vld [vmem:[%s1 + $0x190] sm:$0xff]
          %v1014 = vld [vmem:[%s1 + $0x198] sm:$0xff]
          %v1015 = vld [vmem:[%s1 + $0x1a0] sm:$0xff]
          %v1016 = vld [vmem:[%s1 + $0x1a8] sm:$0xff]
          %v1017 = vld [vmem:[%s1 + $0x1b0] sm:$0xff]
          %v1018 = vld [vmem:[%s1 + $0x1b8] sm:$0xff]
          %v1019 = vld [vmem:[%s1 + $0x1c0] sm:$0xff]
          %v1020 = vld [vmem:[%s1 + $0x1c8] sm:$0xff]
          %v1021 = vld [vmem:[%s1 + $0x1d0] sm:$0xff]
          %v1022 = vld [vmem:[%s1 + $0x1d8] sm:$0xff]
          %v1023 = vld [vmem:[%s1 + $0x1e0] sm:$0xff]
          %v1024 = vld [vmem:[%s1 + $0x1e8] sm:$0xff]
          %v1025 = vld [vmem:[%s1 + $0x1f0] sm:$0xff]
          %v1026 = vld [vmem:[%s1 + $0x1f8] sm:$0xff]
          %v1027 = vld [vmem:[%s1 + $0x200] sm:$0xff]
          %v1028 = vld [vmem:[%s1 + $0x208] sm:$0xff]
          %v1029 = vld [vmem:[%s1 + $0x210] sm:$0xff]
          %v1030 = vld [vmem:[%s1 + $0x218] sm:$0xff]
          %v1031 = vld [vmem:[%s1 + $0x220] sm:$0xff]
          %v1032 = vld [vmem:[%s1 + $0x228] sm:$0xff]
          %v1033 = vld [vmem:[%s1 + $0x230] sm:$0xff]
          %v1034 = vld [vmem:[%s1 + $0x238] sm:$0xff]
          %v1035 = vld [vmem:[%s1 + $0x240] sm:$0xff]
          %v1036 = vld [vmem:[%s1 + $0x248] sm:$0xff]
          %v1037 = vld [vmem:[%s1 + $0x250] sm:$0xff]
          %v1038 = vld [vmem:[%s1 + $0x258] sm:$0xff]
          %v1039 = vld [vmem:[%s1 + $0x260] sm:$0xff]
          %v1040 = vld [vmem:[%s1 + $0x268] sm:$0xff]
          %v1041 = vld [vmem:[%s1 + $0x270] sm:$0xff]
          %v1042 = vld [vmem:[%s1 + $0x278] sm:$0xff]
          %v1043 = vld [vmem:[%s1 + $0x280] sm:$0xff]
          %v1044 = vld [vmem:[%s1 + $0x288] sm:$0xff]
          %v1045 = vld [vmem:[%s1 + $0x290] sm:$0xff]
          %v1046 = vld [vmem:[%s1 + $0x298] sm:$0xff]
          %v1047 = vld [vmem:[%s1 + $0x2a0] sm:$0xff]
          %v1048 = vld [vmem:[%s1 + $0x2a8] sm:$0xff]
          %v1049 = vld [vmem:[%s1 + $0x2b0] sm:$0xff]
          %v1050 = vld [vmem:[%s1 + $0x2b8] sm:$0xff]
          %v1051 = vld [vmem:[%s1 + $0x2c0] sm:$0xff]
          %v1052 = vld [vmem:[%s1 + $0x2c8] sm:$0xff]
          %v1053 = vld [vmem:[%s1 + $0x2d0] sm:$0xff]
          %v1054 = vld [vmem:[%s1 + $0x2d8] sm:$0xff]
          %v1055 = vld [vmem:[%s1 + $0x2e0] sm:$0xff]
          %v1056 = vld [vmem:[%s1 + $0x2e8] sm:$0xff]
          %v1057 = vld [vmem:[%s1 + $0x2f0] sm:$0xff]
          %v1058 = vld [vmem:[%s1 + $0x2f8] sm:$0xff]
          %v1059 = vld [vmem:[%s1 + $0x300] sm:$0xff]
          %v1060 = vld [vmem:[%s1 + $0x308] sm:$0xff]
          %v1061 = vld [vmem:[%s1 + $0x310] sm:$0xff]
          %v1062 = vld [vmem:[%s1 + $0x318] sm:$0xff]
          %v1063 = vld [vmem:[%s1 + $0x320] sm:$0xff]
          %v1064 = vld [vmem:[%s1 + $0x328] sm:$0xff]
          %v1065 = vld [vmem:[%s1 + $0x330] sm:$0xff]
          %v1066 = vld [vmem:[%s1 + $0x338] sm:$0xff]
          %v1067 = vld [vmem:[%s1 + $0x340] sm:$0xff]
          %v1068 = vld [vmem:[%s1 + $0x348] sm:$0xff]
          %v1069 = vld [vmem:[%s1 + $0x350] sm:$0xff]
          %v1070 = vld [vmem:[%s1 + $0x358] sm:$0xff]
          %v1071 = vld [vmem:[%s1 + $0x360] sm:$0xff]
          %v1072 = vld [vmem:[%s1 + $0x368] sm:$0xff]
          %v1073 = vld [vmem:[%s1 + $0x370] sm:$0xff]
          %v1074 = vld [vmem:[%s1 + $0x378] sm:$0xff]
          %v1075 = vld [vmem:[%s1 + $0x380] sm:$0xff]
          %v1076 = vld [vmem:[%s1 + $0x388] sm:$0xff]
          %v1077 = vld [vmem:[%s1 + $0x390] sm:$0xff]
          %v1078 = vld [vmem:[%s1 + $0x398] sm:$0xff]
          %v1079 = vld [vmem:[%s1 + $0x3a0] sm:$0xff]
          %v1080 = vld [vmem:[%s1 + $0x3a8] sm:$0xff]
          %v1081 = vld [vmem:[%s1 + $0x3b0] sm:$0xff]
          %v1082 = vld [vmem:[%s1 + $0x3b8] sm:$0xff]
          %v1083 = vld [vmem:[%s1 + $0x3c0] sm:$0xff]
          %v1084 = vld [vmem:[%s1 + $0x3c8] sm:$0xff]
          %v1085 = vld [vmem:[%s1 + $0x3d0] sm:$0xff]
          %v1086 = vld [vmem:[%s1 + $0x3d8] sm:$0xff]
          %v1087 = vld [vmem:[%s1 + $0x3e0] sm:$0xff]
          %v1088 = vld [vmem:[%s1 + $0x3e8] sm:$0xff]
          %v1089 = vld [vmem:[%s1 + $0x3f0] sm:$0xff]
          %v1090 = vld [vmem:[%s1 + $0x3f8] sm:$0xff]
          %v1091 = vld [vmem:[%s1 + $0x400] sm:$0xff]
          %v1092 = vld [vmem:[%s1 + $0x408] sm:$0xff]
          %v1093 = vld [vmem:[%s1 + $0x410] sm:$0xff]
          %v1094 = vld [vmem:[%s1 + $0x418] sm:$0xff]
          %v1095 = vld [vmem:[%s1 + $0x420] sm:$0xff]
          %v1096 = vld [vmem:[%s1 + $0x428] sm:$0xff]
          %v1097 = vld [vmem:[%s1 + $0x430] sm:$0xff]
          %v1098 = vld [vmem:[%s1 + $0x438] sm:$0xff]
          %v1099 = vld [vmem:[%s1 + $0x440] sm:$0xff]
          %v1100 = vld [vmem:[%s1 + $0x448] sm:$0xff]
          %v1101 = vld [vmem:[%s1 + $0x450] sm:$0xff]
          %v1102 = vld [vmem:[%s1 + $0x458] sm:$0xff]
          %v1103 = vld [vmem:[%s1 + $0x460] sm:$0xff]
          %v1104 = vld [vmem:[%s1 + $0x468] sm:$0xff]
          %v1105 = vld [vmem:[%s1 + $0x470] sm:$0xff]
          %v1106 = vld [vmem:[%s1 + $0x478] sm:$0xff]
          %v1107 = vld [vmem:[%s1 + $0x480] sm:$0xff]
          %v1108 = vld [vmem:[%s1 + $0x488] sm:$0xff]
          %v1109 = vld [vmem:[%s1 + $0x490] sm:$0xff]
          %v1110 = vld [vmem:[%s1 + $0x498] sm:$0xff]
          %v1111 = vld [vmem:[%s1 + $0x4a0] sm:$0xff]
          %v1112 = vld [vmem:[%s1 + $0x4a8] sm:$0xff]
          %v1113 = vld [vmem:[%s1 + $0x4b0] sm:$0xff]
          %v1114 = vld [vmem:[%s1 + $0x4b8] sm:$0xff]
          %v1115 = vld [vmem:[%s1 + $0x4c0] sm:$0xff]
          %v1116 = vld [vmem:[%s1 + $0x4c8] sm:$0xff]
          %v1117 = vld [vmem:[%s1 + $0x4d0] sm:$0xff]
          %v1118 = vld [vmem:[%s1 + $0x4d8] sm:$0xff]
          %v1119 = vld [vmem:[%s1 + $0x4e0] sm:$0xff]
          %v1120 = vld [vmem:[%s1 + $0x4e8] sm:$0xff]
          %v1121 = vld [vmem:[%s1 + $0x4f0] sm:$0xff]
          %v1122 = vld [vmem:[%s1 + $0x4f8] sm:$0xff]
          %v1123 = vld [vmem:[%s1 + $0x500] sm:$0xff]
          %v1124 = vld [vmem:[%s1 + $0x508] sm:$0xff]
          %v1125 = vld [vmem:[%s1 + $0x510] sm:$0xff]
          %v1126 = vld [vmem:[%s1 + $0x518] sm:$0xff]
          %v1127 = vld [vmem:[%s1 + $0x520] sm:$0xff]
          %v1128 = vld [vmem:[%s1 + $0x528] sm:$0xff]
          %v1129 = vld [vmem:[%s1 + $0x530] sm:$0xff]
          %v1130 = vld [vmem:[%s1 + $0x538] sm:$0xff]
          %v1131 = vld [vmem:[%s1 + $0x540] sm:$0xff]
          %v1132 = vld [vmem:[%s1 + $0x548] sm:$0xff]
          %v1133 = vld [vmem:[%s1 + $0x550] sm:$0xff]
          %v1134 = vld [vmem:[%s1 + $0x558] sm:$0xff]
          %v1135 = vld [vmem:[%s1 + $0x560] sm:$0xff]
          %v1136 = vld [vmem:[%s1 + $0x568] sm:$0xff]
          %v1137 = vld [vmem:[%s1 + $0x570] sm:$0xff]
          %v1138 = vld [vmem:[%s1 + $0x578] sm:$0xff]
          %v1139 = vld [vmem:[%s1 + $0x580] sm:$0xff]
          %v1140 = vld [vmem:[%s1 + $0x588] sm:$0xff]
          %v1141 = vld [vmem:[%s1 + $0x590] sm:$0xff]
          %v1142 = vld [vmem:[%s1 + $0x598] sm:$0xff]
          %v1143 = vld [vmem:[%s1 + $0x5a0] sm:$0xff]
          %v1144 = vld [vmem:[%s1 + $0x5a8] sm:$0xff]
          %v1145 = vld [vmem:[%s1 + $0x5b0] sm:$0xff]
          %v1146 = vld [vmem:[%s1 + $0x5b8] sm:$0xff]
          %v1147 = vld [vmem:[%s1 + $0x5c0] sm:$0xff]
          %v1148 = vld [vmem:[%s1 + $0x5c8] sm:$0xff]
          %v1149 = vld [vmem:[%s1 + $0x5d0] sm:$0xff]
          %v1150 = vld [vmem:[%s1 + $0x5d8] sm:$0xff]
          %v1151 = vld [vmem:[%s1 + $0x5e0] sm:$0xff]
          %v1152 = vld [vmem:[%s1 + $0x5e8] sm:$0xff]
          %v1153 = vld [vmem:[%s1 + $0x5f0] sm:$0xff]
          %v1154 = vld [vmem:[%s1 + $0x5f8] sm:$0xff]
          %v1155 = vld [vmem:[%s2] sm:$0xff]
          %v1156 = vld [vmem:[%s2 + $0x8] sm:$0xff]
          %v1157 = vld [vmem:[%s2 + $0x10] sm:$0xff]
          %v1158 = vld [vmem:[%s2 + $0x18] sm:$0xff]
          %v1159 = vld [vmem:[%s2 + $0x20] sm:$0xff]
          %v1160 = vld [vmem:[%s2 + $0x28] sm:$0xff]
          %v1161 = vld [vmem:[%s2 + $0x30] sm:$0xff]
          %v1162 = vld [vmem:[%s2 + $0x38] sm:$0xff]
          %v1163 = vld [vmem:[%s2 + $0x40] sm:$0xff]
          %v1164 = vld [vmem:[%s2 + $0x48] sm:$0xff]
          %v1165 = vld [vmem:[%s2 + $0x50] sm:$0xff]
          %v1166 = vld [vmem:[%s2 + $0x58] sm:$0xff]
          %v1167 = vld [vmem:[%s2 + $0x60] sm:$0xff]
          %v1168 = vld [vmem:[%s2 + $0x68] sm:$0xff]
          %v1169 = vld [vmem:[%s2 + $0x70] sm:$0xff]
          %v1170 = vld [vmem:[%s2 + $0x78] sm:$0xff]
          %1171 = vmatpush.msra.mxu0 %v978
          %1172 = vmatpush.msra.mxu0 %v977
          %1173 = vmatpush.msra.mxu0 %v976
          %1174 = vmatpush.msra.mxu0 %v975
          %1175 = vmatpush.msra.mxu0 %v974
          %1176 = vmatpush.msra.mxu0 %v973
          %1177 = vmatpush.msra.mxu0 %v972
          %1178 = vmatpush.msra.mxu0 %v971
          %1179 = vmatpush.msra.mxu0 %v970
          %1180 = vmatpush.msra.mxu0 %v969
          %1181 = vmatpush.msra.mxu0 %v968
          %1182 = vmatpush.msra.mxu0 %v967
          %1183 = vmatpush.msra.mxu0 %v966
          %1184 = vmatpush.msra.mxu0 %v965
          %1185 = vmatpush.msra.mxu0 %v964
          %1186 = vmatpush.msra.mxu0 %v963
          %1187 = vmatmul.f32.gmra.mxu0 %v771
          %v1188 = vpop.f32.mrf.mxu0
          %v1189 = vadd.f32 %v1155, %v1188
          %1190 = vmatmul.f32.gmra.mxu0 %v783
          %v1191 = vpop.f32.mrf.mxu0
          %v1192 = vadd.f32 %v1156, %v1191
          %1193 = vmatmul.f32.gmra.mxu0 %v795
          %v1194 = vpop.f32.mrf.mxu0
          %v1195 = vadd.f32 %v1157, %v1194
          %1196 = vmatmul.f32.gmra.mxu0 %v807
          %v1197 = vpop.f32.mrf.mxu0
          %v1198 = vadd.f32 %v1158, %v1197
          %1199 = vmatmul.f32.gmra.mxu0 %v819
          %v1200 = vpop.f32.mrf.mxu0
          %v1201 = vadd.f32 %v1159, %v1200
          %1202 = vmatmul.f32.gmra.mxu0 %v831
          %v1203 = vpop.f32.mrf.mxu0
          %v1204 = vadd.f32 %v1160, %v1203
          %1205 = vmatmul.f32.gmra.mxu0 %v843
          %v1206 = vpop.f32.mrf.mxu0
          %v1207 = vadd.f32 %v1161, %v1206
          %1208 = vmatmul.f32.gmra.mxu0 %v855
          %v1209 = vpop.f32.mrf.mxu0
          %v1210 = vadd.f32 %v1162, %v1209
          %1211 = vmatmul.f32.gmra.mxu0 %v867
          %v1212 = vpop.f32.mrf.mxu0
          %v1213 = vadd.f32 %v1163, %v1212
          %1214 = vmatmul.f32.gmra.mxu0 %v879
          %v1215 = vpop.f32.mrf.mxu0
          %v1216 = vadd.f32 %v1164, %v1215
          %1217 = vmatmul.f32.gmra.mxu0 %v891
          %v1218 = vpop.f32.mrf.mxu0
          %v1219 = vadd.f32 %v1165, %v1218
          %1220 = vmatmul.f32.gmra.mxu0 %v903
          %v1221 = vpop.f32.mrf.mxu0
          %v1222 = vadd.f32 %v1166, %v1221
          %1223 = vmatmul.f32.gmra.mxu0 %v915
          %v1224 = vpop.f32.mrf.mxu0
          %v1225 = vadd.f32 %v1167, %v1224
          %1226 = vmatmul.f32.gmra.mxu0 %v927
          %v1227 = vpop.f32.mrf.mxu0
          %v1228 = vadd.f32 %v1168, %v1227
          %1229 = vmatmul.f32.gmra.mxu0 %v939
          %v1230 = vpop.f32.mrf.mxu0
          %v1231 = vadd.f32 %v1169, %v1230
          %1232 = vmatmul.f32.gmra.mxu0 %v951
          %v1233 = vpop.f32.mrf.mxu0
          %v1234 = vadd.f32 %v1170, %v1233
          %1235 = vdwg.mxu0
          %1236 = vmatpush.msra.mxu0 %v994
          %1237 = vmatpush.msra.mxu0 %v993
          %1238 = vmatpush.msra.mxu0 %v992
          %1239 = vmatpush.msra.mxu0 %v991
          %1240 = vmatpush.msra.mxu0 %v990
          %1241 = vmatpush.msra.mxu0 %v989
          %1242 = vmatpush.msra.mxu0 %v988
          %1243 = vmatpush.msra.mxu0 %v987
          %1244 = vmatpush.msra.mxu0 %v986
          %1245 = vmatpush.msra.mxu0 %v985
          %1246 = vmatpush.msra.mxu0 %v984
          %1247 = vmatpush.msra.mxu0 %v983
          %1248 = vmatpush.msra.mxu0 %v982
          %1249 = vmatpush.msra.mxu0 %v981
          %1250 = vmatpush.msra.mxu0 %v980
          %1251 = vmatpush.msra.mxu0 %v979
          %1252 = vmatmul.f32.gmra.mxu0 %v772
          %v1253 = vpop.f32.mrf.mxu0
          %v1254 = vadd.f32 %v1189, %v1253
          %1255 = vmatmul.f32.gmra.mxu0 %v784
          %v1256 = vpop.f32.mrf.mxu0
          %v1257 = vadd.f32 %v1192, %v1256
          %1258 = vmatmul.f32.gmra.mxu0 %v796
          %v1259 = vpop.f32.mrf.mxu0
          %v1260 = vadd.f32 %v1195, %v1259
          %1261 = vmatmul.f32.gmra.mxu0 %v808
          %v1262 = vpop.f32.mrf.mxu0
          %v1263 = vadd.f32 %v1198, %v1262
          %1264 = vmatmul.f32.gmra.mxu0 %v820
          %v1265 = vpop.f32.mrf.mxu0
          %v1266 = vadd.f32 %v1201, %v1265
          %1267 = vmatmul.f32.gmra.mxu0 %v832
          %v1268 = vpop.f32.mrf.mxu0
          %v1269 = vadd.f32 %v1204, %v1268
          %1270 = vmatmul.f32.gmra.mxu0 %v844
          %v1271 = vpop.f32.mrf.mxu0
          %v1272 = vadd.f32 %v1207, %v1271
          %1273 = vmatmul.f32.gmra.mxu0 %v856
          %v1274 = vpop.f32.mrf.mxu0
          %v1275 = vadd.f32 %v1210, %v1274
          %1276 = vmatmul.f32.gmra.mxu0 %v868
          %v1277 = vpop.f32.mrf.mxu0
          %v1278 = vadd.f32 %v1213, %v1277
          %1279 = vmatmul.f32.gmra.mxu0 %v880
          %v1280 = vpop.f32.mrf.mxu0
          %v1281 = vadd.f32 %v1216, %v1280
          %1282 = vmatmul.f32.gmra.mxu0 %v892
          %v1283 = vpop.f32.mrf.mxu0
          %v1284 = vadd.f32 %v1219, %v1283
          %1285 = vmatmul.f32.gmra.mxu0 %v904
          %v1286 = vpop.f32.mrf.mxu0
          %v1287 = vadd.f32 %v1222, %v1286
          %1288 = vmatmul.f32.gmra.mxu0 %v916
          %v1289 = vpop.f32.mrf.mxu0
          %v1290 = vadd.f32 %v1225, %v1289
          %1291 = vmatmul.f32.gmra.mxu0 %v928
          %v1292 = vpop.f32.mrf.mxu0
          %v1293 = vadd.f32 %v1228, %v1292
          %1294 = vmatmul.f32.gmra.mxu0 %v940
          %v1295 = vpop.f32.mrf.mxu0
          %v1296 = vadd.f32 %v1231, %v1295
          %1297 = vmatmul.f32.gmra.mxu0 %v952
          %v1298 = vpop.f32.mrf.mxu0
          %v1299 = vadd.f32 %v1234, %v1298
          %1300 = vdwg.mxu0
          %1301 = vmatpush.msra.mxu0 %v1010
          %1302 = vmatpush.msra.mxu0 %v1009
          %1303 = vmatpush.msra.mxu0 %v1008
          %1304 = vmatpush.msra.mxu0 %v1007
          %1305 = vmatpush.msra.mxu0 %v1006
          %1306 = vmatpush.msra.mxu0 %v1005
          %1307 = vmatpush.msra.mxu0 %v1004
          %1308 = vmatpush.msra.mxu0 %v1003
          %1309 = vmatpush.msra.mxu0 %v1002
          %1310 = vmatpush.msra.mxu0 %v1001
          %1311 = vmatpush.msra.mxu0 %v1000
          %1312 = vmatpush.msra.mxu0 %v999
          %1313 = vmatpush.msra.mxu0 %v998
          %1314 = vmatpush.msra.mxu0 %v997
          %1315 = vmatpush.msra.mxu0 %v996
          %1316 = vmatpush.msra.mxu0 %v995
          %1317 = vmatmul.f32.gmra.mxu0 %v773
          %v1318 = vpop.f32.mrf.mxu0
          %v1319 = vadd.f32 %v1254, %v1318
          %1320 = vmatmul.f32.gmra.mxu0 %v785
          %v1321 = vpop.f32.mrf.mxu0
          %v1322 = vadd.f32 %v1257, %v1321
          %1323 = vmatmul.f32.gmra.mxu0 %v797
          %v1324 = vpop.f32.mrf.mxu0
          %v1325 = vadd.f32 %v1260, %v1324
          %1326 = vmatmul.f32.gmra.mxu0 %v809
          %v1327 = vpop.f32.mrf.mxu0
          %v1328 = vadd.f32 %v1263, %v1327
          %1329 = vmatmul.f32.gmra.mxu0 %v821
          %v1330 = vpop.f32.mrf.mxu0
          %v1331 = vadd.f32 %v1266, %v1330
          %1332 = vmatmul.f32.gmra.mxu0 %v833
          %v1333 = vpop.f32.mrf.mxu0
          %v1334 = vadd.f32 %v1269, %v1333
          %1335 = vmatmul.f32.gmra.mxu0 %v845
          %v1336 = vpop.f32.mrf.mxu0
          %v1337 = vadd.f32 %v1272, %v1336
          %1338 = vmatmul.f32.gmra.mxu0 %v857
          %v1339 = vpop.f32.mrf.mxu0
          %v1340 = vadd.f32 %v1275, %v1339
          %1341 = vmatmul.f32.gmra.mxu0 %v869
          %v1342 = vpop.f32.mrf.mxu0
          %v1343 = vadd.f32 %v1278, %v1342
          %1344 = vmatmul.f32.gmra.mxu0 %v881
          %v1345 = vpop.f32.mrf.mxu0
          %v1346 = vadd.f32 %v1281, %v1345
          %1347 = vmatmul.f32.gmra.mxu0 %v893
          %v1348 = vpop.f32.mrf.mxu0
          %v1349 = vadd.f32 %v1284, %v1348
          %1350 = vmatmul.f32.gmra.mxu0 %v905
          %v1351 = vpop.f32.mrf.mxu0
          %v1352 = vadd.f32 %v1287, %v1351
          %1353 = vmatmul.f32.gmra.mxu0 %v917
          %v1354 = vpop.f32.mrf.mxu0
          %v1355 = vadd.f32 %v1290, %v1354
          %1356 = vmatmul.f32.gmra.mxu0 %v929
          %v1357 = vpop.f32.mrf.mxu0
          %v1358 = vadd.f32 %v1293, %v1357
          %1359 = vmatmul.f32.gmra.mxu0 %v941
          %v1360 = vpop.f32.mrf.mxu0
          %v1361 = vadd.f32 %v1296, %v1360
          %1362 = vmatmul.f32.gmra.mxu0 %v953
          %v1363 = vpop.f32.mrf.mxu0
          %v1364 = vadd.f32 %v1299, %v1363
          %1365 = vdwg.mxu0
          %1366 = vmatpush.msra.mxu0 %v1026
          %1367 = vmatpush.msra.mxu0 %v1025
          %1368 = vmatpush.msra.mxu0 %v1024
          %1369 = vmatpush.msra.mxu0 %v1023
          %1370 = vmatpush.msra.mxu0 %v1022
          %1371 = vmatpush.msra.mxu0 %v1021
          %1372 = vmatpush.msra.mxu0 %v1020
          %1373 = vmatpush.msra.mxu0 %v1019
          %1374 = vmatpush.msra.mxu0 %v1018
          %1375 = vmatpush.msra.mxu0 %v1017
          %1376 = vmatpush.msra.mxu0 %v1016
          %1377 = vmatpush.msra.mxu0 %v1015
          %1378 = vmatpush.msra.mxu0 %v1014
          %1379 = vmatpush.msra.mxu0 %v1013
          %1380 = vmatpush.msra.mxu0 %v1012
          %1381 = vmatpush.msra.mxu0 %v1011
          %1382 = vmatmul.f32.gmra.mxu0 %v774
          %v1383 = vpop.f32.mrf.mxu0
          %v1384 = vadd.f32 %v1319, %v1383
          %1385 = vmatmul.f32.gmra.mxu0 %v786
          %v1386 = vpop.f32.mrf.mxu0
          %v1387 = vadd.f32 %v1322, %v1386
          %1388 = vmatmul.f32.gmra.mxu0 %v798
          %v1389 = vpop.f32.mrf.mxu0
          %v1390 = vadd.f32 %v1325, %v1389
          %1391 = vmatmul.f32.gmra.mxu0 %v810
          %v1392 = vpop.f32.mrf.mxu0
          %v1393 = vadd.f32 %v1328, %v1392
          %1394 = vmatmul.f32.gmra.mxu0 %v822
          %v1395 = vpop.f32.mrf.mxu0
          %v1396 = vadd.f32 %v1331, %v1395
          %1397 = vmatmul.f32.gmra.mxu0 %v834
          %v1398 = vpop.f32.mrf.mxu0
          %v1399 = vadd.f32 %v1334, %v1398
          %1400 = vmatmul.f32.gmra.mxu0 %v846
          %v1401 = vpop.f32.mrf.mxu0
          %v1402 = vadd.f32 %v1337, %v1401
          %1403 = vmatmul.f32.gmra.mxu0 %v858
          %v1404 = vpop.f32.mrf.mxu0
          %v1405 = vadd.f32 %v1340, %v1404
          %1406 = vmatmul.f32.gmra.mxu0 %v870
          %v1407 = vpop.f32.mrf.mxu0
          %v1408 = vadd.f32 %v1343, %v1407
          %1409 = vmatmul.f32.gmra.mxu0 %v882
          %v1410 = vpop.f32.mrf.mxu0
          %v1411 = vadd.f32 %v1346, %v1410
          %1412 = vmatmul.f32.gmra.mxu0 %v894
          %v1413 = vpop.f32.mrf.mxu0
          %v1414 = vadd.f32 %v1349, %v1413
          %1415 = vmatmul.f32.gmra.mxu0 %v906
          %v1416 = vpop.f32.mrf.mxu0
          %v1417 = vadd.f32 %v1352, %v1416
          %1418 = vmatmul.f32.gmra.mxu0 %v918
          %v1419 = vpop.f32.mrf.mxu0
          %v1420 = vadd.f32 %v1355, %v1419
          %1421 = vmatmul.f32.gmra.mxu0 %v930
          %v1422 = vpop.f32.mrf.mxu0
          %v1423 = vadd.f32 %v1358, %v1422
          %1424 = vmatmul.f32.gmra.mxu0 %v942
          %v1425 = vpop.f32.mrf.mxu0
          %v1426 = vadd.f32 %v1361, %v1425
          %1427 = vmatmul.f32.gmra.mxu0 %v954
          %v1428 = vpop.f32.mrf.mxu0
          %v1429 = vadd.f32 %v1364, %v1428
          %1430 = vdwg.mxu0
          %1431 = vmatpush.msra.mxu0 %v1042
          %1432 = vmatpush.msra.mxu0 %v1041
          %1433 = vmatpush.msra.mxu0 %v1040
          %1434 = vmatpush.msra.mxu0 %v1039
          %1435 = vmatpush.msra.mxu0 %v1038
          %1436 = vmatpush.msra.mxu0 %v1037
          %1437 = vmatpush.msra.mxu0 %v1036
          %1438 = vmatpush.msra.mxu0 %v1035
          %1439 = vmatpush.msra.mxu0 %v1034
          %1440 = vmatpush.msra.mxu0 %v1033
          %1441 = vmatpush.msra.mxu0 %v1032
          %1442 = vmatpush.msra.mxu0 %v1031
          %1443 = vmatpush.msra.mxu0 %v1030
          %1444 = vmatpush.msra.mxu0 %v1029
          %1445 = vmatpush.msra.mxu0 %v1028
          %1446 = vmatpush.msra.mxu0 %v1027
          %1447 = vmatmul.f32.gmra.mxu0 %v775
          %v1448 = vpop.f32.mrf.mxu0
          %v1449 = vadd.f32 %v1384, %v1448
          %1450 = vmatmul.f32.gmra.mxu0 %v787
          %v1451 = vpop.f32.mrf.mxu0
          %v1452 = vadd.f32 %v1387, %v1451
          %1453 = vmatmul.f32.gmra.mxu0 %v799
          %v1454 = vpop.f32.mrf.mxu0
          %v1455 = vadd.f32 %v1390, %v1454
          %1456 = vmatmul.f32.gmra.mxu0 %v811
          %v1457 = vpop.f32.mrf.mxu0
          %v1458 = vadd.f32 %v1393, %v1457
          %1459 = vmatmul.f32.gmra.mxu0 %v823
          %v1460 = vpop.f32.mrf.mxu0
          %v1461 = vadd.f32 %v1396, %v1460
          %1462 = vmatmul.f32.gmra.mxu0 %v835
          %v1463 = vpop.f32.mrf.mxu0
          %v1464 = vadd.f32 %v1399, %v1463
          %1465 = vmatmul.f32.gmra.mxu0 %v847
          %v1466 = vpop.f32.mrf.mxu0
          %v1467 = vadd.f32 %v1402, %v1466
          %1468 = vmatmul.f32.gmra.mxu0 %v859
          %v1469 = vpop.f32.mrf.mxu0
          %v1470 = vadd.f32 %v1405, %v1469
          %1471 = vmatmul.f32.gmra.mxu0 %v871
          %v1472 = vpop.f32.mrf.mxu0
          %v1473 = vadd.f32 %v1408, %v1472
          %1474 = vmatmul.f32.gmra.mxu0 %v883
          %v1475 = vpop.f32.mrf.mxu0
          %v1476 = vadd.f32 %v1411, %v1475
          %1477 = vmatmul.f32.gmra.mxu0 %v895
          %v1478 = vpop.f32.mrf.mxu0
          %v1479 = vadd.f32 %v1414, %v1478
          %1480 = vmatmul.f32.gmra.mxu0 %v907
          %v1481 = vpop.f32.mrf.mxu0
          %v1482 = vadd.f32 %v1417, %v1481
          %1483 = vmatmul.f32.gmra.mxu0 %v919
          %v1484 = vpop.f32.mrf.mxu0
          %v1485 = vadd.f32 %v1420, %v1484
          %1486 = vmatmul.f32.gmra.mxu0 %v931
          %v1487 = vpop.f32.mrf.mxu0
          %v1488 = vadd.f32 %v1423, %v1487
          %1489 = vmatmul.f32.gmra.mxu0 %v943
          %v1490 = vpop.f32.mrf.mxu0
          %v1491 = vadd.f32 %v1426, %v1490
          %1492 = vmatmul.f32.gmra.mxu0 %v955
          %v1493 = vpop.f32.mrf.mxu0
          %v1494 = vadd.f32 %v1429, %v1493
          %1495 = vdwg.mxu0
          %1496 = vmatpush.msra.mxu0 %v1058
          %1497 = vmatpush.msra.mxu0 %v1057
          %1498 = vmatpush.msra.mxu0 %v1056
          %1499 = vmatpush.msra.mxu0 %v1055
          %1500 = vmatpush.msra.mxu0 %v1054
          %1501 = vmatpush.msra.mxu0 %v1053
          %1502 = vmatpush.msra.mxu0 %v1052
          %1503 = vmatpush.msra.mxu0 %v1051
          %1504 = vmatpush.msra.mxu0 %v1050
          %1505 = vmatpush.msra.mxu0 %v1049
          %1506 = vmatpush.msra.mxu0 %v1048
          %1507 = vmatpush.msra.mxu0 %v1047
          %1508 = vmatpush.msra.mxu0 %v1046
          %1509 = vmatpush.msra.mxu0 %v1045
          %1510 = vmatpush.msra.mxu0 %v1044
          %1511 = vmatpush.msra.mxu0 %v1043
          %1512 = vmatmul.f32.gmra.mxu0 %v776
          %v1513 = vpop.f32.mrf.mxu0
          %v1514 = vadd.f32 %v1449, %v1513
          %1515 = vmatmul.f32.gmra.mxu0 %v788
          %v1516 = vpop.f32.mrf.mxu0
          %v1517 = vadd.f32 %v1452, %v1516
          %1518 = vmatmul.f32.gmra.mxu0 %v800
          %v1519 = vpop.f32.mrf.mxu0
          %v1520 = vadd.f32 %v1455, %v1519
          %1521 = vmatmul.f32.gmra.mxu0 %v812
          %v1522 = vpop.f32.mrf.mxu0
          %v1523 = vadd.f32 %v1458, %v1522
          %1524 = vmatmul.f32.gmra.mxu0 %v824
          %v1525 = vpop.f32.mrf.mxu0
          %v1526 = vadd.f32 %v1461, %v1525
          %1527 = vmatmul.f32.gmra.mxu0 %v836
          %v1528 = vpop.f32.mrf.mxu0
          %v1529 = vadd.f32 %v1464, %v1528
          %1530 = vmatmul.f32.gmra.mxu0 %v848
          %v1531 = vpop.f32.mrf.mxu0
          %v1532 = vadd.f32 %v1467, %v1531
          %1533 = vmatmul.f32.gmra.mxu0 %v860
          %v1534 = vpop.f32.mrf.mxu0
          %v1535 = vadd.f32 %v1470, %v1534
          %1536 = vmatmul.f32.gmra.mxu0 %v872
          %v1537 = vpop.f32.mrf.mxu0
          %v1538 = vadd.f32 %v1473, %v1537
          %1539 = vmatmul.f32.gmra.mxu0 %v884
          %v1540 = vpop.f32.mrf.mxu0
          %v1541 = vadd.f32 %v1476, %v1540
          %1542 = vmatmul.f32.gmra.mxu0 %v896
          %v1543 = vpop.f32.mrf.mxu0
          %v1544 = vadd.f32 %v1479, %v1543
          %1545 = vmatmul.f32.gmra.mxu0 %v908
          %v1546 = vpop.f32.mrf.mxu0
          %v1547 = vadd.f32 %v1482, %v1546
          %1548 = vmatmul.f32.gmra.mxu0 %v920
          %v1549 = vpop.f32.mrf.mxu0
          %v1550 = vadd.f32 %v1485, %v1549
          %1551 = vmatmul.f32.gmra.mxu0 %v932
          %v1552 = vpop.f32.mrf.mxu0
          %v1553 = vadd.f32 %v1488, %v1552
          %1554 = vmatmul.f32.gmra.mxu0 %v944
          %v1555 = vpop.f32.mrf.mxu0
          %v1556 = vadd.f32 %v1491, %v1555
          %1557 = vmatmul.f32.gmra.mxu0 %v956
          %v1558 = vpop.f32.mrf.mxu0
          %v1559 = vadd.f32 %v1494, %v1558
          %1560 = vdwg.mxu0
          %1561 = vmatpush.msra.mxu0 %v1074
          %1562 = vmatpush.msra.mxu0 %v1073
          %1563 = vmatpush.msra.mxu0 %v1072
          %1564 = vmatpush.msra.mxu0 %v1071
          %1565 = vmatpush.msra.mxu0 %v1070
          %1566 = vmatpush.msra.mxu0 %v1069
          %1567 = vmatpush.msra.mxu0 %v1068
          %1568 = vmatpush.msra.mxu0 %v1067
          %1569 = vmatpush.msra.mxu0 %v1066
          %1570 = vmatpush.msra.mxu0 %v1065
          %1571 = vmatpush.msra.mxu0 %v1064
          %1572 = vmatpush.msra.mxu0 %v1063
          %1573 = vmatpush.msra.mxu0 %v1062
          %1574 = vmatpush.msra.mxu0 %v1061
          %1575 = vmatpush.msra.mxu0 %v1060
          %1576 = vmatpush.msra.mxu0 %v1059
          %1577 = vmatmul.f32.gmra.mxu0 %v777
          %v1578 = vpop.f32.mrf.mxu0
          %v1579 = vadd.f32 %v1514, %v1578
          %1580 = vmatmul.f32.gmra.mxu0 %v789
          %v1581 = vpop.f32.mrf.mxu0
          %v1582 = vadd.f32 %v1517, %v1581
          %1583 = vmatmul.f32.gmra.mxu0 %v801
          %v1584 = vpop.f32.mrf.mxu0
          %v1585 = vadd.f32 %v1520, %v1584
          %1586 = vmatmul.f32.gmra.mxu0 %v813
          %v1587 = vpop.f32.mrf.mxu0
          %v1588 = vadd.f32 %v1523, %v1587
          %1589 = vmatmul.f32.gmra.mxu0 %v825
          %v1590 = vpop.f32.mrf.mxu0
          %v1591 = vadd.f32 %v1526, %v1590
          %1592 = vmatmul.f32.gmra.mxu0 %v837
          %v1593 = vpop.f32.mrf.mxu0
          %v1594 = vadd.f32 %v1529, %v1593
          %1595 = vmatmul.f32.gmra.mxu0 %v849
          %v1596 = vpop.f32.mrf.mxu0
          %v1597 = vadd.f32 %v1532, %v1596
          %1598 = vmatmul.f32.gmra.mxu0 %v861
          %v1599 = vpop.f32.mrf.mxu0
          %v1600 = vadd.f32 %v1535, %v1599
          %1601 = vmatmul.f32.gmra.mxu0 %v873
          %v1602 = vpop.f32.mrf.mxu0
          %v1603 = vadd.f32 %v1538, %v1602
          %1604 = vmatmul.f32.gmra.mxu0 %v885
          %v1605 = vpop.f32.mrf.mxu0
          %v1606 = vadd.f32 %v1541, %v1605
          %1607 = vmatmul.f32.gmra.mxu0 %v897
          %v1608 = vpop.f32.mrf.mxu0
          %v1609 = vadd.f32 %v1544, %v1608
          %1610 = vmatmul.f32.gmra.mxu0 %v909
          %v1611 = vpop.f32.mrf.mxu0
          %v1612 = vadd.f32 %v1547, %v1611
          %1613 = vmatmul.f32.gmra.mxu0 %v921
          %v1614 = vpop.f32.mrf.mxu0
          %v1615 = vadd.f32 %v1550, %v1614
          %1616 = vmatmul.f32.gmra.mxu0 %v933
          %v1617 = vpop.f32.mrf.mxu0
          %v1618 = vadd.f32 %v1553, %v1617
          %1619 = vmatmul.f32.gmra.mxu0 %v945
          %v1620 = vpop.f32.mrf.mxu0
          %v1621 = vadd.f32 %v1556, %v1620
          %1622 = vmatmul.f32.gmra.mxu0 %v957
          %v1623 = vpop.f32.mrf.mxu0
          %v1624 = vadd.f32 %v1559, %v1623
          %1625 = vdwg.mxu0
          %1626 = vmatpush.msra.mxu0 %v1090
          %1627 = vmatpush.msra.mxu0 %v1089
          %1628 = vmatpush.msra.mxu0 %v1088
          %1629 = vmatpush.msra.mxu0 %v1087
          %1630 = vmatpush.msra.mxu0 %v1086
          %1631 = vmatpush.msra.mxu0 %v1085
          %1632 = vmatpush.msra.mxu0 %v1084
          %1633 = vmatpush.msra.mxu0 %v1083
          %1634 = vmatpush.msra.mxu0 %v1082
          %1635 = vmatpush.msra.mxu0 %v1081
          %1636 = vmatpush.msra.mxu0 %v1080
          %1637 = vmatpush.msra.mxu0 %v1079
          %1638 = vmatpush.msra.mxu0 %v1078
          %1639 = vmatpush.msra.mxu0 %v1077
          %1640 = vmatpush.msra.mxu0 %v1076
          %1641 = vmatpush.msra.mxu0 %v1075
          %1642 = vmatmul.f32.gmra.mxu0 %v778
          %v1643 = vpop.f32.mrf.mxu0
          %v1644 = vadd.f32 %v1579, %v1643
          %1645 = vmatmul.f32.gmra.mxu0 %v790
          %v1646 = vpop.f32.mrf.mxu0
          %v1647 = vadd.f32 %v1582, %v1646
          %1648 = vmatmul.f32.gmra.mxu0 %v802
          %v1649 = vpop.f32.mrf.mxu0
          %v1650 = vadd.f32 %v1585, %v1649
          %1651 = vmatmul.f32.gmra.mxu0 %v814
          %v1652 = vpop.f32.mrf.mxu0
          %v1653 = vadd.f32 %v1588, %v1652
          %1654 = vmatmul.f32.gmra.mxu0 %v826
          %v1655 = vpop.f32.mrf.mxu0
          %v1656 = vadd.f32 %v1591, %v1655
          %1657 = vmatmul.f32.gmra.mxu0 %v838
          %v1658 = vpop.f32.mrf.mxu0
          %v1659 = vadd.f32 %v1594, %v1658
          %1660 = vmatmul.f32.gmra.mxu0 %v850
          %v1661 = vpop.f32.mrf.mxu0
          %v1662 = vadd.f32 %v1597, %v1661
          %1663 = vmatmul.f32.gmra.mxu0 %v862
          %v1664 = vpop.f32.mrf.mxu0
          %v1665 = vadd.f32 %v1600, %v1664
          %1666 = vmatmul.f32.gmra.mxu0 %v874
          %v1667 = vpop.f32.mrf.mxu0
          %v1668 = vadd.f32 %v1603, %v1667
          %1669 = vmatmul.f32.gmra.mxu0 %v886
          %v1670 = vpop.f32.mrf.mxu0
          %v1671 = vadd.f32 %v1606, %v1670
          %1672 = vmatmul.f32.gmra.mxu0 %v898
          %v1673 = vpop.f32.mrf.mxu0
          %v1674 = vadd.f32 %v1609, %v1673
          %1675 = vmatmul.f32.gmra.mxu0 %v910
          %v1676 = vpop.f32.mrf.mxu0
          %v1677 = vadd.f32 %v1612, %v1676
          %1678 = vmatmul.f32.gmra.mxu0 %v922
          %v1679 = vpop.f32.mrf.mxu0
          %v1680 = vadd.f32 %v1615, %v1679
          %1681 = vmatmul.f32.gmra.mxu0 %v934
          %v1682 = vpop.f32.mrf.mxu0
          %v1683 = vadd.f32 %v1618, %v1682
          %1684 = vmatmul.f32.gmra.mxu0 %v946
          %v1685 = vpop.f32.mrf.mxu0
          %v1686 = vadd.f32 %v1621, %v1685
          %1687 = vmatmul.f32.gmra.mxu0 %v958
          %v1688 = vpop.f32.mrf.mxu0
          %v1689 = vadd.f32 %v1624, %v1688
          %1690 = vdwg.mxu0
          %1691 = vmatpush.msra.mxu0 %v1106
          %1692 = vmatpush.msra.mxu0 %v1105
          %1693 = vmatpush.msra.mxu0 %v1104
          %1694 = vmatpush.msra.mxu0 %v1103
          %1695 = vmatpush.msra.mxu0 %v1102
          %1696 = vmatpush.msra.mxu0 %v1101
          %1697 = vmatpush.msra.mxu0 %v1100
          %1698 = vmatpush.msra.mxu0 %v1099
          %1699 = vmatpush.msra.mxu0 %v1098
          %1700 = vmatpush.msra.mxu0 %v1097
          %1701 = vmatpush.msra.mxu0 %v1096
          %1702 = vmatpush.msra.mxu0 %v1095
          %1703 = vmatpush.msra.mxu0 %v1094
          %1704 = vmatpush.msra.mxu0 %v1093
          %1705 = vmatpush.msra.mxu0 %v1092
          %1706 = vmatpush.msra.mxu0 %v1091
          %1707 = vmatmul.f32.gmra.mxu0 %v779
          %v1708 = vpop.f32.mrf.mxu0
          %v1709 = vadd.f32 %v1644, %v1708
          %1710 = vmatmul.f32.gmra.mxu0 %v791
          %v1711 = vpop.f32.mrf.mxu0
          %v1712 = vadd.f32 %v1647, %v1711
          %1713 = vmatmul.f32.gmra.mxu0 %v803
          %v1714 = vpop.f32.mrf.mxu0
          %v1715 = vadd.f32 %v1650, %v1714
          %1716 = vmatmul.f32.gmra.mxu0 %v815
          %v1717 = vpop.f32.mrf.mxu0
          %v1718 = vadd.f32 %v1653, %v1717
          %1719 = vmatmul.f32.gmra.mxu0 %v827
          %v1720 = vpop.f32.mrf.mxu0
          %v1721 = vadd.f32 %v1656, %v1720
          %1722 = vmatmul.f32.gmra.mxu0 %v839
          %v1723 = vpop.f32.mrf.mxu0
          %v1724 = vadd.f32 %v1659, %v1723
          %1725 = vmatmul.f32.gmra.mxu0 %v851
          %v1726 = vpop.f32.mrf.mxu0
          %v1727 = vadd.f32 %v1662, %v1726
          %1728 = vmatmul.f32.gmra.mxu0 %v863
          %v1729 = vpop.f32.mrf.mxu0
          %v1730 = vadd.f32 %v1665, %v1729
          %1731 = vmatmul.f32.gmra.mxu0 %v875
          %v1732 = vpop.f32.mrf.mxu0
          %v1733 = vadd.f32 %v1668, %v1732
          %1734 = vmatmul.f32.gmra.mxu0 %v887
          %v1735 = vpop.f32.mrf.mxu0
          %v1736 = vadd.f32 %v1671, %v1735
          %1737 = vmatmul.f32.gmra.mxu0 %v899
          %v1738 = vpop.f32.mrf.mxu0
          %v1739 = vadd.f32 %v1674, %v1738
          %1740 = vmatmul.f32.gmra.mxu0 %v911
          %v1741 = vpop.f32.mrf.mxu0
          %v1742 = vadd.f32 %v1677, %v1741
          %1743 = vmatmul.f32.gmra.mxu0 %v923
          %v1744 = vpop.f32.mrf.mxu0
          %v1745 = vadd.f32 %v1680, %v1744
          %1746 = vmatmul.f32.gmra.mxu0 %v935
          %v1747 = vpop.f32.mrf.mxu0
          %v1748 = vadd.f32 %v1683, %v1747
          %1749 = vmatmul.f32.gmra.mxu0 %v947
          %v1750 = vpop.f32.mrf.mxu0
          %v1751 = vadd.f32 %v1686, %v1750
          %1752 = vmatmul.f32.gmra.mxu0 %v959
          %v1753 = vpop.f32.mrf.mxu0
          %v1754 = vadd.f32 %v1689, %v1753
          %1755 = vdwg.mxu0
          %1756 = vmatpush.msra.mxu0 %v1122
          %1757 = vmatpush.msra.mxu0 %v1121
          %1758 = vmatpush.msra.mxu0 %v1120
          %1759 = vmatpush.msra.mxu0 %v1119
          %1760 = vmatpush.msra.mxu0 %v1118
          %1761 = vmatpush.msra.mxu0 %v1117
          %1762 = vmatpush.msra.mxu0 %v1116
          %1763 = vmatpush.msra.mxu0 %v1115
          %1764 = vmatpush.msra.mxu0 %v1114
          %1765 = vmatpush.msra.mxu0 %v1113
          %1766 = vmatpush.msra.mxu0 %v1112
          %1767 = vmatpush.msra.mxu0 %v1111
          %1768 = vmatpush.msra.mxu0 %v1110
          %1769 = vmatpush.msra.mxu0 %v1109
          %1770 = vmatpush.msra.mxu0 %v1108
          %1771 = vmatpush.msra.mxu0 %v1107
          %1772 = vmatmul.f32.gmra.mxu0 %v780
          %v1773 = vpop.f32.mrf.mxu0
          %v1774 = vadd.f32 %v1709, %v1773
          %1775 = vmatmul.f32.gmra.mxu0 %v792
          %v1776 = vpop.f32.mrf.mxu0
          %v1777 = vadd.f32 %v1712, %v1776
          %1778 = vmatmul.f32.gmra.mxu0 %v804
          %v1779 = vpop.f32.mrf.mxu0
          %v1780 = vadd.f32 %v1715, %v1779
          %1781 = vmatmul.f32.gmra.mxu0 %v816
          %v1782 = vpop.f32.mrf.mxu0
          %v1783 = vadd.f32 %v1718, %v1782
          %1784 = vmatmul.f32.gmra.mxu0 %v828
          %v1785 = vpop.f32.mrf.mxu0
          %v1786 = vadd.f32 %v1721, %v1785
          %1787 = vmatmul.f32.gmra.mxu0 %v840
          %v1788 = vpop.f32.mrf.mxu0
          %v1789 = vadd.f32 %v1724, %v1788
          %1790 = vmatmul.f32.gmra.mxu0 %v852
          %v1791 = vpop.f32.mrf.mxu0
          %v1792 = vadd.f32 %v1727, %v1791
          %1793 = vmatmul.f32.gmra.mxu0 %v864
          %v1794 = vpop.f32.mrf.mxu0
          %v1795 = vadd.f32 %v1730, %v1794
          %1796 = vmatmul.f32.gmra.mxu0 %v876
          %v1797 = vpop.f32.mrf.mxu0
          %v1798 = vadd.f32 %v1733, %v1797
          %1799 = vmatmul.f32.gmra.mxu0 %v888
          %v1800 = vpop.f32.mrf.mxu0
          %v1801 = vadd.f32 %v1736, %v1800
          %1802 = vmatmul.f32.gmra.mxu0 %v900
          %v1803 = vpop.f32.mrf.mxu0
          %v1804 = vadd.f32 %v1739, %v1803
          %1805 = vmatmul.f32.gmra.mxu0 %v912
          %v1806 = vpop.f32.mrf.mxu0
          %v1807 = vadd.f32 %v1742, %v1806
          %1808 = vmatmul.f32.gmra.mxu0 %v924
          %v1809 = vpop.f32.mrf.mxu0
          %v1810 = vadd.f32 %v1745, %v1809
          %1811 = vmatmul.f32.gmra.mxu0 %v936
          %v1812 = vpop.f32.mrf.mxu0
          %v1813 = vadd.f32 %v1748, %v1812
          %1814 = vmatmul.f32.gmra.mxu0 %v948
          %v1815 = vpop.f32.mrf.mxu0
          %v1816 = vadd.f32 %v1751, %v1815
          %1817 = vmatmul.f32.gmra.mxu0 %v960
          %v1818 = vpop.f32.mrf.mxu0
          %v1819 = vadd.f32 %v1754, %v1818
          %1820 = vdwg.mxu0
          %1821 = vmatpush.msra.mxu0 %v1138
          %1822 = vmatpush.msra.mxu0 %v1137
          %1823 = vmatpush.msra.mxu0 %v1136
          %1824 = vmatpush.msra.mxu0 %v1135
          %1825 = vmatpush.msra.mxu0 %v1134
          %1826 = vmatpush.msra.mxu0 %v1133
          %1827 = vmatpush.msra.mxu0 %v1132
          %1828 = vmatpush.msra.mxu0 %v1131
          %1829 = vmatpush.msra.mxu0 %v1130
          %1830 = vmatpush.msra.mxu0 %v1129
          %1831 = vmatpush.msra.mxu0 %v1128
          %1832 = vmatpush.msra.mxu0 %v1127
          %1833 = vmatpush.msra.mxu0 %v1126
          %1834 = vmatpush.msra.mxu0 %v1125
          %1835 = vmatpush.msra.mxu0 %v1124
          %1836 = vmatpush.msra.mxu0 %v1123
          %1837 = vmatmul.f32.gmra.mxu0 %v781
          %v1838 = vpop.f32.mrf.mxu0
          %v1839 = vadd.f32 %v1774, %v1838
          %1840 = vmatmul.f32.gmra.mxu0 %v793
          %v1841 = vpop.f32.mrf.mxu0
          %v1842 = vadd.f32 %v1777, %v1841
          %1843 = vmatmul.f32.gmra.mxu0 %v805
          %v1844 = vpop.f32.mrf.mxu0
          %v1845 = vadd.f32 %v1780, %v1844
          %1846 = vmatmul.f32.gmra.mxu0 %v817
          %v1847 = vpop.f32.mrf.mxu0
          %v1848 = vadd.f32 %v1783, %v1847
          %1849 = vmatmul.f32.gmra.mxu0 %v829
          %v1850 = vpop.f32.mrf.mxu0
          %v1851 = vadd.f32 %v1786, %v1850
          %1852 = vmatmul.f32.gmra.mxu0 %v841
          %v1853 = vpop.f32.mrf.mxu0
          %v1854 = vadd.f32 %v1789, %v1853
          %1855 = vmatmul.f32.gmra.mxu0 %v853
          %v1856 = vpop.f32.mrf.mxu0
          %v1857 = vadd.f32 %v1792, %v1856
          %1858 = vmatmul.f32.gmra.mxu0 %v865
          %v1859 = vpop.f32.mrf.mxu0
          %v1860 = vadd.f32 %v1795, %v1859
          %1861 = vmatmul.f32.gmra.mxu0 %v877
          %v1862 = vpop.f32.mrf.mxu0
          %v1863 = vadd.f32 %v1798, %v1862
          %1864 = vmatmul.f32.gmra.mxu0 %v889
          %v1865 = vpop.f32.mrf.mxu0
          %v1866 = vadd.f32 %v1801, %v1865
          %1867 = vmatmul.f32.gmra.mxu0 %v901
          %v1868 = vpop.f32.mrf.mxu0
          %v1869 = vadd.f32 %v1804, %v1868
          %1870 = vmatmul.f32.gmra.mxu0 %v913
          %v1871 = vpop.f32.mrf.mxu0
          %v1872 = vadd.f32 %v1807, %v1871
          %1873 = vmatmul.f32.gmra.mxu0 %v925
          %v1874 = vpop.f32.mrf.mxu0
          %v1875 = vadd.f32 %v1810, %v1874
          %1876 = vmatmul.f32.gmra.mxu0 %v937
          %v1877 = vpop.f32.mrf.mxu0
          %v1878 = vadd.f32 %v1813, %v1877
          %1879 = vmatmul.f32.gmra.mxu0 %v949
          %v1880 = vpop.f32.mrf.mxu0
          %v1881 = vadd.f32 %v1816, %v1880
          %1882 = vmatmul.f32.gmra.mxu0 %v961
          %v1883 = vpop.f32.mrf.mxu0
          %v1884 = vadd.f32 %v1819, %v1883
          %1885 = vdwg.mxu0
          %1886 = vmatpush.msra.mxu0 %v1154
          %1887 = vmatpush.msra.mxu0 %v1153
          %1888 = vmatpush.msra.mxu0 %v1152
          %1889 = vmatpush.msra.mxu0 %v1151
          %1890 = vmatpush.msra.mxu0 %v1150
          %1891 = vmatpush.msra.mxu0 %v1149
          %1892 = vmatpush.msra.mxu0 %v1148
          %1893 = vmatpush.msra.mxu0 %v1147
          %1894 = vmatpush.msra.mxu0 %v1146
          %1895 = vmatpush.msra.mxu0 %v1145
          %1896 = vmatpush.msra.mxu0 %v1144
          %1897 = vmatpush.msra.mxu0 %v1143
          %1898 = vmatpush.msra.mxu0 %v1142
          %1899 = vmatpush.msra.mxu0 %v1141
          %1900 = vmatpush.msra.mxu0 %v1140
          %1901 = vmatpush.msra.mxu0 %v1139
          %1902 = vmatmul.f32.gmra.mxu0 %v782
          %v1903 = vpop.f32.mrf.mxu0
          %v1904 = vadd.f32 %v1839, %v1903
          %1905 = vmatmul.f32.gmra.mxu0 %v794
          %v1906 = vpop.f32.mrf.mxu0
          %v1907 = vadd.f32 %v1842, %v1906
          %1908 = vmatmul.f32.gmra.mxu0 %v806
          %v1909 = vpop.f32.mrf.mxu0
          %v1910 = vadd.f32 %v1845, %v1909
          %1911 = vmatmul.f32.gmra.mxu0 %v818
          %v1912 = vpop.f32.mrf.mxu0
          %v1913 = vadd.f32 %v1848, %v1912
          %1914 = vmatmul.f32.gmra.mxu0 %v830
          %v1915 = vpop.f32.mrf.mxu0
          %v1916 = vadd.f32 %v1851, %v1915
          %1917 = vmatmul.f32.gmra.mxu0 %v842
          %v1918 = vpop.f32.mrf.mxu0
          %v1919 = vadd.f32 %v1854, %v1918
          %1920 = vmatmul.f32.gmra.mxu0 %v854
          %v1921 = vpop.f32.mrf.mxu0
          %v1922 = vadd.f32 %v1857, %v1921
          %1923 = vmatmul.f32.gmra.mxu0 %v866
          %v1924 = vpop.f32.mrf.mxu0
          %v1925 = vadd.f32 %v1860, %v1924
          %1926 = vmatmul.f32.gmra.mxu0 %v878
          %v1927 = vpop.f32.mrf.mxu0
          %v1928 = vadd.f32 %v1863, %v1927
          %1929 = vmatmul.f32.gmra.mxu0 %v890
          %v1930 = vpop.f32.mrf.mxu0
          %v1931 = vadd.f32 %v1866, %v1930
          %1932 = vmatmul.f32.gmra.mxu0 %v902
          %v1933 = vpop.f32.mrf.mxu0
          %v1934 = vadd.f32 %v1869, %v1933
          %1935 = vmatmul.f32.gmra.mxu0 %v914
          %v1936 = vpop.f32.mrf.mxu0
          %v1937 = vadd.f32 %v1872, %v1936
          %1938 = vmatmul.f32.gmra.mxu0 %v926
          %v1939 = vpop.f32.mrf.mxu0
          %v1940 = vadd.f32 %v1875, %v1939
          %1941 = vmatmul.f32.gmra.mxu0 %v938
          %v1942 = vpop.f32.mrf.mxu0
          %v1943 = vadd.f32 %v1878, %v1942
          %1944 = vmatmul.f32.gmra.mxu0 %v950
          %v1945 = vpop.f32.mrf.mxu0
          %v1946 = vadd.f32 %v1881, %v1945
          %1947 = vmatmul.f32.gmra.mxu0 %v962
          %v1948 = vpop.f32.mrf.mxu0
          %v1949 = vadd.f32 %v1884, %v1948
          %1950 = vdwg.mxu0
          %vm1951 = vcmask 523264
          %1952 = vst.msk [vmem:[#allocation2] sm:$0xff] %vm1951, %v1904
          %1953 = vst.msk [vmem:[#allocation2 + $0x8] sm:$0xff] %vm1951, %v1907
          %1954 = vst.msk [vmem:[#allocation2 + $0x10] sm:$0xff] %vm1951, %v1910
          %1955 = vst.msk [vmem:[#allocation2 + $0x18] sm:$0xff] %vm1951, %v1913
          %1956 = vst.msk [vmem:[#allocation2 + $0x20] sm:$0xff] %vm1951, %v1916
          %1957 = vst.msk [vmem:[#allocation2 + $0x28] sm:$0xff] %vm1951, %v1919
          %1958 = vst.msk [vmem:[#allocation2 + $0x30] sm:$0xff] %vm1951, %v1922
          %1959 = vst.msk [vmem:[#allocation2 + $0x38] sm:$0xff] %vm1951, %v1925
          %1960 = vst.msk [vmem:[#allocation2 + $0x40] sm:$0xff] %vm1951, %v1928
          %1961 = vst.msk [vmem:[#allocation2 + $0x48] sm:$0xff] %vm1951, %v1931
          %1962 = vst.msk [vmem:[#allocation2 + $0x50] sm:$0xff] %vm1951, %v1934
          %1963 = vst.msk [vmem:[#allocation2 + $0x58] sm:$0xff] %vm1951, %v1937
          %1964 = vst.msk [vmem:[#allocation2 + $0x60] sm:$0xff] %vm1951, %v1940
          %1965 = vst.msk [vmem:[#allocation2 + $0x68] sm:$0xff] %vm1951, %v1943
          %1966 = vst.msk [vmem:[#allocation2 + $0x70] sm:$0xff] %vm1951, %v1946
          %1967 = vst.msk [vmem:[#allocation2 + $0x78] sm:$0xff] %vm1951, %v1949
        $region100: #{tpu_custom_call.1} parent=95 // pred_fallthru
          _
        %v1968 = vld [vmem:[#allocation2] sm:$0xff]
        %v1969 = vld [vmem:[#allocation2 + $0x8] sm:$0xff]
        %v1970 = vld [vmem:[#allocation2 + $0x10] sm:$0xff]
        %v1971 = vld [vmem:[#allocation2 + $0x18] sm:$0xff]
        %v1972 = vld [vmem:[#allocation2 + $0x20] sm:$0xff]
        %v1973 = vld [vmem:[#allocation2 + $0x28] sm:$0xff]
        %v1974 = vld [vmem:[#allocation2 + $0x30] sm:$0xff]
        %v1975 = vld [vmem:[#allocation2 + $0x38] sm:$0xff]
        %v1976 = vld [vmem:[#allocation2 + $0x40] sm:$0xff]
        %v1977 = vld [vmem:[#allocation2 + $0x48] sm:$0xff]
        %v1978 = vld [vmem:[#allocation2 + $0x50] sm:$0xff]
        %v1979 = vld [vmem:[#allocation2 + $0x58] sm:$0xff]
        %v1980 = vld [vmem:[#allocation2 + $0x60] sm:$0xff]
        %v1981 = vld [vmem:[#allocation2 + $0x68] sm:$0xff]
        %v1982 = vld [vmem:[#allocation2 + $0x70] sm:$0xff]
        %v1983 = vld [vmem:[#allocation2 + $0x78] sm:$0xff]
        %v1984 = vld [vmem:[%s723] sm:$0x1]
        %v1985 = vld [vmem:[%s726] sm:$0x1]
        %v1986 = vld [vmem:[%s731] sm:$0xff]
        %v1987 = vld [vmem:[%s731 + $0x8] sm:$0xff]
        %v1988 = vld [vmem:[%s731 + $0x10] sm:$0xff]
        %v1989 = vld [vmem:[%s731 + $0x18] sm:$0xff]
        %v1990 = vld [vmem:[%s731 + $0x20] sm:$0xff]
        %v1991 = vld [vmem:[%s731 + $0x28] sm:$0xff]
        %v1992 = vld [vmem:[%s731 + $0x30] sm:$0xff]
        %v1993 = vld [vmem:[%s731 + $0x38] sm:$0xff]
        %v1994 = vld [vmem:[%s731 + $0x40] sm:$0xff]
        %v1995 = vld [vmem:[%s731 + $0x48] sm:$0xff]
        %v1996 = vld [vmem:[%s731 + $0x50] sm:$0xff]
        %v1997 = vld [vmem:[%s731 + $0x58] sm:$0xff]
        %v1998 = vld [vmem:[%s731 + $0x60] sm:$0xff]
        %v1999 = vld [vmem:[%s731 + $0x68] sm:$0xff]
        %v2000 = vld [vmem:[%s731 + $0x70] sm:$0xff]
        %v2001 = vld [vmem:[%s731 + $0x78] sm:$0xff]
        %v2002 = vld [vmem:[%s735] sm:$0x3]
        %v2003 = vld [vmem:[%s740] sm:$0xff]
        %v2004 = vld [vmem:[%s740 + $0x8] sm:$0xff]
        %v2005 = vld [vmem:[%s740 + $0x10] sm:$0xff]
        %v2006 = vld [vmem:[%s740 + $0x18] sm:$0xff]
        %v2007 = vld [vmem:[%s740 + $0x20] sm:$0xff]
        %v2008 = vld [vmem:[%s740 + $0x28] sm:$0xff]
        %v2009 = vld [vmem:[%s740 + $0x30] sm:$0xff]
        %v2010 = vld [vmem:[%s740 + $0x38] sm:$0xff]
        %v2011 = vld [vmem:[%s743] sm:$0x1]
        %vm2012 = vcmask 523264
        %v2013 = vsel %vm2012, %v1968, 0.0
        %2014 = vadd.xlane.f32.xlu0 %v2013
        %v2015 = vpop.xlane.xlu0 %2014
        %v2016 = vsel %vm2012, %v1969, 0.0
        %2017 = vadd.xlane.f32.xlu0 %v2016
        %v2018 = vpop.xlane.xlu0 %2017
        %v2019 = vsel %vm2012, %v1970, 0.0
        %2020 = vadd.xlane.f32.xlu0 %v2019
        %v2021 = vpop.xlane.xlu0 %2020
        %v2022 = vsel %vm2012, %v1971, 0.0
        %2023 = vadd.xlane.f32.xlu0 %v2022
        %v2024 = vpop.xlane.xlu0 %2023
        %v2025 = vsel %vm2012, %v1972, 0.0
        %2026 = vadd.xlane.f32.xlu0 %v2025
        %v2027 = vpop.xlane.xlu0 %2026
        %v2028 = vsel %vm2012, %v1973, 0.0
        %2029 = vadd.xlane.f32.xlu0 %v2028
        %v2030 = vpop.xlane.xlu0 %2029
        %v2031 = vsel %vm2012, %v1974, 0.0
        %2032 = vadd.xlane.f32.xlu0 %v2031
        %v2033 = vpop.xlane.xlu0 %2032
        %v2034 = vsel %vm2012, %v1975, 0.0
        %2035 = vadd.xlane.f32.xlu0 %v2034
        %v2036 = vpop.xlane.xlu0 %2035
        %v2037 = vsel %vm2012, %v1976, 0.0
        %2038 = vadd.xlane.f32.xlu0 %v2037
        %v2039 = vpop.xlane.xlu0 %2038
        %v2040 = vsel %vm2012, %v1977, 0.0
        %2041 = vadd.xlane.f32.xlu0 %v2040
        %v2042 = vpop.xlane.xlu0 %2041
        %v2043 = vsel %vm2012, %v1978, 0.0
        %2044 = vadd.xlane.f32.xlu0 %v2043
        %v2045 = vpop.xlane.xlu0 %2044
        %v2046 = vsel %vm2012, %v1979, 0.0
        %2047 = vadd.xlane.f32.xlu0 %v2046
        %v2048 = vpop.xlane.xlu0 %2047
        %v2049 = vsel %vm2012, %v1980, 0.0
        %2050 = vadd.xlane.f32.xlu0 %v2049
        %v2051 = vpop.xlane.xlu0 %2050
        %v2052 = vsel %vm2012, %v1981, 0.0
        %2053 = vadd.xlane.f32.xlu0 %v2052
        %v2054 = vpop.xlane.xlu0 %2053
        %v2055 = vsel %vm2012, %v1982, 0.0
        %2056 = vadd.xlane.f32.xlu0 %v2055
        %v2057 = vpop.xlane.xlu0 %2056
        %v2058 = vsel %vm2012, %v1983, 0.0
        %2059 = vadd.xlane.f32.xlu0 %v2058
        %v2060 = vpop.xlane.xlu0 %2059
        %v2061 = vrcp.pop 64.0
        %v2062 = vmul.f32 64.0, %v2061
        %v2063 = vsub.f32 1.0, %v2062
        %v2064 = vmul.f32 %v2061, %v2063
        %v2065 = vadd.f32 %v2061, %v2064
        %vm2066 = vweird.f32 %v2061
        %v2067 = vsel %vm2066, %v2061, %v2065
        %v2068 = vmul.f32 %v2015, %v2067
        %v2069 = vmul.f32 %v2018, %v2067
        %v2070 = vmul.f32 %v2021, %v2067
        %v2071 = vmul.f32 %v2024, %v2067
        %v2072 = vmul.f32 %v2027, %v2067
        %v2073 = vmul.f32 %v2030, %v2067
        %v2074 = vmul.f32 %v2033, %v2067
        %v2075 = vmul.f32 %v2036, %v2067
        %v2076 = vmul.f32 %v2039, %v2067
        %v2077 = vmul.f32 %v2042, %v2067
        %v2078 = vmul.f32 %v2045, %v2067
        %v2079 = vmul.f32 %v2048, %v2067
        %v2080 = vmul.f32 %v2051, %v2067
        %v2081 = vmul.f32 %v2054, %v2067
        %v2082 = vmul.f32 %v2057, %v2067
        %v2083 = vmul.f32 %v2060, %v2067
        %v2084 = vsub.f32 %v1968, %v2068
        %v2085 = vsub.f32 %v1969, %v2069
        %v2086 = vsub.f32 %v1970, %v2070
        %v2087 = vsub.f32 %v1971, %v2071
        %v2088 = vsub.f32 %v1972, %v2072
        %v2089 = vsub.f32 %v1973, %v2073
        %v2090 = vsub.f32 %v1974, %v2074
        %v2091 = vsub.f32 %v1975, %v2075
        %v2092 = vsub.f32 %v1976, %v2076
        %v2093 = vsub.f32 %v1977, %v2077
        %v2094 = vsub.f32 %v1978, %v2078
        %v2095 = vsub.f32 %v1979, %v2079
        %v2096 = vsub.f32 %v1980, %v2080
        %v2097 = vsub.f32 %v1981, %v2081
        %v2098 = vsub.f32 %v1982, %v2082
        %v2099 = vsub.f32 %v1983, %v2083
        %v2100 = vmul.f32 %v2084, %v2084
        %v2101 = vmul.f32 %v2085, %v2085
        %v2102 = vmul.f32 %v2086, %v2086
        %v2103 = vmul.f32 %v2087, %v2087
        %v2104 = vmul.f32 %v2088, %v2088
        %v2105 = vmul.f32 %v2089, %v2089
        %v2106 = vmul.f32 %v2090, %v2090
        %v2107 = vmul.f32 %v2091, %v2091
        %v2108 = vmul.f32 %v2092, %v2092
        %v2109 = vmul.f32 %v2093, %v2093
        %v2110 = vmul.f32 %v2094, %v2094
        %v2111 = vmul.f32 %v2095, %v2095
        %v2112 = vmul.f32 %v2096, %v2096
        %v2113 = vmul.f32 %v2097, %v2097
        %v2114 = vmul.f32 %v2098, %v2098
        %v2115 = vmul.f32 %v2099, %v2099
        %v2116 = vsel %vm2012, %v2100, 0.0
        %2117 = vadd.xlane.f32.xlu0 %v2116
        %v2118 = vpop.xlane.xlu0 %2117
        %v2119 = vsel %vm2012, %v2101, 0.0
        %2120 = vadd.xlane.f32.xlu0 %v2119
        %v2121 = vpop.xlane.xlu0 %2120
        %v2122 = vsel %vm2012, %v2102, 0.0
        %2123 = vadd.xlane.f32.xlu0 %v2122
        %v2124 = vpop.xlane.xlu0 %2123
        %v2125 = vsel %vm2012, %v2103, 0.0
        %2126 = vadd.xlane.f32.xlu0 %v2125
        %v2127 = vpop.xlane.xlu0 %2126
        %v2128 = vsel %vm2012, %v2104, 0.0
        %2129 = vadd.xlane.f32.xlu0 %v2128
        %v2130 = vpop.xlane.xlu0 %2129
        %v2131 = vsel %vm2012, %v2105, 0.0
        %2132 = vadd.xlane.f32.xlu0 %v2131
        %v2133 = vpop.xlane.xlu0 %2132
        %v2134 = vsel %vm2012, %v2106, 0.0
        %2135 = vadd.xlane.f32.xlu0 %v2134
        %v2136 = vpop.xlane.xlu0 %2135
        %v2137 = vsel %vm2012, %v2107, 0.0
        %2138 = vadd.xlane.f32.xlu0 %v2137
        %v2139 = vpop.xlane.xlu0 %2138
        %v2140 = vsel %vm2012, %v2108, 0.0
        %2141 = vadd.xlane.f32.xlu0 %v2140
        %v2142 = vpop.xlane.xlu0 %2141
        %v2143 = vsel %vm2012, %v2109, 0.0
        %2144 = vadd.xlane.f32.xlu0 %v2143
        %v2145 = vpop.xlane.xlu0 %2144
        %v2146 = vsel %vm2012, %v2110, 0.0
        %2147 = vadd.xlane.f32.xlu0 %v2146
        %v2148 = vpop.xlane.xlu0 %2147
        %v2149 = vsel %vm2012, %v2111, 0.0
        %2150 = vadd.xlane.f32.xlu0 %v2149
        %v2151 = vpop.xlane.xlu0 %2150
        %v2152 = vsel %vm2012, %v2112, 0.0
        %2153 = vadd.xlane.f32.xlu0 %v2152
        %v2154 = vpop.xlane.xlu0 %2153
        %v2155 = vsel %vm2012, %v2113, 0.0
        %2156 = vadd.xlane.f32.xlu0 %v2155
        %v2157 = vpop.xlane.xlu0 %2156
        %v2158 = vsel %vm2012, %v2114, 0.0
        %2159 = vadd.xlane.f32.xlu0 %v2158
        %v2160 = vpop.xlane.xlu0 %2159
        %v2161 = vsel %vm2012, %v2115, 0.0
        %2162 = vadd.xlane.f32.xlu0 %v2161
        %v2163 = vpop.xlane.xlu0 %2162
        %v2164 = vmul.f32 %v2118, %v2067
        %v2165 = vmul.f32 %v2121, %v2067
        %v2166 = vmul.f32 %v2124, %v2067
        %v2167 = vmul.f32 %v2127, %v2067
        %v2168 = vmul.f32 %v2130, %v2067
        %v2169 = vmul.f32 %v2133, %v2067
        %v2170 = vmul.f32 %v2136, %v2067
        %v2171 = vmul.f32 %v2139, %v2067
        %v2172 = vmul.f32 %v2142, %v2067
        %v2173 = vmul.f32 %v2145, %v2067
        %v2174 = vmul.f32 %v2148, %v2067
        %v2175 = vmul.f32 %v2151, %v2067
        %v2176 = vmul.f32 %v2154, %v2067
        %v2177 = vmul.f32 %v2157, %v2067
        %v2178 = vmul.f32 %v2160, %v2067
        %v2179 = vmul.f32 %v2163, %v2067
        %v2180 = vadd.f32 %v2164, 1e-06
        %v2181 = vadd.f32 %v2165, 1e-06
        %v2182 = vadd.f32 %v2166, 1e-06
        %v2183 = vadd.f32 %v2167, 1e-06
        %v2184 = vadd.f32 %v2168, 1e-06
        %v2185 = vadd.f32 %v2169, 1e-06
        %v2186 = vadd.f32 %v2170, 1e-06
        %v2187 = vadd.f32 %v2171, 1e-06
        %v2188 = vadd.f32 %v2172, 1e-06
        %v2189 = vadd.f32 %v2173, 1e-06
        %v2190 = vadd.f32 %v2174, 1e-06
        %v2191 = vadd.f32 %v2175, 1e-06
        %v2192 = vadd.f32 %v2176, 1e-06
        %v2193 = vadd.f32 %v2177, 1e-06
        %v2194 = vadd.f32 %v2178, 1e-06
        %v2195 = vadd.f32 %v2179, 1e-06
        %v2196 = vrsqrt.pop %v2180
        %v2197 = vmul.f32 %v2196, %v2180
        %v2198 = vmul.f32 %v2197, %v2196
        %v2199 = vmul.f32 0.5, %v2198
        %v2200 = vsub.f32 1.5, %v2199
        %v2201 = vmul.f32 %v2196, %v2200
        %vm2202 = vweird.f32 %v2180
        %vm2203 = vweird.f32 %v2196
        %vm2204 = vmor %vm2202, %vm2203
        %v2205 = vsel %vm2204, %v2196, %v2201
        %v2206 = vrsqrt.pop %v2181
        %v2207 = vmul.f32 %v2206, %v2181
        %v2208 = vmul.f32 %v2207, %v2206
        %v2209 = vmul.f32 0.5, %v2208
        %v2210 = vsub.f32 1.5, %v2209
        %v2211 = vmul.f32 %v2206, %v2210
        %vm2212 = vweird.f32 %v2181
        %vm2213 = vweird.f32 %v2206
        %vm2214 = vmor %vm2212, %vm2213
        %v2215 = vsel %vm2214, %v2206, %v2211
        %v2216 = vrsqrt.pop %v2182
        %v2217 = vmul.f32 %v2216, %v2182
        %v2218 = vmul.f32 %v2217, %v2216
        %v2219 = vmul.f32 0.5, %v2218
        %v2220 = vsub.f32 1.5, %v2219
        %v2221 = vmul.f32 %v2216, %v2220
        %vm2222 = vweird.f32 %v2182
        %vm2223 = vweird.f32 %v2216
        %vm2224 = vmor %vm2222, %vm2223
        %v2225 = vsel %vm2224, %v2216, %v2221
        %v2226 = vrsqrt.pop %v2183
        %v2227 = vmul.f32 %v2226, %v2183
        %v2228 = vmul.f32 %v2227, %v2226
        %v2229 = vmul.f32 0.5, %v2228
        %v2230 = vsub.f32 1.5, %v2229
        %v2231 = vmul.f32 %v2226, %v2230
        %vm2232 = vweird.f32 %v2183
        %vm2233 = vweird.f32 %v2226
        %vm2234 = vmor %vm2232, %vm2233
        %v2235 = vsel %vm2234, %v2226, %v2231
        %v2236 = vrsqrt.pop %v2184
        %v2237 = vmul.f32 %v2236, %v2184
        %v2238 = vmul.f32 %v2237, %v2236
        %v2239 = vmul.f32 0.5, %v2238
        %v2240 = vsub.f32 1.5, %v2239
        %v2241 = vmul.f32 %v2236, %v2240
        %vm2242 = vweird.f32 %v2184
        %vm2243 = vweird.f32 %v2236
        %vm2244 = vmor %vm2242, %vm2243
        %v2245 = vsel %vm2244, %v2236, %v2241
        %v2246 = vrsqrt.pop %v2185
        %v2247 = vmul.f32 %v2246, %v2185
        %v2248 = vmul.f32 %v2247, %v2246
        %v2249 = vmul.f32 0.5, %v2248
        %v2250 = vsub.f32 1.5, %v2249
        %v2251 = vmul.f32 %v2246, %v2250
        %vm2252 = vweird.f32 %v2185
        %vm2253 = vweird.f32 %v2246
        %vm2254 = vmor %vm2252, %vm2253
        %v2255 = vsel %vm2254, %v2246, %v2251
        %v2256 = vrsqrt.pop %v2186
        %v2257 = vmul.f32 %v2256, %v2186
        %v2258 = vmul.f32 %v2257, %v2256
        %v2259 = vmul.f32 0.5, %v2258
        %v2260 = vsub.f32 1.5, %v2259
        %v2261 = vmul.f32 %v2256, %v2260
        %vm2262 = vweird.f32 %v2186
        %vm2263 = vweird.f32 %v2256
        %vm2264 = vmor %vm2262, %vm2263
        %v2265 = vsel %vm2264, %v2256, %v2261
        %v2266 = vrsqrt.pop %v2187
        %v2267 = vmul.f32 %v2266, %v2187
        %v2268 = vmul.f32 %v2267, %v2266
        %v2269 = vmul.f32 0.5, %v2268
        %v2270 = vsub.f32 1.5, %v2269
        %v2271 = vmul.f32 %v2266, %v2270
        %vm2272 = vweird.f32 %v2187
        %vm2273 = vweird.f32 %v2266
        %vm2274 = vmor %vm2272, %vm2273
        %v2275 = vsel %vm2274, %v2266, %v2271
        %v2276 = vrsqrt.pop %v2188
        %v2277 = vmul.f32 %v2276, %v2188
        %v2278 = vmul.f32 %v2277, %v2276
        %v2279 = vmul.f32 0.5, %v2278
        %v2280 = vsub.f32 1.5, %v2279
        %v2281 = vmul.f32 %v2276, %v2280
        %vm2282 = vweird.f32 %v2188
        %vm2283 = vweird.f32 %v2276
        %vm2284 = vmor %vm2282, %vm2283
        %v2285 = vsel %vm2284, %v2276, %v2281
        %v2286 = vrsqrt.pop %v2189
        %v2287 = vmul.f32 %v2286, %v2189
        %v2288 = vmul.f32 %v2287, %v2286
        %v2289 = vmul.f32 0.5, %v2288
        %v2290 = vsub.f32 1.5, %v2289
        %v2291 = vmul.f32 %v2286, %v2290
        %vm2292 = vweird.f32 %v2189
        %vm2293 = vweird.f32 %v2286
        %vm2294 = vmor %vm2292, %vm2293
        %v2295 = vsel %vm2294, %v2286, %v2291
        %v2296 = vrsqrt.pop %v2190
        %v2297 = vmul.f32 %v2296, %v2190
        %v2298 = vmul.f32 %v2297, %v2296
        %v2299 = vmul.f32 0.5, %v2298
        %v2300 = vsub.f32 1.5, %v2299
        %v2301 = vmul.f32 %v2296, %v2300
        %vm2302 = vweird.f32 %v2190
        %vm2303 = vweird.f32 %v2296
        %vm2304 = vmor %vm2302, %vm2303
        %v2305 = vsel %vm2304, %v2296, %v2301
        %v2306 = vrsqrt.pop %v2191
        %v2307 = vmul.f32 %v2306, %v2191
        %v2308 = vmul.f32 %v2307, %v2306
        %v2309 = vmul.f32 0.5, %v2308
        %v2310 = vsub.f32 1.5, %v2309
        %v2311 = vmul.f32 %v2306, %v2310
        %vm2312 = vweird.f32 %v2191
        %vm2313 = vweird.f32 %v2306
        %vm2314 = vmor %vm2312, %vm2313
        %v2315 = vsel %vm2314, %v2306, %v2311
        %v2316 = vrsqrt.pop %v2192
        %v2317 = vmul.f32 %v2316, %v2192
        %v2318 = vmul.f32 %v2317, %v2316
        %v2319 = vmul.f32 0.5, %v2318
        %v2320 = vsub.f32 1.5, %v2319
        %v2321 = vmul.f32 %v2316, %v2320
        %vm2322 = vweird.f32 %v2192
        %vm2323 = vweird.f32 %v2316
        %vm2324 = vmor %vm2322, %vm2323
        %v2325 = vsel %vm2324, %v2316, %v2321
        %v2326 = vrsqrt.pop %v2193
        %v2327 = vmul.f32 %v2326, %v2193
        %v2328 = vmul.f32 %v2327, %v2326
        %v2329 = vmul.f32 0.5, %v2328
        %v2330 = vsub.f32 1.5, %v2329
        %v2331 = vmul.f32 %v2326, %v2330
        %vm2332 = vweird.f32 %v2193
        %vm2333 = vweird.f32 %v2326
        %vm2334 = vmor %vm2332, %vm2333
        %v2335 = vsel %vm2334, %v2326, %v2331
        %v2336 = vrsqrt.pop %v2194
        %v2337 = vmul.f32 %v2336, %v2194
        %v2338 = vmul.f32 %v2337, %v2336
        %v2339 = vmul.f32 0.5, %v2338
        %v2340 = vsub.f32 1.5, %v2339
        %v2341 = vmul.f32 %v2336, %v2340
        %vm2342 = vweird.f32 %v2194
        %vm2343 = vweird.f32 %v2336
        %vm2344 = vmor %vm2342, %vm2343
        %v2345 = vsel %vm2344, %v2336, %v2341
        %v2346 = vrsqrt.pop %v2195
        %v2347 = vmul.f32 %v2346, %v2195
        %v2348 = vmul.f32 %v2347, %v2346
        %v2349 = vmul.f32 0.5, %v2348
        %v2350 = vsub.f32 1.5, %v2349
        %v2351 = vmul.f32 %v2346, %v2350
        %vm2352 = vweird.f32 %v2195
        %vm2353 = vweird.f32 %v2346
        %vm2354 = vmor %vm2352, %vm2353
        %v2355 = vsel %vm2354, %v2346, %v2351
        %v2356 = vmul.f32 %v2084, %v2205
        %v2357 = vmul.f32 %v2085, %v2215
        %v2358 = vmul.f32 %v2086, %v2225
        %v2359 = vmul.f32 %v2087, %v2235
        %v2360 = vmul.f32 %v2088, %v2245
        %v2361 = vmul.f32 %v2089, %v2255
        %v2362 = vmul.f32 %v2090, %v2265
        %v2363 = vmul.f32 %v2091, %v2275
        %v2364 = vmul.f32 %v2092, %v2285
        %v2365 = vmul.f32 %v2093, %v2295
        %v2366 = vmul.f32 %v2094, %v2305
        %v2367 = vmul.f32 %v2095, %v2315
        %v2368 = vmul.f32 %v2096, %v2325
        %v2369 = vmul.f32 %v2097, %v2335
        %v2370 = vmul.f32 %v2098, %v2345
        %v2371 = vmul.f32 %v2099, %v2355
        %v2373 = vperm.slane %v1984, 0
        %v2375 = vmul.f32 %v2356, %v2373
        %v2376 = vmul.f32 %v2357, %v2373
        %v2377 = vmul.f32 %v2358, %v2373
        %v2378 = vmul.f32 %v2359, %v2373
        %v2379 = vmul.f32 %v2360, %v2373
        %v2380 = vmul.f32 %v2361, %v2373
        %v2381 = vmul.f32 %v2362, %v2373
        %v2382 = vmul.f32 %v2363, %v2373
        %v2383 = vmul.f32 %v2364, %v2373
        %v2384 = vmul.f32 %v2365, %v2373
        %v2385 = vmul.f32 %v2366, %v2373
        %v2386 = vmul.f32 %v2367, %v2373
        %v2387 = vmul.f32 %v2368, %v2373
        %v2388 = vmul.f32 %v2369, %v2373
        %v2389 = vmul.f32 %v2370, %v2373
        %v2390 = vmul.f32 %v2371, %v2373
        %v2392 = vperm.slane %v1985, 0
        %v2394 = vadd.f32 %v2375, %v2392
        %v2395 = vadd.f32 %v2376, %v2392
        %v2396 = vadd.f32 %v2377, %v2392
        %v2397 = vadd.f32 %v2378, %v2392
        %v2398 = vadd.f32 %v2379, %v2392
        %v2399 = vadd.f32 %v2380, %v2392
        %v2400 = vadd.f32 %v2381, %v2392
        %v2401 = vadd.f32 %v2382, %v2392
        %v2402 = vadd.f32 %v2383, %v2392
        %v2403 = vadd.f32 %v2384, %v2392
        %v2404 = vadd.f32 %v2385, %v2392
        %v2405 = vadd.f32 %v2386, %v2392
        %v2406 = vadd.f32 %v2387, %v2392
        %v2407 = vadd.f32 %v2388, %v2392
        %v2408 = vadd.f32 %v2389, %v2392
        %v2409 = vadd.f32 %v2390, %v2392
        %v2411 = vperm.slane %v2002, 0
        %v2412 = vperm.slane %v2002, 1
        %v2416 = vsel %vm2012, %v2394, 0
        %v2419 = vsel %vm2012, %v2395, 0
        %v2422 = vsel %vm2012, %v2396, 0
        %v2425 = vsel %vm2012, %v2397, 0
        %v2428 = vsel %vm2012, %v2398, 0
        %v2431 = vsel %vm2012, %v2399, 0
        %v2434 = vsel %vm2012, %v2400, 0
        %v2437 = vsel %vm2012, %v2401, 0
        %v2440 = vsel %vm2012, %v2402, 0
        %v2443 = vsel %vm2012, %v2403, 0
        %v2446 = vsel %vm2012, %v2404, 0
        %v2449 = vsel %vm2012, %v2405, 0
        %v2452 = vsel %vm2012, %v2406, 0
        %v2455 = vsel %vm2012, %v2407, 0
        %v2458 = vsel %vm2012, %v2408, 0
        %v2461 = vsel %vm2012, %v2409, 0
        %2463 = vmatpush.msra.mxu0 0.0
        %2464 = vmatpush.msra.mxu0 0.0
        %2465 = vmatpush.msra.mxu0 0.0
        %2466 = vmatpush.msra.mxu0 0.0
        %2467 = vmatpush.msra.mxu0 0.0
        %2468 = vmatpush.msra.mxu0 0.0
        %2469 = vmatpush.msra.mxu0 0.0
        %2470 = vmatpush.msra.mxu0 0.0
        %2471 = vmatpush.msra.mxu0 %v2000
        %2472 = vmatpush.msra.mxu0 %v1998
        %2473 = vmatpush.msra.mxu0 %v1996
        %2474 = vmatpush.msra.mxu0 %v1994
        %2475 = vmatpush.msra.mxu0 %v1992
        %2476 = vmatpush.msra.mxu0 %v1990
        %2477 = vmatpush.msra.mxu0 %v1988
        %2478 = vmatpush.msra.mxu0 %v1986
        %2479 = vmatmul.f32.gmra.mxu0 %v2416
        %v2480 = vpop.f32.mrf.mxu0
        %v2481 = vadd.f32 %v2411, %v2480
        %2482 = vmatmul.f32.gmra.mxu0 %v2419
        %v2483 = vpop.f32.mrf.mxu0
        %v2484 = vadd.f32 %v2411, %v2483
        %2485 = vmatmul.f32.gmra.mxu0 %v2422
        %v2486 = vpop.f32.mrf.mxu0
        %v2487 = vadd.f32 %v2411, %v2486
        %2488 = vmatmul.f32.gmra.mxu0 %v2425
        %v2489 = vpop.f32.mrf.mxu0
        %v2490 = vadd.f32 %v2411, %v2489
        %2491 = vmatmul.f32.gmra.mxu0 %v2428
        %v2492 = vpop.f32.mrf.mxu0
        %v2493 = vadd.f32 %v2411, %v2492
        %2494 = vmatmul.f32.gmra.mxu0 %v2431
        %v2495 = vpop.f32.mrf.mxu0
        %v2496 = vadd.f32 %v2411, %v2495
        %2497 = vmatmul.f32.gmra.mxu0 %v2434
        %v2498 = vpop.f32.mrf.mxu0
        %v2499 = vadd.f32 %v2411, %v2498
        %2500 = vmatmul.f32.gmra.mxu0 %v2437
        %v2501 = vpop.f32.mrf.mxu0
        %v2502 = vadd.f32 %v2411, %v2501
        %2503 = vmatmul.f32.gmra.mxu0 %v2440
        %v2504 = vpop.f32.mrf.mxu0
        %v2505 = vadd.f32 %v2411, %v2504
        %2506 = vmatmul.f32.gmra.mxu0 %v2443
        %v2507 = vpop.f32.mrf.mxu0
        %v2508 = vadd.f32 %v2411, %v2507
        %2509 = vmatmul.f32.gmra.mxu0 %v2446
        %v2510 = vpop.f32.mrf.mxu0
        %v2511 = vadd.f32 %v2411, %v2510
        %2512 = vmatmul.f32.gmra.mxu0 %v2449
        %v2513 = vpop.f32.mrf.mxu0
        %v2514 = vadd.f32 %v2411, %v2513
        %2515 = vmatmul.f32.gmra.mxu0 %v2452
        %v2516 = vpop.f32.mrf.mxu0
        %v2517 = vadd.f32 %v2411, %v2516
        %2518 = vmatmul.f32.gmra.mxu0 %v2455
        %v2519 = vpop.f32.mrf.mxu0
        %v2520 = vadd.f32 %v2411, %v2519
        %2521 = vmatmul.f32.gmra.mxu0 %v2458
        %v2522 = vpop.f32.mrf.mxu0
        %v2523 = vadd.f32 %v2411, %v2522
        %2524 = vmatmul.f32.gmra.mxu0 %v2461
        %v2525 = vpop.f32.mrf.mxu0
        %v2526 = vadd.f32 %v2411, %v2525
        %2527 = vdwg.mxu0
        %2528 = vmatpush.msra.mxu0 0.0
        %2529 = vmatpush.msra.mxu0 0.0
        %2530 = vmatpush.msra.mxu0 0.0
        %2531 = vmatpush.msra.mxu0 0.0
        %2532 = vmatpush.msra.mxu0 0.0
        %2533 = vmatpush.msra.mxu0 0.0
        %2534 = vmatpush.msra.mxu0 0.0
        %2535 = vmatpush.msra.mxu0 0.0
        %2536 = vmatpush.msra.mxu0 %v2001
        %2537 = vmatpush.msra.mxu0 %v1999
        %2538 = vmatpush.msra.mxu0 %v1997
        %2539 = vmatpush.msra.mxu0 %v1995
        %2540 = vmatpush.msra.mxu0 %v1993
        %2541 = vmatpush.msra.mxu0 %v1991
        %2542 = vmatpush.msra.mxu0 %v1989
        %2543 = vmatpush.msra.mxu0 %v1987
        %2544 = vmatmul.f32.gmra.mxu0 %v2416
        %v2545 = vpop.f32.mrf.mxu0
        %v2546 = vadd.f32 %v2412, %v2545
        %2547 = vmatmul.f32.gmra.mxu0 %v2419
        %v2548 = vpop.f32.mrf.mxu0
        %v2549 = vadd.f32 %v2412, %v2548
        %2550 = vmatmul.f32.gmra.mxu0 %v2422
        %v2551 = vpop.f32.mrf.mxu0
        %v2552 = vadd.f32 %v2412, %v2551
        %2553 = vmatmul.f32.gmra.mxu0 %v2425
        %v2554 = vpop.f32.mrf.mxu0
        %v2555 = vadd.f32 %v2412, %v2554
        %2556 = vmatmul.f32.gmra.mxu0 %v2428
        %v2557 = vpop.f32.mrf.mxu0
        %v2558 = vadd.f32 %v2412, %v2557
        %2559 = vmatmul.f32.gmra.mxu0 %v2431
        %v2560 = vpop.f32.mrf.mxu0
        %v2561 = vadd.f32 %v2412, %v2560
        %2562 = vmatmul.f32.gmra.mxu0 %v2434
        %v2563 = vpop.f32.mrf.mxu0
        %v2564 = vadd.f32 %v2412, %v2563
        %2565 = vmatmul.f32.gmra.mxu0 %v2437
        %v2566 = vpop.f32.mrf.mxu0
        %v2567 = vadd.f32 %v2412, %v2566
        %2568 = vmatmul.f32.gmra.mxu0 %v2440
        %v2569 = vpop.f32.mrf.mxu0
        %v2570 = vadd.f32 %v2412, %v2569
        %2571 = vmatmul.f32.gmra.mxu0 %v2443
        %v2572 = vpop.f32.mrf.mxu0
        %v2573 = vadd.f32 %v2412, %v2572
        %2574 = vmatmul.f32.gmra.mxu0 %v2446
        %v2575 = vpop.f32.mrf.mxu0
        %v2576 = vadd.f32 %v2412, %v2575
        %2577 = vmatmul.f32.gmra.mxu0 %v2449
        %v2578 = vpop.f32.mrf.mxu0
        %v2579 = vadd.f32 %v2412, %v2578
        %2580 = vmatmul.f32.gmra.mxu0 %v2452
        %v2581 = vpop.f32.mrf.mxu0
        %v2582 = vadd.f32 %v2412, %v2581
        %2583 = vmatmul.f32.gmra.mxu0 %v2455
        %v2584 = vpop.f32.mrf.mxu0
        %v2585 = vadd.f32 %v2412, %v2584
        %2586 = vmatmul.f32.gmra.mxu0 %v2458
        %v2587 = vpop.f32.mrf.mxu0
        %v2588 = vadd.f32 %v2412, %v2587
        %2589 = vmatmul.f32.gmra.mxu0 %v2461
        %v2590 = vpop.f32.mrf.mxu0
        %v2591 = vadd.f32 %v2412, %v2590
        %2592 = vdwg.mxu0
        %2601 = vrot.lane.b32.xlu0 %v2481, 64
        %v2602 = vpop.permute.xlu0 %2601
        %2603 = vrot.lane.b32.xlu0 %v2484, 64
        %v2604 = vpop.permute.xlu0 %2603
        %2605 = vrot.lane.b32.xlu0 %v2487, 64
        %v2606 = vpop.permute.xlu0 %2605
        %2607 = vrot.lane.b32.xlu0 %v2490, 64
        %v2608 = vpop.permute.xlu0 %2607
        %2609 = vrot.lane.b32.xlu0 %v2493, 64
        %v2610 = vpop.permute.xlu0 %2609
        %2611 = vrot.lane.b32.xlu0 %v2496, 64
        %v2612 = vpop.permute.xlu0 %2611
        %2613 = vrot.lane.b32.xlu0 %v2499, 64
        %v2614 = vpop.permute.xlu0 %2613
        %2615 = vrot.lane.b32.xlu0 %v2502, 64
        %v2616 = vpop.permute.xlu0 %2615
        %vm2617 = vcmask 261120
        %v2618 = vsel %vm2617, %v2481, 0
        %v2620 = vsel %vm2617, %v2484, 0
        %v2622 = vsel %vm2617, %v2487, 0
        %v2624 = vsel %vm2617, %v2490, 0
        %v2626 = vsel %vm2617, %v2493, 0
        %v2628 = vsel %vm2617, %v2496, 0
        %v2630 = vsel %vm2617, %v2499, 0
        %v2632 = vsel %vm2617, %v2502, 0
        %v2634 = vsel %vm2617, %v2602, 0
        %v2636 = vsel %vm2617, %v2604, 0
        %v2638 = vsel %vm2617, %v2606, 0
        %v2640 = vsel %vm2617, %v2608, 0
        %v2642 = vsel %vm2617, %v2610, 0
        %v2644 = vsel %vm2617, %v2612, 0
        %v2646 = vsel %vm2617, %v2614, 0
        %v2648 = vsel %vm2617, %v2616, 0
        %2650 = vmatpush.xpose.msra.mxu0 0.0
        %2651 = vmatpush.xpose.msra.mxu0 0.0
        %2652 = vmatpush.xpose.msra.mxu0 0.0
        %2653 = vmatpush.xpose.msra.mxu0 0.0
        %2654 = vmatpush.xpose.msra.mxu0 0.0
        %2655 = vmatpush.xpose.msra.mxu0 0.0
        %2656 = vmatpush.xpose.msra.mxu0 0.0
        %2657 = vmatpush.xpose.msra.mxu0 0.0
        %2658 = vmatpush.xpose.msra.mxu0 %v2648
        %2659 = vmatpush.xpose.msra.mxu0 %v2646
        %2660 = vmatpush.xpose.msra.mxu0 %v2644
        %2661 = vmatpush.xpose.msra.mxu0 %v2642
        %2662 = vmatpush.xpose.msra.mxu0 %v2640
        %2663 = vmatpush.xpose.msra.mxu0 %v2638
        %2664 = vmatpush.xpose.msra.mxu0 %v2636
        %2665 = vmatpush.xpose.msra.mxu0 %v2634
        %2666 = vmatmul.f32.gmra.mxu0 %v2618
        %v2667 = vpop.f32.mrf.mxu0
        %v2668 = vadd.f32 0.0, %v2667
        %2669 = vmatmul.f32.gmra.mxu0 %v2620
        %v2670 = vpop.f32.mrf.mxu0
        %v2671 = vadd.f32 0.0, %v2670
        %2672 = vmatmul.f32.gmra.mxu0 %v2622
        %v2673 = vpop.f32.mrf.mxu0
        %v2674 = vadd.f32 0.0, %v2673
        %2675 = vmatmul.f32.gmra.mxu0 %v2624
        %v2676 = vpop.f32.mrf.mxu0
        %v2677 = vadd.f32 0.0, %v2676
        %2678 = vmatmul.f32.gmra.mxu0 %v2626
        %v2679 = vpop.f32.mrf.mxu0
        %v2680 = vadd.f32 0.0, %v2679
        %2681 = vmatmul.f32.gmra.mxu0 %v2628
        %v2682 = vpop.f32.mrf.mxu0
        %v2683 = vadd.f32 0.0, %v2682
        %2684 = vmatmul.f32.gmra.mxu0 %v2630
        %v2685 = vpop.f32.mrf.mxu0
        %v2686 = vadd.f32 0.0, %v2685
        %2687 = vmatmul.f32.gmra.mxu0 %v2632
        %v2688 = vpop.f32.mrf.mxu0
        %v2689 = vadd.f32 0.0, %v2688
        %2690 = vdwg.mxu0
        %2699 = vrot.lane.b32.xlu0 %v2505, 64
        %v2700 = vpop.permute.xlu0 %2699
        %2701 = vrot.lane.b32.xlu0 %v2508, 64
        %v2702 = vpop.permute.xlu0 %2701
        %2703 = vrot.lane.b32.xlu0 %v2511, 64
        %v2704 = vpop.permute.xlu0 %2703
        %2705 = vrot.lane.b32.xlu0 %v2514, 64
        %v2706 = vpop.permute.xlu0 %2705
        %2707 = vrot.lane.b32.xlu0 %v2517, 64
        %v2708 = vpop.permute.xlu0 %2707
        %2709 = vrot.lane.b32.xlu0 %v2520, 64
        %v2710 = vpop.permute.xlu0 %2709
        %2711 = vrot.lane.b32.xlu0 %v2523, 64
        %v2712 = vpop.permute.xlu0 %2711
        %2713 = vrot.lane.b32.xlu0 %v2526, 64
        %v2714 = vpop.permute.xlu0 %2713
        %v2715 = vsel %vm2617, %v2505, 0
        %v2717 = vsel %vm2617, %v2508, 0
        %v2719 = vsel %vm2617, %v2511, 0
        %v2721 = vsel %vm2617, %v2514, 0
        %v2723 = vsel %vm2617, %v2517, 0
        %v2725 = vsel %vm2617, %v2520, 0
        %v2727 = vsel %vm2617, %v2523, 0
        %v2729 = vsel %vm2617, %v2526, 0
        %v2731 = vsel %vm2617, %v2700, 0
        %v2733 = vsel %vm2617, %v2702, 0
        %v2735 = vsel %vm2617, %v2704, 0
        %v2737 = vsel %vm2617, %v2706, 0
        %v2739 = vsel %vm2617, %v2708, 0
        %v2741 = vsel %vm2617, %v2710, 0
        %v2743 = vsel %vm2617, %v2712, 0
        %v2745 = vsel %vm2617, %v2714, 0
        %2747 = vmatpush.xpose.msra.mxu0 0.0
        %2748 = vmatpush.xpose.msra.mxu0 0.0
        %2749 = vmatpush.xpose.msra.mxu0 0.0
        %2750 = vmatpush.xpose.msra.mxu0 0.0
        %2751 = vmatpush.xpose.msra.mxu0 0.0
        %2752 = vmatpush.xpose.msra.mxu0 0.0
        %2753 = vmatpush.xpose.msra.mxu0 0.0
        %2754 = vmatpush.xpose.msra.mxu0 0.0
        %2755 = vmatpush.xpose.msra.mxu0 %v2745
        %2756 = vmatpush.xpose.msra.mxu0 %v2743
        %2757 = vmatpush.xpose.msra.mxu0 %v2741
        %2758 = vmatpush.xpose.msra.mxu0 %v2739
        %2759 = vmatpush.xpose.msra.mxu0 %v2737
        %2760 = vmatpush.xpose.msra.mxu0 %v2735
        %2761 = vmatpush.xpose.msra.mxu0 %v2733
        %2762 = vmatpush.xpose.msra.mxu0 %v2731
        %2763 = vmatmul.f32.gmra.mxu0 %v2715
        %v2764 = vpop.f32.mrf.mxu0
        %v2765 = vadd.f32 0.0, %v2764
        %2766 = vmatmul.f32.gmra.mxu0 %v2717
        %v2767 = vpop.f32.mrf.mxu0
        %v2768 = vadd.f32 0.0, %v2767
        %2769 = vmatmul.f32.gmra.mxu0 %v2719
        %v2770 = vpop.f32.mrf.mxu0
        %v2771 = vadd.f32 0.0, %v2770
        %2772 = vmatmul.f32.gmra.mxu0 %v2721
        %v2773 = vpop.f32.mrf.mxu0
        %v2774 = vadd.f32 0.0, %v2773
        %2775 = vmatmul.f32.gmra.mxu0 %v2723
        %v2776 = vpop.f32.mrf.mxu0
        %v2777 = vadd.f32 0.0, %v2776
        %2778 = vmatmul.f32.gmra.mxu0 %v2725
        %v2779 = vpop.f32.mrf.mxu0
        %v2780 = vadd.f32 0.0, %v2779
        %2781 = vmatmul.f32.gmra.mxu0 %v2727
        %v2782 = vpop.f32.mrf.mxu0
        %v2783 = vadd.f32 0.0, %v2782
        %2784 = vmatmul.f32.gmra.mxu0 %v2729
        %v2785 = vpop.f32.mrf.mxu0
        %v2786 = vadd.f32 0.0, %v2785
        %2787 = vdwg.mxu0
        %v2788 = vmul.f32 %v2668, 0.17677669
        %v2789 = vmul.f32 %v2671, 0.17677669
        %v2790 = vmul.f32 %v2674, 0.17677669
        %v2791 = vmul.f32 %v2677, 0.17677669
        %v2792 = vmul.f32 %v2680, 0.17677669
        %v2793 = vmul.f32 %v2683, 0.17677669
        %v2794 = vmul.f32 %v2686, 0.17677669
        %v2795 = vmul.f32 %v2689, 0.17677669
        %v2796 = vmul.f32 %v2765, 0.17677669
        %v2797 = vmul.f32 %v2768, 0.17677669
        %v2798 = vmul.f32 %v2771, 0.17677669
        %v2799 = vmul.f32 %v2774, 0.17677669
        %v2800 = vmul.f32 %v2777, 0.17677669
        %v2801 = vmul.f32 %v2780, 0.17677669
        %v2802 = vmul.f32 %v2783, 0.17677669
        %v2803 = vmul.f32 %v2786, 0.17677669
        %v2804 = vsel %vm2012, %v2788, -inf
        %2805 = vmax.xlane.f32.xlu0 %v2804
        %v2806 = vpop.xlane.xlu0 %2805
        %v2807 = vsel %vm2012, %v2789, -inf
        %2808 = vmax.xlane.f32.xlu0 %v2807
        %v2809 = vpop.xlane.xlu0 %2808
        %v2810 = vsel %vm2012, %v2790, -inf
        %2811 = vmax.xlane.f32.xlu0 %v2810
        %v2812 = vpop.xlane.xlu0 %2811
        %v2813 = vsel %vm2012, %v2791, -inf
        %2814 = vmax.xlane.f32.xlu0 %v2813
        %v2815 = vpop.xlane.xlu0 %2814
        %v2816 = vsel %vm2012, %v2792, -inf
        %2817 = vmax.xlane.f32.xlu0 %v2816
        %v2818 = vpop.xlane.xlu0 %2817
        %v2819 = vsel %vm2012, %v2793, -inf
        %2820 = vmax.xlane.f32.xlu0 %v2819
        %v2821 = vpop.xlane.xlu0 %2820
        %v2822 = vsel %vm2012, %v2794, -inf
        %2823 = vmax.xlane.f32.xlu0 %v2822
        %v2824 = vpop.xlane.xlu0 %2823
        %v2825 = vsel %vm2012, %v2795, -inf
        %2826 = vmax.xlane.f32.xlu0 %v2825
        %v2827 = vpop.xlane.xlu0 %2826
        %v2828 = vsel %vm2012, %v2796, -inf
        %2829 = vmax.xlane.f32.xlu0 %v2828
        %v2830 = vpop.xlane.xlu0 %2829
        %v2831 = vsel %vm2012, %v2797, -inf
        %2832 = vmax.xlane.f32.xlu0 %v2831
        %v2833 = vpop.xlane.xlu0 %2832
        %v2834 = vsel %vm2012, %v2798, -inf
        %2835 = vmax.xlane.f32.xlu0 %v2834
        %v2836 = vpop.xlane.xlu0 %2835
        %v2837 = vsel %vm2012, %v2799, -inf
        %2838 = vmax.xlane.f32.xlu0 %v2837
        %v2839 = vpop.xlane.xlu0 %2838
        %v2840 = vsel %vm2012, %v2800, -inf
        %2841 = vmax.xlane.f32.xlu0 %v2840
        %v2842 = vpop.xlane.xlu0 %2841
        %v2843 = vsel %vm2012, %v2801, -inf
        %2844 = vmax.xlane.f32.xlu0 %v2843
        %v2845 = vpop.xlane.xlu0 %2844
        %v2846 = vsel %vm2012, %v2802, -inf
        %2847 = vmax.xlane.f32.xlu0 %v2846
        %v2848 = vpop.xlane.xlu0 %2847
        %v2849 = vsel %vm2012, %v2803, -inf
        %2850 = vmax.xlane.f32.xlu0 %v2849
        %v2851 = vpop.xlane.xlu0 %2850
        %v2852 = vsub.f32 %v2788, %v2806
        %v2853 = vsub.f32 %v2789, %v2809
        %v2854 = vsub.f32 %v2790, %v2812
        %v2855 = vsub.f32 %v2791, %v2815
        %v2856 = vsub.f32 %v2792, %v2818
        %v2857 = vsub.f32 %v2793, %v2821
        %v2858 = vsub.f32 %v2794, %v2824
        %v2859 = vsub.f32 %v2795, %v2827
        %v2860 = vsub.f32 %v2796, %v2830
        %v2861 = vsub.f32 %v2797, %v2833
        %v2862 = vsub.f32 %v2798, %v2836
        %v2863 = vsub.f32 %v2799, %v2839
        %v2864 = vsub.f32 %v2800, %v2842
        %v2865 = vsub.f32 %v2801, %v2845
        %v2866 = vsub.f32 %v2802, %v2848
        %v2867 = vsub.f32 %v2803, %v2851
        %v2868 = vmul.f32 %v2852, 1.442695
        %v2869 = vpow.pop %v2868
        %v2870 = vmul.f32 %v2853, 1.442695
        %v2871 = vpow.pop %v2870
        %v2872 = vmul.f32 %v2854, 1.442695
        %v2873 = vpow.pop %v2872
        %v2874 = vmul.f32 %v2855, 1.442695
        %v2875 = vpow.pop %v2874
        %v2876 = vmul.f32 %v2856, 1.442695
        %v2877 = vpow.pop %v2876
        %v2878 = vmul.f32 %v2857, 1.442695
        %v2879 = vpow.pop %v2878
        %v2880 = vmul.f32 %v2858, 1.442695
        %v2881 = vpow.pop %v2880
        %v2882 = vmul.f32 %v2859, 1.442695
        %v2883 = vpow.pop %v2882
        %v2884 = vmul.f32 %v2860, 1.442695
        %v2885 = vpow.pop %v2884
        %v2886 = vmul.f32 %v2861, 1.442695
        %v2887 = vpow.pop %v2886
        %v2888 = vmul.f32 %v2862, 1.442695
        %v2889 = vpow.pop %v2888
        %v2890 = vmul.f32 %v2863, 1.442695
        %v2891 = vpow.pop %v2890
        %v2892 = vmul.f32 %v2864, 1.442695
        %v2893 = vpow.pop %v2892
        %v2894 = vmul.f32 %v2865, 1.442695
        %v2895 = vpow.pop %v2894
        %v2896 = vmul.f32 %v2866, 1.442695
        %v2897 = vpow.pop %v2896
        %v2898 = vmul.f32 %v2867, 1.442695
        %v2899 = vpow.pop %v2898
        %v2900 = vsel %vm2012, %v2869, 0.0
        %2901 = vadd.xlane.f32.xlu0 %v2900
        %v2902 = vpop.xlane.xlu0 %2901
        %v2903 = vsel %vm2012, %v2871, 0.0
        %2904 = vadd.xlane.f32.xlu0 %v2903
        %v2905 = vpop.xlane.xlu0 %2904
        %v2906 = vsel %vm2012, %v2873, 0.0
        %2907 = vadd.xlane.f32.xlu0 %v2906
        %v2908 = vpop.xlane.xlu0 %2907
        %v2909 = vsel %vm2012, %v2875, 0.0
        %2910 = vadd.xlane.f32.xlu0 %v2909
        %v2911 = vpop.xlane.xlu0 %2910
        %v2912 = vsel %vm2012, %v2877, 0.0
        %2913 = vadd.xlane.f32.xlu0 %v2912
        %v2914 = vpop.xlane.xlu0 %2913
        %v2915 = vsel %vm2012, %v2879, 0.0
        %2916 = vadd.xlane.f32.xlu0 %v2915
        %v2917 = vpop.xlane.xlu0 %2916
        %v2918 = vsel %vm2012, %v2881, 0.0
        %2919 = vadd.xlane.f32.xlu0 %v2918
        %v2920 = vpop.xlane.xlu0 %2919
        %v2921 = vsel %vm2012, %v2883, 0.0
        %2922 = vadd.xlane.f32.xlu0 %v2921
        %v2923 = vpop.xlane.xlu0 %2922
        %v2924 = vsel %vm2012, %v2885, 0.0
        %2925 = vadd.xlane.f32.xlu0 %v2924
        %v2926 = vpop.xlane.xlu0 %2925
        %v2927 = vsel %vm2012, %v2887, 0.0
        %2928 = vadd.xlane.f32.xlu0 %v2927
        %v2929 = vpop.xlane.xlu0 %2928
        %v2930 = vsel %vm2012, %v2889, 0.0
        %2931 = vadd.xlane.f32.xlu0 %v2930
        %v2932 = vpop.xlane.xlu0 %2931
        %v2933 = vsel %vm2012, %v2891, 0.0
        %2934 = vadd.xlane.f32.xlu0 %v2933
        %v2935 = vpop.xlane.xlu0 %2934
        %v2936 = vsel %vm2012, %v2893, 0.0
        %2937 = vadd.xlane.f32.xlu0 %v2936
        %v2938 = vpop.xlane.xlu0 %2937
        %v2939 = vsel %vm2012, %v2895, 0.0
        %2940 = vadd.xlane.f32.xlu0 %v2939
        %v2941 = vpop.xlane.xlu0 %2940
        %v2942 = vsel %vm2012, %v2897, 0.0
        %2943 = vadd.xlane.f32.xlu0 %v2942
        %v2944 = vpop.xlane.xlu0 %2943
        %v2945 = vsel %vm2012, %v2899, 0.0
        %2946 = vadd.xlane.f32.xlu0 %v2945
        %v2947 = vpop.xlane.xlu0 %2946
        %v2948 = vrcp.pop %v2902
        %v2949 = vrcp.pop %v2905
        %v2950 = vrcp.pop %v2908
        %v2951 = vrcp.pop %v2911
        %v2952 = vrcp.pop %v2914
        %v2953 = vrcp.pop %v2917
        %v2954 = vrcp.pop %v2920
        %v2955 = vrcp.pop %v2923
        %v2956 = vrcp.pop %v2926
        %v2957 = vrcp.pop %v2929
        %v2958 = vrcp.pop %v2932
        %v2959 = vrcp.pop %v2935
        %v2960 = vrcp.pop %v2938
        %v2961 = vrcp.pop %v2941
        %v2962 = vrcp.pop %v2944
        %v2963 = vrcp.pop %v2947
        %v2964 = vmul.f32 %v2869, %v2948
        %v2965 = vmul.f32 %v2871, %v2949
        %v2966 = vmul.f32 %v2873, %v2950
        %v2967 = vmul.f32 %v2875, %v2951
        %v2968 = vmul.f32 %v2877, %v2952
        %v2969 = vmul.f32 %v2879, %v2953
        %v2970 = vmul.f32 %v2881, %v2954
        %v2971 = vmul.f32 %v2883, %v2955
        %v2972 = vmul.f32 %v2885, %v2956
        %v2973 = vmul.f32 %v2887, %v2957
        %v2974 = vmul.f32 %v2889, %v2958
        %v2975 = vmul.f32 %v2891, %v2959
        %v2976 = vmul.f32 %v2893, %v2960
        %v2977 = vmul.f32 %v2895, %v2961
        %v2978 = vmul.f32 %v2897, %v2962
        %v2979 = vmul.f32 %v2899, %v2963
        %v2981 = vsel %vm2012, %v2964, 0
        %v2984 = vsel %vm2012, %v2965, 0
        %v2987 = vsel %vm2012, %v2966, 0
        %v2990 = vsel %vm2012, %v2967, 0
        %v2993 = vsel %vm2012, %v2968, 0
        %v2996 = vsel %vm2012, %v2969, 0
        %v2999 = vsel %vm2012, %v2970, 0
        %v3002 = vsel %vm2012, %v2971, 0
        %3004 = vmatpush.msra.mxu0 0.0
        %3005 = vmatpush.msra.mxu0 0.0
        %3006 = vmatpush.msra.mxu0 0.0
        %3007 = vmatpush.msra.mxu0 0.0
        %3008 = vmatpush.msra.mxu0 0.0
        %3009 = vmatpush.msra.mxu0 0.0
        %3010 = vmatpush.msra.mxu0 0.0
        %3011 = vmatpush.msra.mxu0 0.0
        %3012 = vmatpush.msra.mxu0 %v2567
        %3013 = vmatpush.msra.mxu0 %v2564
        %3014 = vmatpush.msra.mxu0 %v2561
        %3015 = vmatpush.msra.mxu0 %v2558
        %3016 = vmatpush.msra.mxu0 %v2555
        %3017 = vmatpush.msra.mxu0 %v2552
        %3018 = vmatpush.msra.mxu0 %v2549
        %3019 = vmatpush.msra.mxu0 %v2546
        %3020 = vmatmul.f32.gmra.mxu0 %v2981
        %v3021 = vpop.f32.mrf.mxu0
        %v3022 = vadd.f32 0.0, %v3021
        %3023 = vmatmul.f32.gmra.mxu0 %v2984
        %v3024 = vpop.f32.mrf.mxu0
        %v3025 = vadd.f32 0.0, %v3024
        %3026 = vmatmul.f32.gmra.mxu0 %v2987
        %v3027 = vpop.f32.mrf.mxu0
        %v3028 = vadd.f32 0.0, %v3027
        %3029 = vmatmul.f32.gmra.mxu0 %v2990
        %v3030 = vpop.f32.mrf.mxu0
        %v3031 = vadd.f32 0.0, %v3030
        %3032 = vmatmul.f32.gmra.mxu0 %v2993
        %v3033 = vpop.f32.mrf.mxu0
        %v3034 = vadd.f32 0.0, %v3033
        %3035 = vmatmul.f32.gmra.mxu0 %v2996
        %v3036 = vpop.f32.mrf.mxu0
        %v3037 = vadd.f32 0.0, %v3036
        %3038 = vmatmul.f32.gmra.mxu0 %v2999
        %v3039 = vpop.f32.mrf.mxu0
        %v3040 = vadd.f32 0.0, %v3039
        %3041 = vmatmul.f32.gmra.mxu0 %v3002
        %v3042 = vpop.f32.mrf.mxu0
        %v3043 = vadd.f32 0.0, %v3042
        %3044 = vdwg.mxu0
        %v3046 = vsel %vm2012, %v2972, 0
        %v3049 = vsel %vm2012, %v2973, 0
        %v3052 = vsel %vm2012, %v2974, 0
        %v3055 = vsel %vm2012, %v2975, 0
        %v3058 = vsel %vm2012, %v2976, 0
        %v3061 = vsel %vm2012, %v2977, 0
        %v3064 = vsel %vm2012, %v2978, 0
        %v3067 = vsel %vm2012, %v2979, 0
        %3069 = vmatpush.msra.mxu0 0.0
        %3070 = vmatpush.msra.mxu0 0.0
        %3071 = vmatpush.msra.mxu0 0.0
        %3072 = vmatpush.msra.mxu0 0.0
        %3073 = vmatpush.msra.mxu0 0.0
        %3074 = vmatpush.msra.mxu0 0.0
        %3075 = vmatpush.msra.mxu0 0.0
        %3076 = vmatpush.msra.mxu0 0.0
        %3077 = vmatpush.msra.mxu0 %v2591
        %3078 = vmatpush.msra.mxu0 %v2588
        %3079 = vmatpush.msra.mxu0 %v2585
        %3080 = vmatpush.msra.mxu0 %v2582
        %3081 = vmatpush.msra.mxu0 %v2579
        %3082 = vmatpush.msra.mxu0 %v2576
        %3083 = vmatpush.msra.mxu0 %v2573
        %3084 = vmatpush.msra.mxu0 %v2570
        %3085 = vmatmul.f32.gmra.mxu0 %v3046
        %v3086 = vpop.f32.mrf.mxu0
        %v3087 = vadd.f32 0.0, %v3086
        %3088 = vmatmul.f32.gmra.mxu0 %v3049
        %v3089 = vpop.f32.mrf.mxu0
        %v3090 = vadd.f32 0.0, %v3089
        %3091 = vmatmul.f32.gmra.mxu0 %v3052
        %v3092 = vpop.f32.mrf.mxu0
        %v3093 = vadd.f32 0.0, %v3092
        %3094 = vmatmul.f32.gmra.mxu0 %v3055
        %v3095 = vpop.f32.mrf.mxu0
        %v3096 = vadd.f32 0.0, %v3095
        %3097 = vmatmul.f32.gmra.mxu0 %v3058
        %v3098 = vpop.f32.mrf.mxu0
        %v3099 = vadd.f32 0.0, %v3098
        %3100 = vmatmul.f32.gmra.mxu0 %v3061
        %v3101 = vpop.f32.mrf.mxu0
        %v3102 = vadd.f32 0.0, %v3101
        %3103 = vmatmul.f32.gmra.mxu0 %v3064
        %v3104 = vpop.f32.mrf.mxu0
        %v3105 = vadd.f32 0.0, %v3104
        %3106 = vmatmul.f32.gmra.mxu0 %v3067
        %v3107 = vpop.f32.mrf.mxu0
        %v3108 = vadd.f32 0.0, %v3107
        %3109 = vdwg.mxu0
        %3110 = vrot.lane.b32.xlu0 %v2481, 96
        %v3111 = vpop.permute.xlu0 %3110
        %3112 = vrot.lane.b32.xlu0 %v2484, 96
        %v3113 = vpop.permute.xlu0 %3112
        %3114 = vrot.lane.b32.xlu0 %v2487, 96
        %v3115 = vpop.permute.xlu0 %3114
        %3116 = vrot.lane.b32.xlu0 %v2490, 96
        %v3117 = vpop.permute.xlu0 %3116
        %3118 = vrot.lane.b32.xlu0 %v2493, 96
        %v3119 = vpop.permute.xlu0 %3118
        %3120 = vrot.lane.b32.xlu0 %v2496, 96
        %v3121 = vpop.permute.xlu0 %3120
        %3122 = vrot.lane.b32.xlu0 %v2499, 96
        %v3123 = vpop.permute.xlu0 %3122
        %3124 = vrot.lane.b32.xlu0 %v2502, 96
        %v3125 = vpop.permute.xlu0 %3124
        %3126 = vrot.lane.b32.xlu0 %v2481, 32
        %v3127 = vpop.permute.xlu0 %3126
        %3128 = vrot.lane.b32.xlu0 %v2484, 32
        %v3129 = vpop.permute.xlu0 %3128
        %3130 = vrot.lane.b32.xlu0 %v2487, 32
        %v3131 = vpop.permute.xlu0 %3130
        %3132 = vrot.lane.b32.xlu0 %v2490, 32
        %v3133 = vpop.permute.xlu0 %3132
        %3134 = vrot.lane.b32.xlu0 %v2493, 32
        %v3135 = vpop.permute.xlu0 %3134
        %3136 = vrot.lane.b32.xlu0 %v2496, 32
        %v3137 = vpop.permute.xlu0 %3136
        %3138 = vrot.lane.b32.xlu0 %v2499, 32
        %v3139 = vpop.permute.xlu0 %3138
        %3140 = vrot.lane.b32.xlu0 %v2502, 32
        %v3141 = vpop.permute.xlu0 %3140
        %v3142 = vsel %vm2617, %v3111, 0
        %v3144 = vsel %vm2617, %v3113, 0
        %v3146 = vsel %vm2617, %v3115, 0
        %v3148 = vsel %vm2617, %v3117, 0
        %v3150 = vsel %vm2617, %v3119, 0
        %v3152 = vsel %vm2617, %v3121, 0
        %v3154 = vsel %vm2617, %v3123, 0
        %v3156 = vsel %vm2617, %v3125, 0
        %v3158 = vsel %vm2617, %v3127, 0
        %v3160 = vsel %vm2617, %v3129, 0
        %v3162 = vsel %vm2617, %v3131, 0
        %v3164 = vsel %vm2617, %v3133, 0
        %v3166 = vsel %vm2617, %v3135, 0
        %v3168 = vsel %vm2617, %v3137, 0
        %v3170 = vsel %vm2617, %v3139, 0
        %v3172 = vsel %vm2617, %v3141, 0
        %3174 = vmatpush.xpose.msra.mxu0 0.0
        %3175 = vmatpush.xpose.msra.mxu0 0.0
        %3176 = vmatpush.xpose.msra.mxu0 0.0
        %3177 = vmatpush.xpose.msra.mxu0 0.0
        %3178 = vmatpush.xpose.msra.mxu0 0.0
        %3179 = vmatpush.xpose.msra.mxu0 0.0
        %3180 = vmatpush.xpose.msra.mxu0 0.0
        %3181 = vmatpush.xpose.msra.mxu0 0.0
        %3182 = vmatpush.xpose.msra.mxu0 %v3172
        %3183 = vmatpush.xpose.msra.mxu0 %v3170
        %3184 = vmatpush.xpose.msra.mxu0 %v3168
        %3185 = vmatpush.xpose.msra.mxu0 %v3166
        %3186 = vmatpush.xpose.msra.mxu0 %v3164
        %3187 = vmatpush.xpose.msra.mxu0 %v3162
        %3188 = vmatpush.xpose.msra.mxu0 %v3160
        %3189 = vmatpush.xpose.msra.mxu0 %v3158
        %3190 = vmatmul.f32.gmra.mxu0 %v3142
        %v3191 = vpop.f32.mrf.mxu0
        %v3192 = vadd.f32 0.0, %v3191
        %3193 = vmatmul.f32.gmra.mxu0 %v3144
        %v3194 = vpop.f32.mrf.mxu0
        %v3195 = vadd.f32 0.0, %v3194
        %3196 = vmatmul.f32.gmra.mxu0 %v3146
        %v3197 = vpop.f32.mrf.mxu0
        %v3198 = vadd.f32 0.0, %v3197
        %3199 = vmatmul.f32.gmra.mxu0 %v3148
        %v3200 = vpop.f32.mrf.mxu0
        %v3201 = vadd.f32 0.0, %v3200
        %3202 = vmatmul.f32.gmra.mxu0 %v3150
        %v3203 = vpop.f32.mrf.mxu0
        %v3204 = vadd.f32 0.0, %v3203
        %3205 = vmatmul.f32.gmra.mxu0 %v3152
        %v3206 = vpop.f32.mrf.mxu0
        %v3207 = vadd.f32 0.0, %v3206
        %3208 = vmatmul.f32.gmra.mxu0 %v3154
        %v3209 = vpop.f32.mrf.mxu0
        %v3210 = vadd.f32 0.0, %v3209
        %3211 = vmatmul.f32.gmra.mxu0 %v3156
        %v3212 = vpop.f32.mrf.mxu0
        %v3213 = vadd.f32 0.0, %v3212
        %3214 = vdwg.mxu0
        %3215 = vrot.lane.b32.xlu0 %v2505, 96
        %v3216 = vpop.permute.xlu0 %3215
        %3217 = vrot.lane.b32.xlu0 %v2508, 96
        %v3218 = vpop.permute.xlu0 %3217
        %3219 = vrot.lane.b32.xlu0 %v2511, 96
        %v3220 = vpop.permute.xlu0 %3219
        %3221 = vrot.lane.b32.xlu0 %v2514, 96
        %v3222 = vpop.permute.xlu0 %3221
        %3223 = vrot.lane.b32.xlu0 %v2517, 96
        %v3224 = vpop.permute.xlu0 %3223
        %3225 = vrot.lane.b32.xlu0 %v2520, 96
        %v3226 = vpop.permute.xlu0 %3225
        %3227 = vrot.lane.b32.xlu0 %v2523, 96
        %v3228 = vpop.permute.xlu0 %3227
        %3229 = vrot.lane.b32.xlu0 %v2526, 96
        %v3230 = vpop.permute.xlu0 %3229
        %3231 = vrot.lane.b32.xlu0 %v2505, 32
        %v3232 = vpop.permute.xlu0 %3231
        %3233 = vrot.lane.b32.xlu0 %v2508, 32
        %v3234 = vpop.permute.xlu0 %3233
        %3235 = vrot.lane.b32.xlu0 %v2511, 32
        %v3236 = vpop.permute.xlu0 %3235
        %3237 = vrot.lane.b32.xlu0 %v2514, 32
        %v3238 = vpop.permute.xlu0 %3237
        %3239 = vrot.lane.b32.xlu0 %v2517, 32
        %v3240 = vpop.permute.xlu0 %3239
        %3241 = vrot.lane.b32.xlu0 %v2520, 32
        %v3242 = vpop.permute.xlu0 %3241
        %3243 = vrot.lane.b32.xlu0 %v2523, 32
        %v3244 = vpop.permute.xlu0 %3243
        %3245 = vrot.lane.b32.xlu0 %v2526, 32
        %v3246 = vpop.permute.xlu0 %3245
        %v3247 = vsel %vm2617, %v3216, 0
        %v3249 = vsel %vm2617, %v3218, 0
        %v3251 = vsel %vm2617, %v3220, 0
        %v3253 = vsel %vm2617, %v3222, 0
        %v3255 = vsel %vm2617, %v3224, 0
        %v3257 = vsel %vm2617, %v3226, 0
        %v3259 = vsel %vm2617, %v3228, 0
        %v3261 = vsel %vm2617, %v3230, 0
        %v3263 = vsel %vm2617, %v3232, 0
        %v3265 = vsel %vm2617, %v3234, 0
        %v3267 = vsel %vm2617, %v3236, 0
        %v3269 = vsel %vm2617, %v3238, 0
        %v3271 = vsel %vm2617, %v3240, 0
        %v3273 = vsel %vm2617, %v3242, 0
        %v3275 = vsel %vm2617, %v3244, 0
        %v3277 = vsel %vm2617, %v3246, 0
        %3279 = vmatpush.xpose.msra.mxu0 0.0
        %3280 = vmatpush.xpose.msra.mxu0 0.0
        %3281 = vmatpush.xpose.msra.mxu0 0.0
        %3282 = vmatpush.xpose.msra.mxu0 0.0
        %3283 = vmatpush.xpose.msra.mxu0 0.0
        %3284 = vmatpush.xpose.msra.mxu0 0.0
        %3285 = vmatpush.xpose.msra.mxu0 0.0
        %3286 = vmatpush.xpose.msra.mxu0 0.0
        %3287 = vmatpush.xpose.msra.mxu0 %v3277
        %3288 = vmatpush.xpose.msra.mxu0 %v3275
        %3289 = vmatpush.xpose.msra.mxu0 %v3273
        %3290 = vmatpush.xpose.msra.mxu0 %v3271
        %3291 = vmatpush.xpose.msra.mxu0 %v3269
        %3292 = vmatpush.xpose.msra.mxu0 %v3267
        %3293 = vmatpush.xpose.msra.mxu0 %v3265
        %3294 = vmatpush.xpose.msra.mxu0 %v3263
        %3295 = vmatmul.f32.gmra.mxu0 %v3247
        %v3296 = vpop.f32.mrf.mxu0
        %v3297 = vadd.f32 0.0, %v3296
        %3298 = vmatmul.f32.gmra.mxu0 %v3249
        %v3299 = vpop.f32.mrf.mxu0
        %v3300 = vadd.f32 0.0, %v3299
        %3301 = vmatmul.f32.gmra.mxu0 %v3251
        %v3302 = vpop.f32.mrf.mxu0
        %v3303 = vadd.f32 0.0, %v3302
        %3304 = vmatmul.f32.gmra.mxu0 %v3253
        %v3305 = vpop.f32.mrf.mxu0
        %v3306 = vadd.f32 0.0, %v3305
        %3307 = vmatmul.f32.gmra.mxu0 %v3255
        %v3308 = vpop.f32.mrf.mxu0
        %v3309 = vadd.f32 0.0, %v3308
        %3310 = vmatmul.f32.gmra.mxu0 %v3257
        %v3311 = vpop.f32.mrf.mxu0
        %v3312 = vadd.f32 0.0, %v3311
        %3313 = vmatmul.f32.gmra.mxu0 %v3259
        %v3314 = vpop.f32.mrf.mxu0
        %v3315 = vadd.f32 0.0, %v3314
        %3316 = vmatmul.f32.gmra.mxu0 %v3261
        %v3317 = vpop.f32.mrf.mxu0
        %v3318 = vadd.f32 0.0, %v3317
        %3319 = vdwg.mxu0
        %v3320 = vmul.f32 %v3192, 0.17677669
        %v3321 = vmul.f32 %v3195, 0.17677669
        %v3322 = vmul.f32 %v3198, 0.17677669
        %v3323 = vmul.f32 %v3201, 0.17677669
        %v3324 = vmul.f32 %v3204, 0.17677669
        %v3325 = vmul.f32 %v3207, 0.17677669
        %v3326 = vmul.f32 %v3210, 0.17677669
        %v3327 = vmul.f32 %v3213, 0.17677669
        %v3328 = vmul.f32 %v3297, 0.17677669
        %v3329 = vmul.f32 %v3300, 0.17677669
        %v3330 = vmul.f32 %v3303, 0.17677669
        %v3331 = vmul.f32 %v3306, 0.17677669
        %v3332 = vmul.f32 %v3309, 0.17677669
        %v3333 = vmul.f32 %v3312, 0.17677669
        %v3334 = vmul.f32 %v3315, 0.17677669
        %v3335 = vmul.f32 %v3318, 0.17677669
        %v3336 = vsel %vm2012, %v3320, -inf
        %3337 = vmax.xlane.f32.xlu0 %v3336
        %v3338 = vpop.xlane.xlu0 %3337
        %v3339 = vsel %vm2012, %v3321, -inf
        %3340 = vmax.xlane.f32.xlu0 %v3339
        %v3341 = vpop.xlane.xlu0 %3340
        %v3342 = vsel %vm2012, %v3322, -inf
        %3343 = vmax.xlane.f32.xlu0 %v3342
        %v3344 = vpop.xlane.xlu0 %3343
        %v3345 = vsel %vm2012, %v3323, -inf
        %3346 = vmax.xlane.f32.xlu0 %v3345
        %v3347 = vpop.xlane.xlu0 %3346
        %v3348 = vsel %vm2012, %v3324, -inf
        %3349 = vmax.xlane.f32.xlu0 %v3348
        %v3350 = vpop.xlane.xlu0 %3349
        %v3351 = vsel %vm2012, %v3325, -inf
        %3352 = vmax.xlane.f32.xlu0 %v3351
        %v3353 = vpop.xlane.xlu0 %3352
        %v3354 = vsel %vm2012, %v3326, -inf
        %3355 = vmax.xlane.f32.xlu0 %v3354
        %v3356 = vpop.xlane.xlu0 %3355
        %v3357 = vsel %vm2012, %v3327, -inf
        %3358 = vmax.xlane.f32.xlu0 %v3357
        %v3359 = vpop.xlane.xlu0 %3358
        %v3360 = vsel %vm2012, %v3328, -inf
        %3361 = vmax.xlane.f32.xlu0 %v3360
        %v3362 = vpop.xlane.xlu0 %3361
        %v3363 = vsel %vm2012, %v3329, -inf
        %3364 = vmax.xlane.f32.xlu0 %v3363
        %v3365 = vpop.xlane.xlu0 %3364
        %v3366 = vsel %vm2012, %v3330, -inf
        %3367 = vmax.xlane.f32.xlu0 %v3366
        %v3368 = vpop.xlane.xlu0 %3367
        %v3369 = vsel %vm2012, %v3331, -inf
        %3370 = vmax.xlane.f32.xlu0 %v3369
        %v3371 = vpop.xlane.xlu0 %3370
        %v3372 = vsel %vm2012, %v3332, -inf
        %3373 = vmax.xlane.f32.xlu0 %v3372
        %v3374 = vpop.xlane.xlu0 %3373
        %v3375 = vsel %vm2012, %v3333, -inf
        %3376 = vmax.xlane.f32.xlu0 %v3375
        %v3377 = vpop.xlane.xlu0 %3376
        %v3378 = vsel %vm2012, %v3334, -inf
        %3379 = vmax.xlane.f32.xlu0 %v3378
        %v3380 = vpop.xlane.xlu0 %3379
        %v3381 = vsel %vm2012, %v3335, -inf
        %3382 = vmax.xlane.f32.xlu0 %v3381
        %v3383 = vpop.xlane.xlu0 %3382
        %v3384 = vsub.f32 %v3320, %v3338
        %v3385 = vsub.f32 %v3321, %v3341
        %v3386 = vsub.f32 %v3322, %v3344
        %v3387 = vsub.f32 %v3323, %v3347
        %v3388 = vsub.f32 %v3324, %v3350
        %v3389 = vsub.f32 %v3325, %v3353
        %v3390 = vsub.f32 %v3326, %v3356
        %v3391 = vsub.f32 %v3327, %v3359
        %v3392 = vsub.f32 %v3328, %v3362
        %v3393 = vsub.f32 %v3329, %v3365
        %v3394 = vsub.f32 %v3330, %v3368
        %v3395 = vsub.f32 %v3331, %v3371
        %v3396 = vsub.f32 %v3332, %v3374
        %v3397 = vsub.f32 %v3333, %v3377
        %v3398 = vsub.f32 %v3334, %v3380
        %v3399 = vsub.f32 %v3335, %v3383
        %v3400 = vmul.f32 %v3384, 1.442695
        %v3401 = vpow.pop %v3400
        %v3402 = vmul.f32 %v3385, 1.442695
        %v3403 = vpow.pop %v3402
        %v3404 = vmul.f32 %v3386, 1.442695
        %v3405 = vpow.pop %v3404
        %v3406 = vmul.f32 %v3387, 1.442695
        %v3407 = vpow.pop %v3406
        %v3408 = vmul.f32 %v3388, 1.442695
        %v3409 = vpow.pop %v3408
        %v3410 = vmul.f32 %v3389, 1.442695
        %v3411 = vpow.pop %v3410
        %v3412 = vmul.f32 %v3390, 1.442695
        %v3413 = vpow.pop %v3412
        %v3414 = vmul.f32 %v3391, 1.442695
        %v3415 = vpow.pop %v3414
        %v3416 = vmul.f32 %v3392, 1.442695
        %v3417 = vpow.pop %v3416
        %v3418 = vmul.f32 %v3393, 1.442695
        %v3419 = vpow.pop %v3418
        %v3420 = vmul.f32 %v3394, 1.442695
        %v3421 = vpow.pop %v3420
        %v3422 = vmul.f32 %v3395, 1.442695
        %v3423 = vpow.pop %v3422
        %v3424 = vmul.f32 %v3396, 1.442695
        %v3425 = vpow.pop %v3424
        %v3426 = vmul.f32 %v3397, 1.442695
        %v3427 = vpow.pop %v3426
        %v3428 = vmul.f32 %v3398, 1.442695
        %v3429 = vpow.pop %v3428
        %v3430 = vmul.f32 %v3399, 1.442695
        %v3431 = vpow.pop %v3430
        %v3432 = vsel %vm2012, %v3401, 0.0
        %3433 = vadd.xlane.f32.xlu0 %v3432
        %v3434 = vpop.xlane.xlu0 %3433
        %v3435 = vsel %vm2012, %v3403, 0.0
        %3436 = vadd.xlane.f32.xlu0 %v3435
        %v3437 = vpop.xlane.xlu0 %3436
        %v3438 = vsel %vm2012, %v3405, 0.0
        %3439 = vadd.xlane.f32.xlu0 %v3438
        %v3440 = vpop.xlane.xlu0 %3439
        %v3441 = vsel %vm2012, %v3407, 0.0
        %3442 = vadd.xlane.f32.xlu0 %v3441
        %v3443 = vpop.xlane.xlu0 %3442
        %v3444 = vsel %vm2012, %v3409, 0.0
        %3445 = vadd.xlane.f32.xlu0 %v3444
        %v3446 = vpop.xlane.xlu0 %3445
        %v3447 = vsel %vm2012, %v3411, 0.0
        %3448 = vadd.xlane.f32.xlu0 %v3447
        %v3449 = vpop.xlane.xlu0 %3448
        %v3450 = vsel %vm2012, %v3413, 0.0
        %3451 = vadd.xlane.f32.xlu0 %v3450
        %v3452 = vpop.xlane.xlu0 %3451
        %v3453 = vsel %vm2012, %v3415, 0.0
        %3454 = vadd.xlane.f32.xlu0 %v3453
        %v3455 = vpop.xlane.xlu0 %3454
        %v3456 = vsel %vm2012, %v3417, 0.0
        %3457 = vadd.xlane.f32.xlu0 %v3456
        %v3458 = vpop.xlane.xlu0 %3457
        %v3459 = vsel %vm2012, %v3419, 0.0
        %3460 = vadd.xlane.f32.xlu0 %v3459
        %v3461 = vpop.xlane.xlu0 %3460
        %v3462 = vsel %vm2012, %v3421, 0.0
        %3463 = vadd.xlane.f32.xlu0 %v3462
        %v3464 = vpop.xlane.xlu0 %3463
        %v3465 = vsel %vm2012, %v3423, 0.0
        %3466 = vadd.xlane.f32.xlu0 %v3465
        %v3467 = vpop.xlane.xlu0 %3466
        %v3468 = vsel %vm2012, %v3425, 0.0
        %3469 = vadd.xlane.f32.xlu0 %v3468
        %v3470 = vpop.xlane.xlu0 %3469
        %v3471 = vsel %vm2012, %v3427, 0.0
        %3472 = vadd.xlane.f32.xlu0 %v3471
        %v3473 = vpop.xlane.xlu0 %3472
        %v3474 = vsel %vm2012, %v3429, 0.0
        %3475 = vadd.xlane.f32.xlu0 %v3474
        %v3476 = vpop.xlane.xlu0 %3475
        %v3477 = vsel %vm2012, %v3431, 0.0
        %3478 = vadd.xlane.f32.xlu0 %v3477
        %v3479 = vpop.xlane.xlu0 %3478
        %v3480 = vrcp.pop %v3434
        %v3481 = vrcp.pop %v3437
        %v3482 = vrcp.pop %v3440
        %v3483 = vrcp.pop %v3443
        %v3484 = vrcp.pop %v3446
        %v3485 = vrcp.pop %v3449
        %v3486 = vrcp.pop %v3452
        %v3487 = vrcp.pop %v3455
        %v3488 = vrcp.pop %v3458
        %v3489 = vrcp.pop %v3461
        %v3490 = vrcp.pop %v3464
        %v3491 = vrcp.pop %v3467
        %v3492 = vrcp.pop %v3470
        %v3493 = vrcp.pop %v3473
        %v3494 = vrcp.pop %v3476
        %v3495 = vrcp.pop %v3479
        %v3496 = vmul.f32 %v3401, %v3480
        %v3497 = vmul.f32 %v3403, %v3481
        %v3498 = vmul.f32 %v3405, %v3482
        %v3499 = vmul.f32 %v3407, %v3483
        %v3500 = vmul.f32 %v3409, %v3484
        %v3501 = vmul.f32 %v3411, %v3485
        %v3502 = vmul.f32 %v3413, %v3486
        %v3503 = vmul.f32 %v3415, %v3487
        %v3504 = vmul.f32 %v3417, %v3488
        %v3505 = vmul.f32 %v3419, %v3489
        %v3506 = vmul.f32 %v3421, %v3490
        %v3507 = vmul.f32 %v3423, %v3491
        %v3508 = vmul.f32 %v3425, %v3492
        %v3509 = vmul.f32 %v3427, %v3493
        %v3510 = vmul.f32 %v3429, %v3494
        %v3511 = vmul.f32 %v3431, %v3495
        %3520 = vrot.lane.b32.xlu0 %v2546, 96
        %v3521 = vpop.permute.xlu0 %3520
        %3522 = vrot.lane.b32.xlu0 %v2549, 96
        %v3523 = vpop.permute.xlu0 %3522
        %3524 = vrot.lane.b32.xlu0 %v2552, 96
        %v3525 = vpop.permute.xlu0 %3524
        %3526 = vrot.lane.b32.xlu0 %v2555, 96
        %v3527 = vpop.permute.xlu0 %3526
        %3528 = vrot.lane.b32.xlu0 %v2558, 96
        %v3529 = vpop.permute.xlu0 %3528
        %3530 = vrot.lane.b32.xlu0 %v2561, 96
        %v3531 = vpop.permute.xlu0 %3530
        %3532 = vrot.lane.b32.xlu0 %v2564, 96
        %v3533 = vpop.permute.xlu0 %3532
        %3534 = vrot.lane.b32.xlu0 %v2567, 96
        %v3535 = vpop.permute.xlu0 %3534
        %v3545 = vsel %vm2012, %v3496, 0
        %v3548 = vsel %vm2012, %v3497, 0
        %v3551 = vsel %vm2012, %v3498, 0
        %v3554 = vsel %vm2012, %v3499, 0
        %v3557 = vsel %vm2012, %v3500, 0
        %v3560 = vsel %vm2012, %v3501, 0
        %v3563 = vsel %vm2012, %v3502, 0
        %v3566 = vsel %vm2012, %v3503, 0
        %3568 = vmatpush.msra.mxu0 0.0
        %3569 = vmatpush.msra.mxu0 0.0
        %3570 = vmatpush.msra.mxu0 0.0
        %3571 = vmatpush.msra.mxu0 0.0
        %3572 = vmatpush.msra.mxu0 0.0
        %3573 = vmatpush.msra.mxu0 0.0
        %3574 = vmatpush.msra.mxu0 0.0
        %3575 = vmatpush.msra.mxu0 0.0
        %3576 = vmatpush.msra.mxu0 %v3535
        %3577 = vmatpush.msra.mxu0 %v3533
        %3578 = vmatpush.msra.mxu0 %v3531
        %3579 = vmatpush.msra.mxu0 %v3529
        %3580 = vmatpush.msra.mxu0 %v3527
        %3581 = vmatpush.msra.mxu0 %v3525
        %3582 = vmatpush.msra.mxu0 %v3523
        %3583 = vmatpush.msra.mxu0 %v3521
        %3584 = vmatmul.f32.gmra.mxu0 %v3545
        %v3585 = vpop.f32.mrf.mxu0
        %v3586 = vadd.f32 0.0, %v3585
        %3587 = vmatmul.f32.gmra.mxu0 %v3548
        %v3588 = vpop.f32.mrf.mxu0
        %v3589 = vadd.f32 0.0, %v3588
        %3590 = vmatmul.f32.gmra.mxu0 %v3551
        %v3591 = vpop.f32.mrf.mxu0
        %v3592 = vadd.f32 0.0, %v3591
        %3593 = vmatmul.f32.gmra.mxu0 %v3554
        %v3594 = vpop.f32.mrf.mxu0
        %v3595 = vadd.f32 0.0, %v3594
        %3596 = vmatmul.f32.gmra.mxu0 %v3557
        %v3597 = vpop.f32.mrf.mxu0
        %v3598 = vadd.f32 0.0, %v3597
        %3599 = vmatmul.f32.gmra.mxu0 %v3560
        %v3600 = vpop.f32.mrf.mxu0
        %v3601 = vadd.f32 0.0, %v3600
        %3602 = vmatmul.f32.gmra.mxu0 %v3563
        %v3603 = vpop.f32.mrf.mxu0
        %v3604 = vadd.f32 0.0, %v3603
        %3605 = vmatmul.f32.gmra.mxu0 %v3566
        %v3606 = vpop.f32.mrf.mxu0
        %v3607 = vadd.f32 0.0, %v3606
        %3608 = vdwg.mxu0
        %3617 = vrot.lane.b32.xlu0 %v2570, 96
        %v3618 = vpop.permute.xlu0 %3617
        %3619 = vrot.lane.b32.xlu0 %v2573, 96
        %v3620 = vpop.permute.xlu0 %3619
        %3621 = vrot.lane.b32.xlu0 %v2576, 96
        %v3622 = vpop.permute.xlu0 %3621
        %3623 = vrot.lane.b32.xlu0 %v2579, 96
        %v3624 = vpop.permute.xlu0 %3623
        %3625 = vrot.lane.b32.xlu0 %v2582, 96
        %v3626 = vpop.permute.xlu0 %3625
        %3627 = vrot.lane.b32.xlu0 %v2585, 96
        %v3628 = vpop.permute.xlu0 %3627
        %3629 = vrot.lane.b32.xlu0 %v2588, 96
        %v3630 = vpop.permute.xlu0 %3629
        %3631 = vrot.lane.b32.xlu0 %v2591, 96
        %v3632 = vpop.permute.xlu0 %3631
        %v3642 = vsel %vm2012, %v3504, 0
        %v3645 = vsel %vm2012, %v3505, 0
        %v3648 = vsel %vm2012, %v3506, 0
        %v3651 = vsel %vm2012, %v3507, 0
        %v3654 = vsel %vm2012, %v3508, 0
        %v3657 = vsel %vm2012, %v3509, 0
        %v3660 = vsel %vm2012, %v3510, 0
        %v3663 = vsel %vm2012, %v3511, 0
        %3665 = vmatpush.msra.mxu0 0.0
        %3666 = vmatpush.msra.mxu0 0.0
        %3667 = vmatpush.msra.mxu0 0.0
        %3668 = vmatpush.msra.mxu0 0.0
        %3669 = vmatpush.msra.mxu0 0.0
        %3670 = vmatpush.msra.mxu0 0.0
        %3671 = vmatpush.msra.mxu0 0.0
        %3672 = vmatpush.msra.mxu0 0.0
        %3673 = vmatpush.msra.mxu0 %v3632
        %3674 = vmatpush.msra.mxu0 %v3630
        %3675 = vmatpush.msra.mxu0 %v3628
        %3676 = vmatpush.msra.mxu0 %v3626
        %3677 = vmatpush.msra.mxu0 %v3624
        %3678 = vmatpush.msra.mxu0 %v3622
        %3679 = vmatpush.msra.mxu0 %v3620
        %3680 = vmatpush.msra.mxu0 %v3618
        %3681 = vmatmul.f32.gmra.mxu0 %v3642
        %v3682 = vpop.f32.mrf.mxu0
        %v3683 = vadd.f32 0.0, %v3682
        %3684 = vmatmul.f32.gmra.mxu0 %v3645
        %v3685 = vpop.f32.mrf.mxu0
        %v3686 = vadd.f32 0.0, %v3685
        %3687 = vmatmul.f32.gmra.mxu0 %v3648
        %v3688 = vpop.f32.mrf.mxu0
        %v3689 = vadd.f32 0.0, %v3688
        %3690 = vmatmul.f32.gmra.mxu0 %v3651
        %v3691 = vpop.f32.mrf.mxu0
        %v3692 = vadd.f32 0.0, %v3691
        %3693 = vmatmul.f32.gmra.mxu0 %v3654
        %v3694 = vpop.f32.mrf.mxu0
        %v3695 = vadd.f32 0.0, %v3694
        %3696 = vmatmul.f32.gmra.mxu0 %v3657
        %v3697 = vpop.f32.mrf.mxu0
        %v3698 = vadd.f32 0.0, %v3697
        %3699 = vmatmul.f32.gmra.mxu0 %v3660
        %v3700 = vpop.f32.mrf.mxu0
        %v3701 = vadd.f32 0.0, %v3700
        %3702 = vmatmul.f32.gmra.mxu0 %v3663
        %v3703 = vpop.f32.mrf.mxu0
        %v3704 = vadd.f32 0.0, %v3703
        %3705 = vdwg.mxu0
        %v3707 = vsel %vm2617, %v3586, 0
        %v3710 = vsel %vm2617, %v3589, 0
        %v3713 = vsel %vm2617, %v3592, 0
        %v3716 = vsel %vm2617, %v3595, 0
        %v3719 = vsel %vm2617, %v3598, 0
        %v3722 = vsel %vm2617, %v3601, 0
        %v3725 = vsel %vm2617, %v3604, 0
        %v3728 = vsel %vm2617, %v3607, 0
        %v3731 = vsel %vm2617, %v3683, 0
        %v3734 = vsel %vm2617, %v3686, 0
        %v3737 = vsel %vm2617, %v3689, 0
        %v3740 = vsel %vm2617, %v3692, 0
        %v3743 = vsel %vm2617, %v3695, 0
        %v3746 = vsel %vm2617, %v3698, 0
        %v3749 = vsel %vm2617, %v3701, 0
        %v3752 = vsel %vm2617, %v3704, 0
        %3754 = vmatpush.msra.mxu0 0.0
        %3755 = vmatpush.msra.mxu0 0.0
        %3756 = vmatpush.msra.mxu0 0.0
        %3757 = vmatpush.msra.mxu0 0.0
        %3758 = vmatpush.msra.mxu0 0.0
        %3759 = vmatpush.msra.mxu0 0.0
        %3760 = vmatpush.msra.mxu0 0.0
        %3761 = vmatpush.msra.mxu0 0.0
        %3762 = vmatpush.msra.mxu0 0.0
        %3763 = vmatpush.msra.mxu0 0.0
        %3764 = vmatpush.msra.mxu0 0.0
        %3765 = vmatpush.msra.mxu0 0.0
        %3766 = vmatpush.msra.mxu0 %v2010
        %3767 = vmatpush.msra.mxu0 %v2009
        %3768 = vmatpush.msra.mxu0 %v2008
        %3769 = vmatpush.msra.mxu0 %v2007
        %3770 = vmatmul.f32.gmra.mxu0 %v3707
        %v3771 = vpop.f32.mrf.mxu0
        %v3772 = vadd.f32 0.0, %v3771
        %3773 = vmatmul.f32.gmra.mxu0 %v3710
        %v3774 = vpop.f32.mrf.mxu0
        %v3775 = vadd.f32 0.0, %v3774
        %3776 = vmatmul.f32.gmra.mxu0 %v3713
        %v3777 = vpop.f32.mrf.mxu0
        %v3778 = vadd.f32 0.0, %v3777
        %3779 = vmatmul.f32.gmra.mxu0 %v3716
        %v3780 = vpop.f32.mrf.mxu0
        %v3781 = vadd.f32 0.0, %v3780
        %3782 = vmatmul.f32.gmra.mxu0 %v3719
        %v3783 = vpop.f32.mrf.mxu0
        %v3784 = vadd.f32 0.0, %v3783
        %3785 = vmatmul.f32.gmra.mxu0 %v3722
        %v3786 = vpop.f32.mrf.mxu0
        %v3787 = vadd.f32 0.0, %v3786
        %3788 = vmatmul.f32.gmra.mxu0 %v3725
        %v3789 = vpop.f32.mrf.mxu0
        %v3790 = vadd.f32 0.0, %v3789
        %3791 = vmatmul.f32.gmra.mxu0 %v3728
        %v3792 = vpop.f32.mrf.mxu0
        %v3793 = vadd.f32 0.0, %v3792
        %3794 = vmatmul.f32.gmra.mxu0 %v3731
        %v3795 = vpop.f32.mrf.mxu0
        %v3796 = vadd.f32 0.0, %v3795
        %3797 = vmatmul.f32.gmra.mxu0 %v3734
        %v3798 = vpop.f32.mrf.mxu0
        %v3799 = vadd.f32 0.0, %v3798
        %3800 = vmatmul.f32.gmra.mxu0 %v3737
        %v3801 = vpop.f32.mrf.mxu0
        %v3802 = vadd.f32 0.0, %v3801
        %3803 = vmatmul.f32.gmra.mxu0 %v3740
        %v3804 = vpop.f32.mrf.mxu0
        %v3805 = vadd.f32 0.0, %v3804
        %3806 = vmatmul.f32.gmra.mxu0 %v3743
        %v3807 = vpop.f32.mrf.mxu0
        %v3808 = vadd.f32 0.0, %v3807
        %3809 = vmatmul.f32.gmra.mxu0 %v3746
        %v3810 = vpop.f32.mrf.mxu0
        %v3811 = vadd.f32 0.0, %v3810
        %3812 = vmatmul.f32.gmra.mxu0 %v3749
        %v3813 = vpop.f32.mrf.mxu0
        %v3814 = vadd.f32 0.0, %v3813
        %3815 = vmatmul.f32.gmra.mxu0 %v3752
        %v3816 = vpop.f32.mrf.mxu0
        %v3817 = vadd.f32 0.0, %v3816
        %3818 = vdwg.mxu0
        %v3820 = vsel %vm2617, %v3022, 0
        %v3823 = vsel %vm2617, %v3025, 0
        %v3826 = vsel %vm2617, %v3028, 0
        %v3829 = vsel %vm2617, %v3031, 0
        %v3832 = vsel %vm2617, %v3034, 0
        %v3835 = vsel %vm2617, %v3037, 0
        %v3838 = vsel %vm2617, %v3040, 0
        %v3841 = vsel %vm2617, %v3043, 0
        %v3844 = vsel %vm2617, %v3087, 0
        %v3847 = vsel %vm2617, %v3090, 0
        %v3850 = vsel %vm2617, %v3093, 0
        %v3853 = vsel %vm2617, %v3096, 0
        %v3856 = vsel %vm2617, %v3099, 0
        %v3859 = vsel %vm2617, %v3102, 0
        %v3862 = vsel %vm2617, %v3105, 0
        %v3865 = vsel %vm2617, %v3108, 0
        %3867 = vmatpush.msra.mxu0 0.0
        %3868 = vmatpush.msra.mxu0 0.0
        %3869 = vmatpush.msra.mxu0 0.0
        %3870 = vmatpush.msra.mxu0 0.0
        %3871 = vmatpush.msra.mxu0 0.0
        %3872 = vmatpush.msra.mxu0 0.0
        %3873 = vmatpush.msra.mxu0 0.0
        %3874 = vmatpush.msra.mxu0 0.0
        %3875 = vmatpush.msra.mxu0 0.0
        %3876 = vmatpush.msra.mxu0 0.0
        %3877 = vmatpush.msra.mxu0 0.0
        %3878 = vmatpush.msra.mxu0 0.0
        %3879 = vmatpush.msra.mxu0 %v2006
        %3880 = vmatpush.msra.mxu0 %v2005
        %3881 = vmatpush.msra.mxu0 %v2004
        %3882 = vmatpush.msra.mxu0 %v2003
        %3883 = vmatmul.f32.gmra.mxu0 %v3820
        %v3884 = vpop.f32.mrf.mxu0
        %v3885 = vadd.f32 %v3772, %v3884
        %3886 = vmatmul.f32.gmra.mxu0 %v3823
        %v3887 = vpop.f32.mrf.mxu0
        %v3888 = vadd.f32 %v3775, %v3887
        %3889 = vmatmul.f32.gmra.mxu0 %v3826
        %v3890 = vpop.f32.mrf.mxu0
        %v3891 = vadd.f32 %v3778, %v3890
        %3892 = vmatmul.f32.gmra.mxu0 %v3829
        %v3893 = vpop.f32.mrf.mxu0
        %v3894 = vadd.f32 %v3781, %v3893
        %3895 = vmatmul.f32.gmra.mxu0 %v3832
        %v3896 = vpop.f32.mrf.mxu0
        %v3897 = vadd.f32 %v3784, %v3896
        %3898 = vmatmul.f32.gmra.mxu0 %v3835
        %v3899 = vpop.f32.mrf.mxu0
        %v3900 = vadd.f32 %v3787, %v3899
        %3901 = vmatmul.f32.gmra.mxu0 %v3838
        %v3902 = vpop.f32.mrf.mxu0
        %v3903 = vadd.f32 %v3790, %v3902
        %3904 = vmatmul.f32.gmra.mxu0 %v3841
        %v3905 = vpop.f32.mrf.mxu0
        %v3906 = vadd.f32 %v3793, %v3905
        %3907 = vmatmul.f32.gmra.mxu0 %v3844
        %v3908 = vpop.f32.mrf.mxu0
        %v3909 = vadd.f32 %v3796, %v3908
        %3910 = vmatmul.f32.gmra.mxu0 %v3847
        %v3911 = vpop.f32.mrf.mxu0
        %v3912 = vadd.f32 %v3799, %v3911
        %3913 = vmatmul.f32.gmra.mxu0 %v3850
        %v3914 = vpop.f32.mrf.mxu0
        %v3915 = vadd.f32 %v3802, %v3914
        %3916 = vmatmul.f32.gmra.mxu0 %v3853
        %v3917 = vpop.f32.mrf.mxu0
        %v3918 = vadd.f32 %v3805, %v3917
        %3919 = vmatmul.f32.gmra.mxu0 %v3856
        %v3920 = vpop.f32.mrf.mxu0
        %v3921 = vadd.f32 %v3808, %v3920
        %3922 = vmatmul.f32.gmra.mxu0 %v3859
        %v3923 = vpop.f32.mrf.mxu0
        %v3924 = vadd.f32 %v3811, %v3923
        %3925 = vmatmul.f32.gmra.mxu0 %v3862
        %v3926 = vpop.f32.mrf.mxu0
        %v3927 = vadd.f32 %v3814, %v3926
        %3928 = vmatmul.f32.gmra.mxu0 %v3865
        %v3929 = vpop.f32.mrf.mxu0
        %v3930 = vadd.f32 %v3817, %v3929
        %3931 = vdwg.mxu0
        %v3932 = vadd.f32 %v1968, %v3885
        %v3933 = vadd.f32 %v1969, %v3888
        %v3934 = vadd.f32 %v1970, %v3891
        %v3935 = vadd.f32 %v1971, %v3894
        %v3936 = vadd.f32 %v1972, %v3897
        %v3937 = vadd.f32 %v1973, %v3900
        %v3938 = vadd.f32 %v1974, %v3903
        %v3939 = vadd.f32 %v1975, %v3906
        %v3940 = vadd.f32 %v1976, %v3909
        %v3941 = vadd.f32 %v1977, %v3912
        %v3942 = vadd.f32 %v1978, %v3915
        %v3943 = vadd.f32 %v1979, %v3918
        %v3944 = vadd.f32 %v1980, %v3921
        %v3945 = vadd.f32 %v1981, %v3924
        %v3946 = vadd.f32 %v1982, %v3927
        %v3947 = vadd.f32 %v1983, %v3930
        %v3949 = vperm.slane %v2011, 0
        %v3951 = vadd.f32 %v3932, %v3949
        %v3952 = vadd.f32 %v3933, %v3949
        %v3953 = vadd.f32 %v3934, %v3949
        %v3954 = vadd.f32 %v3935, %v3949
        %v3955 = vadd.f32 %v3936, %v3949
        %v3956 = vadd.f32 %v3937, %v3949
        %v3957 = vadd.f32 %v3938, %v3949
        %v3958 = vadd.f32 %v3939, %v3949
        %v3959 = vadd.f32 %v3940, %v3949
        %v3960 = vadd.f32 %v3941, %v3949
        %v3961 = vadd.f32 %v3942, %v3949
        %v3962 = vadd.f32 %v3943, %v3949
        %v3963 = vadd.f32 %v3944, %v3949
        %v3964 = vadd.f32 %v3945, %v3949
        %v3965 = vadd.f32 %v3946, %v3949
        %v3966 = vadd.f32 %v3947, %v3949
        %v3967 = vld [vmem:[%s746] sm:$0x1]
        %v3968 = vld [vmem:[%s749] sm:$0x1]
        %v3969 = vsel %vm2012, %v3951, 0.0
        %3970 = vadd.xlane.f32.xlu0 %v3969
        %v3971 = vpop.xlane.xlu0 %3970
        %v3972 = vsel %vm2012, %v3952, 0.0
        %3973 = vadd.xlane.f32.xlu0 %v3972
        %v3974 = vpop.xlane.xlu0 %3973
        %v3975 = vsel %vm2012, %v3953, 0.0
        %3976 = vadd.xlane.f32.xlu0 %v3975
        %v3977 = vpop.xlane.xlu0 %3976
        %v3978 = vsel %vm2012, %v3954, 0.0
        %3979 = vadd.xlane.f32.xlu0 %v3978
        %v3980 = vpop.xlane.xlu0 %3979
        %v3981 = vsel %vm2012, %v3955, 0.0
        %3982 = vadd.xlane.f32.xlu0 %v3981
        %v3983 = vpop.xlane.xlu0 %3982
        %v3984 = vsel %vm2012, %v3956, 0.0
        %3985 = vadd.xlane.f32.xlu0 %v3984
        %v3986 = vpop.xlane.xlu0 %3985
        %v3987 = vsel %vm2012, %v3957, 0.0
        %3988 = vadd.xlane.f32.xlu0 %v3987
        %v3989 = vpop.xlane.xlu0 %3988
        %v3990 = vsel %vm2012, %v3958, 0.0
        %3991 = vadd.xlane.f32.xlu0 %v3990
        %v3992 = vpop.xlane.xlu0 %3991
        %v3993 = vsel %vm2012, %v3959, 0.0
        %3994 = vadd.xlane.f32.xlu0 %v3993
        %v3995 = vpop.xlane.xlu0 %3994
        %v3996 = vsel %vm2012, %v3960, 0.0
        %3997 = vadd.xlane.f32.xlu0 %v3996
        %v3998 = vpop.xlane.xlu0 %3997
        %v3999 = vsel %vm2012, %v3961, 0.0
        %4000 = vadd.xlane.f32.xlu0 %v3999
        %v4001 = vpop.xlane.xlu0 %4000
        %v4002 = vsel %vm2012, %v3962, 0.0
        %4003 = vadd.xlane.f32.xlu0 %v4002
        %v4004 = vpop.xlane.xlu0 %4003
        %v4005 = vsel %vm2012, %v3963, 0.0
        %4006 = vadd.xlane.f32.xlu0 %v4005
        %v4007 = vpop.xlane.xlu0 %4006
        %v4008 = vsel %vm2012, %v3964, 0.0
        %4009 = vadd.xlane.f32.xlu0 %v4008
        %v4010 = vpop.xlane.xlu0 %4009
        %v4011 = vsel %vm2012, %v3965, 0.0
        %4012 = vadd.xlane.f32.xlu0 %v4011
        %v4013 = vpop.xlane.xlu0 %4012
        %v4014 = vsel %vm2012, %v3966, 0.0
        %4015 = vadd.xlane.f32.xlu0 %v4014
        %v4016 = vpop.xlane.xlu0 %4015
        %v4017 = vmul.f32 %v3971, %v2067
        %v4018 = vmul.f32 %v3974, %v2067
        %v4019 = vmul.f32 %v3977, %v2067
        %v4020 = vmul.f32 %v3980, %v2067
        %v4021 = vmul.f32 %v3983, %v2067
        %v4022 = vmul.f32 %v3986, %v2067
        %v4023 = vmul.f32 %v3989, %v2067
        %v4024 = vmul.f32 %v3992, %v2067
        %v4025 = vmul.f32 %v3995, %v2067
        %v4026 = vmul.f32 %v3998, %v2067
        %v4027 = vmul.f32 %v4001, %v2067
        %v4028 = vmul.f32 %v4004, %v2067
        %v4029 = vmul.f32 %v4007, %v2067
        %v4030 = vmul.f32 %v4010, %v2067
        %v4031 = vmul.f32 %v4013, %v2067
        %v4032 = vmul.f32 %v4016, %v2067
        %v4033 = vsub.f32 %v3951, %v4017
        %v4034 = vsub.f32 %v3952, %v4018
        %v4035 = vsub.f32 %v3953, %v4019
        %v4036 = vsub.f32 %v3954, %v4020
        %v4037 = vsub.f32 %v3955, %v4021
        %v4038 = vsub.f32 %v3956, %v4022
        %v4039 = vsub.f32 %v3957, %v4023
        %v4040 = vsub.f32 %v3958, %v4024
        %v4041 = vsub.f32 %v3959, %v4025
        %v4042 = vsub.f32 %v3960, %v4026
        %v4043 = vsub.f32 %v3961, %v4027
        %v4044 = vsub.f32 %v3962, %v4028
        %v4045 = vsub.f32 %v3963, %v4029
        %v4046 = vsub.f32 %v3964, %v4030
        %v4047 = vsub.f32 %v3965, %v4031
        %v4048 = vsub.f32 %v3966, %v4032
        %v4049 = vmul.f32 %v4033, %v4033
        %v4050 = vmul.f32 %v4034, %v4034
        %v4051 = vmul.f32 %v4035, %v4035
        %v4052 = vmul.f32 %v4036, %v4036
        %v4053 = vmul.f32 %v4037, %v4037
        %v4054 = vmul.f32 %v4038, %v4038
        %v4055 = vmul.f32 %v4039, %v4039
        %v4056 = vmul.f32 %v4040, %v4040
        %v4057 = vmul.f32 %v4041, %v4041
        %v4058 = vmul.f32 %v4042, %v4042
        %v4059 = vmul.f32 %v4043, %v4043
        %v4060 = vmul.f32 %v4044, %v4044
        %v4061 = vmul.f32 %v4045, %v4045
        %v4062 = vmul.f32 %v4046, %v4046
        %v4063 = vmul.f32 %v4047, %v4047
        %v4064 = vmul.f32 %v4048, %v4048
        %v4065 = vsel %vm2012, %v4049, 0.0
        %4066 = vadd.xlane.f32.xlu0 %v4065
        %v4067 = vpop.xlane.xlu0 %4066
        %v4068 = vsel %vm2012, %v4050, 0.0
        %4069 = vadd.xlane.f32.xlu0 %v4068
        %v4070 = vpop.xlane.xlu0 %4069
        %v4071 = vsel %vm2012, %v4051, 0.0
        %4072 = vadd.xlane.f32.xlu0 %v4071
        %v4073 = vpop.xlane.xlu0 %4072
        %v4074 = vsel %vm2012, %v4052, 0.0
        %4075 = vadd.xlane.f32.xlu0 %v4074
        %v4076 = vpop.xlane.xlu0 %4075
        %v4077 = vsel %vm2012, %v4053, 0.0
        %4078 = vadd.xlane.f32.xlu0 %v4077
        %v4079 = vpop.xlane.xlu0 %4078
        %v4080 = vsel %vm2012, %v4054, 0.0
        %4081 = vadd.xlane.f32.xlu0 %v4080
        %v4082 = vpop.xlane.xlu0 %4081
        %v4083 = vsel %vm2012, %v4055, 0.0
        %4084 = vadd.xlane.f32.xlu0 %v4083
        %v4085 = vpop.xlane.xlu0 %4084
        %v4086 = vsel %vm2012, %v4056, 0.0
        %4087 = vadd.xlane.f32.xlu0 %v4086
        %v4088 = vpop.xlane.xlu0 %4087
        %v4089 = vsel %vm2012, %v4057, 0.0
        %4090 = vadd.xlane.f32.xlu0 %v4089
        %v4091 = vpop.xlane.xlu0 %4090
        %v4092 = vsel %vm2012, %v4058, 0.0
        %4093 = vadd.xlane.f32.xlu0 %v4092
        %v4094 = vpop.xlane.xlu0 %4093
        %v4095 = vsel %vm2012, %v4059, 0.0
        %4096 = vadd.xlane.f32.xlu0 %v4095
        %v4097 = vpop.xlane.xlu0 %4096
        %v4098 = vsel %vm2012, %v4060, 0.0
        %4099 = vadd.xlane.f32.xlu0 %v4098
        %v4100 = vpop.xlane.xlu0 %4099
        %v4101 = vsel %vm2012, %v4061, 0.0
        %4102 = vadd.xlane.f32.xlu0 %v4101
        %v4103 = vpop.xlane.xlu0 %4102
        %v4104 = vsel %vm2012, %v4062, 0.0
        %4105 = vadd.xlane.f32.xlu0 %v4104
        %v4106 = vpop.xlane.xlu0 %4105
        %v4107 = vsel %vm2012, %v4063, 0.0
        %4108 = vadd.xlane.f32.xlu0 %v4107
        %v4109 = vpop.xlane.xlu0 %4108
        %v4110 = vsel %vm2012, %v4064, 0.0
        %4111 = vadd.xlane.f32.xlu0 %v4110
        %v4112 = vpop.xlane.xlu0 %4111
        %v4113 = vmul.f32 %v4067, %v2067
        %v4114 = vmul.f32 %v4070, %v2067
        %v4115 = vmul.f32 %v4073, %v2067
        %v4116 = vmul.f32 %v4076, %v2067
        %v4117 = vmul.f32 %v4079, %v2067
        %v4118 = vmul.f32 %v4082, %v2067
        %v4119 = vmul.f32 %v4085, %v2067
        %v4120 = vmul.f32 %v4088, %v2067
        %v4121 = vmul.f32 %v4091, %v2067
        %v4122 = vmul.f32 %v4094, %v2067
        %v4123 = vmul.f32 %v4097, %v2067
        %v4124 = vmul.f32 %v4100, %v2067
        %v4125 = vmul.f32 %v4103, %v2067
        %v4126 = vmul.f32 %v4106, %v2067
        %v4127 = vmul.f32 %v4109, %v2067
        %v4128 = vmul.f32 %v4112, %v2067
        %v4129 = vadd.f32 %v4113, 1e-06
        %v4130 = vadd.f32 %v4114, 1e-06
        %v4131 = vadd.f32 %v4115, 1e-06
        %v4132 = vadd.f32 %v4116, 1e-06
        %v4133 = vadd.f32 %v4117, 1e-06
        %v4134 = vadd.f32 %v4118, 1e-06
        %v4135 = vadd.f32 %v4119, 1e-06
        %v4136 = vadd.f32 %v4120, 1e-06
        %v4137 = vadd.f32 %v4121, 1e-06
        %v4138 = vadd.f32 %v4122, 1e-06
        %v4139 = vadd.f32 %v4123, 1e-06
        %v4140 = vadd.f32 %v4124, 1e-06
        %v4141 = vadd.f32 %v4125, 1e-06
        %v4142 = vadd.f32 %v4126, 1e-06
        %v4143 = vadd.f32 %v4127, 1e-06
        %v4144 = vadd.f32 %v4128, 1e-06
        %v4145 = vrsqrt.pop %v4129
        %v4146 = vmul.f32 %v4145, %v4129
        %v4147 = vmul.f32 %v4146, %v4145
        %v4148 = vmul.f32 0.5, %v4147
        %v4149 = vsub.f32 1.5, %v4148
        %v4150 = vmul.f32 %v4145, %v4149
        %vm4151 = vweird.f32 %v4129
        %vm4152 = vweird.f32 %v4145
        %vm4153 = vmor %vm4151, %vm4152
        %v4154 = vsel %vm4153, %v4145, %v4150
        %v4155 = vrsqrt.pop %v4130
        %v4156 = vmul.f32 %v4155, %v4130
        %v4157 = vmul.f32 %v4156, %v4155
        %v4158 = vmul.f32 0.5, %v4157
        %v4159 = vsub.f32 1.5, %v4158
        %v4160 = vmul.f32 %v4155, %v4159
        %vm4161 = vweird.f32 %v4130
        %vm4162 = vweird.f32 %v4155
        %vm4163 = vmor %vm4161, %vm4162
        %v4164 = vsel %vm4163, %v4155, %v4160
        %v4165 = vrsqrt.pop %v4131
        %v4166 = vmul.f32 %v4165, %v4131
        %v4167 = vmul.f32 %v4166, %v4165
        %v4168 = vmul.f32 0.5, %v4167
        %v4169 = vsub.f32 1.5, %v4168
        %v4170 = vmul.f32 %v4165, %v4169
        %vm4171 = vweird.f32 %v4131
        %vm4172 = vweird.f32 %v4165
        %vm4173 = vmor %vm4171, %vm4172
        %v4174 = vsel %vm4173, %v4165, %v4170
        %v4175 = vrsqrt.pop %v4132
        %v4176 = vmul.f32 %v4175, %v4132
        %v4177 = vmul.f32 %v4176, %v4175
        %v4178 = vmul.f32 0.5, %v4177
        %v4179 = vsub.f32 1.5, %v4178
        %v4180 = vmul.f32 %v4175, %v4179
        %vm4181 = vweird.f32 %v4132
        %vm4182 = vweird.f32 %v4175
        %vm4183 = vmor %vm4181, %vm4182
        %v4184 = vsel %vm4183, %v4175, %v4180
        %v4185 = vrsqrt.pop %v4133
        %v4186 = vmul.f32 %v4185, %v4133
        %v4187 = vmul.f32 %v4186, %v4185
        %v4188 = vmul.f32 0.5, %v4187
        %v4189 = vsub.f32 1.5, %v4188
        %v4190 = vmul.f32 %v4185, %v4189
        %vm4191 = vweird.f32 %v4133
        %vm4192 = vweird.f32 %v4185
        %vm4193 = vmor %vm4191, %vm4192
        %v4194 = vsel %vm4193, %v4185, %v4190
        %v4195 = vrsqrt.pop %v4134
        %v4196 = vmul.f32 %v4195, %v4134
        %v4197 = vmul.f32 %v4196, %v4195
        %v4198 = vmul.f32 0.5, %v4197
        %v4199 = vsub.f32 1.5, %v4198
        %v4200 = vmul.f32 %v4195, %v4199
        %vm4201 = vweird.f32 %v4134
        %vm4202 = vweird.f32 %v4195
        %vm4203 = vmor %vm4201, %vm4202
        %v4204 = vsel %vm4203, %v4195, %v4200
        %v4205 = vrsqrt.pop %v4135
        %v4206 = vmul.f32 %v4205, %v4135
        %v4207 = vmul.f32 %v4206, %v4205
        %v4208 = vmul.f32 0.5, %v4207
        %v4209 = vsub.f32 1.5, %v4208
        %v4210 = vmul.f32 %v4205, %v4209
        %vm4211 = vweird.f32 %v4135
        %vm4212 = vweird.f32 %v4205
        %vm4213 = vmor %vm4211, %vm4212
        %v4214 = vsel %vm4213, %v4205, %v4210
        %v4215 = vrsqrt.pop %v4136
        %v4216 = vmul.f32 %v4215, %v4136
        %v4217 = vmul.f32 %v4216, %v4215
        %v4218 = vmul.f32 0.5, %v4217
        %v4219 = vsub.f32 1.5, %v4218
        %v4220 = vmul.f32 %v4215, %v4219
        %vm4221 = vweird.f32 %v4136
        %vm4222 = vweird.f32 %v4215
        %vm4223 = vmor %vm4221, %vm4222
        %v4224 = vsel %vm4223, %v4215, %v4220
        %v4225 = vrsqrt.pop %v4137
        %v4226 = vmul.f32 %v4225, %v4137
        %v4227 = vmul.f32 %v4226, %v4225
        %v4228 = vmul.f32 0.5, %v4227
        %v4229 = vsub.f32 1.5, %v4228
        %v4230 = vmul.f32 %v4225, %v4229
        %vm4231 = vweird.f32 %v4137
        %vm4232 = vweird.f32 %v4225
        %vm4233 = vmor %vm4231, %vm4232
        %v4234 = vsel %vm4233, %v4225, %v4230
        %v4235 = vrsqrt.pop %v4138
        %v4236 = vmul.f32 %v4235, %v4138
        %v4237 = vmul.f32 %v4236, %v4235
        %v4238 = vmul.f32 0.5, %v4237
        %v4239 = vsub.f32 1.5, %v4238
        %v4240 = vmul.f32 %v4235, %v4239
        %vm4241 = vweird.f32 %v4138
        %vm4242 = vweird.f32 %v4235
        %vm4243 = vmor %vm4241, %vm4242
        %v4244 = vsel %vm4243, %v4235, %v4240
        %v4245 = vrsqrt.pop %v4139
        %v4246 = vmul.f32 %v4245, %v4139
        %v4247 = vmul.f32 %v4246, %v4245
        %v4248 = vmul.f32 0.5, %v4247
        %v4249 = vsub.f32 1.5, %v4248
        %v4250 = vmul.f32 %v4245, %v4249
        %vm4251 = vweird.f32 %v4139
        %vm4252 = vweird.f32 %v4245
        %vm4253 = vmor %vm4251, %vm4252
        %v4254 = vsel %vm4253, %v4245, %v4250
        %v4255 = vrsqrt.pop %v4140
        %v4256 = vmul.f32 %v4255, %v4140
        %v4257 = vmul.f32 %v4256, %v4255
        %v4258 = vmul.f32 0.5, %v4257
        %v4259 = vsub.f32 1.5, %v4258
        %v4260 = vmul.f32 %v4255, %v4259
        %vm4261 = vweird.f32 %v4140
        %vm4262 = vweird.f32 %v4255
        %vm4263 = vmor %vm4261, %vm4262
        %v4264 = vsel %vm4263, %v4255, %v4260
        %v4265 = vrsqrt.pop %v4141
        %v4266 = vmul.f32 %v4265, %v4141
        %v4267 = vmul.f32 %v4266, %v4265
        %v4268 = vmul.f32 0.5, %v4267
        %v4269 = vsub.f32 1.5, %v4268
        %v4270 = vmul.f32 %v4265, %v4269
        %vm4271 = vweird.f32 %v4141
        %vm4272 = vweird.f32 %v4265
        %vm4273 = vmor %vm4271, %vm4272
        %v4274 = vsel %vm4273, %v4265, %v4270
        %v4275 = vrsqrt.pop %v4142
        %v4276 = vmul.f32 %v4275, %v4142
        %v4277 = vmul.f32 %v4276, %v4275
        %v4278 = vmul.f32 0.5, %v4277
        %v4279 = vsub.f32 1.5, %v4278
        %v4280 = vmul.f32 %v4275, %v4279
        %vm4281 = vweird.f32 %v4142
        %vm4282 = vweird.f32 %v4275
        %vm4283 = vmor %vm4281, %vm4282
        %v4284 = vsel %vm4283, %v4275, %v4280
        %v4285 = vrsqrt.pop %v4143
        %v4286 = vmul.f32 %v4285, %v4143
        %v4287 = vmul.f32 %v4286, %v4285
        %v4288 = vmul.f32 0.5, %v4287
        %v4289 = vsub.f32 1.5, %v4288
        %v4290 = vmul.f32 %v4285, %v4289
        %vm4291 = vweird.f32 %v4143
        %vm4292 = vweird.f32 %v4285
        %vm4293 = vmor %vm4291, %vm4292
        %v4294 = vsel %vm4293, %v4285, %v4290
        %v4295 = vrsqrt.pop %v4144
        %v4296 = vmul.f32 %v4295, %v4144
        %v4297 = vmul.f32 %v4296, %v4295
        %v4298 = vmul.f32 0.5, %v4297
        %v4299 = vsub.f32 1.5, %v4298
        %v4300 = vmul.f32 %v4295, %v4299
        %vm4301 = vweird.f32 %v4144
        %vm4302 = vweird.f32 %v4295
        %vm4303 = vmor %vm4301, %vm4302
        %v4304 = vsel %vm4303, %v4295, %v4300
        %v4305 = vmul.f32 %v4033, %v4154
        %v4306 = vmul.f32 %v4034, %v4164
        %v4307 = vmul.f32 %v4035, %v4174
        %v4308 = vmul.f32 %v4036, %v4184
        %v4309 = vmul.f32 %v4037, %v4194
        %v4310 = vmul.f32 %v4038, %v4204
        %v4311 = vmul.f32 %v4039, %v4214
        %v4312 = vmul.f32 %v4040, %v4224
        %v4313 = vmul.f32 %v4041, %v4234
        %v4314 = vmul.f32 %v4042, %v4244
        %v4315 = vmul.f32 %v4043, %v4254
        %v4316 = vmul.f32 %v4044, %v4264
        %v4317 = vmul.f32 %v4045, %v4274
        %v4318 = vmul.f32 %v4046, %v4284
        %v4319 = vmul.f32 %v4047, %v4294
        %v4320 = vmul.f32 %v4048, %v4304
        %v4322 = vperm.slane %v3967, 0
        %v4324 = vmul.f32 %v4305, %v4322
        %v4325 = vmul.f32 %v4306, %v4322
        %v4326 = vmul.f32 %v4307, %v4322
        %v4327 = vmul.f32 %v4308, %v4322
        %v4328 = vmul.f32 %v4309, %v4322
        %v4329 = vmul.f32 %v4310, %v4322
        %v4330 = vmul.f32 %v4311, %v4322
        %v4331 = vmul.f32 %v4312, %v4322
        %v4332 = vmul.f32 %v4313, %v4322
        %v4333 = vmul.f32 %v4314, %v4322
        %v4334 = vmul.f32 %v4315, %v4322
        %v4335 = vmul.f32 %v4316, %v4322
        %v4336 = vmul.f32 %v4317, %v4322
        %v4337 = vmul.f32 %v4318, %v4322
        %v4338 = vmul.f32 %v4319, %v4322
        %v4339 = vmul.f32 %v4320, %v4322
        %v4341 = vperm.slane %v3968, 0
        %v4343 = vadd.f32 %v4324, %v4341
        %v4344 = vadd.f32 %v4325, %v4341
        %v4345 = vadd.f32 %v4326, %v4341
        %v4346 = vadd.f32 %v4327, %v4341
        %v4347 = vadd.f32 %v4328, %v4341
        %v4348 = vadd.f32 %v4329, %v4341
        %v4349 = vadd.f32 %v4330, %v4341
        %v4350 = vadd.f32 %v4331, %v4341
        %v4351 = vadd.f32 %v4332, %v4341
        %v4352 = vadd.f32 %v4333, %v4341
        %v4353 = vadd.f32 %v4334, %v4341
        %v4354 = vadd.f32 %v4335, %v4341
        %v4355 = vadd.f32 %v4336, %v4341
        %v4356 = vadd.f32 %v4337, %v4341
        %v4357 = vadd.f32 %v4338, %v4341
        %v4358 = vadd.f32 %v4339, %v4341
        %v4359 = vld [vmem:[%s754] sm:$0xff]
        %v4360 = vld [vmem:[%s754 + $0x8] sm:$0xff]
        %v4361 = vld [vmem:[%s754 + $0x10] sm:$0xff]
        %v4362 = vld [vmem:[%s754 + $0x18] sm:$0xff]
        %v4363 = vld [vmem:[%s754 + $0x20] sm:$0xff]
        %v4364 = vld [vmem:[%s754 + $0x28] sm:$0xff]
        %v4365 = vld [vmem:[%s754 + $0x30] sm:$0xff]
        %v4366 = vld [vmem:[%s754 + $0x38] sm:$0xff]
        %v4367 = vld [vmem:[%s754 + $0x40] sm:$0xff]
        %v4368 = vld [vmem:[%s754 + $0x48] sm:$0xff]
        %v4369 = vld [vmem:[%s754 + $0x50] sm:$0xff]
        %v4370 = vld [vmem:[%s754 + $0x58] sm:$0xff]
        %v4371 = vld [vmem:[%s754 + $0x60] sm:$0xff]
        %v4372 = vld [vmem:[%s754 + $0x68] sm:$0xff]
        %v4373 = vld [vmem:[%s754 + $0x70] sm:$0xff]
        %v4374 = vld [vmem:[%s754 + $0x78] sm:$0xff]
        %v4375 = vld [vmem:[%s758] sm:$0x3]
        %v4377 = vperm.slane %v4375, 0
        %v4378 = vperm.slane %v4375, 1
        %v4382 = vsel %vm2012, %v4343, 0
        %v4385 = vsel %vm2012, %v4344, 0
        %v4388 = vsel %vm2012, %v4345, 0
        %v4391 = vsel %vm2012, %v4346, 0
        %v4394 = vsel %vm2012, %v4347, 0
        %v4397 = vsel %vm2012, %v4348, 0
        %v4400 = vsel %vm2012, %v4349, 0
        %v4403 = vsel %vm2012, %v4350, 0
        %v4406 = vsel %vm2012, %v4351, 0
        %v4409 = vsel %vm2012, %v4352, 0
        %v4412 = vsel %vm2012, %v4353, 0
        %v4415 = vsel %vm2012, %v4354, 0
        %v4418 = vsel %vm2012, %v4355, 0
        %v4421 = vsel %vm2012, %v4356, 0
        %v4424 = vsel %vm2012, %v4357, 0
        %v4427 = vsel %vm2012, %v4358, 0
        %4429 = vmatpush.msra.mxu0 0.0
        %4430 = vmatpush.msra.mxu0 0.0
        %4431 = vmatpush.msra.mxu0 0.0
        %4432 = vmatpush.msra.mxu0 0.0
        %4433 = vmatpush.msra.mxu0 0.0
        %4434 = vmatpush.msra.mxu0 0.0
        %4435 = vmatpush.msra.mxu0 0.0
        %4436 = vmatpush.msra.mxu0 0.0
        %4437 = vmatpush.msra.mxu0 %v4373
        %4438 = vmatpush.msra.mxu0 %v4371
        %4439 = vmatpush.msra.mxu0 %v4369
        %4440 = vmatpush.msra.mxu0 %v4367
        %4441 = vmatpush.msra.mxu0 %v4365
        %4442 = vmatpush.msra.mxu0 %v4363
        %4443 = vmatpush.msra.mxu0 %v4361
        %4444 = vmatpush.msra.mxu0 %v4359
        %4445 = vmatmul.f32.gmra.mxu0 %v4382
        %v4446 = vpop.f32.mrf.mxu0
        %v4447 = vadd.f32 %v4377, %v4446
        %4448 = vmatmul.f32.gmra.mxu0 %v4385
        %v4449 = vpop.f32.mrf.mxu0
        %v4450 = vadd.f32 %v4377, %v4449
        %4451 = vmatmul.f32.gmra.mxu0 %v4388
        %v4452 = vpop.f32.mrf.mxu0
        %v4453 = vadd.f32 %v4377, %v4452
        %4454 = vmatmul.f32.gmra.mxu0 %v4391
        %v4455 = vpop.f32.mrf.mxu0
        %v4456 = vadd.f32 %v4377, %v4455
        %4457 = vmatmul.f32.gmra.mxu0 %v4394
        %v4458 = vpop.f32.mrf.mxu0
        %v4459 = vadd.f32 %v4377, %v4458
        %4460 = vmatmul.f32.gmra.mxu0 %v4397
        %v4461 = vpop.f32.mrf.mxu0
        %v4462 = vadd.f32 %v4377, %v4461
        %4463 = vmatmul.f32.gmra.mxu0 %v4400
        %v4464 = vpop.f32.mrf.mxu0
        %v4465 = vadd.f32 %v4377, %v4464
        %4466 = vmatmul.f32.gmra.mxu0 %v4403
        %v4467 = vpop.f32.mrf.mxu0
        %v4468 = vadd.f32 %v4377, %v4467
        %4469 = vmatmul.f32.gmra.mxu0 %v4406
        %v4470 = vpop.f32.mrf.mxu0
        %v4471 = vadd.f32 %v4377, %v4470
        %4472 = vmatmul.f32.gmra.mxu0 %v4409
        %v4473 = vpop.f32.mrf.mxu0
        %v4474 = vadd.f32 %v4377, %v4473
        %4475 = vmatmul.f32.gmra.mxu0 %v4412
        %v4476 = vpop.f32.mrf.mxu0
        %v4477 = vadd.f32 %v4377, %v4476
        %4478 = vmatmul.f32.gmra.mxu0 %v4415
        %v4479 = vpop.f32.mrf.mxu0
        %v4480 = vadd.f32 %v4377, %v4479
        %4481 = vmatmul.f32.gmra.mxu0 %v4418
        %v4482 = vpop.f32.mrf.mxu0
        %v4483 = vadd.f32 %v4377, %v4482
        %4484 = vmatmul.f32.gmra.mxu0 %v4421
        %v4485 = vpop.f32.mrf.mxu0
        %v4486 = vadd.f32 %v4377, %v4485
        %4487 = vmatmul.f32.gmra.mxu0 %v4424
        %v4488 = vpop.f32.mrf.mxu0
        %v4489 = vadd.f32 %v4377, %v4488
        %4490 = vmatmul.f32.gmra.mxu0 %v4427
        %v4491 = vpop.f32.mrf.mxu0
        %v4492 = vadd.f32 %v4377, %v4491
        %4493 = vdwg.mxu0
        %4494 = vmatpush.msra.mxu0 0.0
        %4495 = vmatpush.msra.mxu0 0.0
        %4496 = vmatpush.msra.mxu0 0.0
        %4497 = vmatpush.msra.mxu0 0.0
        %4498 = vmatpush.msra.mxu0 0.0
        %4499 = vmatpush.msra.mxu0 0.0
        %4500 = vmatpush.msra.mxu0 0.0
        %4501 = vmatpush.msra.mxu0 0.0
        %4502 = vmatpush.msra.mxu0 %v4374
        %4503 = vmatpush.msra.mxu0 %v4372
        %4504 = vmatpush.msra.mxu0 %v4370
        %4505 = vmatpush.msra.mxu0 %v4368
        %4506 = vmatpush.msra.mxu0 %v4366
        %4507 = vmatpush.msra.mxu0 %v4364
        %4508 = vmatpush.msra.mxu0 %v4362
        %4509 = vmatpush.msra.mxu0 %v4360
        %4510 = vmatmul.f32.gmra.mxu0 %v4382
        %v4511 = vpop.f32.mrf.mxu0
        %v4512 = vadd.f32 %v4378, %v4511
        %4513 = vmatmul.f32.gmra.mxu0 %v4385
        %v4514 = vpop.f32.mrf.mxu0
        %v4515 = vadd.f32 %v4378, %v4514
        %4516 = vmatmul.f32.gmra.mxu0 %v4388
        %v4517 = vpop.f32.mrf.mxu0
        %v4518 = vadd.f32 %v4378, %v4517
        %4519 = vmatmul.f32.gmra.mxu0 %v4391
        %v4520 = vpop.f32.mrf.mxu0
        %v4521 = vadd.f32 %v4378, %v4520
        %4522 = vmatmul.f32.gmra.mxu0 %v4394
        %v4523 = vpop.f32.mrf.mxu0
        %v4524 = vadd.f32 %v4378, %v4523
        %4525 = vmatmul.f32.gmra.mxu0 %v4397
        %v4526 = vpop.f32.mrf.mxu0
        %v4527 = vadd.f32 %v4378, %v4526
        %4528 = vmatmul.f32.gmra.mxu0 %v4400
        %v4529 = vpop.f32.mrf.mxu0
        %v4530 = vadd.f32 %v4378, %v4529
        %4531 = vmatmul.f32.gmra.mxu0 %v4403
        %v4532 = vpop.f32.mrf.mxu0
        %v4533 = vadd.f32 %v4378, %v4532
        %4534 = vmatmul.f32.gmra.mxu0 %v4406
        %v4535 = vpop.f32.mrf.mxu0
        %v4536 = vadd.f32 %v4378, %v4535
        %4537 = vmatmul.f32.gmra.mxu0 %v4409
        %v4538 = vpop.f32.mrf.mxu0
        %v4539 = vadd.f32 %v4378, %v4538
        %4540 = vmatmul.f32.gmra.mxu0 %v4412
        %v4541 = vpop.f32.mrf.mxu0
        %v4542 = vadd.f32 %v4378, %v4541
        %4543 = vmatmul.f32.gmra.mxu0 %v4415
        %v4544 = vpop.f32.mrf.mxu0
        %v4545 = vadd.f32 %v4378, %v4544
        %4546 = vmatmul.f32.gmra.mxu0 %v4418
        %v4547 = vpop.f32.mrf.mxu0
        %v4548 = vadd.f32 %v4378, %v4547
        %4549 = vmatmul.f32.gmra.mxu0 %v4421
        %v4550 = vpop.f32.mrf.mxu0
        %v4551 = vadd.f32 %v4378, %v4550
        %4552 = vmatmul.f32.gmra.mxu0 %v4424
        %v4553 = vpop.f32.mrf.mxu0
        %v4554 = vadd.f32 %v4378, %v4553
        %4555 = vmatmul.f32.gmra.mxu0 %v4427
        %v4556 = vpop.f32.mrf.mxu0
        %v4557 = vadd.f32 %v4378, %v4556
        %4558 = vdwg.mxu0
        %v4559 = vmul.f32 %v4447, 0.5
        %v4560 = vmul.f32 %v4512, 0.5
        %v4561 = vmul.f32 %v4450, 0.5
        %v4562 = vmul.f32 %v4515, 0.5
        %v4563 = vmul.f32 %v4453, 0.5
        %v4564 = vmul.f32 %v4518, 0.5
        %v4565 = vmul.f32 %v4456, 0.5
        %v4566 = vmul.f32 %v4521, 0.5
        %v4567 = vmul.f32 %v4459, 0.5
        %v4568 = vmul.f32 %v4524, 0.5
        %v4569 = vmul.f32 %v4462, 0.5
        %v4570 = vmul.f32 %v4527, 0.5
        %v4571 = vmul.f32 %v4465, 0.5
        %v4572 = vmul.f32 %v4530, 0.5
        %v4573 = vmul.f32 %v4468, 0.5
        %v4574 = vmul.f32 %v4533, 0.5
        %v4575 = vmul.f32 %v4471, 0.5
        %v4576 = vmul.f32 %v4536, 0.5
        %v4577 = vmul.f32 %v4474, 0.5
        %v4578 = vmul.f32 %v4539, 0.5
        %v4579 = vmul.f32 %v4477, 0.5
        %v4580 = vmul.f32 %v4542, 0.5
        %v4581 = vmul.f32 %v4480, 0.5
        %v4582 = vmul.f32 %v4545, 0.5
        %v4583 = vmul.f32 %v4483, 0.5
        %v4584 = vmul.f32 %v4548, 0.5
        %v4585 = vmul.f32 %v4486, 0.5
        %v4586 = vmul.f32 %v4551, 0.5
        %v4587 = vmul.f32 %v4489, 0.5
        %v4588 = vmul.f32 %v4554, 0.5
        %v4589 = vmul.f32 %v4492, 0.5
        %v4590 = vmul.f32 %v4557, 0.5
        %v4591 = vrcp.pop 1.4142135
        %v4592 = vmul.f32 1.4142135, %v4591
        %v4593 = vsub.f32 1.0, %v4592
        %v4594 = vmul.f32 %v4591, %v4593
        %v4595 = vadd.f32 %v4591, %v4594
        %vm4596 = vweird.f32 %v4591
        %v4597 = vsel %vm4596, %v4591, %v4595
        %v4598 = vmul.f32 %v4447, %v4597
        %v4599 = vmul.f32 %v4512, %v4597
        %v4600 = vmul.f32 %v4450, %v4597
        %v4601 = vmul.f32 %v4515, %v4597
        %v4602 = vmul.f32 %v4453, %v4597
        %v4603 = vmul.f32 %v4518, %v4597
        %v4604 = vmul.f32 %v4456, %v4597
        %v4605 = vmul.f32 %v4521, %v4597
        %v4606 = vmul.f32 %v4459, %v4597
        %v4607 = vmul.f32 %v4524, %v4597
        %v4608 = vmul.f32 %v4462, %v4597
        %v4609 = vmul.f32 %v4527, %v4597
        %v4610 = vmul.f32 %v4465, %v4597
        %v4611 = vmul.f32 %v4530, %v4597
        %v4612 = vmul.f32 %v4468, %v4597
        %v4613 = vmul.f32 %v4533, %v4597
        %v4614 = vmul.f32 %v4471, %v4597
        %v4615 = vmul.f32 %v4536, %v4597
        %v4616 = vmul.f32 %v4474, %v4597
        %v4617 = vmul.f32 %v4539, %v4597
        %v4618 = vmul.f32 %v4477, %v4597
        %v4619 = vmul.f32 %v4542, %v4597
        %v4620 = vmul.f32 %v4480, %v4597
        %v4621 = vmul.f32 %v4545, %v4597
        %v4622 = vmul.f32 %v4483, %v4597
        %v4623 = vmul.f32 %v4548, %v4597
        %v4624 = vmul.f32 %v4486, %v4597
        %v4625 = vmul.f32 %v4551, %v4597
        %v4626 = vmul.f32 %v4489, %v4597
        %v4627 = vmul.f32 %v4554, %v4597
        %v4628 = vmul.f32 %v4492, %v4597
        %v4629 = vmul.f32 %v4557, %v4597
        %v4630 = vmul.f32 %v4598, %v4598
        %v4631 = vmin.f32 16.0, %v4630
        %v4632 = vmul.f32 %v4631, 2.1237322e-06
        %v4633 = vadd.f32 %v4632, 0.00028619796
        %v4634 = vmul.f32 %v4631, %v4633
        %v4635 = vadd.f32 %v4634, 0.0036580483
        %v4636 = vmul.f32 %v4631, %v4635
        %v4637 = vadd.f32 %v4636, 0.05243302
        %v4638 = vmul.f32 %v4631, %v4637
        %v4639 = vadd.f32 %v4638, 0.18741608
        %v4640 = vmul.f32 %v4631, %v4639
        %v4641 = vadd.f32 %v4640, 1.1283791
        %v4642 = vmul.f32 %v4598, %v4641
        %v4643 = vmul.f32 %v4631, 3.8918573e-05
        %v4644 = vadd.f32 %v4643, 0.001143296
        %v4645 = vmul.f32 %v4631, %v4644
        %v4646 = vadd.f32 %v4645, 0.014752088
        %v4647 = vmul.f32 %v4631, %v4646
        %v4648 = vadd.f32 %v4647, 0.112945676
        %v4649 = vmul.f32 %v4631, %v4648
        %v4650 = vadd.f32 %v4649, 0.4994258
        %v4651 = vmul.f32 %v4631, %v4650
        %v4652 = vadd.f32 %v4651, 1.0
        %v4653 = vrcp.pop %v4652
        %v4654 = vmul.f32 %v4652, %v4653
        %v4655 = vsub.f32 1.0, %v4654
        %v4656 = vmul.f32 %v4653, %v4655
        %v4657 = vadd.f32 %v4653, %v4656
        %vm4658 = vweird.f32 %v4652
        %vm4659 = vweird.f32 %v4653
        %vm4660 = vmor %vm4658, %vm4659
        %v4661 = vsel %vm4660, %v4653, %v4657
        %v4662 = vand.u32 2147483647, %v4652
        %vm4663 = vcmp.eq.f32.partialorder %v4662, 8.507059e+37
        %v4664 = vand.u32 %v4652, 2147483648
        %v4665 = vor.u32 1.1754944e-38, %v4664
        %v4666 = vsel %vm4663, %v4665, %v4661
        %v4667 = vmul.f32 %v4642, %v4666
        %v4668 = vmin.f32 %v4667, 1.0
        %v4669 = vmax.f32 %v4668, -1.0
        %v4670 = vmul.f32 %v4599, %v4599
        %v4671 = vmin.f32 16.0, %v4670
        %v4672 = vmul.f32 %v4671, 2.1237322e-06
        %v4673 = vadd.f32 %v4672, 0.00028619796
        %v4674 = vmul.f32 %v4671, %v4673
        %v4675 = vadd.f32 %v4674, 0.0036580483
        %v4676 = vmul.f32 %v4671, %v4675
        %v4677 = vadd.f32 %v4676, 0.05243302
        %v4678 = vmul.f32 %v4671, %v4677
        %v4679 = vadd.f32 %v4678, 0.18741608
        %v4680 = vmul.f32 %v4671, %v4679
        %v4681 = vadd.f32 %v4680, 1.1283791
        %v4682 = vmul.f32 %v4599, %v4681
        %v4683 = vmul.f32 %v4671, 3.8918573e-05
        %v4684 = vadd.f32 %v4683, 0.001143296
        %v4685 = vmul.f32 %v4671, %v4684
        %v4686 = vadd.f32 %v4685, 0.014752088
        %v4687 = vmul.f32 %v4671, %v4686
        %v4688 = vadd.f32 %v4687, 0.112945676
        %v4689 = vmul.f32 %v4671, %v4688
        %v4690 = vadd.f32 %v4689, 0.4994258
        %v4691 = vmul.f32 %v4671, %v4690
        %v4692 = vadd.f32 %v4691, 1.0
        %v4693 = vrcp.pop %v4692
        %v4694 = vmul.f32 %v4692, %v4693
        %v4695 = vsub.f32 1.0, %v4694
        %v4696 = vmul.f32 %v4693, %v4695
        %v4697 = vadd.f32 %v4693, %v4696
        %vm4698 = vweird.f32 %v4692
        %vm4699 = vweird.f32 %v4693
        %vm4700 = vmor %vm4698, %vm4699
        %v4701 = vsel %vm4700, %v4693, %v4697
        %v4702 = vand.u32 2147483647, %v4692
        %vm4703 = vcmp.eq.f32.partialorder %v4702, 8.507059e+37
        %v4704 = vand.u32 %v4692, 2147483648
        %v4705 = vor.u32 1.1754944e-38, %v4704
        %v4706 = vsel %vm4703, %v4705, %v4701
        %v4707 = vmul.f32 %v4682, %v4706
        %v4708 = vmin.f32 %v4707, 1.0
        %v4709 = vmax.f32 %v4708, -1.0
        %v4710 = vmul.f32 %v4600, %v4600
        %v4711 = vmin.f32 16.0, %v4710
        %v4712 = vmul.f32 %v4711, 2.1237322e-06
        %v4713 = vadd.f32 %v4712, 0.00028619796
        %v4714 = vmul.f32 %v4711, %v4713
        %v4715 = vadd.f32 %v4714, 0.0036580483
        %v4716 = vmul.f32 %v4711, %v4715
        %v4717 = vadd.f32 %v4716, 0.05243302
        %v4718 = vmul.f32 %v4711, %v4717
        %v4719 = vadd.f32 %v4718, 0.18741608
        %v4720 = vmul.f32 %v4711, %v4719
        %v4721 = vadd.f32 %v4720, 1.1283791
        %v4722 = vmul.f32 %v4600, %v4721
        %v4723 = vmul.f32 %v4711, 3.8918573e-05
        %v4724 = vadd.f32 %v4723, 0.001143296
        %v4725 = vmul.f32 %v4711, %v4724
        %v4726 = vadd.f32 %v4725, 0.014752088
        %v4727 = vmul.f32 %v4711, %v4726
        %v4728 = vadd.f32 %v4727, 0.112945676
        %v4729 = vmul.f32 %v4711, %v4728
        %v4730 = vadd.f32 %v4729, 0.4994258
        %v4731 = vmul.f32 %v4711, %v4730
        %v4732 = vadd.f32 %v4731, 1.0
        %v4733 = vrcp.pop %v4732
        %v4734 = vmul.f32 %v4732, %v4733
        %v4735 = vsub.f32 1.0, %v4734
        %v4736 = vmul.f32 %v4733, %v4735
        %v4737 = vadd.f32 %v4733, %v4736
        %vm4738 = vweird.f32 %v4732
        %vm4739 = vweird.f32 %v4733
        %vm4740 = vmor %vm4738, %vm4739
        %v4741 = vsel %vm4740, %v4733, %v4737
        %v4742 = vand.u32 2147483647, %v4732
        %vm4743 = vcmp.eq.f32.partialorder %v4742, 8.507059e+37
        %v4744 = vand.u32 %v4732, 2147483648
        %v4745 = vor.u32 1.1754944e-38, %v4744
        %v4746 = vsel %vm4743, %v4745, %v4741
        %v4747 = vmul.f32 %v4722, %v4746
        %v4748 = vmin.f32 %v4747, 1.0
        %v4749 = vmax.f32 %v4748, -1.0
        %v4750 = vmul.f32 %v4601, %v4601
        %v4751 = vmin.f32 16.0, %v4750
        %v4752 = vmul.f32 %v4751, 2.1237322e-06
        %v4753 = vadd.f32 %v4752, 0.00028619796
        %v4754 = vmul.f32 %v4751, %v4753
        %v4755 = vadd.f32 %v4754, 0.0036580483
        %v4756 = vmul.f32 %v4751, %v4755
        %v4757 = vadd.f32 %v4756, 0.05243302
        %v4758 = vmul.f32 %v4751, %v4757
        %v4759 = vadd.f32 %v4758, 0.18741608
        %v4760 = vmul.f32 %v4751, %v4759
        %v4761 = vadd.f32 %v4760, 1.1283791
        %v4762 = vmul.f32 %v4601, %v4761
        %v4763 = vmul.f32 %v4751, 3.8918573e-05
        %v4764 = vadd.f32 %v4763, 0.001143296
        %v4765 = vmul.f32 %v4751, %v4764
        %v4766 = vadd.f32 %v4765, 0.014752088
        %v4767 = vmul.f32 %v4751, %v4766
        %v4768 = vadd.f32 %v4767, 0.112945676
        %v4769 = vmul.f32 %v4751, %v4768
        %v4770 = vadd.f32 %v4769, 0.4994258
        %v4771 = vmul.f32 %v4751, %v4770
        %v4772 = vadd.f32 %v4771, 1.0
        %v4773 = vrcp.pop %v4772
        %v4774 = vmul.f32 %v4772, %v4773
        %v4775 = vsub.f32 1.0, %v4774
        %v4776 = vmul.f32 %v4773, %v4775
        %v4777 = vadd.f32 %v4773, %v4776
        %vm4778 = vweird.f32 %v4772
        %vm4779 = vweird.f32 %v4773
        %vm4780 = vmor %vm4778, %vm4779
        %v4781 = vsel %vm4780, %v4773, %v4777
        %v4782 = vand.u32 2147483647, %v4772
        %vm4783 = vcmp.eq.f32.partialorder %v4782, 8.507059e+37
        %v4784 = vand.u32 %v4772, 2147483648
        %v4785 = vor.u32 1.1754944e-38, %v4784
        %v4786 = vsel %vm4783, %v4785, %v4781
        %v4787 = vmul.f32 %v4762, %v4786
        %v4788 = vmin.f32 %v4787, 1.0
        %v4789 = vmax.f32 %v4788, -1.0
        %v4790 = vmul.f32 %v4602, %v4602
        %v4791 = vmin.f32 16.0, %v4790
        %v4792 = vmul.f32 %v4791, 2.1237322e-06
        %v4793 = vadd.f32 %v4792, 0.00028619796
        %v4794 = vmul.f32 %v4791, %v4793
        %v4795 = vadd.f32 %v4794, 0.0036580483
        %v4796 = vmul.f32 %v4791, %v4795
        %v4797 = vadd.f32 %v4796, 0.05243302
        %v4798 = vmul.f32 %v4791, %v4797
        %v4799 = vadd.f32 %v4798, 0.18741608
        %v4800 = vmul.f32 %v4791, %v4799
        %v4801 = vadd.f32 %v4800, 1.1283791
        %v4802 = vmul.f32 %v4602, %v4801
        %v4803 = vmul.f32 %v4791, 3.8918573e-05
        %v4804 = vadd.f32 %v4803, 0.001143296
        %v4805 = vmul.f32 %v4791, %v4804
        %v4806 = vadd.f32 %v4805, 0.014752088
        %v4807 = vmul.f32 %v4791, %v4806
        %v4808 = vadd.f32 %v4807, 0.112945676
        %v4809 = vmul.f32 %v4791, %v4808
        %v4810 = vadd.f32 %v4809, 0.4994258
        %v4811 = vmul.f32 %v4791, %v4810
        %v4812 = vadd.f32 %v4811, 1.0
        %v4813 = vrcp.pop %v4812
        %v4814 = vmul.f32 %v4812, %v4813
        %v4815 = vsub.f32 1.0, %v4814
        %v4816 = vmul.f32 %v4813, %v4815
        %v4817 = vadd.f32 %v4813, %v4816
        %vm4818 = vweird.f32 %v4812
        %vm4819 = vweird.f32 %v4813
        %vm4820 = vmor %vm4818, %vm4819
        %v4821 = vsel %vm4820, %v4813, %v4817
        %v4822 = vand.u32 2147483647, %v4812
        %vm4823 = vcmp.eq.f32.partialorder %v4822, 8.507059e+37
        %v4824 = vand.u32 %v4812, 2147483648
        %v4825 = vor.u32 1.1754944e-38, %v4824
        %v4826 = vsel %vm4823, %v4825, %v4821
        %v4827 = vmul.f32 %v4802, %v4826
        %v4828 = vmin.f32 %v4827, 1.0
        %v4829 = vmax.f32 %v4828, -1.0
        %v4830 = vmul.f32 %v4603, %v4603
        %v4831 = vmin.f32 16.0, %v4830
        %v4832 = vmul.f32 %v4831, 2.1237322e-06
        %v4833 = vadd.f32 %v4832, 0.00028619796
        %v4834 = vmul.f32 %v4831, %v4833
        %v4835 = vadd.f32 %v4834, 0.0036580483
        %v4836 = vmul.f32 %v4831, %v4835
        %v4837 = vadd.f32 %v4836, 0.05243302
        %v4838 = vmul.f32 %v4831, %v4837
        %v4839 = vadd.f32 %v4838, 0.18741608
        %v4840 = vmul.f32 %v4831, %v4839
        %v4841 = vadd.f32 %v4840, 1.1283791
        %v4842 = vmul.f32 %v4603, %v4841
        %v4843 = vmul.f32 %v4831, 3.8918573e-05
        %v4844 = vadd.f32 %v4843, 0.001143296
        %v4845 = vmul.f32 %v4831, %v4844
        %v4846 = vadd.f32 %v4845, 0.014752088
        %v4847 = vmul.f32 %v4831, %v4846
        %v4848 = vadd.f32 %v4847, 0.112945676
        %v4849 = vmul.f32 %v4831, %v4848
        %v4850 = vadd.f32 %v4849, 0.4994258
        %v4851 = vmul.f32 %v4831, %v4850
        %v4852 = vadd.f32 %v4851, 1.0
        %v4853 = vrcp.pop %v4852
        %v4854 = vmul.f32 %v4852, %v4853
        %v4855 = vsub.f32 1.0, %v4854
        %v4856 = vmul.f32 %v4853, %v4855
        %v4857 = vadd.f32 %v4853, %v4856
        %vm4858 = vweird.f32 %v4852
        %vm4859 = vweird.f32 %v4853
        %vm4860 = vmor %vm4858, %vm4859
        %v4861 = vsel %vm4860, %v4853, %v4857
        %v4862 = vand.u32 2147483647, %v4852
        %vm4863 = vcmp.eq.f32.partialorder %v4862, 8.507059e+37
        %v4864 = vand.u32 %v4852, 2147483648
        %v4865 = vor.u32 1.1754944e-38, %v4864
        %v4866 = vsel %vm4863, %v4865, %v4861
        %v4867 = vmul.f32 %v4842, %v4866
        %v4868 = vmin.f32 %v4867, 1.0
        %v4869 = vmax.f32 %v4868, -1.0
        %v4870 = vmul.f32 %v4604, %v4604
        %v4871 = vmin.f32 16.0, %v4870
        %v4872 = vmul.f32 %v4871, 2.1237322e-06
        %v4873 = vadd.f32 %v4872, 0.00028619796
        %v4874 = vmul.f32 %v4871, %v4873
        %v4875 = vadd.f32 %v4874, 0.0036580483
        %v4876 = vmul.f32 %v4871, %v4875
        %v4877 = vadd.f32 %v4876, 0.05243302
        %v4878 = vmul.f32 %v4871, %v4877
        %v4879 = vadd.f32 %v4878, 0.18741608
        %v4880 = vmul.f32 %v4871, %v4879
        %v4881 = vadd.f32 %v4880, 1.1283791
        %v4882 = vmul.f32 %v4604, %v4881
        %v4883 = vmul.f32 %v4871, 3.8918573e-05
        %v4884 = vadd.f32 %v4883, 0.001143296
        %v4885 = vmul.f32 %v4871, %v4884
        %v4886 = vadd.f32 %v4885, 0.014752088
        %v4887 = vmul.f32 %v4871, %v4886
        %v4888 = vadd.f32 %v4887, 0.112945676
        %v4889 = vmul.f32 %v4871, %v4888
        %v4890 = vadd.f32 %v4889, 0.4994258
        %v4891 = vmul.f32 %v4871, %v4890
        %v4892 = vadd.f32 %v4891, 1.0
        %v4893 = vrcp.pop %v4892
        %v4894 = vmul.f32 %v4892, %v4893
        %v4895 = vsub.f32 1.0, %v4894
        %v4896 = vmul.f32 %v4893, %v4895
        %v4897 = vadd.f32 %v4893, %v4896
        %vm4898 = vweird.f32 %v4892
        %vm4899 = vweird.f32 %v4893
        %vm4900 = vmor %vm4898, %vm4899
        %v4901 = vsel %vm4900, %v4893, %v4897
        %v4902 = vand.u32 2147483647, %v4892
        %vm4903 = vcmp.eq.f32.partialorder %v4902, 8.507059e+37
        %v4904 = vand.u32 %v4892, 2147483648
        %v4905 = vor.u32 1.1754944e-38, %v4904
        %v4906 = vsel %vm4903, %v4905, %v4901
        %v4907 = vmul.f32 %v4882, %v4906
        %v4908 = vmin.f32 %v4907, 1.0
        %v4909 = vmax.f32 %v4908, -1.0
        %v4910 = vmul.f32 %v4605, %v4605
        %v4911 = vmin.f32 16.0, %v4910
        %v4912 = vmul.f32 %v4911, 2.1237322e-06
        %v4913 = vadd.f32 %v4912, 0.00028619796
        %v4914 = vmul.f32 %v4911, %v4913
        %v4915 = vadd.f32 %v4914, 0.0036580483
        %v4916 = vmul.f32 %v4911, %v4915
        %v4917 = vadd.f32 %v4916, 0.05243302
        %v4918 = vmul.f32 %v4911, %v4917
        %v4919 = vadd.f32 %v4918, 0.18741608
        %v4920 = vmul.f32 %v4911, %v4919
        %v4921 = vadd.f32 %v4920, 1.1283791
        %v4922 = vmul.f32 %v4605, %v4921
        %v4923 = vmul.f32 %v4911, 3.8918573e-05
        %v4924 = vadd.f32 %v4923, 0.001143296
        %v4925 = vmul.f32 %v4911, %v4924
        %v4926 = vadd.f32 %v4925, 0.014752088
        %v4927 = vmul.f32 %v4911, %v4926
        %v4928 = vadd.f32 %v4927, 0.112945676
        %v4929 = vmul.f32 %v4911, %v4928
        %v4930 = vadd.f32 %v4929, 0.4994258
        %v4931 = vmul.f32 %v4911, %v4930
        %v4932 = vadd.f32 %v4931, 1.0
        %v4933 = vrcp.pop %v4932
        %v4934 = vmul.f32 %v4932, %v4933
        %v4935 = vsub.f32 1.0, %v4934
        %v4936 = vmul.f32 %v4933, %v4935
        %v4937 = vadd.f32 %v4933, %v4936
        %vm4938 = vweird.f32 %v4932
        %vm4939 = vweird.f32 %v4933
        %vm4940 = vmor %vm4938, %vm4939
        %v4941 = vsel %vm4940, %v4933, %v4937
        %v4942 = vand.u32 2147483647, %v4932
        %vm4943 = vcmp.eq.f32.partialorder %v4942, 8.507059e+37
        %v4944 = vand.u32 %v4932, 2147483648
        %v4945 = vor.u32 1.1754944e-38, %v4944
        %v4946 = vsel %vm4943, %v4945, %v4941
        %v4947 = vmul.f32 %v4922, %v4946
        %v4948 = vmin.f32 %v4947, 1.0
        %v4949 = vmax.f32 %v4948, -1.0
        %v4950 = vmul.f32 %v4606, %v4606
        %v4951 = vmin.f32 16.0, %v4950
        %v4952 = vmul.f32 %v4951, 2.1237322e-06
        %v4953 = vadd.f32 %v4952, 0.00028619796
        %v4954 = vmul.f32 %v4951, %v4953
        %v4955 = vadd.f32 %v4954, 0.0036580483
        %v4956 = vmul.f32 %v4951, %v4955
        %v4957 = vadd.f32 %v4956, 0.05243302
        %v4958 = vmul.f32 %v4951, %v4957
        %v4959 = vadd.f32 %v4958, 0.18741608
        %v4960 = vmul.f32 %v4951, %v4959
        %v4961 = vadd.f32 %v4960, 1.1283791
        %v4962 = vmul.f32 %v4606, %v4961
        %v4963 = vmul.f32 %v4951, 3.8918573e-05
        %v4964 = vadd.f32 %v4963, 0.001143296
        %v4965 = vmul.f32 %v4951, %v4964
        %v4966 = vadd.f32 %v4965, 0.014752088
        %v4967 = vmul.f32 %v4951, %v4966
        %v4968 = vadd.f32 %v4967, 0.112945676
        %v4969 = vmul.f32 %v4951, %v4968
        %v4970 = vadd.f32 %v4969, 0.4994258
        %v4971 = vmul.f32 %v4951, %v4970
        %v4972 = vadd.f32 %v4971, 1.0
        %v4973 = vrcp.pop %v4972
        %v4974 = vmul.f32 %v4972, %v4973
        %v4975 = vsub.f32 1.0, %v4974
        %v4976 = vmul.f32 %v4973, %v4975
        %v4977 = vadd.f32 %v4973, %v4976
        %vm4978 = vweird.f32 %v4972
        %vm4979 = vweird.f32 %v4973
        %vm4980 = vmor %vm4978, %vm4979
        %v4981 = vsel %vm4980, %v4973, %v4977
        %v4982 = vand.u32 2147483647, %v4972
        %vm4983 = vcmp.eq.f32.partialorder %v4982, 8.507059e+37
        %v4984 = vand.u32 %v4972, 2147483648
        %v4985 = vor.u32 1.1754944e-38, %v4984
        %v4986 = vsel %vm4983, %v4985, %v4981
        %v4987 = vmul.f32 %v4962, %v4986
        %v4988 = vmin.f32 %v4987, 1.0
        %v4989 = vmax.f32 %v4988, -1.0
        %v4990 = vmul.f32 %v4607, %v4607
        %v4991 = vmin.f32 16.0, %v4990
        %v4992 = vmul.f32 %v4991, 2.1237322e-06
        %v4993 = vadd.f32 %v4992, 0.00028619796
        %v4994 = vmul.f32 %v4991, %v4993
        %v4995 = vadd.f32 %v4994, 0.0036580483
        %v4996 = vmul.f32 %v4991, %v4995
        %v4997 = vadd.f32 %v4996, 0.05243302
        %v4998 = vmul.f32 %v4991, %v4997
        %v4999 = vadd.f32 %v4998, 0.18741608
        %v5000 = vmul.f32 %v4991, %v4999
        %v5001 = vadd.f32 %v5000, 1.1283791
        %v5002 = vmul.f32 %v4607, %v5001
        %v5003 = vmul.f32 %v4991, 3.8918573e-05
        %v5004 = vadd.f32 %v5003, 0.001143296
        %v5005 = vmul.f32 %v4991, %v5004
        %v5006 = vadd.f32 %v5005, 0.014752088
        %v5007 = vmul.f32 %v4991, %v5006
        %v5008 = vadd.f32 %v5007, 0.112945676
        %v5009 = vmul.f32 %v4991, %v5008
        %v5010 = vadd.f32 %v5009, 0.4994258
        %v5011 = vmul.f32 %v4991, %v5010
        %v5012 = vadd.f32 %v5011, 1.0
        %v5013 = vrcp.pop %v5012
        %v5014 = vmul.f32 %v5012, %v5013
        %v5015 = vsub.f32 1.0, %v5014
        %v5016 = vmul.f32 %v5013, %v5015
        %v5017 = vadd.f32 %v5013, %v5016
        %vm5018 = vweird.f32 %v5012
        %vm5019 = vweird.f32 %v5013
        %vm5020 = vmor %vm5018, %vm5019
        %v5021 = vsel %vm5020, %v5013, %v5017
        %v5022 = vand.u32 2147483647, %v5012
        %vm5023 = vcmp.eq.f32.partialorder %v5022, 8.507059e+37
        %v5024 = vand.u32 %v5012, 2147483648
        %v5025 = vor.u32 1.1754944e-38, %v5024
        %v5026 = vsel %vm5023, %v5025, %v5021
        %v5027 = vmul.f32 %v5002, %v5026
        %v5028 = vmin.f32 %v5027, 1.0
        %v5029 = vmax.f32 %v5028, -1.0
        %v5030 = vmul.f32 %v4608, %v4608
        %v5031 = vmin.f32 16.0, %v5030
        %v5032 = vmul.f32 %v5031, 2.1237322e-06
        %v5033 = vadd.f32 %v5032, 0.00028619796
        %v5034 = vmul.f32 %v5031, %v5033
        %v5035 = vadd.f32 %v5034, 0.0036580483
        %v5036 = vmul.f32 %v5031, %v5035
        %v5037 = vadd.f32 %v5036, 0.05243302
        %v5038 = vmul.f32 %v5031, %v5037
        %v5039 = vadd.f32 %v5038, 0.18741608
        %v5040 = vmul.f32 %v5031, %v5039
        %v5041 = vadd.f32 %v5040, 1.1283791
        %v5042 = vmul.f32 %v4608, %v5041
        %v5043 = vmul.f32 %v5031, 3.8918573e-05
        %v5044 = vadd.f32 %v5043, 0.001143296
        %v5045 = vmul.f32 %v5031, %v5044
        %v5046 = vadd.f32 %v5045, 0.014752088
        %v5047 = vmul.f32 %v5031, %v5046
        %v5048 = vadd.f32 %v5047, 0.112945676
        %v5049 = vmul.f32 %v5031, %v5048
        %v5050 = vadd.f32 %v5049, 0.4994258
        %v5051 = vmul.f32 %v5031, %v5050
        %v5052 = vadd.f32 %v5051, 1.0
        %v5053 = vrcp.pop %v5052
        %v5054 = vmul.f32 %v5052, %v5053
        %v5055 = vsub.f32 1.0, %v5054
        %v5056 = vmul.f32 %v5053, %v5055
        %v5057 = vadd.f32 %v5053, %v5056
        %vm5058 = vweird.f32 %v5052
        %vm5059 = vweird.f32 %v5053
        %vm5060 = vmor %vm5058, %vm5059
        %v5061 = vsel %vm5060, %v5053, %v5057
        %v5062 = vand.u32 2147483647, %v5052
        %vm5063 = vcmp.eq.f32.partialorder %v5062, 8.507059e+37
        %v5064 = vand.u32 %v5052, 2147483648
        %v5065 = vor.u32 1.1754944e-38, %v5064
        %v5066 = vsel %vm5063, %v5065, %v5061
        %v5067 = vmul.f32 %v5042, %v5066
        %v5068 = vmin.f32 %v5067, 1.0
        %v5069 = vmax.f32 %v5068, -1.0
        %v5070 = vmul.f32 %v4609, %v4609
        %v5071 = vmin.f32 16.0, %v5070
        %v5072 = vmul.f32 %v5071, 2.1237322e-06
        %v5073 = vadd.f32 %v5072, 0.00028619796
        %v5074 = vmul.f32 %v5071, %v5073
        %v5075 = vadd.f32 %v5074, 0.0036580483
        %v5076 = vmul.f32 %v5071, %v5075
        %v5077 = vadd.f32 %v5076, 0.05243302
        %v5078 = vmul.f32 %v5071, %v5077
        %v5079 = vadd.f32 %v5078, 0.18741608
        %v5080 = vmul.f32 %v5071, %v5079
        %v5081 = vadd.f32 %v5080, 1.1283791
        %v5082 = vmul.f32 %v4609, %v5081
        %v5083 = vmul.f32 %v5071, 3.8918573e-05
        %v5084 = vadd.f32 %v5083, 0.001143296
        %v5085 = vmul.f32 %v5071, %v5084
        %v5086 = vadd.f32 %v5085, 0.014752088
        %v5087 = vmul.f32 %v5071, %v5086
        %v5088 = vadd.f32 %v5087, 0.112945676
        %v5089 = vmul.f32 %v5071, %v5088
        %v5090 = vadd.f32 %v5089, 0.4994258
        %v5091 = vmul.f32 %v5071, %v5090
        %v5092 = vadd.f32 %v5091, 1.0
        %v5093 = vrcp.pop %v5092
        %v5094 = vmul.f32 %v5092, %v5093
        %v5095 = vsub.f32 1.0, %v5094
        %v5096 = vmul.f32 %v5093, %v5095
        %v5097 = vadd.f32 %v5093, %v5096
        %vm5098 = vweird.f32 %v5092
        %vm5099 = vweird.f32 %v5093
        %vm5100 = vmor %vm5098, %vm5099
        %v5101 = vsel %vm5100, %v5093, %v5097
        %v5102 = vand.u32 2147483647, %v5092
        %vm5103 = vcmp.eq.f32.partialorder %v5102, 8.507059e+37
        %v5104 = vand.u32 %v5092, 2147483648
        %v5105 = vor.u32 1.1754944e-38, %v5104
        %v5106 = vsel %vm5103, %v5105, %v5101
        %v5107 = vmul.f32 %v5082, %v5106
        %v5108 = vmin.f32 %v5107, 1.0
        %v5109 = vmax.f32 %v5108, -1.0
        %v5110 = vmul.f32 %v4610, %v4610
        %v5111 = vmin.f32 16.0, %v5110
        %v5112 = vmul.f32 %v5111, 2.1237322e-06
        %v5113 = vadd.f32 %v5112, 0.00028619796
        %v5114 = vmul.f32 %v5111, %v5113
        %v5115 = vadd.f32 %v5114, 0.0036580483
        %v5116 = vmul.f32 %v5111, %v5115
        %v5117 = vadd.f32 %v5116, 0.05243302
        %v5118 = vmul.f32 %v5111, %v5117
        %v5119 = vadd.f32 %v5118, 0.18741608
        %v5120 = vmul.f32 %v5111, %v5119
        %v5121 = vadd.f32 %v5120, 1.1283791
        %v5122 = vmul.f32 %v4610, %v5121
        %v5123 = vmul.f32 %v5111, 3.8918573e-05
        %v5124 = vadd.f32 %v5123, 0.001143296
        %v5125 = vmul.f32 %v5111, %v5124
        %v5126 = vadd.f32 %v5125, 0.014752088
        %v5127 = vmul.f32 %v5111, %v5126
        %v5128 = vadd.f32 %v5127, 0.112945676
        %v5129 = vmul.f32 %v5111, %v5128
        %v5130 = vadd.f32 %v5129, 0.4994258
        %v5131 = vmul.f32 %v5111, %v5130
        %v5132 = vadd.f32 %v5131, 1.0
        %v5133 = vrcp.pop %v5132
        %v5134 = vmul.f32 %v5132, %v5133
        %v5135 = vsub.f32 1.0, %v5134
        %v5136 = vmul.f32 %v5133, %v5135
        %v5137 = vadd.f32 %v5133, %v5136
        %vm5138 = vweird.f32 %v5132
        %vm5139 = vweird.f32 %v5133
        %vm5140 = vmor %vm5138, %vm5139
        %v5141 = vsel %vm5140, %v5133, %v5137
        %v5142 = vand.u32 2147483647, %v5132
        %vm5143 = vcmp.eq.f32.partialorder %v5142, 8.507059e+37
        %v5144 = vand.u32 %v5132, 2147483648
        %v5145 = vor.u32 1.1754944e-38, %v5144
        %v5146 = vsel %vm5143, %v5145, %v5141
        %v5147 = vmul.f32 %v5122, %v5146
        %v5148 = vmin.f32 %v5147, 1.0
        %v5149 = vmax.f32 %v5148, -1.0
        %v5150 = vmul.f32 %v4611, %v4611
        %v5151 = vmin.f32 16.0, %v5150
        %v5152 = vmul.f32 %v5151, 2.1237322e-06
        %v5153 = vadd.f32 %v5152, 0.00028619796
        %v5154 = vmul.f32 %v5151, %v5153
        %v5155 = vadd.f32 %v5154, 0.0036580483
        %v5156 = vmul.f32 %v5151, %v5155
        %v5157 = vadd.f32 %v5156, 0.05243302
        %v5158 = vmul.f32 %v5151, %v5157
        %v5159 = vadd.f32 %v5158, 0.18741608
        %v5160 = vmul.f32 %v5151, %v5159
        %v5161 = vadd.f32 %v5160, 1.1283791
        %v5162 = vmul.f32 %v4611, %v5161
        %v5163 = vmul.f32 %v5151, 3.8918573e-05
        %v5164 = vadd.f32 %v5163, 0.001143296
        %v5165 = vmul.f32 %v5151, %v5164
        %v5166 = vadd.f32 %v5165, 0.014752088
        %v5167 = vmul.f32 %v5151, %v5166
        %v5168 = vadd.f32 %v5167, 0.112945676
        %v5169 = vmul.f32 %v5151, %v5168
        %v5170 = vadd.f32 %v5169, 0.4994258
        %v5171 = vmul.f32 %v5151, %v5170
        %v5172 = vadd.f32 %v5171, 1.0
        %v5173 = vrcp.pop %v5172
        %v5174 = vmul.f32 %v5172, %v5173
        %v5175 = vsub.f32 1.0, %v5174
        %v5176 = vmul.f32 %v5173, %v5175
        %v5177 = vadd.f32 %v5173, %v5176
        %vm5178 = vweird.f32 %v5172
        %vm5179 = vweird.f32 %v5173
        %vm5180 = vmor %vm5178, %vm5179
        %v5181 = vsel %vm5180, %v5173, %v5177
        %v5182 = vand.u32 2147483647, %v5172
        %vm5183 = vcmp.eq.f32.partialorder %v5182, 8.507059e+37
        %v5184 = vand.u32 %v5172, 2147483648
        %v5185 = vor.u32 1.1754944e-38, %v5184
        %v5186 = vsel %vm5183, %v5185, %v5181
        %v5187 = vmul.f32 %v5162, %v5186
        %v5188 = vmin.f32 %v5187, 1.0
        %v5189 = vmax.f32 %v5188, -1.0
        %v5190 = vmul.f32 %v4612, %v4612
        %v5191 = vmin.f32 16.0, %v5190
        %v5192 = vmul.f32 %v5191, 2.1237322e-06
        %v5193 = vadd.f32 %v5192, 0.00028619796
        %v5194 = vmul.f32 %v5191, %v5193
        %v5195 = vadd.f32 %v5194, 0.0036580483
        %v5196 = vmul.f32 %v5191, %v5195
        %v5197 = vadd.f32 %v5196, 0.05243302
        %v5198 = vmul.f32 %v5191, %v5197
        %v5199 = vadd.f32 %v5198, 0.18741608
        %v5200 = vmul.f32 %v5191, %v5199
        %v5201 = vadd.f32 %v5200, 1.1283791
        %v5202 = vmul.f32 %v4612, %v5201
        %v5203 = vmul.f32 %v5191, 3.8918573e-05
        %v5204 = vadd.f32 %v5203, 0.001143296
        %v5205 = vmul.f32 %v5191, %v5204
        %v5206 = vadd.f32 %v5205, 0.014752088
        %v5207 = vmul.f32 %v5191, %v5206
        %v5208 = vadd.f32 %v5207, 0.112945676
        %v5209 = vmul.f32 %v5191, %v5208
        %v5210 = vadd.f32 %v5209, 0.4994258
        %v5211 = vmul.f32 %v5191, %v5210
        %v5212 = vadd.f32 %v5211, 1.0
        %v5213 = vrcp.pop %v5212
        %v5214 = vmul.f32 %v5212, %v5213
        %v5215 = vsub.f32 1.0, %v5214
        %v5216 = vmul.f32 %v5213, %v5215
        %v5217 = vadd.f32 %v5213, %v5216
        %vm5218 = vweird.f32 %v5212
        %vm5219 = vweird.f32 %v5213
        %vm5220 = vmor %vm5218, %vm5219
        %v5221 = vsel %vm5220, %v5213, %v5217
        %v5222 = vand.u32 2147483647, %v5212
        %vm5223 = vcmp.eq.f32.partialorder %v5222, 8.507059e+37
        %v5224 = vand.u32 %v5212, 2147483648
        %v5225 = vor.u32 1.1754944e-38, %v5224
        %v5226 = vsel %vm5223, %v5225, %v5221
        %v5227 = vmul.f32 %v5202, %v5226
        %v5228 = vmin.f32 %v5227, 1.0
        %v5229 = vmax.f32 %v5228, -1.0
        %v5230 = vmul.f32 %v4613, %v4613
        %v5231 = vmin.f32 16.0, %v5230
        %v5232 = vmul.f32 %v5231, 2.1237322e-06
        %v5233 = vadd.f32 %v5232, 0.00028619796
        %v5234 = vmul.f32 %v5231, %v5233
        %v5235 = vadd.f32 %v5234, 0.0036580483
        %v5236 = vmul.f32 %v5231, %v5235
        %v5237 = vadd.f32 %v5236, 0.05243302
        %v5238 = vmul.f32 %v5231, %v5237
        %v5239 = vadd.f32 %v5238, 0.18741608
        %v5240 = vmul.f32 %v5231, %v5239
        %v5241 = vadd.f32 %v5240, 1.1283791
        %v5242 = vmul.f32 %v4613, %v5241
        %v5243 = vmul.f32 %v5231, 3.8918573e-05
        %v5244 = vadd.f32 %v5243, 0.001143296
        %v5245 = vmul.f32 %v5231, %v5244
        %v5246 = vadd.f32 %v5245, 0.014752088
        %v5247 = vmul.f32 %v5231, %v5246
        %v5248 = vadd.f32 %v5247, 0.112945676
        %v5249 = vmul.f32 %v5231, %v5248
        %v5250 = vadd.f32 %v5249, 0.4994258
        %v5251 = vmul.f32 %v5231, %v5250
        %v5252 = vadd.f32 %v5251, 1.0
        %v5253 = vrcp.pop %v5252
        %v5254 = vmul.f32 %v5252, %v5253
        %v5255 = vsub.f32 1.0, %v5254
        %v5256 = vmul.f32 %v5253, %v5255
        %v5257 = vadd.f32 %v5253, %v5256
        %vm5258 = vweird.f32 %v5252
        %vm5259 = vweird.f32 %v5253
        %vm5260 = vmor %vm5258, %vm5259
        %v5261 = vsel %vm5260, %v5253, %v5257
        %v5262 = vand.u32 2147483647, %v5252
        %vm5263 = vcmp.eq.f32.partialorder %v5262, 8.507059e+37
        %v5264 = vand.u32 %v5252, 2147483648
        %v5265 = vor.u32 1.1754944e-38, %v5264
        %v5266 = vsel %vm5263, %v5265, %v5261
        %v5267 = vmul.f32 %v5242, %v5266
        %v5268 = vmin.f32 %v5267, 1.0
        %v5269 = vmax.f32 %v5268, -1.0
        %v5270 = vmul.f32 %v4614, %v4614
        %v5271 = vmin.f32 16.0, %v5270
        %v5272 = vmul.f32 %v5271, 2.1237322e-06
        %v5273 = vadd.f32 %v5272, 0.00028619796
        %v5274 = vmul.f32 %v5271, %v5273
        %v5275 = vadd.f32 %v5274, 0.0036580483
        %v5276 = vmul.f32 %v5271, %v5275
        %v5277 = vadd.f32 %v5276, 0.05243302
        %v5278 = vmul.f32 %v5271, %v5277
        %v5279 = vadd.f32 %v5278, 0.18741608
        %v5280 = vmul.f32 %v5271, %v5279
        %v5281 = vadd.f32 %v5280, 1.1283791
        %v5282 = vmul.f32 %v4614, %v5281
        %v5283 = vmul.f32 %v5271, 3.8918573e-05
        %v5284 = vadd.f32 %v5283, 0.001143296
        %v5285 = vmul.f32 %v5271, %v5284
        %v5286 = vadd.f32 %v5285, 0.014752088
        %v5287 = vmul.f32 %v5271, %v5286
        %v5288 = vadd.f32 %v5287, 0.112945676
        %v5289 = vmul.f32 %v5271, %v5288
        %v5290 = vadd.f32 %v5289, 0.4994258
        %v5291 = vmul.f32 %v5271, %v5290
        %v5292 = vadd.f32 %v5291, 1.0
        %v5293 = vrcp.pop %v5292
        %v5294 = vmul.f32 %v5292, %v5293
        %v5295 = vsub.f32 1.0, %v5294
        %v5296 = vmul.f32 %v5293, %v5295
        %v5297 = vadd.f32 %v5293, %v5296
        %vm5298 = vweird.f32 %v5292
        %vm5299 = vweird.f32 %v5293
        %vm5300 = vmor %vm5298, %vm5299
        %v5301 = vsel %vm5300, %v5293, %v5297
        %v5302 = vand.u32 2147483647, %v5292
        %vm5303 = vcmp.eq.f32.partialorder %v5302, 8.507059e+37
        %v5304 = vand.u32 %v5292, 2147483648
        %v5305 = vor.u32 1.1754944e-38, %v5304
        %v5306 = vsel %vm5303, %v5305, %v5301
        %v5307 = vmul.f32 %v5282, %v5306
        %v5308 = vmin.f32 %v5307, 1.0
        %v5309 = vmax.f32 %v5308, -1.0
        %v5310 = vmul.f32 %v4615, %v4615
        %v5311 = vmin.f32 16.0, %v5310
        %v5312 = vmul.f32 %v5311, 2.1237322e-06
        %v5313 = vadd.f32 %v5312, 0.00028619796
        %v5314 = vmul.f32 %v5311, %v5313
        %v5315 = vadd.f32 %v5314, 0.0036580483
        %v5316 = vmul.f32 %v5311, %v5315
        %v5317 = vadd.f32 %v5316, 0.05243302
        %v5318 = vmul.f32 %v5311, %v5317
        %v5319 = vadd.f32 %v5318, 0.18741608
        %v5320 = vmul.f32 %v5311, %v5319
        %v5321 = vadd.f32 %v5320, 1.1283791
        %v5322 = vmul.f32 %v4615, %v5321
        %v5323 = vmul.f32 %v5311, 3.8918573e-05
        %v5324 = vadd.f32 %v5323, 0.001143296
        %v5325 = vmul.f32 %v5311, %v5324
        %v5326 = vadd.f32 %v5325, 0.014752088
        %v5327 = vmul.f32 %v5311, %v5326
        %v5328 = vadd.f32 %v5327, 0.112945676
        %v5329 = vmul.f32 %v5311, %v5328
        %v5330 = vadd.f32 %v5329, 0.4994258
        %v5331 = vmul.f32 %v5311, %v5330
        %v5332 = vadd.f32 %v5331, 1.0
        %v5333 = vrcp.pop %v5332
        %v5334 = vmul.f32 %v5332, %v5333
        %v5335 = vsub.f32 1.0, %v5334
        %v5336 = vmul.f32 %v5333, %v5335
        %v5337 = vadd.f32 %v5333, %v5336
        %vm5338 = vweird.f32 %v5332
        %vm5339 = vweird.f32 %v5333
        %vm5340 = vmor %vm5338, %vm5339
        %v5341 = vsel %vm5340, %v5333, %v5337
        %v5342 = vand.u32 2147483647, %v5332
        %vm5343 = vcmp.eq.f32.partialorder %v5342, 8.507059e+37
        %v5344 = vand.u32 %v5332, 2147483648
        %v5345 = vor.u32 1.1754944e-38, %v5344
        %v5346 = vsel %vm5343, %v5345, %v5341
        %v5347 = vmul.f32 %v5322, %v5346
        %v5348 = vmin.f32 %v5347, 1.0
        %v5349 = vmax.f32 %v5348, -1.0
        %v5350 = vmul.f32 %v4616, %v4616
        %v5351 = vmin.f32 16.0, %v5350
        %v5352 = vmul.f32 %v5351, 2.1237322e-06
        %v5353 = vadd.f32 %v5352, 0.00028619796
        %v5354 = vmul.f32 %v5351, %v5353
        %v5355 = vadd.f32 %v5354, 0.0036580483
        %v5356 = vmul.f32 %v5351, %v5355
        %v5357 = vadd.f32 %v5356, 0.05243302
        %v5358 = vmul.f32 %v5351, %v5357
        %v5359 = vadd.f32 %v5358, 0.18741608
        %v5360 = vmul.f32 %v5351, %v5359
        %v5361 = vadd.f32 %v5360, 1.1283791
        %v5362 = vmul.f32 %v4616, %v5361
        %v5363 = vmul.f32 %v5351, 3.8918573e-05
        %v5364 = vadd.f32 %v5363, 0.001143296
        %v5365 = vmul.f32 %v5351, %v5364
        %v5366 = vadd.f32 %v5365, 0.014752088
        %v5367 = vmul.f32 %v5351, %v5366
        %v5368 = vadd.f32 %v5367, 0.112945676
        %v5369 = vmul.f32 %v5351, %v5368
        %v5370 = vadd.f32 %v5369, 0.4994258
        %v5371 = vmul.f32 %v5351, %v5370
        %v5372 = vadd.f32 %v5371, 1.0
        %v5373 = vrcp.pop %v5372
        %v5374 = vmul.f32 %v5372, %v5373
        %v5375 = vsub.f32 1.0, %v5374
        %v5376 = vmul.f32 %v5373, %v5375
        %v5377 = vadd.f32 %v5373, %v5376
        %vm5378 = vweird.f32 %v5372
        %vm5379 = vweird.f32 %v5373
        %vm5380 = vmor %vm5378, %vm5379
        %v5381 = vsel %vm5380, %v5373, %v5377
        %v5382 = vand.u32 2147483647, %v5372
        %vm5383 = vcmp.eq.f32.partialorder %v5382, 8.507059e+37
        %v5384 = vand.u32 %v5372, 2147483648
        %v5385 = vor.u32 1.1754944e-38, %v5384
        %v5386 = vsel %vm5383, %v5385, %v5381
        %v5387 = vmul.f32 %v5362, %v5386
        %v5388 = vmin.f32 %v5387, 1.0
        %v5389 = vmax.f32 %v5388, -1.0
        %v5390 = vmul.f32 %v4617, %v4617
        %v5391 = vmin.f32 16.0, %v5390
        %v5392 = vmul.f32 %v5391, 2.1237322e-06
        %v5393 = vadd.f32 %v5392, 0.00028619796
        %v5394 = vmul.f32 %v5391, %v5393
        %v5395 = vadd.f32 %v5394, 0.0036580483
        %v5396 = vmul.f32 %v5391, %v5395
        %v5397 = vadd.f32 %v5396, 0.05243302
        %v5398 = vmul.f32 %v5391, %v5397
        %v5399 = vadd.f32 %v5398, 0.18741608
        %v5400 = vmul.f32 %v5391, %v5399
        %v5401 = vadd.f32 %v5400, 1.1283791
        %v5402 = vmul.f32 %v4617, %v5401
        %v5403 = vmul.f32 %v5391, 3.8918573e-05
        %v5404 = vadd.f32 %v5403, 0.001143296
        %v5405 = vmul.f32 %v5391, %v5404
        %v5406 = vadd.f32 %v5405, 0.014752088
        %v5407 = vmul.f32 %v5391, %v5406
        %v5408 = vadd.f32 %v5407, 0.112945676
        %v5409 = vmul.f32 %v5391, %v5408
        %v5410 = vadd.f32 %v5409, 0.4994258
        %v5411 = vmul.f32 %v5391, %v5410
        %v5412 = vadd.f32 %v5411, 1.0
        %v5413 = vrcp.pop %v5412
        %v5414 = vmul.f32 %v5412, %v5413
        %v5415 = vsub.f32 1.0, %v5414
        %v5416 = vmul.f32 %v5413, %v5415
        %v5417 = vadd.f32 %v5413, %v5416
        %vm5418 = vweird.f32 %v5412
        %vm5419 = vweird.f32 %v5413
        %vm5420 = vmor %vm5418, %vm5419
        %v5421 = vsel %vm5420, %v5413, %v5417
        %v5422 = vand.u32 2147483647, %v5412
        %vm5423 = vcmp.eq.f32.partialorder %v5422, 8.507059e+37
        %v5424 = vand.u32 %v5412, 2147483648
        %v5425 = vor.u32 1.1754944e-38, %v5424
        %v5426 = vsel %vm5423, %v5425, %v5421
        %v5427 = vmul.f32 %v5402, %v5426
        %v5428 = vmin.f32 %v5427, 1.0
        %v5429 = vmax.f32 %v5428, -1.0
        %v5430 = vmul.f32 %v4618, %v4618
        %v5431 = vmin.f32 16.0, %v5430
        %v5432 = vmul.f32 %v5431, 2.1237322e-06
        %v5433 = vadd.f32 %v5432, 0.00028619796
        %v5434 = vmul.f32 %v5431, %v5433
        %v5435 = vadd.f32 %v5434, 0.0036580483
        %v5436 = vmul.f32 %v5431, %v5435
        %v5437 = vadd.f32 %v5436, 0.05243302
        %v5438 = vmul.f32 %v5431, %v5437
        %v5439 = vadd.f32 %v5438, 0.18741608
        %v5440 = vmul.f32 %v5431, %v5439
        %v5441 = vadd.f32 %v5440, 1.1283791
        %v5442 = vmul.f32 %v4618, %v5441
        %v5443 = vmul.f32 %v5431, 3.8918573e-05
        %v5444 = vadd.f32 %v5443, 0.001143296
        %v5445 = vmul.f32 %v5431, %v5444
        %v5446 = vadd.f32 %v5445, 0.014752088
        %v5447 = vmul.f32 %v5431, %v5446
        %v5448 = vadd.f32 %v5447, 0.112945676
        %v5449 = vmul.f32 %v5431, %v5448
        %v5450 = vadd.f32 %v5449, 0.4994258
        %v5451 = vmul.f32 %v5431, %v5450
        %v5452 = vadd.f32 %v5451, 1.0
        %v5453 = vrcp.pop %v5452
        %v5454 = vmul.f32 %v5452, %v5453
        %v5455 = vsub.f32 1.0, %v5454
        %v5456 = vmul.f32 %v5453, %v5455
        %v5457 = vadd.f32 %v5453, %v5456
        %vm5458 = vweird.f32 %v5452
        %vm5459 = vweird.f32 %v5453
        %vm5460 = vmor %vm5458, %vm5459
        %v5461 = vsel %vm5460, %v5453, %v5457
        %v5462 = vand.u32 2147483647, %v5452
        %vm5463 = vcmp.eq.f32.partialorder %v5462, 8.507059e+37
        %v5464 = vand.u32 %v5452, 2147483648
        %v5465 = vor.u32 1.1754944e-38, %v5464
        %v5466 = vsel %vm5463, %v5465, %v5461
        %v5467 = vmul.f32 %v5442, %v5466
        %v5468 = vmin.f32 %v5467, 1.0
        %v5469 = vmax.f32 %v5468, -1.0
        %v5470 = vmul.f32 %v4619, %v4619
        %v5471 = vmin.f32 16.0, %v5470
        %v5472 = vmul.f32 %v5471, 2.1237322e-06
        %v5473 = vadd.f32 %v5472, 0.00028619796
        %v5474 = vmul.f32 %v5471, %v5473
        %v5475 = vadd.f32 %v5474, 0.0036580483
        %v5476 = vmul.f32 %v5471, %v5475
        %v5477 = vadd.f32 %v5476, 0.05243302
        %v5478 = vmul.f32 %v5471, %v5477
        %v5479 = vadd.f32 %v5478, 0.18741608
        %v5480 = vmul.f32 %v5471, %v5479
        %v5481 = vadd.f32 %v5480, 1.1283791
        %v5482 = vmul.f32 %v4619, %v5481
        %v5483 = vmul.f32 %v5471, 3.8918573e-05
        %v5484 = vadd.f32 %v5483, 0.001143296
        %v5485 = vmul.f32 %v5471, %v5484
        %v5486 = vadd.f32 %v5485, 0.014752088
        %v5487 = vmul.f32 %v5471, %v5486
        %v5488 = vadd.f32 %v5487, 0.112945676
        %v5489 = vmul.f32 %v5471, %v5488
        %v5490 = vadd.f32 %v5489, 0.4994258
        %v5491 = vmul.f32 %v5471, %v5490
        %v5492 = vadd.f32 %v5491, 1.0
        %v5493 = vrcp.pop %v5492
        %v5494 = vmul.f32 %v5492, %v5493
        %v5495 = vsub.f32 1.0, %v5494
        %v5496 = vmul.f32 %v5493, %v5495
        %v5497 = vadd.f32 %v5493, %v5496
        %vm5498 = vweird.f32 %v5492
        %vm5499 = vweird.f32 %v5493
        %vm5500 = vmor %vm5498, %vm5499
        %v5501 = vsel %vm5500, %v5493, %v5497
        %v5502 = vand.u32 2147483647, %v5492
        %vm5503 = vcmp.eq.f32.partialorder %v5502, 8.507059e+37
        %v5504 = vand.u32 %v5492, 2147483648
        %v5505 = vor.u32 1.1754944e-38, %v5504
        %v5506 = vsel %vm5503, %v5505, %v5501
        %v5507 = vmul.f32 %v5482, %v5506
        %v5508 = vmin.f32 %v5507, 1.0
        %v5509 = vmax.f32 %v5508, -1.0
        %v5510 = vmul.f32 %v4620, %v4620
        %v5511 = vmin.f32 16.0, %v5510
        %v5512 = vmul.f32 %v5511, 2.1237322e-06
        %v5513 = vadd.f32 %v5512, 0.00028619796
        %v5514 = vmul.f32 %v5511, %v5513
        %v5515 = vadd.f32 %v5514, 0.0036580483
        %v5516 = vmul.f32 %v5511, %v5515
        %v5517 = vadd.f32 %v5516, 0.05243302
        %v5518 = vmul.f32 %v5511, %v5517
        %v5519 = vadd.f32 %v5518, 0.18741608
        %v5520 = vmul.f32 %v5511, %v5519
        %v5521 = vadd.f32 %v5520, 1.1283791
        %v5522 = vmul.f32 %v4620, %v5521
        %v5523 = vmul.f32 %v5511, 3.8918573e-05
        %v5524 = vadd.f32 %v5523, 0.001143296
        %v5525 = vmul.f32 %v5511, %v5524
        %v5526 = vadd.f32 %v5525, 0.014752088
        %v5527 = vmul.f32 %v5511, %v5526
        %v5528 = vadd.f32 %v5527, 0.112945676
        %v5529 = vmul.f32 %v5511, %v5528
        %v5530 = vadd.f32 %v5529, 0.4994258
        %v5531 = vmul.f32 %v5511, %v5530
        %v5532 = vadd.f32 %v5531, 1.0
        %v5533 = vrcp.pop %v5532
        %v5534 = vmul.f32 %v5532, %v5533
        %v5535 = vsub.f32 1.0, %v5534
        %v5536 = vmul.f32 %v5533, %v5535
        %v5537 = vadd.f32 %v5533, %v5536
        %vm5538 = vweird.f32 %v5532
        %vm5539 = vweird.f32 %v5533
        %vm5540 = vmor %vm5538, %vm5539
        %v5541 = vsel %vm5540, %v5533, %v5537
        %v5542 = vand.u32 2147483647, %v5532
        %vm5543 = vcmp.eq.f32.partialorder %v5542, 8.507059e+37
        %v5544 = vand.u32 %v5532, 2147483648
        %v5545 = vor.u32 1.1754944e-38, %v5544
        %v5546 = vsel %vm5543, %v5545, %v5541
        %v5547 = vmul.f32 %v5522, %v5546
        %v5548 = vmin.f32 %v5547, 1.0
        %v5549 = vmax.f32 %v5548, -1.0
        %v5550 = vmul.f32 %v4621, %v4621
        %v5551 = vmin.f32 16.0, %v5550
        %v5552 = vmul.f32 %v5551, 2.1237322e-06
        %v5553 = vadd.f32 %v5552, 0.00028619796
        %v5554 = vmul.f32 %v5551, %v5553
        %v5555 = vadd.f32 %v5554, 0.0036580483
        %v5556 = vmul.f32 %v5551, %v5555
        %v5557 = vadd.f32 %v5556, 0.05243302
        %v5558 = vmul.f32 %v5551, %v5557
        %v5559 = vadd.f32 %v5558, 0.18741608
        %v5560 = vmul.f32 %v5551, %v5559
        %v5561 = vadd.f32 %v5560, 1.1283791
        %v5562 = vmul.f32 %v4621, %v5561
        %v5563 = vmul.f32 %v5551, 3.8918573e-05
        %v5564 = vadd.f32 %v5563, 0.001143296
        %v5565 = vmul.f32 %v5551, %v5564
        %v5566 = vadd.f32 %v5565, 0.014752088
        %v5567 = vmul.f32 %v5551, %v5566
        %v5568 = vadd.f32 %v5567, 0.112945676
        %v5569 = vmul.f32 %v5551, %v5568
        %v5570 = vadd.f32 %v5569, 0.4994258
        %v5571 = vmul.f32 %v5551, %v5570
        %v5572 = vadd.f32 %v5571, 1.0
        %v5573 = vrcp.pop %v5572
        %v5574 = vmul.f32 %v5572, %v5573
        %v5575 = vsub.f32 1.0, %v5574
        %v5576 = vmul.f32 %v5573, %v5575
        %v5577 = vadd.f32 %v5573, %v5576
        %vm5578 = vweird.f32 %v5572
        %vm5579 = vweird.f32 %v5573
        %vm5580 = vmor %vm5578, %vm5579
        %v5581 = vsel %vm5580, %v5573, %v5577
        %v5582 = vand.u32 2147483647, %v5572
        %vm5583 = vcmp.eq.f32.partialorder %v5582, 8.507059e+37
        %v5584 = vand.u32 %v5572, 2147483648
        %v5585 = vor.u32 1.1754944e-38, %v5584
        %v5586 = vsel %vm5583, %v5585, %v5581
        %v5587 = vmul.f32 %v5562, %v5586
        %v5588 = vmin.f32 %v5587, 1.0
        %v5589 = vmax.f32 %v5588, -1.0
        %v5590 = vmul.f32 %v4622, %v4622
        %v5591 = vmin.f32 16.0, %v5590
        %v5592 = vmul.f32 %v5591, 2.1237322e-06
        %v5593 = vadd.f32 %v5592, 0.00028619796
        %v5594 = vmul.f32 %v5591, %v5593
        %v5595 = vadd.f32 %v5594, 0.0036580483
        %v5596 = vmul.f32 %v5591, %v5595
        %v5597 = vadd.f32 %v5596, 0.05243302
        %v5598 = vmul.f32 %v5591, %v5597
        %v5599 = vadd.f32 %v5598, 0.18741608
        %v5600 = vmul.f32 %v5591, %v5599
        %v5601 = vadd.f32 %v5600, 1.1283791
        %v5602 = vmul.f32 %v4622, %v5601
        %v5603 = vmul.f32 %v5591, 3.8918573e-05
        %v5604 = vadd.f32 %v5603, 0.001143296
        %v5605 = vmul.f32 %v5591, %v5604
        %v5606 = vadd.f32 %v5605, 0.014752088
        %v5607 = vmul.f32 %v5591, %v5606
        %v5608 = vadd.f32 %v5607, 0.112945676
        %v5609 = vmul.f32 %v5591, %v5608
        %v5610 = vadd.f32 %v5609, 0.4994258
        %v5611 = vmul.f32 %v5591, %v5610
        %v5612 = vadd.f32 %v5611, 1.0
        %v5613 = vrcp.pop %v5612
        %v5614 = vmul.f32 %v5612, %v5613
        %v5615 = vsub.f32 1.0, %v5614
        %v5616 = vmul.f32 %v5613, %v5615
        %v5617 = vadd.f32 %v5613, %v5616
        %vm5618 = vweird.f32 %v5612
        %vm5619 = vweird.f32 %v5613
        %vm5620 = vmor %vm5618, %vm5619
        %v5621 = vsel %vm5620, %v5613, %v5617
        %v5622 = vand.u32 2147483647, %v5612
        %vm5623 = vcmp.eq.f32.partialorder %v5622, 8.507059e+37
        %v5624 = vand.u32 %v5612, 2147483648
        %v5625 = vor.u32 1.1754944e-38, %v5624
        %v5626 = vsel %vm5623, %v5625, %v5621
        %v5627 = vmul.f32 %v5602, %v5626
        %v5628 = vmin.f32 %v5627, 1.0
        %v5629 = vmax.f32 %v5628, -1.0
        %v5630 = vmul.f32 %v4623, %v4623
        %v5631 = vmin.f32 16.0, %v5630
        %v5632 = vmul.f32 %v5631, 2.1237322e-06
        %v5633 = vadd.f32 %v5632, 0.00028619796
        %v5634 = vmul.f32 %v5631, %v5633
        %v5635 = vadd.f32 %v5634, 0.0036580483
        %v5636 = vmul.f32 %v5631, %v5635
        %v5637 = vadd.f32 %v5636, 0.05243302
        %v5638 = vmul.f32 %v5631, %v5637
        %v5639 = vadd.f32 %v5638, 0.18741608
        %v5640 = vmul.f32 %v5631, %v5639
        %v5641 = vadd.f32 %v5640, 1.1283791
        %v5642 = vmul.f32 %v4623, %v5641
        %v5643 = vmul.f32 %v5631, 3.8918573e-05
        %v5644 = vadd.f32 %v5643, 0.001143296
        %v5645 = vmul.f32 %v5631, %v5644
        %v5646 = vadd.f32 %v5645, 0.014752088
        %v5647 = vmul.f32 %v5631, %v5646
        %v5648 = vadd.f32 %v5647, 0.112945676
        %v5649 = vmul.f32 %v5631, %v5648
        %v5650 = vadd.f32 %v5649, 0.4994258
        %v5651 = vmul.f32 %v5631, %v5650
        %v5652 = vadd.f32 %v5651, 1.0
        %v5653 = vrcp.pop %v5652
        %v5654 = vmul.f32 %v5652, %v5653
        %v5655 = vsub.f32 1.0, %v5654
        %v5656 = vmul.f32 %v5653, %v5655
        %v5657 = vadd.f32 %v5653, %v5656
        %vm5658 = vweird.f32 %v5652
        %vm5659 = vweird.f32 %v5653
        %vm5660 = vmor %vm5658, %vm5659
        %v5661 = vsel %vm5660, %v5653, %v5657
        %v5662 = vand.u32 2147483647, %v5652
        %vm5663 = vcmp.eq.f32.partialorder %v5662, 8.507059e+37
        %v5664 = vand.u32 %v5652, 2147483648
        %v5665 = vor.u32 1.1754944e-38, %v5664
        %v5666 = vsel %vm5663, %v5665, %v5661
        %v5667 = vmul.f32 %v5642, %v5666
        %v5668 = vmin.f32 %v5667, 1.0
        %v5669 = vmax.f32 %v5668, -1.0
        %v5670 = vmul.f32 %v4624, %v4624
        %v5671 = vmin.f32 16.0, %v5670
        %v5672 = vmul.f32 %v5671, 2.1237322e-06
        %v5673 = vadd.f32 %v5672, 0.00028619796
        %v5674 = vmul.f32 %v5671, %v5673
        %v5675 = vadd.f32 %v5674, 0.0036580483
        %v5676 = vmul.f32 %v5671, %v5675
        %v5677 = vadd.f32 %v5676, 0.05243302
        %v5678 = vmul.f32 %v5671, %v5677
        %v5679 = vadd.f32 %v5678, 0.18741608
        %v5680 = vmul.f32 %v5671, %v5679
        %v5681 = vadd.f32 %v5680, 1.1283791
        %v5682 = vmul.f32 %v4624, %v5681
        %v5683 = vmul.f32 %v5671, 3.8918573e-05
        %v5684 = vadd.f32 %v5683, 0.001143296
        %v5685 = vmul.f32 %v5671, %v5684
        %v5686 = vadd.f32 %v5685, 0.014752088
        %v5687 = vmul.f32 %v5671, %v5686
        %v5688 = vadd.f32 %v5687, 0.112945676
        %v5689 = vmul.f32 %v5671, %v5688
        %v5690 = vadd.f32 %v5689, 0.4994258
        %v5691 = vmul.f32 %v5671, %v5690
        %v5692 = vadd.f32 %v5691, 1.0
        %v5693 = vrcp.pop %v5692
        %v5694 = vmul.f32 %v5692, %v5693
        %v5695 = vsub.f32 1.0, %v5694
        %v5696 = vmul.f32 %v5693, %v5695
        %v5697 = vadd.f32 %v5693, %v5696
        %vm5698 = vweird.f32 %v5692
        %vm5699 = vweird.f32 %v5693
        %vm5700 = vmor %vm5698, %vm5699
        %v5701 = vsel %vm5700, %v5693, %v5697
        %v5702 = vand.u32 2147483647, %v5692
        %vm5703 = vcmp.eq.f32.partialorder %v5702, 8.507059e+37
        %v5704 = vand.u32 %v5692, 2147483648
        %v5705 = vor.u32 1.1754944e-38, %v5704
        %v5706 = vsel %vm5703, %v5705, %v5701
        %v5707 = vmul.f32 %v5682, %v5706
        %v5708 = vmin.f32 %v5707, 1.0
        %v5709 = vmax.f32 %v5708, -1.0
        %v5710 = vmul.f32 %v4625, %v4625
        %v5711 = vmin.f32 16.0, %v5710
        %v5712 = vmul.f32 %v5711, 2.1237322e-06
        %v5713 = vadd.f32 %v5712, 0.00028619796
        %v5714 = vmul.f32 %v5711, %v5713
        %v5715 = vadd.f32 %v5714, 0.0036580483
        %v5716 = vmul.f32 %v5711, %v5715
        %v5717 = vadd.f32 %v5716, 0.05243302
        %v5718 = vmul.f32 %v5711, %v5717
        %v5719 = vadd.f32 %v5718, 0.18741608
        %v5720 = vmul.f32 %v5711, %v5719
        %v5721 = vadd.f32 %v5720, 1.1283791
        %v5722 = vmul.f32 %v4625, %v5721
        %v5723 = vmul.f32 %v5711, 3.8918573e-05
        %v5724 = vadd.f32 %v5723, 0.001143296
        %v5725 = vmul.f32 %v5711, %v5724
        %v5726 = vadd.f32 %v5725, 0.014752088
        %v5727 = vmul.f32 %v5711, %v5726
        %v5728 = vadd.f32 %v5727, 0.112945676
        %v5729 = vmul.f32 %v5711, %v5728
        %v5730 = vadd.f32 %v5729, 0.4994258
        %v5731 = vmul.f32 %v5711, %v5730
        %v5732 = vadd.f32 %v5731, 1.0
        %v5733 = vrcp.pop %v5732
        %v5734 = vmul.f32 %v5732, %v5733
        %v5735 = vsub.f32 1.0, %v5734
        %v5736 = vmul.f32 %v5733, %v5735
        %v5737 = vadd.f32 %v5733, %v5736
        %vm5738 = vweird.f32 %v5732
        %vm5739 = vweird.f32 %v5733
        %vm5740 = vmor %vm5738, %vm5739
        %v5741 = vsel %vm5740, %v5733, %v5737
        %v5742 = vand.u32 2147483647, %v5732
        %vm5743 = vcmp.eq.f32.partialorder %v5742, 8.507059e+37
        %v5744 = vand.u32 %v5732, 2147483648
        %v5745 = vor.u32 1.1754944e-38, %v5744
        %v5746 = vsel %vm5743, %v5745, %v5741
        %v5747 = vmul.f32 %v5722, %v5746
        %v5748 = vmin.f32 %v5747, 1.0
        %v5749 = vmax.f32 %v5748, -1.0
        %v5750 = vmul.f32 %v4626, %v4626
        %v5751 = vmin.f32 16.0, %v5750
        %v5752 = vmul.f32 %v5751, 2.1237322e-06
        %v5753 = vadd.f32 %v5752, 0.00028619796
        %v5754 = vmul.f32 %v5751, %v5753
        %v5755 = vadd.f32 %v5754, 0.0036580483
        %v5756 = vmul.f32 %v5751, %v5755
        %v5757 = vadd.f32 %v5756, 0.05243302
        %v5758 = vmul.f32 %v5751, %v5757
        %v5759 = vadd.f32 %v5758, 0.18741608
        %v5760 = vmul.f32 %v5751, %v5759
        %v5761 = vadd.f32 %v5760, 1.1283791
        %v5762 = vmul.f32 %v4626, %v5761
        %v5763 = vmul.f32 %v5751, 3.8918573e-05
        %v5764 = vadd.f32 %v5763, 0.001143296
        %v5765 = vmul.f32 %v5751, %v5764
        %v5766 = vadd.f32 %v5765, 0.014752088
        %v5767 = vmul.f32 %v5751, %v5766
        %v5768 = vadd.f32 %v5767, 0.112945676
        %v5769 = vmul.f32 %v5751, %v5768
        %v5770 = vadd.f32 %v5769, 0.4994258
        %v5771 = vmul.f32 %v5751, %v5770
        %v5772 = vadd.f32 %v5771, 1.0
        %v5773 = vrcp.pop %v5772
        %v5774 = vmul.f32 %v5772, %v5773
        %v5775 = vsub.f32 1.0, %v5774
        %v5776 = vmul.f32 %v5773, %v5775
        %v5777 = vadd.f32 %v5773, %v5776
        %vm5778 = vweird.f32 %v5772
        %vm5779 = vweird.f32 %v5773
        %vm5780 = vmor %vm5778, %vm5779
        %v5781 = vsel %vm5780, %v5773, %v5777
        %v5782 = vand.u32 2147483647, %v5772
        %vm5783 = vcmp.eq.f32.partialorder %v5782, 8.507059e+37
        %v5784 = vand.u32 %v5772, 2147483648
        %v5785 = vor.u32 1.1754944e-38, %v5784
        %v5786 = vsel %vm5783, %v5785, %v5781
        %v5787 = vmul.f32 %v5762, %v5786
        %v5788 = vmin.f32 %v5787, 1.0
        %v5789 = vmax.f32 %v5788, -1.0
        %v5790 = vmul.f32 %v4627, %v4627
        %v5791 = vmin.f32 16.0, %v5790
        %v5792 = vmul.f32 %v5791, 2.1237322e-06
        %v5793 = vadd.f32 %v5792, 0.00028619796
        %v5794 = vmul.f32 %v5791, %v5793
        %v5795 = vadd.f32 %v5794, 0.0036580483
        %v5796 = vmul.f32 %v5791, %v5795
        %v5797 = vadd.f32 %v5796, 0.05243302
        %v5798 = vmul.f32 %v5791, %v5797
        %v5799 = vadd.f32 %v5798, 0.18741608
        %v5800 = vmul.f32 %v5791, %v5799
        %v5801 = vadd.f32 %v5800, 1.1283791
        %v5802 = vmul.f32 %v4627, %v5801
        %v5803 = vmul.f32 %v5791, 3.8918573e-05
        %v5804 = vadd.f32 %v5803, 0.001143296
        %v5805 = vmul.f32 %v5791, %v5804
        %v5806 = vadd.f32 %v5805, 0.014752088
        %v5807 = vmul.f32 %v5791, %v5806
        %v5808 = vadd.f32 %v5807, 0.112945676
        %v5809 = vmul.f32 %v5791, %v5808
        %v5810 = vadd.f32 %v5809, 0.4994258
        %v5811 = vmul.f32 %v5791, %v5810
        %v5812 = vadd.f32 %v5811, 1.0
        %v5813 = vrcp.pop %v5812
        %v5814 = vmul.f32 %v5812, %v5813
        %v5815 = vsub.f32 1.0, %v5814
        %v5816 = vmul.f32 %v5813, %v5815
        %v5817 = vadd.f32 %v5813, %v5816
        %vm5818 = vweird.f32 %v5812
        %vm5819 = vweird.f32 %v5813
        %vm5820 = vmor %vm5818, %vm5819
        %v5821 = vsel %vm5820, %v5813, %v5817
        %v5822 = vand.u32 2147483647, %v5812
        %vm5823 = vcmp.eq.f32.partialorder %v5822, 8.507059e+37
        %v5824 = vand.u32 %v5812, 2147483648
        %v5825 = vor.u32 1.1754944e-38, %v5824
        %v5826 = vsel %vm5823, %v5825, %v5821
        %v5827 = vmul.f32 %v5802, %v5826
        %v5828 = vmin.f32 %v5827, 1.0
        %v5829 = vmax.f32 %v5828, -1.0
        %v5830 = vmul.f32 %v4628, %v4628
        %v5831 = vmin.f32 16.0, %v5830
        %v5832 = vmul.f32 %v5831, 2.1237322e-06
        %v5833 = vadd.f32 %v5832, 0.00028619796
        %v5834 = vmul.f32 %v5831, %v5833
        %v5835 = vadd.f32 %v5834, 0.0036580483
        %v5836 = vmul.f32 %v5831, %v5835
        %v5837 = vadd.f32 %v5836, 0.05243302
        %v5838 = vmul.f32 %v5831, %v5837
        %v5839 = vadd.f32 %v5838, 0.18741608
        %v5840 = vmul.f32 %v5831, %v5839
        %v5841 = vadd.f32 %v5840, 1.1283791
        %v5842 = vmul.f32 %v4628, %v5841
        %v5843 = vmul.f32 %v5831, 3.8918573e-05
        %v5844 = vadd.f32 %v5843, 0.001143296
        %v5845 = vmul.f32 %v5831, %v5844
        %v5846 = vadd.f32 %v5845, 0.014752088
        %v5847 = vmul.f32 %v5831, %v5846
        %v5848 = vadd.f32 %v5847, 0.112945676
        %v5849 = vmul.f32 %v5831, %v5848
        %v5850 = vadd.f32 %v5849, 0.4994258
        %v5851 = vmul.f32 %v5831, %v5850
        %v5852 = vadd.f32 %v5851, 1.0
        %v5853 = vrcp.pop %v5852
        %v5854 = vmul.f32 %v5852, %v5853
        %v5855 = vsub.f32 1.0, %v5854
        %v5856 = vmul.f32 %v5853, %v5855
        %v5857 = vadd.f32 %v5853, %v5856
        %vm5858 = vweird.f32 %v5852
        %vm5859 = vweird.f32 %v5853
        %vm5860 = vmor %vm5858, %vm5859
        %v5861 = vsel %vm5860, %v5853, %v5857
        %v5862 = vand.u32 2147483647, %v5852
        %vm5863 = vcmp.eq.f32.partialorder %v5862, 8.507059e+37
        %v5864 = vand.u32 %v5852, 2147483648
        %v5865 = vor.u32 1.1754944e-38, %v5864
        %v5866 = vsel %vm5863, %v5865, %v5861
        %v5867 = vmul.f32 %v5842, %v5866
        %v5868 = vmin.f32 %v5867, 1.0
        %v5869 = vmax.f32 %v5868, -1.0
        %v5870 = vmul.f32 %v4629, %v4629
        %v5871 = vmin.f32 16.0, %v5870
        %v5872 = vmul.f32 %v5871, 2.1237322e-06
        %v5873 = vadd.f32 %v5872, 0.00028619796
        %v5874 = vmul.f32 %v5871, %v5873
        %v5875 = vadd.f32 %v5874, 0.0036580483
        %v5876 = vmul.f32 %v5871, %v5875
        %v5877 = vadd.f32 %v5876, 0.05243302
        %v5878 = vmul.f32 %v5871, %v5877
        %v5879 = vadd.f32 %v5878, 0.18741608
        %v5880 = vmul.f32 %v5871, %v5879
        %v5881 = vadd.f32 %v5880, 1.1283791
        %v5882 = vmul.f32 %v4629, %v5881
        %v5883 = vmul.f32 %v5871, 3.8918573e-05
        %v5884 = vadd.f32 %v5883, 0.001143296
        %v5885 = vmul.f32 %v5871, %v5884
        %v5886 = vadd.f32 %v5885, 0.014752088
        %v5887 = vmul.f32 %v5871, %v5886
        %v5888 = vadd.f32 %v5887, 0.112945676
        %v5889 = vmul.f32 %v5871, %v5888
        %v5890 = vadd.f32 %v5889, 0.4994258
        %v5891 = vmul.f32 %v5871, %v5890
        %v5892 = vadd.f32 %v5891, 1.0
        %v5893 = vrcp.pop %v5892
        %v5894 = vmul.f32 %v5892, %v5893
        %v5895 = vsub.f32 1.0, %v5894
        %v5896 = vmul.f32 %v5893, %v5895
        %v5897 = vadd.f32 %v5893, %v5896
        %vm5898 = vweird.f32 %v5892
        %vm5899 = vweird.f32 %v5893
        %vm5900 = vmor %vm5898, %vm5899
        %v5901 = vsel %vm5900, %v5893, %v5897
        %v5902 = vand.u32 2147483647, %v5892
        %vm5903 = vcmp.eq.f32.partialorder %v5902, 8.507059e+37
        %v5904 = vand.u32 %v5892, 2147483648
        %v5905 = vor.u32 1.1754944e-38, %v5904
        %v5906 = vsel %vm5903, %v5905, %v5901
        %v5907 = vmul.f32 %v5882, %v5906
        %v5908 = vmin.f32 %v5907, 1.0
        %v5909 = vmax.f32 %v5908, -1.0
        %v5910 = vadd.f32 %v4669, 1.0
        %v5911 = vadd.f32 %v4709, 1.0
        %v5912 = vadd.f32 %v4749, 1.0
        %v5913 = vadd.f32 %v4789, 1.0
        %v5914 = vadd.f32 %v4829, 1.0
        %v5915 = vadd.f32 %v4869, 1.0
        %v5916 = vadd.f32 %v4909, 1.0
        %v5917 = vadd.f32 %v4949, 1.0
        %v5918 = vadd.f32 %v4989, 1.0
        %v5919 = vadd.f32 %v5029, 1.0
        %v5920 = vadd.f32 %v5069, 1.0
        %v5921 = vadd.f32 %v5109, 1.0
        %v5922 = vadd.f32 %v5149, 1.0
        %v5923 = vadd.f32 %v5189, 1.0
        %v5924 = vadd.f32 %v5229, 1.0
        %v5925 = vadd.f32 %v5269, 1.0
        %v5926 = vadd.f32 %v5309, 1.0
        %v5927 = vadd.f32 %v5349, 1.0
        %v5928 = vadd.f32 %v5389, 1.0
        %v5929 = vadd.f32 %v5429, 1.0
        %v5930 = vadd.f32 %v5469, 1.0
        %v5931 = vadd.f32 %v5509, 1.0
        %v5932 = vadd.f32 %v5549, 1.0
        %v5933 = vadd.f32 %v5589, 1.0
        %v5934 = vadd.f32 %v5629, 1.0
        %v5935 = vadd.f32 %v5669, 1.0
        %v5936 = vadd.f32 %v5709, 1.0
        %v5937 = vadd.f32 %v5749, 1.0
        %v5938 = vadd.f32 %v5789, 1.0
        %v5939 = vadd.f32 %v5829, 1.0
        %v5940 = vadd.f32 %v5869, 1.0
        %v5941 = vadd.f32 %v5909, 1.0
        %v5942 = vmul.f32 %v4559, %v5910
        %v5943 = vmul.f32 %v4560, %v5911
        %v5944 = vmul.f32 %v4561, %v5912
        %v5945 = vmul.f32 %v4562, %v5913
        %v5946 = vmul.f32 %v4563, %v5914
        %v5947 = vmul.f32 %v4564, %v5915
        %v5948 = vmul.f32 %v4565, %v5916
        %v5949 = vmul.f32 %v4566, %v5917
        %v5950 = vmul.f32 %v4567, %v5918
        %v5951 = vmul.f32 %v4568, %v5919
        %v5952 = vmul.f32 %v4569, %v5920
        %v5953 = vmul.f32 %v4570, %v5921
        %v5954 = vmul.f32 %v4571, %v5922
        %v5955 = vmul.f32 %v4572, %v5923
        %v5956 = vmul.f32 %v4573, %v5924
        %v5957 = vmul.f32 %v4574, %v5925
        %v5958 = vmul.f32 %v4575, %v5926
        %v5959 = vmul.f32 %v4576, %v5927
        %v5960 = vmul.f32 %v4577, %v5928
        %v5961 = vmul.f32 %v4578, %v5929
        %v5962 = vmul.f32 %v4579, %v5930
        %v5963 = vmul.f32 %v4580, %v5931
        %v5964 = vmul.f32 %v4581, %v5932
        %v5965 = vmul.f32 %v4582, %v5933
        %v5966 = vmul.f32 %v4583, %v5934
        %v5967 = vmul.f32 %v4584, %v5935
        %v5968 = vmul.f32 %v4585, %v5936
        %v5969 = vmul.f32 %v4586, %v5937
        %v5970 = vmul.f32 %v4587, %v5938
        %v5971 = vmul.f32 %v4588, %v5939
        %v5972 = vmul.f32 %v4589, %v5940
        %v5973 = vmul.f32 %v4590, %v5941
        %v5974 = vld [vmem:[%s763] sm:$0xff]
        %v5975 = vld [vmem:[%s763 + $0x8] sm:$0xff]
        %v5976 = vld [vmem:[%s763 + $0x10] sm:$0xff]
        %v5977 = vld [vmem:[%s763 + $0x18] sm:$0xff]
        %v5978 = vld [vmem:[%s763 + $0x20] sm:$0xff]
        %v5979 = vld [vmem:[%s763 + $0x28] sm:$0xff]
        %v5980 = vld [vmem:[%s763 + $0x30] sm:$0xff]
        %v5981 = vld [vmem:[%s763 + $0x38] sm:$0xff]
        %v5982 = vld [vmem:[%s763 + $0x40] sm:$0xff]
        %v5983 = vld [vmem:[%s763 + $0x48] sm:$0xff]
        %v5984 = vld [vmem:[%s763 + $0x50] sm:$0xff]
        %v5985 = vld [vmem:[%s763 + $0x58] sm:$0xff]
        %v5986 = vld [vmem:[%s763 + $0x60] sm:$0xff]
        %v5987 = vld [vmem:[%s763 + $0x68] sm:$0xff]
        %v5988 = vld [vmem:[%s763 + $0x70] sm:$0xff]
        %v5989 = vld [vmem:[%s763 + $0x78] sm:$0xff]
        %v5990 = vld [vmem:[%s763 + $0x80] sm:$0xff]
        %v5991 = vld [vmem:[%s763 + $0x88] sm:$0xff]
        %v5992 = vld [vmem:[%s763 + $0x90] sm:$0xff]
        %v5993 = vld [vmem:[%s763 + $0x98] sm:$0xff]
        %v5994 = vld [vmem:[%s763 + $0xa0] sm:$0xff]
        %v5995 = vld [vmem:[%s763 + $0xa8] sm:$0xff]
        %v5996 = vld [vmem:[%s763 + $0xb0] sm:$0xff]
        %v5997 = vld [vmem:[%s763 + $0xb8] sm:$0xff]
        %v5998 = vld [vmem:[%s763 + $0xc0] sm:$0xff]
        %v5999 = vld [vmem:[%s763 + $0xc8] sm:$0xff]
        %v6000 = vld [vmem:[%s763 + $0xd0] sm:$0xff]
        %v6001 = vld [vmem:[%s763 + $0xd8] sm:$0xff]
        %v6002 = vld [vmem:[%s763 + $0xe0] sm:$0xff]
        %v6003 = vld [vmem:[%s763 + $0xe8] sm:$0xff]
        %v6004 = vld [vmem:[%s763 + $0xf0] sm:$0xff]
        %v6005 = vld [vmem:[%s763 + $0xf8] sm:$0xff]
        %6006 = vmatpush.msra.mxu0 %v5989
        %6007 = vmatpush.msra.mxu0 %v5988
        %6008 = vmatpush.msra.mxu0 %v5987
        %6009 = vmatpush.msra.mxu0 %v5986
        %6010 = vmatpush.msra.mxu0 %v5985
        %6011 = vmatpush.msra.mxu0 %v5984
        %6012 = vmatpush.msra.mxu0 %v5983
        %6013 = vmatpush.msra.mxu0 %v5982
        %6014 = vmatpush.msra.mxu0 %v5981
        %6015 = vmatpush.msra.mxu0 %v5980
        %6016 = vmatpush.msra.mxu0 %v5979
        %6017 = vmatpush.msra.mxu0 %v5978
        %6018 = vmatpush.msra.mxu0 %v5977
        %6019 = vmatpush.msra.mxu0 %v5976
        %6020 = vmatpush.msra.mxu0 %v5975
        %6021 = vmatpush.msra.mxu0 %v5974
        %6022 = vmatmul.f32.gmra.mxu0 %v5942
        %v6023 = vpop.f32.mrf.mxu0
        %v6024 = vadd.f32 0.0, %v6023
        %6025 = vmatmul.f32.gmra.mxu0 %v5944
        %v6026 = vpop.f32.mrf.mxu0
        %v6027 = vadd.f32 0.0, %v6026
        %6028 = vmatmul.f32.gmra.mxu0 %v5946
        %v6029 = vpop.f32.mrf.mxu0
        %v6030 = vadd.f32 0.0, %v6029
        %6031 = vmatmul.f32.gmra.mxu0 %v5948
        %v6032 = vpop.f32.mrf.mxu0
        %v6033 = vadd.f32 0.0, %v6032
        %6034 = vmatmul.f32.gmra.mxu0 %v5950
        %v6035 = vpop.f32.mrf.mxu0
        %v6036 = vadd.f32 0.0, %v6035
        %6037 = vmatmul.f32.gmra.mxu0 %v5952
        %v6038 = vpop.f32.mrf.mxu0
        %v6039 = vadd.f32 0.0, %v6038
        %6040 = vmatmul.f32.gmra.mxu0 %v5954
        %v6041 = vpop.f32.mrf.mxu0
        %v6042 = vadd.f32 0.0, %v6041
        %6043 = vmatmul.f32.gmra.mxu0 %v5956
        %v6044 = vpop.f32.mrf.mxu0
        %v6045 = vadd.f32 0.0, %v6044
        %6046 = vmatmul.f32.gmra.mxu0 %v5958
        %v6047 = vpop.f32.mrf.mxu0
        %v6048 = vadd.f32 0.0, %v6047
        %6049 = vmatmul.f32.gmra.mxu0 %v5960
        %v6050 = vpop.f32.mrf.mxu0
        %v6051 = vadd.f32 0.0, %v6050
        %6052 = vmatmul.f32.gmra.mxu0 %v5962
        %v6053 = vpop.f32.mrf.mxu0
        %v6054 = vadd.f32 0.0, %v6053
        %6055 = vmatmul.f32.gmra.mxu0 %v5964
        %v6056 = vpop.f32.mrf.mxu0
        %v6057 = vadd.f32 0.0, %v6056
        %6058 = vmatmul.f32.gmra.mxu0 %v5966
        %v6059 = vpop.f32.mrf.mxu0
        %v6060 = vadd.f32 0.0, %v6059
        %6061 = vmatmul.f32.gmra.mxu0 %v5968
        %v6062 = vpop.f32.mrf.mxu0
        %v6063 = vadd.f32 0.0, %v6062
        %6064 = vmatmul.f32.gmra.mxu0 %v5970
        %v6065 = vpop.f32.mrf.mxu0
        %v6066 = vadd.f32 0.0, %v6065
        %6067 = vmatmul.f32.gmra.mxu0 %v5972
        %v6068 = vpop.f32.mrf.mxu0
        %v6069 = vadd.f32 0.0, %v6068
        %6070 = vdwg.mxu0
        %6071 = vmatpush.msra.mxu0 %v6005
        %6072 = vmatpush.msra.mxu0 %v6004
        %6073 = vmatpush.msra.mxu0 %v6003
        %6074 = vmatpush.msra.mxu0 %v6002
        %6075 = vmatpush.msra.mxu0 %v6001
        %6076 = vmatpush.msra.mxu0 %v6000
        %6077 = vmatpush.msra.mxu0 %v5999
        %6078 = vmatpush.msra.mxu0 %v5998
        %6079 = vmatpush.msra.mxu0 %v5997
        %6080 = vmatpush.msra.mxu0 %v5996
        %6081 = vmatpush.msra.mxu0 %v5995
        %6082 = vmatpush.msra.mxu0 %v5994
        %6083 = vmatpush.msra.mxu0 %v5993
        %6084 = vmatpush.msra.mxu0 %v5992
        %6085 = vmatpush.msra.mxu0 %v5991
        %6086 = vmatpush.msra.mxu0 %v5990
        %6087 = vmatmul.f32.gmra.mxu0 %v5943
        %v6088 = vpop.f32.mrf.mxu0
        %v6089 = vadd.f32 %v6024, %v6088
        %6090 = vmatmul.f32.gmra.mxu0 %v5945
        %v6091 = vpop.f32.mrf.mxu0
        %v6092 = vadd.f32 %v6027, %v6091
        %6093 = vmatmul.f32.gmra.mxu0 %v5947
        %v6094 = vpop.f32.mrf.mxu0
        %v6095 = vadd.f32 %v6030, %v6094
        %6096 = vmatmul.f32.gmra.mxu0 %v5949
        %v6097 = vpop.f32.mrf.mxu0
        %v6098 = vadd.f32 %v6033, %v6097
        %6099 = vmatmul.f32.gmra.mxu0 %v5951
        %v6100 = vpop.f32.mrf.mxu0
        %v6101 = vadd.f32 %v6036, %v6100
        %6102 = vmatmul.f32.gmra.mxu0 %v5953
        %v6103 = vpop.f32.mrf.mxu0
        %v6104 = vadd.f32 %v6039, %v6103
        %6105 = vmatmul.f32.gmra.mxu0 %v5955
        %v6106 = vpop.f32.mrf.mxu0
        %v6107 = vadd.f32 %v6042, %v6106
        %6108 = vmatmul.f32.gmra.mxu0 %v5957
        %v6109 = vpop.f32.mrf.mxu0
        %v6110 = vadd.f32 %v6045, %v6109
        %6111 = vmatmul.f32.gmra.mxu0 %v5959
        %v6112 = vpop.f32.mrf.mxu0
        %v6113 = vadd.f32 %v6048, %v6112
        %6114 = vmatmul.f32.gmra.mxu0 %v5961
        %v6115 = vpop.f32.mrf.mxu0
        %v6116 = vadd.f32 %v6051, %v6115
        %6117 = vmatmul.f32.gmra.mxu0 %v5963
        %v6118 = vpop.f32.mrf.mxu0
        %v6119 = vadd.f32 %v6054, %v6118
        %6120 = vmatmul.f32.gmra.mxu0 %v5965
        %v6121 = vpop.f32.mrf.mxu0
        %v6122 = vadd.f32 %v6057, %v6121
        %6123 = vmatmul.f32.gmra.mxu0 %v5967
        %v6124 = vpop.f32.mrf.mxu0
        %v6125 = vadd.f32 %v6060, %v6124
        %6126 = vmatmul.f32.gmra.mxu0 %v5969
        %v6127 = vpop.f32.mrf.mxu0
        %v6128 = vadd.f32 %v6063, %v6127
        %6129 = vmatmul.f32.gmra.mxu0 %v5971
        %v6130 = vpop.f32.mrf.mxu0
        %v6131 = vadd.f32 %v6066, %v6130
        %6132 = vmatmul.f32.gmra.mxu0 %v5973
        %v6133 = vpop.f32.mrf.mxu0
        %v6134 = vadd.f32 %v6069, %v6133
        %6135 = vdwg.mxu0
        %v6136 = vadd.f32 %v3951, %v6089
        %v6137 = vadd.f32 %v3952, %v6092
        %v6138 = vadd.f32 %v3953, %v6095
        %v6139 = vadd.f32 %v3954, %v6098
        %v6140 = vadd.f32 %v3955, %v6101
        %v6141 = vadd.f32 %v3956, %v6104
        %v6142 = vadd.f32 %v3957, %v6107
        %v6143 = vadd.f32 %v3958, %v6110
        %v6144 = vadd.f32 %v3959, %v6113
        %v6145 = vadd.f32 %v3960, %v6116
        %v6146 = vadd.f32 %v3961, %v6119
        %v6147 = vadd.f32 %v3962, %v6122
        %v6148 = vadd.f32 %v3963, %v6125
        %v6149 = vadd.f32 %v3964, %v6128
        %v6150 = vadd.f32 %v3965, %v6131
        %v6151 = vadd.f32 %v3966, %v6134
        %v6152 = vld [vmem:[%s766] sm:$0x1]
        %v6154 = vperm.slane %v6152, 0
        %v6156 = vadd.f32 %v6136, %v6154
        %v6157 = vadd.f32 %v6137, %v6154
        %v6158 = vadd.f32 %v6138, %v6154
        %v6159 = vadd.f32 %v6139, %v6154
        %v6160 = vadd.f32 %v6140, %v6154
        %v6161 = vadd.f32 %v6141, %v6154
        %v6162 = vadd.f32 %v6142, %v6154
        %v6163 = vadd.f32 %v6143, %v6154
        %v6164 = vadd.f32 %v6144, %v6154
        %v6165 = vadd.f32 %v6145, %v6154
        %v6166 = vadd.f32 %v6146, %v6154
        %v6167 = vadd.f32 %v6147, %v6154
        %v6168 = vadd.f32 %v6148, %v6154
        %v6169 = vadd.f32 %v6149, %v6154
        %v6170 = vadd.f32 %v6150, %v6154
        %v6171 = vadd.f32 %v6151, %v6154
        %6172 = vst.msk [vmem:[#allocation2] sm:$0xff] %vm2012, %v6156
        %6173 = vst.msk [vmem:[#allocation2 + $0x8] sm:$0xff] %vm2012, %v6157
        %6174 = vst.msk [vmem:[#allocation2 + $0x10] sm:$0xff] %vm2012, %v6158
        %6175 = vst.msk [vmem:[#allocation2 + $0x18] sm:$0xff] %vm2012, %v6159
        %6176 = vst.msk [vmem:[#allocation2 + $0x20] sm:$0xff] %vm2012, %v6160
        %6177 = vst.msk [vmem:[#allocation2 + $0x28] sm:$0xff] %vm2012, %v6161
        %6178 = vst.msk [vmem:[#allocation2 + $0x30] sm:$0xff] %vm2012, %v6162
        %6179 = vst.msk [vmem:[#allocation2 + $0x38] sm:$0xff] %vm2012, %v6163
        %6180 = vst.msk [vmem:[#allocation2 + $0x40] sm:$0xff] %vm2012, %v6164
        %6181 = vst.msk [vmem:[#allocation2 + $0x48] sm:$0xff] %vm2012, %v6165
        %6182 = vst.msk [vmem:[#allocation2 + $0x50] sm:$0xff] %vm2012, %v6166
        %6183 = vst.msk [vmem:[#allocation2 + $0x58] sm:$0xff] %vm2012, %v6167
        %6184 = vst.msk [vmem:[#allocation2 + $0x60] sm:$0xff] %vm2012, %v6168
        %6185 = vst.msk [vmem:[#allocation2 + $0x68] sm:$0xff] %vm2012, %v6169
        %6186 = vst.msk [vmem:[#allocation2 + $0x70] sm:$0xff] %vm2012, %v6170
        %6187 = vst.msk [vmem:[#allocation2 + $0x78] sm:$0xff] %vm2012, %v6171
        %p6188 = scmp.eq.s32.totalorder %s31, 1
        // Predicated region
        $region101: #{tpu_custom_call.1} parent=95 // pred_check
          %p6189 = pneg %p6188
        $region102: #{tpu_custom_call.1} parent=95 // pred_check_branch
          %6191 = sbr.rel (%p6189) target = $region104
        $region103: #{tpu_custom_call.1} parent=95 // pred_region
          %v6192 = vsel %vm2012, %v6156, 0.0
          %v6193 = vsel %vm2012, %v6157, 0.0
          %v6194 = vadd.f32 %v6192, %v6193
          %v6195 = vsel %vm2012, %v6158, 0.0
          %v6196 = vadd.f32 %v6194, %v6195
          %v6197 = vsel %vm2012, %v6159, 0.0
          %v6198 = vadd.f32 %v6196, %v6197
          %v6199 = vsel %vm2012, %v6160, 0.0
          %v6200 = vadd.f32 %v6198, %v6199
          %v6201 = vsel %vm2012, %v6161, 0.0
          %v6202 = vadd.f32 %v6200, %v6201
          %v6203 = vsel %vm2012, %v6162, 0.0
          %v6204 = vadd.f32 %v6202, %v6203
          %v6205 = vsel %vm2012, %v6163, 0.0
          %v6206 = vadd.f32 %v6204, %v6205
          %v6207 = vrot.slane %v6206, 4
          %v6208 = vadd.f32 %v6206, %v6207
          %v6209 = vrot.slane %v6208, 2
          %v6210 = vadd.f32 %v6208, %v6209
          %v6211 = vrot.slane %v6210, 1
          %v6212 = vadd.f32 %v6210, %v6211
          %v6213 = vsel %vm2012, %v6164, 0.0
          %v6214 = vsel %vm2012, %v6165, 0.0
          %v6215 = vadd.f32 %v6213, %v6214
          %v6216 = vsel %vm2012, %v6166, 0.0
          %v6217 = vadd.f32 %v6215, %v6216
          %v6218 = vsel %vm2012, %v6167, 0.0
          %v6219 = vadd.f32 %v6217, %v6218
          %v6220 = vsel %vm2012, %v6168, 0.0
          %v6221 = vadd.f32 %v6219, %v6220
          %v6222 = vsel %vm2012, %v6169, 0.0
          %v6223 = vadd.f32 %v6221, %v6222
          %v6224 = vsel %vm2012, %v6170, 0.0
          %v6225 = vadd.f32 %v6223, %v6224
          %v6226 = vsel %vm2012, %v6171, 0.0
          %v6227 = vadd.f32 %v6225, %v6226
          %v6228 = vrot.slane %v6227, 4
          %v6229 = vadd.f32 %v6227, %v6228
          %v6230 = vrot.slane %v6229, 2
          %v6231 = vadd.f32 %v6229, %v6230
          %v6232 = vrot.slane %v6231, 1
          %v6233 = vadd.f32 %v6231, %v6232
          %v6234 = vmul.f32 %v6212, %v2067
          %v6235 = vmul.f32 %v6233, %v2067
          %v6236 = vld [vmem:[%s15] sm:$0x1]
          %v6237 = vld [vmem:[%s16] sm:$0x1]
          %vm6240 = vcmask 1041409
          %v6241 = vsel %vm6240, %v6235, %v6234
          %vm6243 = vcmask 517120
          %v6244 = vsel %vm6243, %v6241, 0.0
          %6245 = vadd.xlane.f32.xlu0 %v6244
          %v6246 = vpop.xlane.xlu0 %6245
          %v6247 = vmul.f32 %v6246, %v2067
          %v6249 = vrot.slane %v6247, 1
          %v6252 = vsub.f32 %v6234, %v6247
          %v6253 = vsub.f32 %v6235, %v6249
          %v6254 = vmul.f32 %v6252, %v6252
          %v6255 = vmul.f32 %v6253, %v6253
          %v6258 = vrot.slane %v6255, 7
          %v6259 = vsel %vm6240, %v6258, %v6254
          %v6261 = vsel %vm6243, %v6259, 0.0
          %6262 = vadd.xlane.f32.xlu0 %v6261
          %v6263 = vpop.xlane.xlu0 %6262
          %v6264 = vmul.f32 %v6263, %v2067
          %v6265 = vadd.f32 %v6264, 1e-06
          %v6266 = vrsqrt.pop %v6265
          %v6267 = vmul.f32 %v6266, %v6265
          %v6268 = vmul.f32 %v6267, %v6266
          %v6269 = vmul.f32 0.5, %v6268
          %v6270 = vsub.f32 1.5, %v6269
          %v6271 = vmul.f32 %v6266, %v6270
          %vm6272 = vweird.f32 %v6265
          %vm6273 = vweird.f32 %v6266
          %vm6274 = vmor %vm6272, %vm6273
          %v6275 = vsel %vm6274, %v6266, %v6271
          %v6277 = vrot.slane %v6275, 1
          %v6280 = vmul.f32 %v6252, %v6275
          %v6281 = vmul.f32 %v6253, %v6277
          %v6283 = vperm.slane %v6236, 0
          %v6285 = vmul.f32 %v6280, %v6283
          %v6286 = vmul.f32 %v6281, %v6283
          %v6288 = vperm.slane %v6237, 0
          %v6290 = vadd.f32 %v6285, %v6288
          %v6291 = vadd.f32 %v6286, %v6288
          %v6292 = vld [vmem:[%s17] sm:$0xff]
          %v6293 = vld [vmem:[%s17 + $0x8] sm:$0xff]
          %v6294 = vld [vmem:[%s17 + $0x10] sm:$0xff]
          %v6295 = vld [vmem:[%s17 + $0x18] sm:$0xff]
          %v6296 = vld [vmem:[%s17 + $0x20] sm:$0xff]
          %v6297 = vld [vmem:[%s17 + $0x28] sm:$0xff]
          %v6298 = vld [vmem:[%s17 + $0x30] sm:$0xff]
          %v6299 = vld [vmem:[%s17 + $0x38] sm:$0xff]
          %v6300 = vld [vmem:[%s17 + $0x40] sm:$0xff]
          %v6301 = vld [vmem:[%s17 + $0x48] sm:$0xff]
          %v6302 = vld [vmem:[%s17 + $0x50] sm:$0xff]
          %v6303 = vld [vmem:[%s17 + $0x58] sm:$0xff]
          %v6304 = vld [vmem:[%s17 + $0x60] sm:$0xff]
          %v6305 = vld [vmem:[%s17 + $0x68] sm:$0xff]
          %v6306 = vld [vmem:[%s17 + $0x70] sm:$0xff]
          %v6307 = vld [vmem:[%s17 + $0x78] sm:$0xff]
          %v6308 = vld [vmem:[%s17 + $0x80] sm:$0xff]
          %v6309 = vld [vmem:[%s17 + $0x88] sm:$0xff]
          %v6310 = vld [vmem:[%s17 + $0x90] sm:$0xff]
          %v6311 = vld [vmem:[%s17 + $0x98] sm:$0xff]
          %v6312 = vld [vmem:[%s17 + $0xa0] sm:$0xff]
          %v6313 = vld [vmem:[%s17 + $0xa8] sm:$0xff]
          %v6314 = vld [vmem:[%s17 + $0xb0] sm:$0xff]
          %v6315 = vld [vmem:[%s17 + $0xb8] sm:$0xff]
          %v6316 = vld [vmem:[%s17 + $0xc0] sm:$0xff]
          %v6317 = vld [vmem:[%s17 + $0xc8] sm:$0xff]
          %v6318 = vld [vmem:[%s17 + $0xd0] sm:$0xff]
          %v6319 = vld [vmem:[%s17 + $0xd8] sm:$0xff]
          %v6320 = vld [vmem:[%s17 + $0xe0] sm:$0xff]
          %v6321 = vld [vmem:[%s17 + $0xe8] sm:$0xff]
          %v6322 = vld [vmem:[%s17 + $0xf0] sm:$0xff]
          %v6323 = vld [vmem:[%s17 + $0xf8] sm:$0xff]
          %v6324 = vld [vmem:[%s18] sm:$0xf]
          %v6326 = vperm.slane %v6324, 0
          %v6327 = vperm.slane %v6324, 1
          %v6328 = vperm.slane %v6324, 2
          %v6329 = vperm.slane %v6324, 3
          %v6336 = vrot.slane %v6291, 7
          %v6337 = vsel %vm6240, %v6336, %v6290
          %v6338 = vsel %vm2012, %v6337, 0
          %6340 = vmatpush.msra.mxu0 0.0
          %6341 = vmatpush.msra.mxu0 0.0
          %6342 = vmatpush.msra.mxu0 0.0
          %6343 = vmatpush.msra.mxu0 0.0
          %6344 = vmatpush.msra.mxu0 0.0
          %6345 = vmatpush.msra.mxu0 0.0
          %6346 = vmatpush.msra.mxu0 0.0
          %6347 = vmatpush.msra.mxu0 0.0
          %6348 = vmatpush.msra.mxu0 %v6320
          %6349 = vmatpush.msra.mxu0 %v6316
          %6350 = vmatpush.msra.mxu0 %v6312
          %6351 = vmatpush.msra.mxu0 %v6308
          %6352 = vmatpush.msra.mxu0 %v6304
          %6353 = vmatpush.msra.mxu0 %v6300
          %6354 = vmatpush.msra.mxu0 %v6296
          %6355 = vmatpush.msra.mxu0 %v6292
          %6356 = vmatmul.f32.gmra.mxu0 %v6338
          %v6357 = vpop.f32.mrf.mxu0
          %v6358 = vadd.f32 %v6326, %v6357
          %6359 = vdwg.mxu0
          %6360 = vmatpush.msra.mxu0 0.0
          %6361 = vmatpush.msra.mxu0 0.0
          %6362 = vmatpush.msra.mxu0 0.0
          %6363 = vmatpush.msra.mxu0 0.0
          %6364 = vmatpush.msra.mxu0 0.0
          %6365 = vmatpush.msra.mxu0 0.0
          %6366 = vmatpush.msra.mxu0 0.0
          %6367 = vmatpush.msra.mxu0 0.0
          %6368 = vmatpush.msra.mxu0 %v6321
          %6369 = vmatpush.msra.mxu0 %v6317
          %6370 = vmatpush.msra.mxu0 %v6313
          %6371 = vmatpush.msra.mxu0 %v6309
          %6372 = vmatpush.msra.mxu0 %v6305
          %6373 = vmatpush.msra.mxu0 %v6301
          %6374 = vmatpush.msra.mxu0 %v6297
          %6375 = vmatpush.msra.mxu0 %v6293
          %6376 = vmatmul.f32.gmra.mxu0 %v6338
          %v6377 = vpop.f32.mrf.mxu0
          %v6378 = vadd.f32 %v6327, %v6377
          %6379 = vdwg.mxu0
          %6380 = vmatpush.msra.mxu0 0.0
          %6381 = vmatpush.msra.mxu0 0.0
          %6382 = vmatpush.msra.mxu0 0.0
          %6383 = vmatpush.msra.mxu0 0.0
          %6384 = vmatpush.msra.mxu0 0.0
          %6385 = vmatpush.msra.mxu0 0.0
          %6386 = vmatpush.msra.mxu0 0.0
          %6387 = vmatpush.msra.mxu0 0.0
          %6388 = vmatpush.msra.mxu0 %v6322
          %6389 = vmatpush.msra.mxu0 %v6318
          %6390 = vmatpush.msra.mxu0 %v6314
          %6391 = vmatpush.msra.mxu0 %v6310
          %6392 = vmatpush.msra.mxu0 %v6306
          %6393 = vmatpush.msra.mxu0 %v6302
          %6394 = vmatpush.msra.mxu0 %v6298
          %6395 = vmatpush.msra.mxu0 %v6294
          %6396 = vmatmul.f32.gmra.mxu0 %v6338
          %v6397 = vpop.f32.mrf.mxu0
          %v6398 = vadd.f32 %v6328, %v6397
          %6399 = vdwg.mxu0
          %6400 = vmatpush.msra.mxu0 0.0
          %6401 = vmatpush.msra.mxu0 0.0
          %6402 = vmatpush.msra.mxu0 0.0
          %6403 = vmatpush.msra.mxu0 0.0
          %6404 = vmatpush.msra.mxu0 0.0
          %6405 = vmatpush.msra.mxu0 0.0
          %6406 = vmatpush.msra.mxu0 0.0
          %6407 = vmatpush.msra.mxu0 0.0
          %6408 = vmatpush.msra.mxu0 %v6323
          %6409 = vmatpush.msra.mxu0 %v6319
          %6410 = vmatpush.msra.mxu0 %v6315
          %6411 = vmatpush.msra.mxu0 %v6311
          %6412 = vmatpush.msra.mxu0 %v6307
          %6413 = vmatpush.msra.mxu0 %v6303
          %6414 = vmatpush.msra.mxu0 %v6299
          %6415 = vmatpush.msra.mxu0 %v6295
          %6416 = vmatmul.f32.gmra.mxu0 %v6338
          %v6417 = vpop.f32.mrf.mxu0
          %v6418 = vadd.f32 %v6329, %v6417
          %6419 = vdwg.mxu0
          %v6424 = vrot.slane %v6378, 6
          %v6425 = vrot.slane %v6398, 4
          %v6426 = vrot.slane %v6418, 2
          %vm6427 = vcmask 1041408
          %v6428 = vsel %vm6427, %v6358, %v6424
          %vm6429 = vcmask 1045508
          %v6430 = vsel %vm6429, %v6425, %v6426
          %vm6431 = vcmask 1043456
          %v6432 = vsel %vm6431, %v6428, %v6430
          %6434 = vst [vmem:[#allocation3] sm:$0xff] %v6432
        $region104: #{tpu_custom_call.1} parent=95 // pred_fallthru
          _
        // Predicated region
        $region105: #{tpu_custom_call.1} parent=95 // pred_check
          %p6435 = pneg %p503
        $region106: #{tpu_custom_call.1} parent=95 // pred_check_branch
          %6437 = sbr.rel (%p6435) target = $region108
        $region107: #{tpu_custom_call.1} parent=95 // pred_region
          %6439 = vsyncadd [#allocation4], 0
          %s6441 = sshll.u32 [#allocation3], 4
          %s6442 = int_to_ptr.vmem [resolvable:$true] %s6441
          %s6443 = sshll.u32 %s19, 4
          %s6444 = int_to_ptr.hbm [resolvable:$true] %s6443
          %6446 = dma.vmem_to_hbm [thread:$0]  %s6442, 128, %s6444, [#allocation4]
        $region108: #{tpu_custom_call.1} parent=95 // pred_fallthru
          _
        // Predicated region
        $region109: #{tpu_custom_call.1} parent=95 // pred_check
          %p6447 = pneg %p503
        $region110: #{tpu_custom_call.1} parent=95 // pred_check_branch
          %6449 = sbr.rel (%p6447) target = $region112
        $region111: #{tpu_custom_call.1} parent=95 // pred_region
          %6451 = dma.done [#allocation4], 128
        $region112: #{tpu_custom_call.1} parent=95 // pred_fallthru
          _
      $region96: #{tpu_custom_call.1} parent=5 // pred_fallthru
        _
      %p6452 = scmp.le.s32.totalorder 2, %s26
      // Predicated region
      $region113: #{tpu_custom_call.1} parent=5 // pred_check
        %p6453 = pneg %p6452
      $region114: #{tpu_custom_call.1} parent=5 // pred_check_branch
        %6455 = sbr.rel (%p6453) target = $region116
      $region115: #{tpu_custom_call.1} parent=5 // pred_region
        %s6456 = ssub.s32 %s26, 2
      $region116: #{tpu_custom_call.1} parent=5 // pred_fallthru
        _
    $region6: #{tpu_custom_call.1} parent=1 // loop_footer
      %s30 = sadd.s32 1, %s26
    $region7: #{tpu_custom_call.1} parent=1 // loop_footer_branch
      %25 = sbr.rel target = $region3
    $region8: #{tpu_custom_call.1} parent=1 // loop_exit
      _
    %6457 = vsyncpa [#allocation4], 1
    %s6458 = scalar_lea.sflag [#allocation4], 1
    %6459 = vsyncpa %s6458, 1

</llo_original>
